<compile_context>
chip_gen: v5e
topology: v5e:2x2
jax: 0.10.0
libtpu: 0.0.40
codegen_flags: <defaults>
</compile_context>

<pallas_src>
import functools

import numpy as np
import jax
import jax.numpy as jnp
from jax.experimental import pallas as pl
from jax.experimental.pallas import tpu as pltpu

F32 = jnp.float32

_VMEM_LIMIT = 48 * 1024 * 1024


def _cparams(n_grid_axes=1):
    return pltpu.CompilerParams(
        dimension_semantics=("parallel",) * n_grid_axes,
        vmem_limit_bytes=_VMEM_LIMIT)


# ----------------------------------------------------------------------------
# In-kernel helpers
# ----------------------------------------------------------------------------
def _cmatmul(ar, ai, br, bi):
    # (ar + i*ai) @ (br + i*bi) with 3 real MXU matmuls (Karatsuba) instead of 4.
    dot = functools.partial(jnp.dot, preferred_element_type=jnp.float32)
    p1 = dot(ar, br)
    p2 = dot(ai, bi)
    p3 = dot(ar + ai, br + bi)
    return p1 - p2, p3 - p1 - p2


# ----------------------------------------------------------------------------
# Pallas kernels (all operate on one batch element: blocks (1, C*H, W))
# ----------------------------------------------------------------------------
def _ifft2_center_kernel(hr_ref, hi_ref, wr_ref, wi_ref, cm_ref,
                         kr_ref, ki_ref, or_ref, oi_ref):
    # fused: mask_center -> centered orthonormal 2-D iDFT (sensitivity path)
    h = hr_ref.shape[0]
    c = kr_ref.shape[1] // h
    cm = cm_ref[...]                       # (1, W) centre-line mask, lane broadcast
    xr = kr_ref[0] * cm
    xi = ki_ref[0] * cm
    # W-stage: one big (C*H, W) @ (W, W) complex matmul
    twr, twi = _cmatmul(xr, xi, wr_ref[...], wi_ref[...])
    fhr = hr_ref[...]
    fhi = hi_ref[...]
    for n in range(c):                     # H-stage per coil: Fh @ T_n
        rs = slice(n * h, (n + 1) * h)
        yr, yi = _cmatmul(fhr, fhi, twr[rs], twi[rs])
        or_ref[0, rs, :] = yr
        oi_ref[0, rs, :] = yi


def _ifft2_reduce_kernel(hr_ref, hi_ref, wr_ref, wi_ref,
                         kr_ref, ki_ref, sr_ref, si_ref, or_ref, oi_ref):
    # fused: ifft2(k-space) -> sum_c conj(sens) * image   (VarNetBlock.sens_reduce)
    h = hr_ref.shape[0]
    w = wr_ref.shape[0]
    c = kr_ref.shape[1] // h
    twr, twi = _cmatmul(kr_ref[0], ki_ref[0], wr_ref[...], wi_ref[...])
    fhr = hr_ref[...]
    fhi = hi_ref[...]
    sr = sr_ref[0]
    si = si_ref[0]
    acc_r = jnp.zeros((h, w), jnp.float32)
    acc_i = jnp.zeros((h, w), jnp.float32)
    for n in range(c):
        rs = slice(n * h, (n + 1) * h)
        yr, yi = _cmatmul(fhr, fhi, twr[rs], twi[rs])
        acc_r = acc_r + yr * sr[rs] + yi * si[rs]
        acc_i = acc_i + yi * sr[rs] - yr * si[rs]
    or_ref[0] = acc_r
    oi_ref[0] = acc_i


def _expand_fft2_dc_kernel(dcw_ref, hr_ref, hi_ref, wr_ref, wi_ref, mask_ref,
                           mr_ref, mi_ref, sr_ref, si_ref,
                           cr_ref, ci_ref, rr_ref, ri_ref,
                           or_ref, oi_ref, tr_ref, ti_ref):
    # fused: sens_expand (m * s) -> fft2 -> soft data-consistency cascade combine
    h = hr_ref.shape[0]
    c = sr_ref.shape[1] // h
    fhr = hr_ref[...]
    fhi = hi_ref[...]
    mr = mr_ref[0]                         # (H, W) model output (reduced image)
    mi = mi_ref[0]
    sr = sr_ref[0]                         # (C*H, W) sensitivity maps
    si = si_ref[0]
    # per-coil expand + H-stage DFT matmul, assembled in VMEM scratch
    for n in range(c):
        rs = slice(n * h, (n + 1) * h)
        er = mr * sr[rs] - mi * si[rs]
        ei = mr * si[rs] + mi * sr[rs]
        ar, ai = _cmatmul(fhr, fhi, er, ei)
        tr_ref[rs, :] = ar
        ti_ref[rs, :] = ai
    # W-stage: one big (C*H, W) @ (W, W) complex matmul
    yr, yi = _cmatmul(tr_ref[...], ti_ref[...], wr_ref[...], wi_ref[...])
    # out = cur - where(mask, cur - ref, 0) * dc_w - fft(expand(model(...)))
    dcw = dcw_ref[0]
    msk = mask_ref[...] > 0.0              # (1, W) sampling mask (column mask)
    cr = cr_ref[0]
    ci = ci_ref[0]
    rr = rr_ref[0]
    ri = ri_ref[0]
    zero = jnp.zeros_like(cr)
    or_ref[0] = cr - jnp.where(msk, cr - rr, zero) * dcw - yr
    oi_ref[0] = ci - jnp.where(msk, ci - ri, zero) * dcw - yi


def _ifft2_rss_kernel(hr_ref, hi_ref, wr_ref, wi_ref, kr_ref, ki_ref, o_ref):
    # fused: ifft2 -> complex_abs -> root-sum-of-squares over coils (final output)
    h = hr_ref.shape[0]
    w = wr_ref.shape[0]
    c = kr_ref.shape[1] // h
    twr, twi = _cmatmul(kr_ref[0], ki_ref[0], wr_ref[...], wi_ref[...])
    fhr = hr_ref[...]
    fhi = hi_ref[...]
    acc = jnp.zeros((h, w), jnp.float32)
    for n in range(c):
        rs = slice(n * h, (n + 1) * h)
        yr, yi = _cmatmul(fhr, fhi, twr[rs], twi[rs])
        acc = acc + yr * yr + yi * yi
    o_ref[0] = jnp.sqrt(acc)


def _sens_norm_kernel(xr_ref, xi_ref, or_ref, oi_ref, *, coils):
    # x / root_sum_of_squares_complex(x, dim=coil)   (with eps for zero coils)
    h = xr_ref.shape[1] // coils
    w = xr_ref.shape[2]
    xr = xr_ref[0]
    xi = xi_ref[0]
    acc = jnp.zeros((h, w), jnp.float32)
    for n in range(coils):
        rs = slice(n * h, (n + 1) * h)
        acc = acc + xr[rs] * xr[rs] + xi[rs] * xi[rs]
    inv = jax.lax.rsqrt(acc + 1e-12)
    for n in range(coils):
        rs = slice(n * h, (n + 1) * h)
        or_ref[0, rs, :] = xr[rs] * inv
        oi_ref[0, rs, :] = xi[rs] * inv


def _matmul_bias_kernel(a_ref, b_ref, bias_ref, o_ref, *, relu):
    y = jnp.dot(a_ref[...], b_ref[...], preferred_element_type=jnp.float32)
    y = y + bias_ref[...]
    if relu:
        y = jnp.maximum(y, 0.0)
    o_ref[...] = y


# ----------------------------------------------------------------------------
# Pallas wrappers
# ----------------------------------------------------------------------------
def ifft2_center(kr, ki, center_1w, mats):
    b, ch, w = kr.shape
    ihr, ihi, iwr, iwi = mats["inv"]
    h = ihr.shape[0]
    mh = pl.BlockSpec((h, h), lambda i: (0, 0))
    mw = pl.BlockSpec((w, w), lambda i: (0, 0))
    row = pl.BlockSpec((1, w), lambda i: (0, 0))
    blk = pl.BlockSpec((1, ch, w), lambda i: (i, 0, 0))
    return pl.pallas_call(
        _ifft2_center_kernel,
        out_shape=(jax.ShapeDtypeStruct((b, ch, w), F32),
                   jax.ShapeDtypeStruct((b, ch, w), F32)),
        grid=(b,),
        in_specs=[mh, mh, mw, mw, row, blk, blk],
        out_specs=(blk, blk),
        compiler_params=_cparams(),
    )(ihr, ihi, iwr, iwi, center_1w, kr, ki)


def ifft2_reduce(cr, ci, sr, si, mats):
    b, ch, w = cr.shape
    ihr, ihi, iwr, iwi = mats["inv"]
    h = ihr.shape[0]
    mh = pl.BlockSpec((h, h), lambda i: (0, 0))
    mw = pl.BlockSpec((w, w), lambda i: (0, 0))
    blk = pl.BlockSpec((1, ch, w), lambda i: (i, 0, 0))
    img = pl.BlockSpec((1, h, w), lambda i: (i, 0, 0))
    return pl.pallas_call(
        _ifft2_reduce_kernel,
        out_shape=(jax.ShapeDtypeStruct((b, h, w), F32),
                   jax.ShapeDtypeStruct((b, h, w), F32)),
        grid=(b,),
        in_specs=[mh, mh, mw, mw, blk, blk, blk, blk],
        out_specs=(img, img),
        compiler_params=_cparams(),
    )(ihr, ihi, iwr, iwi, cr, ci, sr, si)


def expand_fft2_dc(dcw, mask_1w, mr, mi, sr, si, cr, ci, rr, ri, mats):
    b, ch, w = sr.shape
    fhr, fhi, fwr, fwi = mats["fwd"]
    h = fhr.shape[0]
    mh = pl.BlockSpec((h, h), lambda i: (0, 0))
    mw = pl.BlockSpec((w, w), lambda i: (0, 0))
    row = pl.BlockSpec((1, w), lambda i: (0, 0))
    img = pl.BlockSpec((1, h, w), lambda i: (i, 0, 0))
    blk = pl.BlockSpec((1, ch, w), lambda i: (i, 0, 0))
    return pl.pallas_call(
        _expand_fft2_dc_kernel,
        out_shape=(jax.ShapeDtypeStruct((b, ch, w), F32),
                   jax.ShapeDtypeStruct((b, ch, w), F32)),
        grid=(b,),
        in_specs=[pl.BlockSpec(memory_space=pltpu.MemorySpace.SMEM),  # dc_weight scalar
                  mh, mh, mw, mw, row,
                  img, img, blk, blk, blk, blk, blk, blk],
        out_specs=(blk, blk),
        scratch_shapes=[pltpu.VMEM((ch, w), F32), pltpu.VMEM((ch, w), F32)],
        compiler_params=_cparams(),
    )(dcw, fhr, fhi, fwr, fwi, mask_1w, mr, mi, sr, si, cr, ci, rr, ri)


def ifft2_rss(cr, ci, mats):
    b, ch, w = cr.shape
    ihr, ihi, iwr, iwi = mats["inv"]
    h = ihr.shape[0]
    mh = pl.BlockSpec((h, h), lambda i: (0, 0))
    mw = pl.BlockSpec((w, w), lambda i: (0, 0))
    blk = pl.BlockSpec((1, ch, w), lambda i: (i, 0, 0))
    img = pl.BlockSpec((1, h, w), lambda i: (i, 0, 0))
    return pl.pallas_call(
        _ifft2_rss_kernel,
        out_shape=jax.ShapeDtypeStruct((b, h, w), F32),
        grid=(b,),
        in_specs=[mh, mh, mw, mw, blk, blk],
        out_specs=img,
        compiler_params=_cparams(),
    )(ihr, ihi, iwr, iwi, cr, ci)


def sens_normalize(xr, xi, coils):
    b, ch, w = xr.shape
    blk = pl.BlockSpec((1, ch, w), lambda i: (i, 0, 0))
    return pl.pallas_call(
        functools.partial(_sens_norm_kernel, coils=coils),
        out_shape=(jax.ShapeDtypeStruct((b, ch, w), F32),
                   jax.ShapeDtypeStruct((b, ch, w), F32)),
        grid=(b,),
        in_specs=[blk, blk],
        out_specs=(blk, blk),
        compiler_params=_cparams(),
    )(xr, xi)


def matmul_bias(a, b, bias, relu):
    m, k = a.shape
    n = b.shape[1]
    tm = m
    for cand in (512, 256, 128):
        if m % cand == 0:
            tm = cand
            break
    return pl.pallas_call(
        functools.partial(_matmul_bias_kernel, relu=relu),
        out_shape=jax.ShapeDtypeStruct((m, n), F32),
        grid=(m // tm,),
        in_specs=[pl.BlockSpec((tm, k), lambda i: (i, 0)),
                  pl.BlockSpec((k, n), lambda i: (0, 0)),
                  pl.BlockSpec((1, n), lambda i: (0, 0))],
        out_specs=pl.BlockSpec((tm, n), lambda i: (i, 0)),
        compiler_params=_cparams(),
    )(a, b, bias)


# ----------------------------------------------------------------------------
# Glue: conv-as-matmul, normalized regularizer, DFT matrices, parameters
# ----------------------------------------------------------------------------
def conv3x3(x, w, b, relu):
    # x: (N, Cin, H, W), w: (Cout, Cin, 3, 3), b: (Cout,); padding=1 ('SAME').
    # TODO(synk): replace the host-side im2col with an in-kernel halo-tile conv to cut
    #   the 9x activation blow-up through HBM (the matmul itself is already tiled).
    n, cin, h, ww = x.shape
    cout = w.shape[0]
    xp = jnp.pad(x, ((0, 0), (0, 0), (1, 1), (1, 1)))
    taps = [xp[:, :, ki:ki + h, kj:kj + ww] for ki in range(3) for kj in range(3)]
    p = jnp.stack(taps, axis=0)                        # (9, N, Cin, H, W)
    p = jnp.transpose(p, (1, 3, 4, 2, 0)).reshape(n * h * ww, cin * 9)
    wf = jnp.transpose(w, (1, 2, 3, 0)).reshape(cin * 9, cout)
    y = matmul_bias(p, wf, b.reshape(1, cout), relu)   # tiled Pallas matmul
    return jnp.transpose(y.reshape(n, h, ww, cout), (0, 3, 1, 2))


def norm_conv_reg(xr, xi, params):
    # Stand-in for NormUnet / NormRSN (see TODO at top of file).
    # xr, xi: (N, H, W) -> complex_to_chan -> normalize -> conv/relu/conv -> unnorm
    x = jnp.stack([xr, xi], axis=1)                    # (N, 2, H, W)
    mean = jnp.mean(x, axis=(2, 3), keepdims=True)
    std = jnp.std(x, axis=(2, 3), keepdims=True) + 1e-6
    xn = (x - mean) / std
    hmid = conv3x3(xn, params["w1"], params["b1"], relu=True)
    y = conv3x3(hmid, params["w2"], params["b2"], relu=False)
    y = y * std + mean
    return y[:, 0], y[:, 1]


def _centered_dft_mats(n, inverse):
    # fftshift(fft(ifftshift(.), norm="ortho")) as a dense (symmetric) matrix
    idx = np.arange(n) + n // 2
    sign = 1.0 if inverse else -1.0
    ang = sign * 2.0 * np.pi * np.outer(idx, idx) / n
    mat = np.exp(1j * ang) / np.sqrt(n)
    return jnp.asarray(mat.real, F32), jnp.asarray(mat.imag, F32)


def build_dft_mats(h, w):
    fhr, fhi = _centered_dft_mats(h, inverse=False)
    fwr, fwi = _centered_dft_mats(w, inverse=False)
    ihr, ihi = _centered_dft_mats(h, inverse=True)
    iwr, iwi = _centered_dft_mats(w, inverse=True)
    return {"fwd": (fhr, fhi, fwr, fwi), "inv": (ihr, ihi, iwr, iwi)}


def init_params(key, sens_chans, chans, num_cascades):
    def conv_reg_params(k, hidden):
        k1, k2, k3, k4 = jax.random.split(k, 4)
        return {
            "w1": 0.1 * jax.random.normal(k1, (hidden, 2, 3, 3), F32),
            "b1": 0.01 * jax.random.normal(k2, (hidden,), F32),
            "w2": 0.1 * jax.random.normal(k3, (2, hidden, 3, 3), F32),
            "b2": 0.01 * jax.random.normal(k4, (2,), F32),
        }

    keys = jax.random.split(key, num_cascades + 1)
    return {
        "sens": conv_reg_params(keys[0], sens_chans),
        "cascades": [
            {"reg": conv_reg_params(keys[i + 1], chans),
             "dc_weight": jnp.ones((1,), F32)}          # nn.Parameter(torch.ones(1))
            for i in range(num_cascades)
        ],
    }


# ----------------------------------------------------------------------------
# Full forward pass (VariationalNetworkModel.forward)
# ----------------------------------------------------------------------------
def varnet_forward(masked_kspace, mask, params, dft_mats, pad, num_low):
    b, c, h, w, _ = masked_kspace.shape
    kr = masked_kspace[..., 0].reshape(b, c * h, w)     # coil-flattened layout
    ki = masked_kspace[..., 1].reshape(b, c * h, w)
    mask_1w = mask.reshape(1, w).astype(F32)
    center_1w = jnp.zeros((1, w), F32).at[0, pad:pad + num_low].set(1.0)  # T.mask_center

    # ---------------- SensitivityModel ----------------
    xr, xi = ifft2_center(kr, ki, center_1w, dft_mats)  # fused mask_center + ifft2
    xr2, xi2 = norm_conv_reg(xr.reshape(b * c, h, w),   # chans_to_batch_dim folded in
                             xi.reshape(b * c, h, w), params["sens"])
    sr, si = sens_normalize(xr2.reshape(b, c * h, w), xi2.reshape(b, c * h, w), c)

    # ---------------- Cascades (VarNetBlock) ----------------
    cr, ci = kr, ki
    for casc in params["cascades"]:
        rr, ri = ifft2_reduce(cr, ci, sr, si, dft_mats)           # (B, H, W)
        mr, mi = norm_conv_reg(rr, ri, casc["reg"])
        cr, ci = expand_fft2_dc(casc["dc_weight"], mask_1w, mr, mi, sr, si,
                                cr, ci, kr, ki, dft_mats)

    # ---------------- Final RSS of |ifft2| ----------------
    return ifft2_rss(cr, ci, dft_mats)                            # (B, H, W)


# ----------------------------------------------------------------------------
if __name__ == "__main__":
    B, C, H, W = 2, 4, 16, 16
    sens_chans, sens_pools = 8, 2     # sens_pools / pools unused in the stand-in reg
    chans, pools = 8, 2
    num_cascades = 2

    key = jax.random.PRNGKey(0)
    kdata, kparam = jax.random.split(key)
    kspace_full = jax.random.normal(kdata, (B, C, H, W, 2), F32)

    # undersampling mask along W (fastMRI shape (1,1,1,W,1)): center lines + every 4th
    mask_np = np.zeros((1, 1, 1, W, 1), np.float32)
    mask_np[..., W // 2 - 2:W // 2 + 2, :] = 1.0
    mask_np[..., ::4, :] = 1.0
    mask = jnp.asarray(mask_np)
    masked_kspace = kspace_full * mask

    params = init_params(kparam, sens_chans, chans, num_cascades)
    dft_mats = build_dft_mats(H, W)

    # host-side get_low_frequency_lines (mirrors the Python while-loop semantics)
    mvec = mask_np.reshape(W).astype(bool)
    l = r = W // 2
    while mvec[r]:
        r += 1
    while mvec[l]:
        l -= 1
    l = l + 1
    num_low = int(r - l)
    pad = int((W - num_low + 1) // 2)

    fwd = jax.jit(varnet_forward, static_argnums=(4, 5))
    out = fwd(masked_kspace, mask, params, dft_mats, pad, num_low)
    out = jax.block_until_ready(out)

    assert out.shape == (B, H, W), out.shape
    assert bool(jnp.all(jnp.isfinite(out)))
    print("KERNEL_OK")
</pallas_src>

<mosaic_0001>
module attributes {stable_mosaic.version = 11 : i64} {
  func.func @_ifft2_center_kernel(%arg0: i32, %arg1: memref<16x16xf32, #tpu.memory_space<vmem>>, %arg2: memref<16x16xf32, #tpu.memory_space<vmem>>, %arg3: memref<16x16xf32, #tpu.memory_space<vmem>>, %arg4: memref<16x16xf32, #tpu.memory_space<vmem>>, %arg5: memref<1x16xf32, #tpu.memory_space<vmem>>, %arg6: memref<1x64x16xf32, #tpu.memory_space<vmem>>, %arg7: memref<1x64x16xf32, #tpu.memory_space<vmem>>, %arg8: memref<1x64x16xf32, #tpu.memory_space<vmem>>, %arg9: memref<1x64x16xf32, #tpu.memory_space<vmem>>) attributes {dimension_semantics = [#tpu.dimension_semantics<parallel>], iteration_bounds = array<i64: 2>, scalar_prefetch = 0 : i64, scratch_operands = 0 : i64, tpu.core_type = #tpu.core_type<tc>, window_params = [{pipeline_mode = #tpu.pipeline_mode<synchronous>, transform_indices = @transform_0, window_bounds = array<i64: 16, 16>}, {pipeline_mode = #tpu.pipeline_mode<synchronous>, transform_indices = @transform_1, window_bounds = array<i64: 16, 16>}, {pipeline_mode = #tpu.pipeline_mode<synchronous>, transform_indices = @transform_2, window_bounds = array<i64: 16, 16>}, {pipeline_mode = #tpu.pipeline_mode<synchronous>, transform_indices = @transform_3, window_bounds = array<i64: 16, 16>}, {pipeline_mode = #tpu.pipeline_mode<synchronous>, transform_indices = @transform_4, window_bounds = array<i64: 1, 16>}, {transform_indices = @transform_5, window_bounds = array<i64: 1, 64, 16>}, {transform_indices = @transform_6, window_bounds = array<i64: 1, 64, 16>}, {transform_indices = @transform_7, window_bounds = array<i64: 1, 64, 16>}, {transform_indices = @transform_8, window_bounds = array<i64: 1, 64, 16>}]} {
    %c0 = arith.constant 0 : index
    %c0_0 = arith.constant 0 : index
    %0 = vector.load %arg5[%c0, %c0_0] : memref<1x16xf32, #tpu.memory_space<vmem>>, vector<1x16xf32>
    %c0_1 = arith.constant 0 : index
    %c0_2 = arith.constant 0 : index
    %c0_3 = arith.constant 0 : index
    %1 = vector.load %arg6[%c0_1, %c0_2, %c0_3] : memref<1x64x16xf32, #tpu.memory_space<vmem>>, vector<1x64x16xf32>
    %2 = vector.shape_cast %1 : vector<1x64x16xf32> to vector<64x16xf32>
    %3 = vector.broadcast %0 : vector<1x16xf32> to vector<64x16xf32>
    %4 = arith.mulf %2, %3 : vector<64x16xf32>
    %c0_4 = arith.constant 0 : index
    %c0_5 = arith.constant 0 : index
    %c0_6 = arith.constant 0 : index
    %5 = vector.load %arg7[%c0_4, %c0_5, %c0_6] : memref<1x64x16xf32, #tpu.memory_space<vmem>>, vector<1x64x16xf32>
    %6 = vector.shape_cast %5 : vector<1x64x16xf32> to vector<64x16xf32>
    %7 = vector.broadcast %0 : vector<1x16xf32> to vector<64x16xf32>
    %8 = arith.mulf %6, %7 : vector<64x16xf32>
    %c0_7 = arith.constant 0 : index
    %c0_8 = arith.constant 0 : index
    %9 = vector.load %arg3[%c0_7, %c0_8] : memref<16x16xf32, #tpu.memory_space<vmem>>, vector<16x16xf32>
    %c0_9 = arith.constant 0 : index
    %c0_10 = arith.constant 0 : index
    %10 = vector.load %arg4[%c0_9, %c0_10] : memref<16x16xf32, #tpu.memory_space<vmem>>, vector<16x16xf32>
    %cst = arith.constant dense<0.000000e+00> : vector<64x16xf32>
    %11 = tpu.matmul %4, %9, %cst {dimension_numbers = #tpu.dot_dimension_numbers<[1], [0], [0], [1], [0, 0, 1, 1], [], []>} : vector<64x16xf32>, vector<16x16xf32>, vector<64x16xf32> -> vector<64x16xf32>
    %cst_11 = arith.constant dense<0.000000e+00> : vector<64x16xf32>
    %12 = tpu.matmul %8, %10, %cst_11 {dimension_numbers = #tpu.dot_dimension_numbers<[1], [0], [0], [1], [0, 0, 1, 1], [], []>} : vector<64x16xf32>, vector<16x16xf32>, vector<64x16xf32> -> vector<64x16xf32>
    %13 = arith.addf %4, %8 : vector<64x16xf32>
    %14 = arith.addf %9, %10 : vector<16x16xf32>
    %cst_12 = arith.constant dense<0.000000e+00> : vector<64x16xf32>
    %15 = tpu.matmul %13, %14, %cst_12 {dimension_numbers = #tpu.dot_dimension_numbers<[1], [0], [0], [1], [0, 0, 1, 1], [], []>} : vector<64x16xf32>, vector<16x16xf32>, vector<64x16xf32> -> vector<64x16xf32>
    %16 = arith.subf %11, %12 : vector<64x16xf32>
    %17 = arith.subf %15, %11 : vector<64x16xf32>
    %18 = arith.subf %17, %12 : vector<64x16xf32>
    %c0_13 = arith.constant 0 : index
    %c0_14 = arith.constant 0 : index
    %19 = vector.load %arg1[%c0_13, %c0_14] : memref<16x16xf32, #tpu.memory_space<vmem>>, vector<16x16xf32>
    %c0_15 = arith.constant 0 : index
    %c0_16 = arith.constant 0 : index
    %20 = vector.load %arg2[%c0_15, %c0_16] : memref<16x16xf32, #tpu.memory_space<vmem>>, vector<16x16xf32>
    %21 = vector.extract_strided_slice %16 {offsets = [0, 0], sizes = [16, 16], strides = [1, 1]} : vector<64x16xf32> to vector<16x16xf32>
    %22 = vector.extract_strided_slice %18 {offsets = [0, 0], sizes = [16, 16], strides = [1, 1]} : vector<64x16xf32> to vector<16x16xf32>
    %cst_17 = arith.constant dense<0.000000e+00> : vector<16x16xf32>
    %23 = tpu.matmul %19, %21, %cst_17 {dimension_numbers = #tpu.dot_dimension_numbers<[1], [0], [0], [1], [0, 0, 1, 1], [], []>} : vector<16x16xf32>, vector<16x16xf32>, vector<16x16xf32> -> vector<16x16xf32>
    %cst_18 = arith.constant dense<0.000000e+00> : vector<16x16xf32>
    %24 = tpu.matmul %20, %22, %cst_18 {dimension_numbers = #tpu.dot_dimension_numbers<[1], [0], [0], [1], [0, 0, 1, 1], [], []>} : vector<16x16xf32>, vector<16x16xf32>, vector<16x16xf32> -> vector<16x16xf32>
    %25 = arith.addf %19, %20 : vector<16x16xf32>
    %26 = arith.addf %21, %22 : vector<16x16xf32>
    %cst_19 = arith.constant dense<0.000000e+00> : vector<16x16xf32>
    %27 = tpu.matmul %25, %26, %cst_19 {dimension_numbers = #tpu.dot_dimension_numbers<[1], [0], [0], [1], [0, 0, 1, 1], [], []>} : vector<16x16xf32>, vector<16x16xf32>, vector<16x16xf32> -> vector<16x16xf32>
    %28 = arith.subf %23, %24 : vector<16x16xf32>
    %29 = arith.subf %27, %23 : vector<16x16xf32>
    %30 = arith.subf %29, %24 : vector<16x16xf32>
    %c0_20 = arith.constant 0 : index
    %c0_21 = arith.constant 0 : index
    %c0_22 = arith.constant 0 : index
    %31 = vector.load %arg8[%c0_20, %c0_21, %c0_22] : memref<1x64x16xf32, #tpu.memory_space<vmem>>, vector<1x16x16xf32>
    %32 = vector.shape_cast %31 : vector<1x16x16xf32> to vector<16x16xf32>
    %33 = vector.shape_cast %28 : vector<16x16xf32> to vector<1x16x16xf32>
    tpu.vector_store %arg8[%c0_20, %c0_21, %c0_22], %33 {strides = array<i32>} : memref<1x64x16xf32, #tpu.memory_space<vmem>>, vector<1x16x16xf32>,
    %c0_23 = arith.constant 0 : index
    %c0_24 = arith.constant 0 : index
    %c0_25 = arith.constant 0 : index
    %34 = vector.load %arg9[%c0_23, %c0_24, %c0_25] : memref<1x64x16xf32, #tpu.memory_space<vmem>>, vector<1x16x16xf32>
    %35 = vector.shape_cast %34 : vector<1x16x16xf32> to vector<16x16xf32>
    %36 = vector.shape_cast %30 : vector<16x16xf32> to vector<1x16x16xf32>
    tpu.vector_store %arg9[%c0_23, %c0_24, %c0_25], %36 {strides = array<i32>} : memref<1x64x16xf32, #tpu.memory_space<vmem>>, vector<1x16x16xf32>,
    %37 = vector.extract_strided_slice %16 {offsets = [16, 0], sizes = [16, 16], strides = [1, 1]} : vector<64x16xf32> to vector<16x16xf32>
    %38 = vector.extract_strided_slice %18 {offsets = [16, 0], sizes = [16, 16], strides = [1, 1]} : vector<64x16xf32> to vector<16x16xf32>
    %cst_26 = arith.constant dense<0.000000e+00> : vector<16x16xf32>
    %39 = tpu.matmul %19, %37, %cst_26 {dimension_numbers = #tpu.dot_dimension_numbers<[1], [0], [0], [1], [0, 0, 1, 1], [], []>} : vector<16x16xf32>, vector<16x16xf32>, vector<16x16xf32> -> vector<16x16xf32>
    %cst_27 = arith.constant dense<0.000000e+00> : vector<16x16xf32>
    %40 = tpu.matmul %20, %38, %cst_27 {dimension_numbers = #tpu.dot_dimension_numbers<[1], [0], [0], [1], [0, 0, 1, 1], [], []>} : vector<16x16xf32>, vector<16x16xf32>, vector<16x16xf32> -> vector<16x16xf32>
    %41 = arith.addf %19, %20 : vector<16x16xf32>
    %42 = arith.addf %37, %38 : vector<16x16xf32>
    %cst_28 = arith.constant dense<0.000000e+00> : vector<16x16xf32>
    %43 = tpu.matmul %41, %42, %cst_28 {dimension_numbers = #tpu.dot_dimension_numbers<[1], [0], [0], [1], [0, 0, 1, 1], [], []>} : vector<16x16xf32>, vector<16x16xf32>, vector<16x16xf32> -> vector<16x16xf32>
    %44 = arith.subf %39, %40 : vector<16x16xf32>
    %45 = arith.subf %43, %39 : vector<16x16xf32>
    %46 = arith.subf %45, %40 : vector<16x16xf32>
    %c0_29 = arith.constant 0 : index
    %c16 = arith.constant 16 : index
    %c0_30 = arith.constant 0 : index
    %47 = vector.load %arg8[%c0_29, %c16, %c0_30] : memref<1x64x16xf32, #tpu.memory_space<vmem>>, vector<1x16x16xf32>
    %48 = vector.shape_cast %47 : vector<1x16x16xf32> to vector<16x16xf32>
    %49 = vector.shape_cast %44 : vector<16x16xf32> to vector<1x16x16xf32>
    tpu.vector_store %arg8[%c0_29, %c16, %c0_30], %49 {strides = array<i32>} : memref<1x64x16xf32, #tpu.memory_space<vmem>>, vector<1x16x16xf32>,
    %c0_31 = arith.constant 0 : index
    %c16_32 = arith.constant 16 : index
    %c0_33 = arith.constant 0 : index
    %50 = vector.load %arg9[%c0_31, %c16_32, %c0_33] : memref<1x64x16xf32, #tpu.memory_space<vmem>>, vector<1x16x16xf32>
    %51 = vector.shape_cast %50 : vector<1x16x16xf32> to vector<16x16xf32>
    %52 = vector.shape_cast %46 : vector<16x16xf32> to vector<1x16x16xf32>
    tpu.vector_store %arg9[%c0_31, %c16_32, %c0_33], %52 {strides = array<i32>} : memref<1x64x16xf32, #tpu.memory_space<vmem>>, vector<1x16x16xf32>,
    %53 = vector.extract_strided_slice %16 {offsets = [32, 0], sizes = [16, 16], strides = [1, 1]} : vector<64x16xf32> to vector<16x16xf32>
    %54 = vector.extract_strided_slice %18 {offsets = [32, 0], sizes = [16, 16], strides = [1, 1]} : vector<64x16xf32> to vector<16x16xf32>
    %cst_34 = arith.constant dense<0.000000e+00> : vector<16x16xf32>
    %55 = tpu.matmul %19, %53, %cst_34 {dimension_numbers = #tpu.dot_dimension_numbers<[1], [0], [0], [1], [0, 0, 1, 1], [], []>} : vector<16x16xf32>, vector<16x16xf32>, vector<16x16xf32> -> vector<16x16xf32>
    %cst_35 = arith.constant dense<0.000000e+00> : vector<16x16xf32>
    %56 = tpu.matmul %20, %54, %cst_35 {dimension_numbers = #tpu.dot_dimension_numbers<[1], [0], [0], [1], [0, 0, 1, 1], [], []>} : vector<16x16xf32>, vector<16x16xf32>, vector<16x16xf32> -> vector<16x16xf32>
    %57 = arith.addf %19, %20 : vector<16x16xf32>
    %58 = arith.addf %53, %54 : vector<16x16xf32>
    %cst_36 = arith.constant dense<0.000000e+00> : vector<16x16xf32>
    %59 = tpu.matmul %57, %58, %cst_36 {dimension_numbers = #tpu.dot_dimension_numbers<[1], [0], [0], [1], [0, 0, 1, 1], [], []>} : vector<16x16xf32>, vector<16x16xf32>, vector<16x16xf32> -> vector<16x16xf32>
    %60 = arith.subf %55, %56 : vector<16x16xf32>
    %61 = arith.subf %59, %55 : vector<16x16xf32>
    %62 = arith.subf %61, %56 : vector<16x16xf32>
    %c0_37 = arith.constant 0 : index
    %c32 = arith.constant 32 : index
    %c0_38 = arith.constant 0 : index
    %63 = vector.load %arg8[%c0_37, %c32, %c0_38] : memref<1x64x16xf32, #tpu.memory_space<vmem>>, vector<1x16x16xf32>
    %64 = vector.shape_cast %63 : vector<1x16x16xf32> to vector<16x16xf32>
    %65 = vector.shape_cast %60 : vector<16x16xf32> to vector<1x16x16xf32>
    tpu.vector_store %arg8[%c0_37, %c32, %c0_38], %65 {strides = array<i32>} : memref<1x64x16xf32, #tpu.memory_space<vmem>>, vector<1x16x16xf32>,
    %c0_39 = arith.constant 0 : index
    %c32_40 = arith.constant 32 : index
    %c0_41 = arith.constant 0 : index
    %66 = vector.load %arg9[%c0_39, %c32_40, %c0_41] : memref<1x64x16xf32, #tpu.memory_space<vmem>>, vector<1x16x16xf32>
    %67 = vector.shape_cast %66 : vector<1x16x16xf32> to vector<16x16xf32>
    %68 = vector.shape_cast %62 : vector<16x16xf32> to vector<1x16x16xf32>
    tpu.vector_store %arg9[%c0_39, %c32_40, %c0_41], %68 {strides = array<i32>} : memref<1x64x16xf32, #tpu.memory_space<vmem>>, vector<1x16x16xf32>,
    %69 = vector.extract_strided_slice %16 {offsets = [48, 0], sizes = [16, 16], strides = [1, 1]} : vector<64x16xf32> to vector<16x16xf32>
    %70 = vector.extract_strided_slice %18 {offsets = [48, 0], sizes = [16, 16], strides = [1, 1]} : vector<64x16xf32> to vector<16x16xf32>
    %cst_42 = arith.constant dense<0.000000e+00> : vector<16x16xf32>
    %71 = tpu.matmul %19, %69, %cst_42 {dimension_numbers = #tpu.dot_dimension_numbers<[1], [0], [0], [1], [0, 0, 1, 1], [], []>} : vector<16x16xf32>, vector<16x16xf32>, vector<16x16xf32> -> vector<16x16xf32>
    %cst_43 = arith.constant dense<0.000000e+00> : vector<16x16xf32>
    %72 = tpu.matmul %20, %70, %cst_43 {dimension_numbers = #tpu.dot_dimension_numbers<[1], [0], [0], [1], [0, 0, 1, 1], [], []>} : vector<16x16xf32>, vector<16x16xf32>, vector<16x16xf32> -> vector<16x16xf32>
    %73 = arith.addf %19, %20 : vector<16x16xf32>
    %74 = arith.addf %69, %70 : vector<16x16xf32>
    %cst_44 = arith.constant dense<0.000000e+00> : vector<16x16xf32>
    %75 = tpu.matmul %73, %74, %cst_44 {dimension_numbers = #tpu.dot_dimension_numbers<[1], [0], [0], [1], [0, 0, 1, 1], [], []>} : vector<16x16xf32>, vector<16x16xf32>, vector<16x16xf32> -> vector<16x16xf32>
    %76 = arith.subf %71, %72 : vector<16x16xf32>
    %77 = arith.subf %75, %71 : vector<16x16xf32>
    %78 = arith.subf %77, %72 : vector<16x16xf32>
    %c0_45 = arith.constant 0 : index
    %c48 = arith.constant 48 : index
    %c0_46 = arith.constant 0 : index
    %79 = vector.load %arg8[%c0_45, %c48, %c0_46] : memref<1x64x16xf32, #tpu.memory_space<vmem>>, vector<1x16x16xf32>
    %80 = vector.shape_cast %79 : vector<1x16x16xf32> to vector<16x16xf32>
    %81 = vector.shape_cast %76 : vector<16x16xf32> to vector<1x16x16xf32>
    tpu.vector_store %arg8[%c0_45, %c48, %c0_46], %81 {strides = array<i32>} : memref<1x64x16xf32, #tpu.memory_space<vmem>>, vector<1x16x16xf32>,
    %c0_47 = arith.constant 0 : index
    %c48_48 = arith.constant 48 : index
    %c0_49 = arith.constant 0 : index
    %82 = vector.load %arg9[%c0_47, %c48_48, %c0_49] : memref<1x64x16xf32, #tpu.memory_space<vmem>>, vector<1x16x16xf32>
    %83 = vector.shape_cast %82 : vector<1x16x16xf32> to vector<16x16xf32>
    %84 = vector.shape_cast %78 : vector<16x16xf32> to vector<1x16x16xf32>
    tpu.vector_store %arg9[%c0_47, %c48_48, %c0_49], %84 {strides = array<i32>} : memref<1x64x16xf32, #tpu.memory_space<vmem>>, vector<1x16x16xf32>,
    return
  }
  func.func @transform_0(%arg0: i32) -> (i32, i32) {
    %c0_i32 = arith.constant 0 : i32
    %c0_i32_0 = arith.constant 0 : i32
    %c0_i32_1 = arith.constant 0 : i32
    return %c0_i32, %c0_i32_0 : i32, i32
  }
  func.func @transform_1(%arg0: i32) -> (i32, i32) {
    %c0_i32 = arith.constant 0 : i32
    %c0_i32_0 = arith.constant 0 : i32
    %c0_i32_1 = arith.constant 0 : i32
    return %c0_i32, %c0_i32_0 : i32, i32
  }
  func.func @transform_2(%arg0: i32) -> (i32, i32) {
    %c0_i32 = arith.constant 0 : i32
    %c0_i32_0 = arith.constant 0 : i32
    %c0_i32_1 = arith.constant 0 : i32
    return %c0_i32, %c0_i32_0 : i32, i32
  }
  func.func @transform_3(%arg0: i32) -> (i32, i32) {
    %c0_i32 = arith.constant 0 : i32
    %c0_i32_0 = arith.constant 0 : i32
    %c0_i32_1 = arith.constant 0 : i32
    return %c0_i32, %c0_i32_0 : i32, i32
  }
  func.func @transform_4(%arg0: i32) -> (i32, i32) {
    %c0_i32 = arith.constant 0 : i32
    %c0_i32_0 = arith.constant 0 : i32
    %c0_i32_1 = arith.constant 0 : i32
    return %c0_i32, %c0_i32_0 : i32, i32
  }
  func.func @transform_5(%arg0: i32) -> (i32, i32, i32) {
    %c0_i32 = arith.constant 0 : i32
    %c0_i32_0 = arith.constant 0 : i32
    %c0_i32_1 = arith.constant 0 : i32
    return %arg0, %c0_i32, %c0_i32_0 : i32, i32, i32
  }
  func.func @transform_6(%arg0: i32) -> (i32, i32, i32) {
    %c0_i32 = arith.constant 0 : i32
    %c0_i32_0 = arith.constant 0 : i32
    %c0_i32_1 = arith.constant 0 : i32
    return %arg0, %c0_i32, %c0_i32_0 : i32, i32, i32
  }
  func.func @transform_7(%arg0: i32) -> (i32, i32, i32) {
    %c0_i32 = arith.constant 0 : i32
    %c0_i32_0 = arith.constant 0 : i32
    %c0_i32_1 = arith.constant 0 : i32
    return %arg0, %c0_i32, %c0_i32_0 : i32, i32, i32
  }
  func.func @transform_8(%arg0: i32) -> (i32, i32, i32) {
    %c0_i32 = arith.constant 0 : i32
    %c0_i32_0 = arith.constant 0 : i32
    %c0_i32_1 = arith.constant 0 : i32
    return %arg0, %c0_i32, %c0_i32_0 : i32, i32, i32
  }
}

module attributes {stable_mosaic.version = 11 : i64} {
  func.func @_matmul_bias_kernel(%arg0: i32, %arg1: memref<512x18xf32, #tpu.memory_space<vmem>>, %arg2: memref<18x8xf32, #tpu.memory_space<vmem>>, %arg3: memref<1x8xf32, #tpu.memory_space<vmem>>, %arg4: memref<512x8xf32, #tpu.memory_space<vmem>>) attributes {dimension_semantics = [#tpu.dimension_semantics<parallel>], iteration_bounds = array<i64: 4>, scalar_prefetch = 0 : i64, scratch_operands = 0 : i64, tpu.core_type = #tpu.core_type<tc>, window_params = [{transform_indices = @transform_0, window_bounds = array<i64: 512, 18>}, {pipeline_mode = #tpu.pipeline_mode<synchronous>, transform_indices = @transform_1, window_bounds = array<i64: 18, 8>}, {pipeline_mode = #tpu.pipeline_mode<synchronous>, transform_indices = @transform_2, window_bounds = array<i64: 1, 8>}, {transform_indices = @transform_3, window_bounds = array<i64: 512, 8>}]} {
    %c0 = arith.constant 0 : index
    %c0_0 = arith.constant 0 : index
    %0 = vector.load %arg1[%c0, %c0_0] : memref<512x18xf32, #tpu.memory_space<vmem>>, vector<512x18xf32>
    %c0_1 = arith.constant 0 : index
    %c0_2 = arith.constant 0 : index
    %1 = vector.load %arg2[%c0_1, %c0_2] : memref<18x8xf32, #tpu.memory_space<vmem>>, vector<18x8xf32>
    %cst = arith.constant dense<0.000000e+00> : vector<512x8xf32>
    %2 = tpu.matmul %0, %1, %cst {dimension_numbers = #tpu.dot_dimension_numbers<[1], [0], [0], [1], [0, 0, 1, 1], [], []>} : vector<512x18xf32>, vector<18x8xf32>, vector<512x8xf32> -> vector<512x8xf32>
    %c0_3 = arith.constant 0 : index
    %c0_4 = arith.constant 0 : index
    %3 = vector.load %arg3[%c0_3, %c0_4] : memref<1x8xf32, #tpu.memory_space<vmem>>, vector<1x8xf32>
    %4 = vector.broadcast %3 : vector<1x8xf32> to vector<512x8xf32>
    %5 = arith.addf %2, %4 : vector<512x8xf32>
    %cst_5 = arith.constant 0.000000e+00 : f32
    %6 = vector.broadcast %cst_5 : f32 to vector<512x8xf32>
    %7 = arith.maximumf %5, %6 : vector<512x8xf32>
    %c0_6 = arith.constant 0 : index
    %c0_7 = arith.constant 0 : index
    %8 = vector.load %arg4[%c0_6, %c0_7] : memref<512x8xf32, #tpu.memory_space<vmem>>, vector<512x8xf32>
    tpu.vector_store %arg4[%c0_6, %c0_7], %7 {strides = array<i32>} : memref<512x8xf32, #tpu.memory_space<vmem>>, vector<512x8xf32>,
    return
  }
  func.func @transform_0(%arg0: i32) -> (i32, i32) {
    %c0_i32 = arith.constant 0 : i32
    %c0_i32_0 = arith.constant 0 : i32
    return %arg0, %c0_i32 : i32, i32
  }
  func.func @transform_1(%arg0: i32) -> (i32, i32) {
    %c0_i32 = arith.constant 0 : i32
    %c0_i32_0 = arith.constant 0 : i32
    %c0_i32_1 = arith.constant 0 : i32
    return %c0_i32, %c0_i32_0 : i32, i32
  }
  func.func @transform_2(%arg0: i32) -> (i32, i32) {
    %c0_i32 = arith.constant 0 : i32
    %c0_i32_0 = arith.constant 0 : i32
    %c0_i32_1 = arith.constant 0 : i32
    return %c0_i32, %c0_i32_0 : i32, i32
  }
  func.func @transform_3(%arg0: i32) -> (i32, i32) {
    %c0_i32 = arith.constant 0 : i32
    %c0_i32_0 = arith.constant 0 : i32
    return %arg0, %c0_i32 : i32, i32
  }
}

module attributes {stable_mosaic.version = 11 : i64} {
  func.func @_matmul_bias_kernel(%arg0: i32, %arg1: memref<512x72xf32, #tpu.memory_space<vmem>>, %arg2: memref<72x2xf32, #tpu.memory_space<vmem>>, %arg3: memref<1x2xf32, #tpu.memory_space<vmem>>, %arg4: memref<512x2xf32, #tpu.memory_space<vmem>>) attributes {dimension_semantics = [#tpu.dimension_semantics<parallel>], iteration_bounds = array<i64: 4>, scalar_prefetch = 0 : i64, scratch_operands = 0 : i64, tpu.core_type = #tpu.core_type<tc>, window_params = [{transform_indices = @transform_0, window_bounds = array<i64: 512, 72>}, {pipeline_mode = #tpu.pipeline_mode<synchronous>, transform_indices = @transform_1, window_bounds = array<i64: 72, 2>}, {pipeline_mode = #tpu.pipeline_mode<synchronous>, transform_indices = @transform_2, window_bounds = array<i64: 1, 2>}, {transform_indices = @transform_3, window_bounds = array<i64: 512, 2>}]} {
    %c0 = arith.constant 0 : index
    %c0_0 = arith.constant 0 : index
    %0 = vector.load %arg1[%c0, %c0_0] : memref<512x72xf32, #tpu.memory_space<vmem>>, vector<512x72xf32>
    %c0_1 = arith.constant 0 : index
    %c0_2 = arith.constant 0 : index
    %1 = vector.load %arg2[%c0_1, %c0_2] : memref<72x2xf32, #tpu.memory_space<vmem>>, vector<72x2xf32>
    %cst = arith.constant dense<0.000000e+00> : vector<512x2xf32>
    %2 = tpu.matmul %0, %1, %cst {dimension_numbers = #tpu.dot_dimension_numbers<[1], [0], [0], [1], [0, 0, 1, 1], [], []>} : vector<512x72xf32>, vector<72x2xf32>, vector<512x2xf32> -> vector<512x2xf32>
    %c0_3 = arith.constant 0 : index
    %c0_4 = arith.constant 0 : index
    %3 = vector.load %arg3[%c0_3, %c0_4] : memref<1x2xf32, #tpu.memory_space<vmem>>, vector<1x2xf32>
    %4 = vector.broadcast %3 : vector<1x2xf32> to vector<512x2xf32>
    %5 = arith.addf %2, %4 : vector<512x2xf32>
    %c0_5 = arith.constant 0 : index
    %c0_6 = arith.constant 0 : index
    %6 = vector.load %arg4[%c0_5, %c0_6] : memref<512x2xf32, #tpu.memory_space<vmem>>, vector<512x2xf32>
    tpu.vector_store %arg4[%c0_5, %c0_6], %5 {strides = array<i32>} : memref<512x2xf32, #tpu.memory_space<vmem>>, vector<512x2xf32>,
    return
  }
  func.func @transform_0(%arg0: i32) -> (i32, i32) {
    %c0_i32 = arith.constant 0 : i32
    %c0_i32_0 = arith.constant 0 : i32
    return %arg0, %c0_i32 : i32, i32
  }
  func.func @transform_1(%arg0: i32) -> (i32, i32) {
    %c0_i32 = arith.constant 0 : i32
    %c0_i32_0 = arith.constant 0 : i32
    %c0_i32_1 = arith.constant 0 : i32
    return %c0_i32, %c0_i32_0 : i32, i32
  }
  func.func @transform_2(%arg0: i32) -> (i32, i32) {
    %c0_i32 = arith.constant 0 : i32
    %c0_i32_0 = arith.constant 0 : i32
    %c0_i32_1 = arith.constant 0 : i32
    return %c0_i32, %c0_i32_0 : i32, i32
  }
  func.func @transform_3(%arg0: i32) -> (i32, i32) {
    %c0_i32 = arith.constant 0 : i32
    %c0_i32_0 = arith.constant 0 : i32
    return %arg0, %c0_i32 : i32, i32
  }
}

module attributes {stable_mosaic.version = 11 : i64} {
  func.func @_sens_norm_kernel(%arg0: i32, %arg1: memref<1x64x16xf32, #tpu.memory_space<vmem>>, %arg2: memref<1x64x16xf32, #tpu.memory_space<vmem>>, %arg3: memref<1x64x16xf32, #tpu.memory_space<vmem>>, %arg4: memref<1x64x16xf32, #tpu.memory_space<vmem>>) attributes {dimension_semantics = [#tpu.dimension_semantics<parallel>], iteration_bounds = array<i64: 2>, scalar_prefetch = 0 : i64, scratch_operands = 0 : i64, tpu.core_type = #tpu.core_type<tc>, window_params = [{transform_indices = @transform_0, window_bounds = array<i64: 1, 64, 16>}, {transform_indices = @transform_1, window_bounds = array<i64: 1, 64, 16>}, {transform_indices = @transform_2, window_bounds = array<i64: 1, 64, 16>}, {transform_indices = @transform_3, window_bounds = array<i64: 1, 64, 16>}]} {
    %c0 = arith.constant 0 : index
    %c0_0 = arith.constant 0 : index
    %c0_1 = arith.constant 0 : index
    %0 = vector.load %arg1[%c0, %c0_0, %c0_1] : memref<1x64x16xf32, #tpu.memory_space<vmem>>, vector<1x64x16xf32>
    %1 = vector.shape_cast %0 : vector<1x64x16xf32> to vector<64x16xf32>
    %c0_2 = arith.constant 0 : index
    %c0_3 = arith.constant 0 : index
    %c0_4 = arith.constant 0 : index
    %2 = vector.load %arg2[%c0_2, %c0_3, %c0_4] : memref<1x64x16xf32, #tpu.memory_space<vmem>>, vector<1x64x16xf32>
    %3 = vector.shape_cast %2 : vector<1x64x16xf32> to vector<64x16xf32>
    %cst = arith.constant 0.000000e+00 : f32
    %4 = vector.broadcast %cst : f32 to vector<16x16xf32>
    %5 = vector.extract_strided_slice %1 {offsets = [0, 0], sizes = [16, 16], strides = [1, 1]} : vector<64x16xf32> to vector<16x16xf32>
    %6 = vector.extract_strided_slice %1 {offsets = [0, 0], sizes = [16, 16], strides = [1, 1]} : vector<64x16xf32> to vector<16x16xf32>
    %7 = arith.mulf %5, %6 : vector<16x16xf32>
    %8 = arith.addf %4, %7 : vector<16x16xf32>
    %9 = vector.extract_strided_slice %3 {offsets = [0, 0], sizes = [16, 16], strides = [1, 1]} : vector<64x16xf32> to vector<16x16xf32>
    %10 = vector.extract_strided_slice %3 {offsets = [0, 0], sizes = [16, 16], strides = [1, 1]} : vector<64x16xf32> to vector<16x16xf32>
    %11 = arith.mulf %9, %10 : vector<16x16xf32>
    %12 = arith.addf %8, %11 : vector<16x16xf32>
    %13 = vector.extract_strided_slice %1 {offsets = [16, 0], sizes = [16, 16], strides = [1, 1]} : vector<64x16xf32> to vector<16x16xf32>
    %14 = vector.extract_strided_slice %1 {offsets = [16, 0], sizes = [16, 16], strides = [1, 1]} : vector<64x16xf32> to vector<16x16xf32>
    %15 = arith.mulf %13, %14 : vector<16x16xf32>
    %16 = arith.addf %12, %15 : vector<16x16xf32>
    %17 = vector.extract_strided_slice %3 {offsets = [16, 0], sizes = [16, 16], strides = [1, 1]} : vector<64x16xf32> to vector<16x16xf32>
    %18 = vector.extract_strided_slice %3 {offsets = [16, 0], sizes = [16, 16], strides = [1, 1]} : vector<64x16xf32> to vector<16x16xf32>
    %19 = arith.mulf %17, %18 : vector<16x16xf32>
    %20 = arith.addf %16, %19 : vector<16x16xf32>
    %21 = vector.extract_strided_slice %1 {offsets = [32, 0], sizes = [16, 16], strides = [1, 1]} : vector<64x16xf32> to vector<16x16xf32>
    %22 = vector.extract_strided_slice %1 {offsets = [32, 0], sizes = [16, 16], strides = [1, 1]} : vector<64x16xf32> to vector<16x16xf32>
    %23 = arith.mulf %21, %22 : vector<16x16xf32>
    %24 = arith.addf %20, %23 : vector<16x16xf32>
    %25 = vector.extract_strided_slice %3 {offsets = [32, 0], sizes = [16, 16], strides = [1, 1]} : vector<64x16xf32> to vector<16x16xf32>
    %26 = vector.extract_strided_slice %3 {offsets = [32, 0], sizes = [16, 16], strides = [1, 1]} : vector<64x16xf32> to vector<16x16xf32>
    %27 = arith.mulf %25, %26 : vector<16x16xf32>
    %28 = arith.addf %24, %27 : vector<16x16xf32>
    %29 = vector.extract_strided_slice %1 {offsets = [48, 0], sizes = [16, 16], strides = [1, 1]} : vector<64x16xf32> to vector<16x16xf32>
    %30 = vector.extract_strided_slice %1 {offsets = [48, 0], sizes = [16, 16], strides = [1, 1]} : vector<64x16xf32> to vector<16x16xf32>
    %31 = arith.mulf %29, %30 : vector<16x16xf32>
    %32 = arith.addf %28, %31 : vector<16x16xf32>
    %33 = vector.extract_strided_slice %3 {offsets = [48, 0], sizes = [16, 16], strides = [1, 1]} : vector<64x16xf32> to vector<16x16xf32>
    %34 = vector.extract_strided_slice %3 {offsets = [48, 0], sizes = [16, 16], strides = [1, 1]} : vector<64x16xf32> to vector<16x16xf32>
    %35 = arith.mulf %33, %34 : vector<16x16xf32>
    %36 = arith.addf %32, %35 : vector<16x16xf32>
    %cst_5 = arith.constant 9.99999996E-13 : f32
    %37 = vector.broadcast %cst_5 : f32 to vector<16x16xf32>
    %38 = arith.addf %36, %37 : vector<16x16xf32>
    %39 = math.rsqrt %38 : vector<16x16xf32>
    %40 = vector.extract_strided_slice %1 {offsets = [0, 0], sizes = [16, 16], strides = [1, 1]} : vector<64x16xf32> to vector<16x16xf32>
    %41 = arith.mulf %40, %39 : vector<16x16xf32>
    %c0_6 = arith.constant 0 : index
    %c0_7 = arith.constant 0 : index
    %c0_8 = arith.constant 0 : index
    %42 = vector.load %arg3[%c0_6, %c0_7, %c0_8] : memref<1x64x16xf32, #tpu.memory_space<vmem>>, vector<1x16x16xf32>
    %43 = vector.shape_cast %42 : vector<1x16x16xf32> to vector<16x16xf32>
    %44 = vector.shape_cast %41 : vector<16x16xf32> to vector<1x16x16xf32>
    tpu.vector_store %arg3[%c0_6, %c0_7, %c0_8], %44 {strides = array<i32>} : memref<1x64x16xf32, #tpu.memory_space<vmem>>, vector<1x16x16xf32>,
    %45 = vector.extract_strided_slice %3 {offsets = [0, 0], sizes = [16, 16], strides = [1, 1]} : vector<64x16xf32> to vector<16x16xf32>
    %46 = arith.mulf %45, %39 : vector<16x16xf32>
    %c0_9 = arith.constant 0 : index
    %c0_10 = arith.constant 0 : index
    %c0_11 = arith.constant 0 : index
    %47 = vector.load %arg4[%c0_9, %c0_10, %c0_11] : memref<1x64x16xf32, #tpu.memory_space<vmem>>, vector<1x16x16xf32>
    %48 = vector.shape_cast %47 : vector<1x16x16xf32> to vector<16x16xf32>
    %49 = vector.shape_cast %46 : vector<16x16xf32> to vector<1x16x16xf32>
    tpu.vector_store %arg4[%c0_9, %c0_10, %c0_11], %49 {strides = array<i32>} : memref<1x64x16xf32, #tpu.memory_space<vmem>>, vector<1x16x16xf32>,
    %50 = vector.extract_strided_slice %1 {offsets = [16, 0], sizes = [16, 16], strides = [1, 1]} : vector<64x16xf32> to vector<16x16xf32>
    %51 = arith.mulf %50, %39 : vector<16x16xf32>
    %c0_12 = arith.constant 0 : index
    %c16 = arith.constant 16 : index
    %c0_13 = arith.constant 0 : index
    %52 = vector.load %arg3[%c0_12, %c16, %c0_13] : memref<1x64x16xf32, #tpu.memory_space<vmem>>, vector<1x16x16xf32>
    %53 = vector.shape_cast %52 : vector<1x16x16xf32> to vector<16x16xf32>
    %54 = vector.shape_cast %51 : vector<16x16xf32> to vector<1x16x16xf32>
    tpu.vector_store %arg3[%c0_12, %c16, %c0_13], %54 {strides = array<i32>} : memref<1x64x16xf32, #tpu.memory_space<vmem>>, vector<1x16x16xf32>,
    %55 = vector.extract_strided_slice %3 {offsets = [16, 0], sizes = [16, 16], strides = [1, 1]} : vector<64x16xf32> to vector<16x16xf32>
    %56 = arith.mulf %55, %39 : vector<16x16xf32>
    %c0_14 = arith.constant 0 : index
    %c16_15 = arith.constant 16 : index
    %c0_16 = arith.constant 0 : index
    %57 = vector.load %arg4[%c0_14, %c16_15, %c0_16] : memref<1x64x16xf32, #tpu.memory_space<vmem>>, vector<1x16x16xf32>
    %58 = vector.shape_cast %57 : vector<1x16x16xf32> to vector<16x16xf32>
    %59 = vector.shape_cast %56 : vector<16x16xf32> to vector<1x16x16xf32>
    tpu.vector_store %arg4[%c0_14, %c16_15, %c0_16], %59 {strides = array<i32>} : memref<1x64x16xf32, #tpu.memory_space<vmem>>, vector<1x16x16xf32>,
    %60 = vector.extract_strided_slice %1 {offsets = [32, 0], sizes = [16, 16], strides = [1, 1]} : vector<64x16xf32> to vector<16x16xf32>
    %61 = arith.mulf %60, %39 : vector<16x16xf32>
    %c0_17 = arith.constant 0 : index
    %c32 = arith.constant 32 : index
    %c0_18 = arith.constant 0 : index
    %62 = vector.load %arg3[%c0_17, %c32, %c0_18] : memref<1x64x16xf32, #tpu.memory_space<vmem>>, vector<1x16x16xf32>
    %63 = vector.shape_cast %62 : vector<1x16x16xf32> to vector<16x16xf32>
    %64 = vector.shape_cast %61 : vector<16x16xf32> to vector<1x16x16xf32>
    tpu.vector_store %arg3[%c0_17, %c32, %c0_18], %64 {strides = array<i32>} : memref<1x64x16xf32, #tpu.memory_space<vmem>>, vector<1x16x16xf32>,
    %65 = vector.extract_strided_slice %3 {offsets = [32, 0], sizes = [16, 16], strides = [1, 1]} : vector<64x16xf32> to vector<16x16xf32>
    %66 = arith.mulf %65, %39 : vector<16x16xf32>
    %c0_19 = arith.constant 0 : index
    %c32_20 = arith.constant 32 : index
    %c0_21 = arith.constant 0 : index
    %67 = vector.load %arg4[%c0_19, %c32_20, %c0_21] : memref<1x64x16xf32, #tpu.memory_space<vmem>>, vector<1x16x16xf32>
    %68 = vector.shape_cast %67 : vector<1x16x16xf32> to vector<16x16xf32>
    %69 = vector.shape_cast %66 : vector<16x16xf32> to vector<1x16x16xf32>
    tpu.vector_store %arg4[%c0_19, %c32_20, %c0_21], %69 {strides = array<i32>} : memref<1x64x16xf32, #tpu.memory_space<vmem>>, vector<1x16x16xf32>,
    %70 = vector.extract_strided_slice %1 {offsets = [48, 0], sizes = [16, 16], strides = [1, 1]} : vector<64x16xf32> to vector<16x16xf32>
    %71 = arith.mulf %70, %39 : vector<16x16xf32>
    %c0_22 = arith.constant 0 : index
    %c48 = arith.constant 48 : index
    %c0_23 = arith.constant 0 : index
    %72 = vector.load %arg3[%c0_22, %c48, %c0_23] : memref<1x64x16xf32, #tpu.memory_space<vmem>>, vector<1x16x16xf32>
    %73 = vector.shape_cast %72 : vector<1x16x16xf32> to vector<16x16xf32>
    %74 = vector.shape_cast %71 : vector<16x16xf32> to vector<1x16x16xf32>
    tpu.vector_store %arg3[%c0_22, %c48, %c0_23], %74 {strides = array<i32>} : memref<1x64x16xf32, #tpu.memory_space<vmem>>, vector<1x16x16xf32>,
    %75 = vector.extract_strided_slice %3 {offsets = [48, 0], sizes = [16, 16], strides = [1, 1]} : vector<64x16xf32> to vector<16x16xf32>
    %76 = arith.mulf %75, %39 : vector<16x16xf32>
    %c0_24 = arith.constant 0 : index
    %c48_25 = arith.constant 48 : index
    %c0_26 = arith.constant 0 : index
    %77 = vector.load %arg4[%c0_24, %c48_25, %c0_26] : memref<1x64x16xf32, #tpu.memory_space<vmem>>, vector<1x16x16xf32>
    %78 = vector.shape_cast %77 : vector<1x16x16xf32> to vector<16x16xf32>
    %79 = vector.shape_cast %76 : vector<16x16xf32> to vector<1x16x16xf32>
    tpu.vector_store %arg4[%c0_24, %c48_25, %c0_26], %79 {strides = array<i32>} : memref<1x64x16xf32, #tpu.memory_space<vmem>>, vector<1x16x16xf32>,
    return
  }
  func.func @transform_0(%arg0: i32) -> (i32, i32, i32) {
    %c0_i32 = arith.constant 0 : i32
    %c0_i32_0 = arith.constant 0 : i32
    %c0_i32_1 = arith.constant 0 : i32
    return %arg0, %c0_i32, %c0_i32_0 : i32, i32, i32
  }
  func.func @transform_1(%arg0: i32) -> (i32, i32, i32) {
    %c0_i32 = arith.constant 0 : i32
    %c0_i32_0 = arith.constant 0 : i32
    %c0_i32_1 = arith.constant 0 : i32
    return %arg0, %c0_i32, %c0_i32_0 : i32, i32, i32
  }
  func.func @transform_2(%arg0: i32) -> (i32, i32, i32) {
    %c0_i32 = arith.constant 0 : i32
    %c0_i32_0 = arith.constant 0 : i32
    %c0_i32_1 = arith.constant 0 : i32
    return %arg0, %c0_i32, %c0_i32_0 : i32, i32, i32
  }
  func.func @transform_3(%arg0: i32) -> (i32, i32, i32) {
    %c0_i32 = arith.constant 0 : i32
    %c0_i32_0 = arith.constant 0 : i32
    %c0_i32_1 = arith.constant 0 : i32
    return %arg0, %c0_i32, %c0_i32_0 : i32, i32, i32
  }
}

module attributes {stable_mosaic.version = 11 : i64} {
  func.func @_ifft2_reduce_kernel(%arg0: i32, %arg1: memref<16x16xf32, #tpu.memory_space<vmem>>, %arg2: memref<16x16xf32, #tpu.memory_space<vmem>>, %arg3: memref<16x16xf32, #tpu.memory_space<vmem>>, %arg4: memref<16x16xf32, #tpu.memory_space<vmem>>, %arg5: memref<1x64x16xf32, #tpu.memory_space<vmem>>, %arg6: memref<1x64x16xf32, #tpu.memory_space<vmem>>, %arg7: memref<1x64x16xf32, #tpu.memory_space<vmem>>, %arg8: memref<1x64x16xf32, #tpu.memory_space<vmem>>, %arg9: memref<1x16x16xf32, #tpu.memory_space<vmem>>, %arg10: memref<1x16x16xf32, #tpu.memory_space<vmem>>) attributes {dimension_semantics = [#tpu.dimension_semantics<parallel>], iteration_bounds = array<i64: 2>, scalar_prefetch = 0 : i64, scratch_operands = 0 : i64, tpu.core_type = #tpu.core_type<tc>, window_params = [{pipeline_mode = #tpu.pipeline_mode<synchronous>, transform_indices = @transform_0, window_bounds = array<i64: 16, 16>}, {pipeline_mode = #tpu.pipeline_mode<synchronous>, transform_indices = @transform_1, window_bounds = array<i64: 16, 16>}, {pipeline_mode = #tpu.pipeline_mode<synchronous>, transform_indices = @transform_2, window_bounds = array<i64: 16, 16>}, {pipeline_mode = #tpu.pipeline_mode<synchronous>, transform_indices = @transform_3, window_bounds = array<i64: 16, 16>}, {transform_indices = @transform_4, window_bounds = array<i64: 1, 64, 16>}, {transform_indices = @transform_5, window_bounds = array<i64: 1, 64, 16>}, {transform_indices = @transform_6, window_bounds = array<i64: 1, 64, 16>}, {transform_indices = @transform_7, window_bounds = array<i64: 1, 64, 16>}, {transform_indices = @transform_8, window_bounds = array<i64: 1, 16, 16>}, {transform_indices = @transform_9, window_bounds = array<i64: 1, 16, 16>}]} {
    %c0 = arith.constant 0 : index
    %c0_0 = arith.constant 0 : index
    %c0_1 = arith.constant 0 : index
    %0 = vector.load %arg5[%c0, %c0_0, %c0_1] : memref<1x64x16xf32, #tpu.memory_space<vmem>>, vector<1x64x16xf32>
    %1 = vector.shape_cast %0 : vector<1x64x16xf32> to vector<64x16xf32>
    %c0_2 = arith.constant 0 : index
    %c0_3 = arith.constant 0 : index
    %c0_4 = arith.constant 0 : index
    %2 = vector.load %arg6[%c0_2, %c0_3, %c0_4] : memref<1x64x16xf32, #tpu.memory_space<vmem>>, vector<1x64x16xf32>
    %3 = vector.shape_cast %2 : vector<1x64x16xf32> to vector<64x16xf32>
    %c0_5 = arith.constant 0 : index
    %c0_6 = arith.constant 0 : index
    %4 = vector.load %arg3[%c0_5, %c0_6] : memref<16x16xf32, #tpu.memory_space<vmem>>, vector<16x16xf32>
    %c0_7 = arith.constant 0 : index
    %c0_8 = arith.constant 0 : index
    %5 = vector.load %arg4[%c0_7, %c0_8] : memref<16x16xf32, #tpu.memory_space<vmem>>, vector<16x16xf32>
    %cst = arith.constant dense<0.000000e+00> : vector<64x16xf32>
    %6 = tpu.matmul %1, %4, %cst {dimension_numbers = #tpu.dot_dimension_numbers<[1], [0], [0], [1], [0, 0, 1, 1], [], []>} : vector<64x16xf32>, vector<16x16xf32>, vector<64x16xf32> -> vector<64x16xf32>
    %cst_9 = arith.constant dense<0.000000e+00> : vector<64x16xf32>
    %7 = tpu.matmul %3, %5, %cst_9 {dimension_numbers = #tpu.dot_dimension_numbers<[1], [0], [0], [1], [0, 0, 1, 1], [], []>} : vector<64x16xf32>, vector<16x16xf32>, vector<64x16xf32> -> vector<64x16xf32>
    %8 = arith.addf %1, %3 : vector<64x16xf32>
    %9 = arith.addf %4, %5 : vector<16x16xf32>
    %cst_10 = arith.constant dense<0.000000e+00> : vector<64x16xf32>
    %10 = tpu.matmul %8, %9, %cst_10 {dimension_numbers = #tpu.dot_dimension_numbers<[1], [0], [0], [1], [0, 0, 1, 1], [], []>} : vector<64x16xf32>, vector<16x16xf32>, vector<64x16xf32> -> vector<64x16xf32>
    %11 = arith.subf %6, %7 : vector<64x16xf32>
    %12 = arith.subf %10, %6 : vector<64x16xf32>
    %13 = arith.subf %12, %7 : vector<64x16xf32>
    %c0_11 = arith.constant 0 : index
    %c0_12 = arith.constant 0 : index
    %14 = vector.load %arg1[%c0_11, %c0_12] : memref<16x16xf32, #tpu.memory_space<vmem>>, vector<16x16xf32>
    %c0_13 = arith.constant 0 : index
    %c0_14 = arith.constant 0 : index
    %15 = vector.load %arg2[%c0_13, %c0_14] : memref<16x16xf32, #tpu.memory_space<vmem>>, vector<16x16xf32>
    %c0_15 = arith.constant 0 : index
    %c0_16 = arith.constant 0 : index
    %c0_17 = arith.constant 0 : index
    %16 = vector.load %arg7[%c0_15, %c0_16, %c0_17] : memref<1x64x16xf32, #tpu.memory_space<vmem>>, vector<1x64x16xf32>
    %17 = vector.shape_cast %16 : vector<1x64x16xf32> to vector<64x16xf32>
    %c0_18 = arith.constant 0 : index
    %c0_19 = arith.constant 0 : index
    %c0_20 = arith.constant 0 : index
    %18 = vector.load %arg8[%c0_18, %c0_19, %c0_20] : memref<1x64x16xf32, #tpu.memory_space<vmem>>, vector<1x64x16xf32>
    %19 = vector.shape_cast %18 : vector<1x64x16xf32> to vector<64x16xf32>
    %cst_21 = arith.constant 0.000000e+00 : f32
    %20 = vector.broadcast %cst_21 : f32 to vector<16x16xf32>
    %cst_22 = arith.constant 0.000000e+00 : f32
    %21 = vector.broadcast %cst_22 : f32 to vector<16x16xf32>
    %22 = vector.extract_strided_slice %11 {offsets = [0, 0], sizes = [16, 16], strides = [1, 1]} : vector<64x16xf32> to vector<16x16xf32>
    %23 = vector.extract_strided_slice %13 {offsets = [0, 0], sizes = [16, 16], strides = [1, 1]} : vector<64x16xf32> to vector<16x16xf32>
    %cst_23 = arith.constant dense<0.000000e+00> : vector<16x16xf32>
    %24 = tpu.matmul %14, %22, %cst_23 {dimension_numbers = #tpu.dot_dimension_numbers<[1], [0], [0], [1], [0, 0, 1, 1], [], []>} : vector<16x16xf32>, vector<16x16xf32>, vector<16x16xf32> -> vector<16x16xf32>
    %cst_24 = arith.constant dense<0.000000e+00> : vector<16x16xf32>
    %25 = tpu.matmul %15, %23, %cst_24 {dimension_numbers = #tpu.dot_dimension_numbers<[1], [0], [0], [1], [0, 0, 1, 1], [], []>} : vector<16x16xf32>, vector<16x16xf32>, vector<16x16xf32> -> vector<16x16xf32>
    %26 = arith.addf %14, %15 : vector<16x16xf32>
    %27 = arith.addf %22, %23 : vector<16x16xf32>
    %cst_25 = arith.constant dense<0.000000e+00> : vector<16x16xf32>
    %28 = tpu.matmul %26, %27, %cst_25 {dimension_numbers = #tpu.dot_dimension_numbers<[1], [0], [0], [1], [0, 0, 1, 1], [], []>} : vector<16x16xf32>, vector<16x16xf32>, vector<16x16xf32> -> vector<16x16xf32>
    %29 = arith.subf %24, %25 : vector<16x16xf32>
    %30 = arith.subf %28, %24 : vector<16x16xf32>
    %31 = arith.subf %30, %25 : vector<16x16xf32>
    %32 = vector.extract_strided_slice %17 {offsets = [0, 0], sizes = [16, 16], strides = [1, 1]} : vector<64x16xf32> to vector<16x16xf32>
    %33 = arith.mulf %29, %32 : vector<16x16xf32>
    %34 = arith.addf %20, %33 : vector<16x16xf32>
    %35 = vector.extract_strided_slice %19 {offsets = [0, 0], sizes = [16, 16], strides = [1, 1]} : vector<64x16xf32> to vector<16x16xf32>
    %36 = arith.mulf %31, %35 : vector<16x16xf32>
    %37 = arith.addf %34, %36 : vector<16x16xf32>
    %38 = vector.extract_strided_slice %17 {offsets = [0, 0], sizes = [16, 16], strides = [1, 1]} : vector<64x16xf32> to vector<16x16xf32>
    %39 = arith.mulf %31, %38 : vector<16x16xf32>
    %40 = arith.addf %21, %39 : vector<16x16xf32>
    %41 = vector.extract_strided_slice %19 {offsets = [0, 0], sizes = [16, 16], strides = [1, 1]} : vector<64x16xf32> to vector<16x16xf32>
    %42 = arith.mulf %29, %41 : vector<16x16xf32>
    %43 = arith.subf %40, %42 : vector<16x16xf32>
    %44 = vector.extract_strided_slice %11 {offsets = [16, 0], sizes = [16, 16], strides = [1, 1]} : vector<64x16xf32> to vector<16x16xf32>
    %45 = vector.extract_strided_slice %13 {offsets = [16, 0], sizes = [16, 16], strides = [1, 1]} : vector<64x16xf32> to vector<16x16xf32>
    %cst_26 = arith.constant dense<0.000000e+00> : vector<16x16xf32>
    %46 = tpu.matmul %14, %44, %cst_26 {dimension_numbers = #tpu.dot_dimension_numbers<[1], [0], [0], [1], [0, 0, 1, 1], [], []>} : vector<16x16xf32>, vector<16x16xf32>, vector<16x16xf32> -> vector<16x16xf32>
    %cst_27 = arith.constant dense<0.000000e+00> : vector<16x16xf32>
    %47 = tpu.matmul %15, %45, %cst_27 {dimension_numbers = #tpu.dot_dimension_numbers<[1], [0], [0], [1], [0, 0, 1, 1], [], []>} : vector<16x16xf32>, vector<16x16xf32>, vector<16x16xf32> -> vector<16x16xf32>
    %48 = arith.addf %14, %15 : vector<16x16xf32>
    %49 = arith.addf %44, %45 : vector<16x16xf32>
    %cst_28 = arith.constant dense<0.000000e+00> : vector<16x16xf32>
    %50 = tpu.matmul %48, %49, %cst_28 {dimension_numbers = #tpu.dot_dimension_numbers<[1], [0], [0], [1], [0, 0, 1, 1], [], []>} : vector<16x16xf32>, vector<16x16xf32>, vector<16x16xf32> -> vector<16x16xf32>
    %51 = arith.subf %46, %47 : vector<16x16xf32>
    %52 = arith.subf %50, %46 : vector<16x16xf32>
    %53 = arith.subf %52, %47 : vector<16x16xf32>
    %54 = vector.extract_strided_slice %17 {offsets = [16, 0], sizes = [16, 16], strides = [1, 1]} : vector<64x16xf32> to vector<16x16xf32>
    %55 = arith.mulf %51, %54 : vector<16x16xf32>
    %56 = arith.addf %37, %55 : vector<16x16xf32>
    %57 = vector.extract_strided_slice %19 {offsets = [16, 0], sizes = [16, 16], strides = [1, 1]} : vector<64x16xf32> to vector<16x16xf32>
    %58 = arith.mulf %53, %57 : vector<16x16xf32>
    %59 = arith.addf %56, %58 : vector<16x16xf32>
    %60 = vector.extract_strided_slice %17 {offsets = [16, 0], sizes = [16, 16], strides = [1, 1]} : vector<64x16xf32> to vector<16x16xf32>
    %61 = arith.mulf %53, %60 : vector<16x16xf32>
    %62 = arith.addf %43, %61 : vector<16x16xf32>
    %63 = vector.extract_strided_slice %19 {offsets = [16, 0], sizes = [16, 16], strides = [1, 1]} : vector<64x16xf32> to vector<16x16xf32>
    %64 = arith.mulf %51, %63 : vector<16x16xf32>
    %65 = arith.subf %62, %64 : vector<16x16xf32>
    %66 = vector.extract_strided_slice %11 {offsets = [32, 0], sizes = [16, 16], strides = [1, 1]} : vector<64x16xf32> to vector<16x16xf32>
    %67 = vector.extract_strided_slice %13 {offsets = [32, 0], sizes = [16, 16], strides = [1, 1]} : vector<64x16xf32> to vector<16x16xf32>
    %cst_29 = arith.constant dense<0.000000e+00> : vector<16x16xf32>
    %68 = tpu.matmul %14, %66, %cst_29 {dimension_numbers = #tpu.dot_dimension_numbers<[1], [0], [0], [1], [0, 0, 1, 1], [], []>} : vector<16x16xf32>, vector<16x16xf32>, vector<16x16xf32> -> vector<16x16xf32>
    %cst_30 = arith.constant dense<0.000000e+00> : vector<16x16xf32>
    %69 = tpu.matmul %15, %67, %cst_30 {dimension_numbers = #tpu.dot_dimension_numbers<[1], [0], [0], [1], [0, 0, 1, 1], [], []>} : vector<16x16xf32>, vector<16x16xf32>, vector<16x16xf32> -> vector<16x16xf32>
    %70 = arith.addf %14, %15 : vector<16x16xf32>
    %71 = arith.addf %66, %67 : vector<16x16xf32>
    %cst_31 = arith.constant dense<0.000000e+00> : vector<16x16xf32>
    %72 = tpu.matmul %70, %71, %cst_31 {dimension_numbers = #tpu.dot_dimension_numbers<[1], [0], [0], [1], [0, 0, 1, 1], [], []>} : vector<16x16xf32>, vector<16x16xf32>, vector<16x16xf32> -> vector<16x16xf32>
    %73 = arith.subf %68, %69 : vector<16x16xf32>
    %74 = arith.subf %72, %68 : vector<16x16xf32>
    %75 = arith.subf %74, %69 : vector<16x16xf32>
    %76 = vector.extract_strided_slice %17 {offsets = [32, 0], sizes = [16, 16], strides = [1, 1]} : vector<64x16xf32> to vector<16x16xf32>
    %77 = arith.mulf %73, %76 : vector<16x16xf32>
    %78 = arith.addf %59, %77 : vector<16x16xf32>
    %79 = vector.extract_strided_slice %19 {offsets = [32, 0], sizes = [16, 16], strides = [1, 1]} : vector<64x16xf32> to vector<16x16xf32>
    %80 = arith.mulf %75, %79 : vector<16x16xf32>
    %81 = arith.addf %78, %80 : vector<16x16xf32>
    %82 = vector.extract_strided_slice %17 {offsets = [32, 0], sizes = [16, 16], strides = [1, 1]} : vector<64x16xf32> to vector<16x16xf32>
    %83 = arith.mulf %75, %82 : vector<16x16xf32>
    %84 = arith.addf %65, %83 : vector<16x16xf32>
    %85 = vector.extract_strided_slice %19 {offsets = [32, 0], sizes = [16, 16], strides = [1, 1]} : vector<64x16xf32> to vector<16x16xf32>
    %86 = arith.mulf %73, %85 : vector<16x16xf32>
    %87 = arith.subf %84, %86 : vector<16x16xf32>
    %88 = vector.extract_strided_slice %11 {offsets = [48, 0], sizes = [16, 16], strides = [1, 1]} : vector<64x16xf32> to vector<16x16xf32>
    %89 = vector.extract_strided_slice %13 {offsets = [48, 0], sizes = [16, 16], strides = [1, 1]} : vector<64x16xf32> to vector<16x16xf32>
    %cst_32 = arith.constant dense<0.000000e+00> : vector<16x16xf32>
    %90 = tpu.matmul %14, %88, %cst_32 {dimension_numbers = #tpu.dot_dimension_numbers<[1], [0], [0], [1], [0, 0, 1, 1], [], []>} : vector<16x16xf32>, vector<16x16xf32>, vector<16x16xf32> -> vector<16x16xf32>
    %cst_33 = arith.constant dense<0.000000e+00> : vector<16x16xf32>
    %91 = tpu.matmul %15, %89, %cst_33 {dimension_numbers = #tpu.dot_dimension_numbers<[1], [0], [0], [1], [0, 0, 1, 1], [], []>} : vector<16x16xf32>, vector<16x16xf32>, vector<16x16xf32> -> vector<16x16xf32>
    %92 = arith.addf %14, %15 : vector<16x16xf32>
    %93 = arith.addf %88, %89 : vector<16x16xf32>
    %cst_34 = arith.constant dense<0.000000e+00> : vector<16x16xf32>
    %94 = tpu.matmul %92, %93, %cst_34 {dimension_numbers = #tpu.dot_dimension_numbers<[1], [0], [0], [1], [0, 0, 1, 1], [], []>} : vector<16x16xf32>, vector<16x16xf32>, vector<16x16xf32> -> vector<16x16xf32>
    %95 = arith.subf %90, %91 : vector<16x16xf32>
    %96 = arith.subf %94, %90 : vector<16x16xf32>
    %97 = arith.subf %96, %91 : vector<16x16xf32>
    %98 = vector.extract_strided_slice %17 {offsets = [48, 0], sizes = [16, 16], strides = [1, 1]} : vector<64x16xf32> to vector<16x16xf32>
    %99 = arith.mulf %95, %98 : vector<16x16xf32>
    %100 = arith.addf %81, %99 : vector<16x16xf32>
    %101 = vector.extract_strided_slice %19 {offsets = [48, 0], sizes = [16, 16], strides = [1, 1]} : vector<64x16xf32> to vector<16x16xf32>
    %102 = arith.mulf %97, %101 : vector<16x16xf32>
    %103 = arith.addf %100, %102 : vector<16x16xf32>
    %104 = vector.extract_strided_slice %17 {offsets = [48, 0], sizes = [16, 16], strides = [1, 1]} : vector<64x16xf32> to vector<16x16xf32>
    %105 = arith.mulf %97, %104 : vector<16x16xf32>
    %106 = arith.addf %87, %105 : vector<16x16xf32>
    %107 = vector.extract_strided_slice %19 {offsets = [48, 0], sizes = [16, 16], strides = [1, 1]} : vector<64x16xf32> to vector<16x16xf32>
    %108 = arith.mulf %95, %107 : vector<16x16xf32>
    %109 = arith.subf %106, %108 : vector<16x16xf32>
    %c0_35 = arith.constant 0 : index
    %c0_36 = arith.constant 0 : index
    %c0_37 = arith.constant 0 : index
    %110 = vector.load %arg9[%c0_35, %c0_36, %c0_37] : memref<1x16x16xf32, #tpu.memory_space<vmem>>, vector<1x16x16xf32>
    %111 = vector.shape_cast %110 : vector<1x16x16xf32> to vector<16x16xf32>
    %112 = vector.shape_cast %103 : vector<16x16xf32> to vector<1x16x16xf32>
    tpu.vector_store %arg9[%c0_35, %c0_36, %c0_37], %112 {strides = array<i32>} : memref<1x16x16xf32, #tpu.memory_space<vmem>>, vector<1x16x16xf32>,
    %c0_38 = arith.constant 0 : index
    %c0_39 = arith.constant 0 : index
    %c0_40 = arith.constant 0 : index
    %113 = vector.load %arg10[%c0_38, %c0_39, %c0_40] : memref<1x16x16xf32, #tpu.memory_space<vmem>>, vector<1x16x16xf32>
    %114 = vector.shape_cast %113 : vector<1x16x16xf32> to vector<16x16xf32>
    %115 = vector.shape_cast %109 : vector<16x16xf32> to vector<1x16x16xf32>
    tpu.vector_store %arg10[%c0_38, %c0_39, %c0_40], %115 {strides = array<i32>} : memref<1x16x16xf32, #tpu.memory_space<vmem>>, vector<1x16x16xf32>,
    return
  }
  func.func @transform_0(%arg0: i32) -> (i32, i32) {
    %c0_i32 = arith.constant 0 : i32
    %c0_i32_0 = arith.constant 0 : i32
    %c0_i32_1 = arith.constant 0 : i32
    return %c0_i32, %c0_i32_0 : i32, i32
  }
  func.func @transform_1(%arg0: i32) -> (i32, i32) {
    %c0_i32 = arith.constant 0 : i32
    %c0_i32_0 = arith.constant 0 : i32
    %c0_i32_1 = arith.constant 0 : i32
    return %c0_i32, %c0_i32_0 : i32, i32
  }
  func.func @transform_2(%arg0: i32) -> (i32, i32) {
    %c0_i32 = arith.constant 0 : i32
    %c0_i32_0 = arith.constant 0 : i32
    %c0_i32_1 = arith.constant 0 : i32
    return %c0_i32, %c0_i32_0 : i32, i32
  }
  func.func @transform_3(%arg0: i32) -> (i32, i32) {
    %c0_i32 = arith.constant 0 : i32
    %c0_i32_0 = arith.constant 0 : i32
    %c0_i32_1 = arith.constant 0 : i32
    return %c0_i32, %c0_i32_0 : i32, i32
  }
  func.func @transform_4(%arg0: i32) -> (i32, i32, i32) {
    %c0_i32 = arith.constant 0 : i32
    %c0_i32_0 = arith.constant 0 : i32
    %c0_i32_1 = arith.constant 0 : i32
    return %arg0, %c0_i32, %c0_i32_0 : i32, i32, i32
  }
  func.func @transform_5(%arg0: i32) -> (i32, i32, i32) {
    %c0_i32 = arith.constant 0 : i32
    %c0_i32_0 = arith.constant 0 : i32
    %c0_i32_1 = arith.constant 0 : i32
    return %arg0, %c0_i32, %c0_i32_0 : i32, i32, i32
  }
  func.func @transform_6(%arg0: i32) -> (i32, i32, i32) {
    %c0_i32 = arith.constant 0 : i32
    %c0_i32_0 = arith.constant 0 : i32
    %c0_i32_1 = arith.constant 0 : i32
    return %arg0, %c0_i32, %c0_i32_0 : i32, i32, i32
  }
  func.func @transform_7(%arg0: i32) -> (i32, i32, i32) {
    %c0_i32 = arith.constant 0 : i32
    %c0_i32_0 = arith.constant 0 : i32
    %c0_i32_1 = arith.constant 0 : i32
    return %arg0, %c0_i32, %c0_i32_0 : i32, i32, i32
  }
  func.func @transform_8(%arg0: i32) -> (i32, i32, i32) {
    %c0_i32 = arith.constant 0 : i32
    %c0_i32_0 = arith.constant 0 : i32
    %c0_i32_1 = arith.constant 0 : i32
    return %arg0, %c0_i32, %c0_i32_0 : i32, i32, i32
  }
  func.func @transform_9(%arg0: i32) -> (i32, i32, i32) {
    %c0_i32 = arith.constant 0 : i32
    %c0_i32_0 = arith.constant 0 : i32
    %c0_i32_1 = arith.constant 0 : i32
    return %arg0, %c0_i32, %c0_i32_0 : i32, i32, i32
  }
}

module attributes {stable_mosaic.version = 11 : i64} {
  func.func @_matmul_bias_kernel(%arg0: i32, %arg1: memref<512x18xf32, #tpu.memory_space<vmem>>, %arg2: memref<18x8xf32, #tpu.memory_space<vmem>>, %arg3: memref<1x8xf32, #tpu.memory_space<vmem>>, %arg4: memref<512x8xf32, #tpu.memory_space<vmem>>) attributes {dimension_semantics = [#tpu.dimension_semantics<parallel>], iteration_bounds = array<i64: 1>, scalar_prefetch = 0 : i64, scratch_operands = 0 : i64, tpu.core_type = #tpu.core_type<tc>, window_params = [{transform_indices = @transform_0, window_bounds = array<i64: 512, 18>}, {pipeline_mode = #tpu.pipeline_mode<synchronous>, transform_indices = @transform_1, window_bounds = array<i64: 18, 8>}, {pipeline_mode = #tpu.pipeline_mode<synchronous>, transform_indices = @transform_2, window_bounds = array<i64: 1, 8>}, {transform_indices = @transform_3, window_bounds = array<i64: 512, 8>}]} {
    %c0 = arith.constant 0 : index
    %c0_0 = arith.constant 0 : index
    %0 = vector.load %arg1[%c0, %c0_0] : memref<512x18xf32, #tpu.memory_space<vmem>>, vector<512x18xf32>
    %c0_1 = arith.constant 0 : index
    %c0_2 = arith.constant 0 : index
    %1 = vector.load %arg2[%c0_1, %c0_2] : memref<18x8xf32, #tpu.memory_space<vmem>>, vector<18x8xf32>
    %cst = arith.constant dense<0.000000e+00> : vector<512x8xf32>
    %2 = tpu.matmul %0, %1, %cst {dimension_numbers = #tpu.dot_dimension_numbers<[1], [0], [0], [1], [0, 0, 1, 1], [], []>} : vector<512x18xf32>, vector<18x8xf32>, vector<512x8xf32> -> vector<512x8xf32>
    %c0_3 = arith.constant 0 : index
    %c0_4 = arith.constant 0 : index
    %3 = vector.load %arg3[%c0_3, %c0_4] : memref<1x8xf32, #tpu.memory_space<vmem>>, vector<1x8xf32>
    %4 = vector.broadcast %3 : vector<1x8xf32> to vector<512x8xf32>
    %5 = arith.addf %2, %4 : vector<512x8xf32>
    %cst_5 = arith.constant 0.000000e+00 : f32
    %6 = vector.broadcast %cst_5 : f32 to vector<512x8xf32>
    %7 = arith.maximumf %5, %6 : vector<512x8xf32>
    %c0_6 = arith.constant 0 : index
    %c0_7 = arith.constant 0 : index
    %8 = vector.load %arg4[%c0_6, %c0_7] : memref<512x8xf32, #tpu.memory_space<vmem>>, vector<512x8xf32>
    tpu.vector_store %arg4[%c0_6, %c0_7], %7 {strides = array<i32>} : memref<512x8xf32, #tpu.memory_space<vmem>>, vector<512x8xf32>,
    return
  }
  func.func @transform_0(%arg0: i32) -> (i32, i32) {
    %c0_i32 = arith.constant 0 : i32
    %c0_i32_0 = arith.constant 0 : i32
    return %arg0, %c0_i32 : i32, i32
  }
  func.func @transform_1(%arg0: i32) -> (i32, i32) {
    %c0_i32 = arith.constant 0 : i32
    %c0_i32_0 = arith.constant 0 : i32
    %c0_i32_1 = arith.constant 0 : i32
    return %c0_i32, %c0_i32_0 : i32, i32
  }
  func.func @transform_2(%arg0: i32) -> (i32, i32) {
    %c0_i32 = arith.constant 0 : i32
    %c0_i32_0 = arith.constant 0 : i32
    %c0_i32_1 = arith.constant 0 : i32
    return %c0_i32, %c0_i32_0 : i32, i32
  }
  func.func @transform_3(%arg0: i32) -> (i32, i32) {
    %c0_i32 = arith.constant 0 : i32
    %c0_i32_0 = arith.constant 0 : i32
    return %arg0, %c0_i32 : i32, i32
  }
}

module attributes {stable_mosaic.version = 11 : i64} {
  func.func @_matmul_bias_kernel(%arg0: i32, %arg1: memref<512x72xf32, #tpu.memory_space<vmem>>, %arg2: memref<72x2xf32, #tpu.memory_space<vmem>>, %arg3: memref<1x2xf32, #tpu.memory_space<vmem>>, %arg4: memref<512x2xf32, #tpu.memory_space<vmem>>) attributes {dimension_semantics = [#tpu.dimension_semantics<parallel>], iteration_bounds = array<i64: 1>, scalar_prefetch = 0 : i64, scratch_operands = 0 : i64, tpu.core_type = #tpu.core_type<tc>, window_params = [{transform_indices = @transform_0, window_bounds = array<i64: 512, 72>}, {pipeline_mode = #tpu.pipeline_mode<synchronous>, transform_indices = @transform_1, window_bounds = array<i64: 72, 2>}, {pipeline_mode = #tpu.pipeline_mode<synchronous>, transform_indices = @transform_2, window_bounds = array<i64: 1, 2>}, {transform_indices = @transform_3, window_bounds = array<i64: 512, 2>}]} {
    %c0 = arith.constant 0 : index
    %c0_0 = arith.constant 0 : index
    %0 = vector.load %arg1[%c0, %c0_0] : memref<512x72xf32, #tpu.memory_space<vmem>>, vector<512x72xf32>
    %c0_1 = arith.constant 0 : index
    %c0_2 = arith.constant 0 : index
    %1 = vector.load %arg2[%c0_1, %c0_2] : memref<72x2xf32, #tpu.memory_space<vmem>>, vector<72x2xf32>
    %cst = arith.constant dense<0.000000e+00> : vector<512x2xf32>
    %2 = tpu.matmul %0, %1, %cst {dimension_numbers = #tpu.dot_dimension_numbers<[1], [0], [0], [1], [0, 0, 1, 1], [], []>} : vector<512x72xf32>, vector<72x2xf32>, vector<512x2xf32> -> vector<512x2xf32>
    %c0_3 = arith.constant 0 : index
    %c0_4 = arith.constant 0 : index
    %3 = vector.load %arg3[%c0_3, %c0_4] : memref<1x2xf32, #tpu.memory_space<vmem>>, vector<1x2xf32>
    %4 = vector.broadcast %3 : vector<1x2xf32> to vector<512x2xf32>
    %5 = arith.addf %2, %4 : vector<512x2xf32>
    %c0_5 = arith.constant 0 : index
    %c0_6 = arith.constant 0 : index
    %6 = vector.load %arg4[%c0_5, %c0_6] : memref<512x2xf32, #tpu.memory_space<vmem>>, vector<512x2xf32>
    tpu.vector_store %arg4[%c0_5, %c0_6], %5 {strides = array<i32>} : memref<512x2xf32, #tpu.memory_space<vmem>>, vector<512x2xf32>,
    return
  }
  func.func @transform_0(%arg0: i32) -> (i32, i32) {
    %c0_i32 = arith.constant 0 : i32
    %c0_i32_0 = arith.constant 0 : i32
    return %arg0, %c0_i32 : i32, i32
  }
  func.func @transform_1(%arg0: i32) -> (i32, i32) {
    %c0_i32 = arith.constant 0 : i32
    %c0_i32_0 = arith.constant 0 : i32
    %c0_i32_1 = arith.constant 0 : i32
    return %c0_i32, %c0_i32_0 : i32, i32
  }
  func.func @transform_2(%arg0: i32) -> (i32, i32) {
    %c0_i32 = arith.constant 0 : i32
    %c0_i32_0 = arith.constant 0 : i32
    %c0_i32_1 = arith.constant 0 : i32
    return %c0_i32, %c0_i32_0 : i32, i32
  }
  func.func @transform_3(%arg0: i32) -> (i32, i32) {
    %c0_i32 = arith.constant 0 : i32
    %c0_i32_0 = arith.constant 0 : i32
    return %arg0, %c0_i32 : i32, i32
  }
}

module attributes {stable_mosaic.version = 11 : i64} {
  func.func @_expand_fft2_dc_kernel(%arg0: i32, %arg1: memref<1xf32, #tpu.memory_space<smem>>, %arg2: memref<16x16xf32, #tpu.memory_space<vmem>>, %arg3: memref<16x16xf32, #tpu.memory_space<vmem>>, %arg4: memref<16x16xf32, #tpu.memory_space<vmem>>, %arg5: memref<16x16xf32, #tpu.memory_space<vmem>>, %arg6: memref<1x16xf32, #tpu.memory_space<vmem>>, %arg7: memref<1x16x16xf32, #tpu.memory_space<vmem>>, %arg8: memref<1x16x16xf32, #tpu.memory_space<vmem>>, %arg9: memref<1x64x16xf32, #tpu.memory_space<vmem>>, %arg10: memref<1x64x16xf32, #tpu.memory_space<vmem>>, %arg11: memref<1x64x16xf32, #tpu.memory_space<vmem>>, %arg12: memref<1x64x16xf32, #tpu.memory_space<vmem>>, %arg13: memref<1x64x16xf32, #tpu.memory_space<vmem>>, %arg14: memref<1x64x16xf32, #tpu.memory_space<vmem>>, %arg15: memref<1x64x16xf32, #tpu.memory_space<vmem>>, %arg16: memref<1x64x16xf32, #tpu.memory_space<vmem>>, %arg17: memref<64x16xf32, #tpu.memory_space<vmem>>, %arg18: memref<64x16xf32, #tpu.memory_space<vmem>>) attributes {dimension_semantics = [#tpu.dimension_semantics<parallel>], iteration_bounds = array<i64: 2>, scalar_prefetch = 0 : i64, scratch_operands = 2 : i64, tpu.core_type = #tpu.core_type<tc>, window_params = [{transform_indices = @transform_0, window_bounds = array<i64: 1>}, {pipeline_mode = #tpu.pipeline_mode<synchronous>, transform_indices = @transform_1, window_bounds = array<i64: 16, 16>}, {pipeline_mode = #tpu.pipeline_mode<synchronous>, transform_indices = @transform_2, window_bounds = array<i64: 16, 16>}, {pipeline_mode = #tpu.pipeline_mode<synchronous>, transform_indices = @transform_3, window_bounds = array<i64: 16, 16>}, {pipeline_mode = #tpu.pipeline_mode<synchronous>, transform_indices = @transform_4, window_bounds = array<i64: 16, 16>}, {pipeline_mode = #tpu.pipeline_mode<synchronous>, transform_indices = @transform_5, window_bounds = array<i64: 1, 16>}, {transform_indices = @transform_6, window_bounds = array<i64: 1, 16, 16>}, {transform_indices = @transform_7, window_bounds = array<i64: 1, 16, 16>}, {transform_indices = @transform_8, window_bounds = array<i64: 1, 64, 16>}, {transform_indices = @transform_9, window_bounds = array<i64: 1, 64, 16>}, {transform_indices = @transform_10, window_bounds = array<i64: 1, 64, 16>}, {transform_indices = @transform_11, window_bounds = array<i64: 1, 64, 16>}, {transform_indices = @transform_12, window_bounds = array<i64: 1, 64, 16>}, {transform_indices = @transform_13, window_bounds = array<i64: 1, 64, 16>}, {transform_indices = @transform_14, window_bounds = array<i64: 1, 64, 16>}, {transform_indices = @transform_15, window_bounds = array<i64: 1, 64, 16>}]} {
    %c0 = arith.constant 0 : index
    %c0_0 = arith.constant 0 : index
    %0 = vector.load %arg2[%c0, %c0_0] : memref<16x16xf32, #tpu.memory_space<vmem>>, vector<16x16xf32>
    %c0_1 = arith.constant 0 : index
    %c0_2 = arith.constant 0 : index
    %1 = vector.load %arg3[%c0_1, %c0_2] : memref<16x16xf32, #tpu.memory_space<vmem>>, vector<16x16xf32>
    %c0_3 = arith.constant 0 : index
    %c0_4 = arith.constant 0 : index
    %c0_5 = arith.constant 0 : index
    %2 = vector.load %arg7[%c0_3, %c0_4, %c0_5] : memref<1x16x16xf32, #tpu.memory_space<vmem>>, vector<1x16x16xf32>
    %3 = vector.shape_cast %2 : vector<1x16x16xf32> to vector<16x16xf32>
    %c0_6 = arith.constant 0 : index
    %c0_7 = arith.constant 0 : index
    %c0_8 = arith.constant 0 : index
    %4 = vector.load %arg8[%c0_6, %c0_7, %c0_8] : memref<1x16x16xf32, #tpu.memory_space<vmem>>, vector<1x16x16xf32>
    %5 = vector.shape_cast %4 : vector<1x16x16xf32> to vector<16x16xf32>
    %c0_9 = arith.constant 0 : index
    %c0_10 = arith.constant 0 : index
    %c0_11 = arith.constant 0 : index
    %6 = vector.load %arg9[%c0_9, %c0_10, %c0_11] : memref<1x64x16xf32, #tpu.memory_space<vmem>>, vector<1x64x16xf32>
    %7 = vector.shape_cast %6 : vector<1x64x16xf32> to vector<64x16xf32>
    %c0_12 = arith.constant 0 : index
    %c0_13 = arith.constant 0 : index
    %c0_14 = arith.constant 0 : index
    %8 = vector.load %arg10[%c0_12, %c0_13, %c0_14] : memref<1x64x16xf32, #tpu.memory_space<vmem>>, vector<1x64x16xf32>
    %9 = vector.shape_cast %8 : vector<1x64x16xf32> to vector<64x16xf32>
    %10 = vector.extract_strided_slice %7 {offsets = [0, 0], sizes = [16, 16], strides = [1, 1]} : vector<64x16xf32> to vector<16x16xf32>
    %11 = arith.mulf %3, %10 : vector<16x16xf32>
    %12 = vector.extract_strided_slice %9 {offsets = [0, 0], sizes = [16, 16], strides = [1, 1]} : vector<64x16xf32> to vector<16x16xf32>
    %13 = arith.mulf %5, %12 : vector<16x16xf32>
    %14 = arith.subf %11, %13 : vector<16x16xf32>
    %15 = vector.extract_strided_slice %9 {offsets = [0, 0], sizes = [16, 16], strides = [1, 1]} : vector<64x16xf32> to vector<16x16xf32>
    %16 = arith.mulf %3, %15 : vector<16x16xf32>
    %17 = vector.extract_strided_slice %7 {offsets = [0, 0], sizes = [16, 16], strides = [1, 1]} : vector<64x16xf32> to vector<16x16xf32>
    %18 = arith.mulf %5, %17 : vector<16x16xf32>
    %19 = arith.addf %16, %18 : vector<16x16xf32>
    %cst = arith.constant dense<0.000000e+00> : vector<16x16xf32>
    %20 = tpu.matmul %0, %14, %cst {dimension_numbers = #tpu.dot_dimension_numbers<[1], [0], [0], [1], [0, 0, 1, 1], [], []>} : vector<16x16xf32>, vector<16x16xf32>, vector<16x16xf32> -> vector<16x16xf32>
    %cst_15 = arith.constant dense<0.000000e+00> : vector<16x16xf32>
    %21 = tpu.matmul %1, %19, %cst_15 {dimension_numbers = #tpu.dot_dimension_numbers<[1], [0], [0], [1], [0, 0, 1, 1], [], []>} : vector<16x16xf32>, vector<16x16xf32>, vector<16x16xf32> -> vector<16x16xf32>
    %22 = arith.addf %0, %1 : vector<16x16xf32>
    %23 = arith.addf %14, %19 : vector<16x16xf32>
    %cst_16 = arith.constant dense<0.000000e+00> : vector<16x16xf32>
    %24 = tpu.matmul %22, %23, %cst_16 {dimension_numbers = #tpu.dot_dimension_numbers<[1], [0], [0], [1], [0, 0, 1, 1], [], []>} : vector<16x16xf32>, vector<16x16xf32>, vector<16x16xf32> -> vector<16x16xf32>
    %25 = arith.subf %20, %21 : vector<16x16xf32>
    %26 = arith.subf %24, %20 : vector<16x16xf32>
    %27 = arith.subf %26, %21 : vector<16x16xf32>
    %c0_17 = arith.constant 0 : index
    %c0_18 = arith.constant 0 : index
    %28 = vector.load %arg17[%c0_17, %c0_18] : memref<64x16xf32, #tpu.memory_space<vmem>>, vector<16x16xf32>
    tpu.vector_store %arg17[%c0_17, %c0_18], %25 {strides = array<i32>} : memref<64x16xf32, #tpu.memory_space<vmem>>, vector<16x16xf32>,
    %c0_19 = arith.constant 0 : index
    %c0_20 = arith.constant 0 : index
    %29 = vector.load %arg18[%c0_19, %c0_20] : memref<64x16xf32, #tpu.memory_space<vmem>>, vector<16x16xf32>
    tpu.vector_store %arg18[%c0_19, %c0_20], %27 {strides = array<i32>} : memref<64x16xf32, #tpu.memory_space<vmem>>, vector<16x16xf32>,
    %30 = vector.extract_strided_slice %7 {offsets = [16, 0], sizes = [16, 16], strides = [1, 1]} : vector<64x16xf32> to vector<16x16xf32>
    %31 = arith.mulf %3, %30 : vector<16x16xf32>
    %32 = vector.extract_strided_slice %9 {offsets = [16, 0], sizes = [16, 16], strides = [1, 1]} : vector<64x16xf32> to vector<16x16xf32>
    %33 = arith.mulf %5, %32 : vector<16x16xf32>
    %34 = arith.subf %31, %33 : vector<16x16xf32>
    %35 = vector.extract_strided_slice %9 {offsets = [16, 0], sizes = [16, 16], strides = [1, 1]} : vector<64x16xf32> to vector<16x16xf32>
    %36 = arith.mulf %3, %35 : vector<16x16xf32>
    %37 = vector.extract_strided_slice %7 {offsets = [16, 0], sizes = [16, 16], strides = [1, 1]} : vector<64x16xf32> to vector<16x16xf32>
    %38 = arith.mulf %5, %37 : vector<16x16xf32>
    %39 = arith.addf %36, %38 : vector<16x16xf32>
    %cst_21 = arith.constant dense<0.000000e+00> : vector<16x16xf32>
    %40 = tpu.matmul %0, %34, %cst_21 {dimension_numbers = #tpu.dot_dimension_numbers<[1], [0], [0], [1], [0, 0, 1, 1], [], []>} : vector<16x16xf32>, vector<16x16xf32>, vector<16x16xf32> -> vector<16x16xf32>
    %cst_22 = arith.constant dense<0.000000e+00> : vector<16x16xf32>
    %41 = tpu.matmul %1, %39, %cst_22 {dimension_numbers = #tpu.dot_dimension_numbers<[1], [0], [0], [1], [0, 0, 1, 1], [], []>} : vector<16x16xf32>, vector<16x16xf32>, vector<16x16xf32> -> vector<16x16xf32>
    %42 = arith.addf %0, %1 : vector<16x16xf32>
    %43 = arith.addf %34, %39 : vector<16x16xf32>
    %cst_23 = arith.constant dense<0.000000e+00> : vector<16x16xf32>
    %44 = tpu.matmul %42, %43, %cst_23 {dimension_numbers = #tpu.dot_dimension_numbers<[1], [0], [0], [1], [0, 0, 1, 1], [], []>} : vector<16x16xf32>, vector<16x16xf32>, vector<16x16xf32> -> vector<16x16xf32>
    %45 = arith.subf %40, %41 : vector<16x16xf32>
    %46 = arith.subf %44, %40 : vector<16x16xf32>
    %47 = arith.subf %46, %41 : vector<16x16xf32>
    %c16 = arith.constant 16 : index
    %c0_24 = arith.constant 0 : index
    %48 = vector.load %arg17[%c16, %c0_24] : memref<64x16xf32, #tpu.memory_space<vmem>>, vector<16x16xf32>
    tpu.vector_store %arg17[%c16, %c0_24], %45 {strides = array<i32>} : memref<64x16xf32, #tpu.memory_space<vmem>>, vector<16x16xf32>,
    %c16_25 = arith.constant 16 : index
    %c0_26 = arith.constant 0 : index
    %49 = vector.load %arg18[%c16_25, %c0_26] : memref<64x16xf32, #tpu.memory_space<vmem>>, vector<16x16xf32>
    tpu.vector_store %arg18[%c16_25, %c0_26], %47 {strides = array<i32>} : memref<64x16xf32, #tpu.memory_space<vmem>>, vector<16x16xf32>,
    %50 = vector.extract_strided_slice %7 {offsets = [32, 0], sizes = [16, 16], strides = [1, 1]} : vector<64x16xf32> to vector<16x16xf32>
    %51 = arith.mulf %3, %50 : vector<16x16xf32>
    %52 = vector.extract_strided_slice %9 {offsets = [32, 0], sizes = [16, 16], strides = [1, 1]} : vector<64x16xf32> to vector<16x16xf32>
    %53 = arith.mulf %5, %52 : vector<16x16xf32>
    %54 = arith.subf %51, %53 : vector<16x16xf32>
    %55 = vector.extract_strided_slice %9 {offsets = [32, 0], sizes = [16, 16], strides = [1, 1]} : vector<64x16xf32> to vector<16x16xf32>
    %56 = arith.mulf %3, %55 : vector<16x16xf32>
    %57 = vector.extract_strided_slice %7 {offsets = [32, 0], sizes = [16, 16], strides = [1, 1]} : vector<64x16xf32> to vector<16x16xf32>
    %58 = arith.mulf %5, %57 : vector<16x16xf32>
    %59 = arith.addf %56, %58 : vector<16x16xf32>
    %cst_27 = arith.constant dense<0.000000e+00> : vector<16x16xf32>
    %60 = tpu.matmul %0, %54, %cst_27 {dimension_numbers = #tpu.dot_dimension_numbers<[1], [0], [0], [1], [0, 0, 1, 1], [], []>} : vector<16x16xf32>, vector<16x16xf32>, vector<16x16xf32> -> vector<16x16xf32>
    %cst_28 = arith.constant dense<0.000000e+00> : vector<16x16xf32>
    %61 = tpu.matmul %1, %59, %cst_28 {dimension_numbers = #tpu.dot_dimension_numbers<[1], [0], [0], [1], [0, 0, 1, 1], [], []>} : vector<16x16xf32>, vector<16x16xf32>, vector<16x16xf32> -> vector<16x16xf32>
    %62 = arith.addf %0, %1 : vector<16x16xf32>
    %63 = arith.addf %54, %59 : vector<16x16xf32>
    %cst_29 = arith.constant dense<0.000000e+00> : vector<16x16xf32>
    %64 = tpu.matmul %62, %63, %cst_29 {dimension_numbers = #tpu.dot_dimension_numbers<[1], [0], [0], [1], [0, 0, 1, 1], [], []>} : vector<16x16xf32>, vector<16x16xf32>, vector<16x16xf32> -> vector<16x16xf32>
    %65 = arith.subf %60, %61 : vector<16x16xf32>
    %66 = arith.subf %64, %60 : vector<16x16xf32>
    %67 = arith.subf %66, %61 : vector<16x16xf32>
    %c32 = arith.constant 32 : index
    %c0_30 = arith.constant 0 : index
    %68 = vector.load %arg17[%c32, %c0_30] : memref<64x16xf32, #tpu.memory_space<vmem>>, vector<16x16xf32>
    tpu.vector_store %arg17[%c32, %c0_30], %65 {strides = array<i32>} : memref<64x16xf32, #tpu.memory_space<vmem>>, vector<16x16xf32>,
    %c32_31 = arith.constant 32 : index
    %c0_32 = arith.constant 0 : index
    %69 = vector.load %arg18[%c32_31, %c0_32] : memref<64x16xf32, #tpu.memory_space<vmem>>, vector<16x16xf32>
    tpu.vector_store %arg18[%c32_31, %c0_32], %67 {strides = array<i32>} : memref<64x16xf32, #tpu.memory_space<vmem>>, vector<16x16xf32>,
    %70 = vector.extract_strided_slice %7 {offsets = [48, 0], sizes = [16, 16], strides = [1, 1]} : vector<64x16xf32> to vector<16x16xf32>
    %71 = arith.mulf %3, %70 : vector<16x16xf32>
    %72 = vector.extract_strided_slice %9 {offsets = [48, 0], sizes = [16, 16], strides = [1, 1]} : vector<64x16xf32> to vector<16x16xf32>
    %73 = arith.mulf %5, %72 : vector<16x16xf32>
    %74 = arith.subf %71, %73 : vector<16x16xf32>
    %75 = vector.extract_strided_slice %9 {offsets = [48, 0], sizes = [16, 16], strides = [1, 1]} : vector<64x16xf32> to vector<16x16xf32>
    %76 = arith.mulf %3, %75 : vector<16x16xf32>
    %77 = vector.extract_strided_slice %7 {offsets = [48, 0], sizes = [16, 16], strides = [1, 1]} : vector<64x16xf32> to vector<16x16xf32>
    %78 = arith.mulf %5, %77 : vector<16x16xf32>
    %79 = arith.addf %76, %78 : vector<16x16xf32>
    %cst_33 = arith.constant dense<0.000000e+00> : vector<16x16xf32>
    %80 = tpu.matmul %0, %74, %cst_33 {dimension_numbers = #tpu.dot_dimension_numbers<[1], [0], [0], [1], [0, 0, 1, 1], [], []>} : vector<16x16xf32>, vector<16x16xf32>, vector<16x16xf32> -> vector<16x16xf32>
    %cst_34 = arith.constant dense<0.000000e+00> : vector<16x16xf32>
    %81 = tpu.matmul %1, %79, %cst_34 {dimension_numbers = #tpu.dot_dimension_numbers<[1], [0], [0], [1], [0, 0, 1, 1], [], []>} : vector<16x16xf32>, vector<16x16xf32>, vector<16x16xf32> -> vector<16x16xf32>
    %82 = arith.addf %0, %1 : vector<16x16xf32>
    %83 = arith.addf %74, %79 : vector<16x16xf32>
    %cst_35 = arith.constant dense<0.000000e+00> : vector<16x16xf32>
    %84 = tpu.matmul %82, %83, %cst_35 {dimension_numbers = #tpu.dot_dimension_numbers<[1], [0], [0], [1], [0, 0, 1, 1], [], []>} : vector<16x16xf32>, vector<16x16xf32>, vector<16x16xf32> -> vector<16x16xf32>
    %85 = arith.subf %80, %81 : vector<16x16xf32>
    %86 = arith.subf %84, %80 : vector<16x16xf32>
    %87 = arith.subf %86, %81 : vector<16x16xf32>
    %c48 = arith.constant 48 : index
    %c0_36 = arith.constant 0 : index
    %88 = vector.load %arg17[%c48, %c0_36] : memref<64x16xf32, #tpu.memory_space<vmem>>, vector<16x16xf32>
    tpu.vector_store %arg17[%c48, %c0_36], %85 {strides = array<i32>} : memref<64x16xf32, #tpu.memory_space<vmem>>, vector<16x16xf32>,
    %c48_37 = arith.constant 48 : index
    %c0_38 = arith.constant 0 : index
    %89 = vector.load %arg18[%c48_37, %c0_38] : memref<64x16xf32, #tpu.memory_space<vmem>>, vector<16x16xf32>
    tpu.vector_store %arg18[%c48_37, %c0_38], %87 {strides = array<i32>} : memref<64x16xf32, #tpu.memory_space<vmem>>, vector<16x16xf32>,
    %c0_39 = arith.constant 0 : index
    %c0_40 = arith.constant 0 : index
    %90 = vector.load %arg17[%c0_39, %c0_40] : memref<64x16xf32, #tpu.memory_space<vmem>>, vector<64x16xf32>
    %c0_41 = arith.constant 0 : index
    %c0_42 = arith.constant 0 : index
    %91 = vector.load %arg18[%c0_41, %c0_42] : memref<64x16xf32, #tpu.memory_space<vmem>>, vector<64x16xf32>
    %c0_43 = arith.constant 0 : index
    %c0_44 = arith.constant 0 : index
    %92 = vector.load %arg4[%c0_43, %c0_44] : memref<16x16xf32, #tpu.memory_space<vmem>>, vector<16x16xf32>
    %c0_45 = arith.constant 0 : index
    %c0_46 = arith.constant 0 : index
    %93 = vector.load %arg5[%c0_45, %c0_46] : memref<16x16xf32, #tpu.memory_space<vmem>>, vector<16x16xf32>
    %cst_47 = arith.constant dense<0.000000e+00> : vector<64x16xf32>
    %94 = tpu.matmul %90, %92, %cst_47 {dimension_numbers = #tpu.dot_dimension_numbers<[1], [0], [0], [1], [0, 0, 1, 1], [], []>} : vector<64x16xf32>, vector<16x16xf32>, vector<64x16xf32> -> vector<64x16xf32>
    %cst_48 = arith.constant dense<0.000000e+00> : vector<64x16xf32>
    %95 = tpu.matmul %91, %93, %cst_48 {dimension_numbers = #tpu.dot_dimension_numbers<[1], [0], [0], [1], [0, 0, 1, 1], [], []>} : vector<64x16xf32>, vector<16x16xf32>, vector<64x16xf32> -> vector<64x16xf32>
    %96 = arith.addf %90, %91 : vector<64x16xf32>
    %97 = arith.addf %92, %93 : vector<16x16xf32>
    %cst_49 = arith.constant dense<0.000000e+00> : vector<64x16xf32>
    %98 = tpu.matmul %96, %97, %cst_49 {dimension_numbers = #tpu.dot_dimension_numbers<[1], [0], [0], [1], [0, 0, 1, 1], [], []>} : vector<64x16xf32>, vector<16x16xf32>, vector<64x16xf32> -> vector<64x16xf32>
    %99 = arith.subf %94, %95 : vector<64x16xf32>
    %100 = arith.subf %98, %94 : vector<64x16xf32>
    %101 = arith.subf %100, %95 : vector<64x16xf32>
    %c0_50 = arith.constant 0 : index
    %102 = memref.load %arg1[%c0_50] : memref<1xf32, #tpu.memory_space<smem>>
    %c0_51 = arith.constant 0 : index
    %c0_52 = arith.constant 0 : index
    %103 = vector.load %arg6[%c0_51, %c0_52] : memref<1x16xf32, #tpu.memory_space<vmem>>, vector<1x16xf32>
    %cst_53 = arith.constant 0.000000e+00 : f32
    %104 = vector.broadcast %cst_53 : f32 to vector<1x16xf32>
    %105 = arith.cmpf ogt, %103, %104 : vector<1x16xf32>
    %c0_54 = arith.constant 0 : index
    %c0_55 = arith.constant 0 : index
    %c0_56 = arith.constant 0 : index
    %106 = vector.load %arg11[%c0_54, %c0_55, %c0_56] : memref<1x64x16xf32, #tpu.memory_space<vmem>>, vector<1x64x16xf32>
    %107 = vector.shape_cast %106 : vector<1x64x16xf32> to vector<64x16xf32>
    %c0_57 = arith.constant 0 : index
    %c0_58 = arith.constant 0 : index
    %c0_59 = arith.constant 0 : index
    %108 = vector.load %arg12[%c0_57, %c0_58, %c0_59] : memref<1x64x16xf32, #tpu.memory_space<vmem>>, vector<1x64x16xf32>
    %109 = vector.shape_cast %108 : vector<1x64x16xf32> to vector<64x16xf32>
    %c0_60 = arith.constant 0 : index
    %c0_61 = arith.constant 0 : index
    %c0_62 = arith.constant 0 : index
    %110 = vector.load %arg13[%c0_60, %c0_61, %c0_62] : memref<1x64x16xf32, #tpu.memory_space<vmem>>, vector<1x64x16xf32>
    %111 = vector.shape_cast %110 : vector<1x64x16xf32> to vector<64x16xf32>
    %c0_63 = arith.constant 0 : index
    %c0_64 = arith.constant 0 : index
    %c0_65 = arith.constant 0 : index
    %112 = vector.load %arg14[%c0_63, %c0_64, %c0_65] : memref<1x64x16xf32, #tpu.memory_space<vmem>>, vector<1x64x16xf32>
    %113 = vector.shape_cast %112 : vector<1x64x16xf32> to vector<64x16xf32>
    %cst_66 = arith.constant 0.000000e+00 : f32
    %114 = vector.broadcast %cst_66 : f32 to vector<64x16xf32>
    %115 = arith.subf %107, %111 : vector<64x16xf32>
    %116 = vector.shape_cast %105 : vector<1x16xi1> to vector<1x16xi1>
    %117 = vector.broadcast %116 : vector<1x16xi1> to vector<64x16xi1>
    %118 = arith.select %117, %115, %114 : vector<64x16xi1>, vector<64x16xf32>
    %119 = vector.broadcast %102 : f32 to vector<64x16xf32>
    %120 = arith.mulf %118, %119 : vector<64x16xf32>
    %121 = arith.subf %107, %120 : vector<64x16xf32>
    %122 = arith.subf %121, %99 : vector<64x16xf32>
    %c0_67 = arith.constant 0 : index
    %c0_68 = arith.constant 0 : index
    %c0_69 = arith.constant 0 : index
    %123 = vector.load %arg15[%c0_67, %c0_68, %c0_69] : memref<1x64x16xf32, #tpu.memory_space<vmem>>, vector<1x64x16xf32>
    %124 = vector.shape_cast %123 : vector<1x64x16xf32> to vector<64x16xf32>
    %125 = vector.shape_cast %122 : vector<64x16xf32> to vector<1x64x16xf32>
    tpu.vector_store %arg15[%c0_67, %c0_68, %c0_69], %125 {strides = array<i32>} : memref<1x64x16xf32, #tpu.memory_space<vmem>>, vector<1x64x16xf32>,
    %126 = arith.subf %109, %113 : vector<64x16xf32>
    %127 = vector.shape_cast %105 : vector<1x16xi1> to vector<1x16xi1>
    %128 = vector.broadcast %127 : vector<1x16xi1> to vector<64x16xi1>
    %129 = arith.select %128, %126, %114 : vector<64x16xi1>, vector<64x16xf32>
    %130 = vector.broadcast %102 : f32 to vector<64x16xf32>
    %131 = arith.mulf %129, %130 : vector<64x16xf32>
    %132 = arith.subf %109, %131 : vector<64x16xf32>
    %133 = arith.subf %132, %101 : vector<64x16xf32>
    %c0_70 = arith.constant 0 : index
    %c0_71 = arith.constant 0 : index
    %c0_72 = arith.constant 0 : index
    %134 = vector.load %arg16[%c0_70, %c0_71, %c0_72] : memref<1x64x16xf32, #tpu.memory_space<vmem>>, vector<1x64x16xf32>
    %135 = vector.shape_cast %134 : vector<1x64x16xf32> to vector<64x16xf32>
    %136 = vector.shape_cast %133 : vector<64x16xf32> to vector<1x64x16xf32>
    tpu.vector_store %arg16[%c0_70, %c0_71, %c0_72], %136 {strides = array<i32>} : memref<1x64x16xf32, #tpu.memory_space<vmem>>, vector<1x64x16xf32>,
    return
  }
  func.func @transform_0(%arg0: i32) -> i32 {
    %c0_i32 = arith.constant 0 : i32
    %c0_i32_0 = arith.constant 0 : i32
    return %c0_i32 : i32
  }
  func.func @transform_1(%arg0: i32) -> (i32, i32) {
    %c0_i32 = arith.constant 0 : i32
    %c0_i32_0 = arith.constant 0 : i32
    %c0_i32_1 = arith.constant 0 : i32
    return %c0_i32, %c0_i32_0 : i32, i32
  }
  func.func @transform_2(%arg0: i32) -> (i32, i32) {
    %c0_i32 = arith.constant 0 : i32
    %c0_i32_0 = arith.constant 0 : i32
    %c0_i32_1 = arith.constant 0 : i32
    return %c0_i32, %c0_i32_0 : i32, i32
  }
  func.func @transform_3(%arg0: i32) -> (i32, i32) {
    %c0_i32 = arith.constant 0 : i32
    %c0_i32_0 = arith.constant 0 : i32
    %c0_i32_1 = arith.constant 0 : i32
    return %c0_i32, %c0_i32_0 : i32, i32
  }
  func.func @transform_4(%arg0: i32) -> (i32, i32) {
    %c0_i32 = arith.constant 0 : i32
    %c0_i32_0 = arith.constant 0 : i32
    %c0_i32_1 = arith.constant 0 : i32
    return %c0_i32, %c0_i32_0 : i32, i32
  }
  func.func @transform_5(%arg0: i32) -> (i32, i32) {
    %c0_i32 = arith.constant 0 : i32
    %c0_i32_0 = arith.constant 0 : i32
    %c0_i32_1 = arith.constant 0 : i32
    return %c0_i32, %c0_i32_0 : i32, i32
  }
  func.func @transform_6(%arg0: i32) -> (i32, i32, i32) {
    %c0_i32 = arith.constant 0 : i32
    %c0_i32_0 = arith.constant 0 : i32
    %c0_i32_1 = arith.constant 0 : i32
    return %arg0, %c0_i32, %c0_i32_0 : i32, i32, i32
  }
  func.func @transform_7(%arg0: i32) -> (i32, i32, i32) {
    %c0_i32 = arith.constant 0 : i32
    %c0_i32_0 = arith.constant 0 : i32
    %c0_i32_1 = arith.constant 0 : i32
    return %arg0, %c0_i32, %c0_i32_0 : i32, i32, i32
  }
  func.func @transform_8(%arg0: i32) -> (i32, i32, i32) {
    %c0_i32 = arith.constant 0 : i32
    %c0_i32_0 = arith.constant 0 : i32
    %c0_i32_1 = arith.constant 0 : i32
    return %arg0, %c0_i32, %c0_i32_0 : i32, i32, i32
  }
  func.func @transform_9(%arg0: i32) -> (i32, i32, i32) {
    %c0_i32 = arith.constant 0 : i32
    %c0_i32_0 = arith.constant 0 : i32
    %c0_i32_1 = arith.constant 0 : i32
    return %arg0, %c0_i32, %c0_i32_0 : i32, i32, i32
  }
  func.func @transform_10(%arg0: i32) -> (i32, i32, i32) {
    %c0_i32 = arith.constant 0 : i32
    %c0_i32_0 = arith.constant 0 : i32
    %c0_i32_1 = arith.constant 0 : i32
    return %arg0, %c0_i32, %c0_i32_0 : i32, i32, i32
  }
  func.func @transform_11(%arg0: i32) -> (i32, i32, i32) {
    %c0_i32 = arith.constant 0 : i32
    %c0_i32_0 = arith.constant 0 : i32
    %c0_i32_1 = arith.constant 0 : i32
    return %arg0, %c0_i32, %c0_i32_0 : i32, i32, i32
  }
  func.func @transform_12(%arg0: i32) -> (i32, i32, i32) {
    %c0_i32 = arith.constant 0 : i32
    %c0_i32_0 = arith.constant 0 : i32
    %c0_i32_1 = arith.constant 0 : i32
    return %arg0, %c0_i32, %c0_i32_0 : i32, i32, i32
  }
  func.func @transform_13(%arg0: i32) -> (i32, i32, i32) {
    %c0_i32 = arith.constant 0 : i32
    %c0_i32_0 = arith.constant 0 : i32
    %c0_i32_1 = arith.constant 0 : i32
    return %arg0, %c0_i32, %c0_i32_0 : i32, i32, i32
  }
  func.func @transform_14(%arg0: i32) -> (i32, i32, i32) {
    %c0_i32 = arith.constant 0 : i32
    %c0_i32_0 = arith.constant 0 : i32
    %c0_i32_1 = arith.constant 0 : i32
    return %arg0, %c0_i32, %c0_i32_0 : i32, i32, i32
  }
  func.func @transform_15(%arg0: i32) -> (i32, i32, i32) {
    %c0_i32 = arith.constant 0 : i32
    %c0_i32_0 = arith.constant 0 : i32
    %c0_i32_1 = arith.constant 0 : i32
    return %arg0, %c0_i32, %c0_i32_0 : i32, i32, i32
  }
}

module attributes {stable_mosaic.version = 11 : i64} {
  func.func @_ifft2_rss_kernel(%arg0: i32, %arg1: memref<16x16xf32, #tpu.memory_space<vmem>>, %arg2: memref<16x16xf32, #tpu.memory_space<vmem>>, %arg3: memref<16x16xf32, #tpu.memory_space<vmem>>, %arg4: memref<16x16xf32, #tpu.memory_space<vmem>>, %arg5: memref<1x64x16xf32, #tpu.memory_space<vmem>>, %arg6: memref<1x64x16xf32, #tpu.memory_space<vmem>>, %arg7: memref<1x16x16xf32, #tpu.memory_space<vmem>>) attributes {dimension_semantics = [#tpu.dimension_semantics<parallel>], iteration_bounds = array<i64: 2>, scalar_prefetch = 0 : i64, scratch_operands = 0 : i64, tpu.core_type = #tpu.core_type<tc>, window_params = [{pipeline_mode = #tpu.pipeline_mode<synchronous>, transform_indices = @transform_0, window_bounds = array<i64: 16, 16>}, {pipeline_mode = #tpu.pipeline_mode<synchronous>, transform_indices = @transform_1, window_bounds = array<i64: 16, 16>}, {pipeline_mode = #tpu.pipeline_mode<synchronous>, transform_indices = @transform_2, window_bounds = array<i64: 16, 16>}, {pipeline_mode = #tpu.pipeline_mode<synchronous>, transform_indices = @transform_3, window_bounds = array<i64: 16, 16>}, {transform_indices = @transform_4, window_bounds = array<i64: 1, 64, 16>}, {transform_indices = @transform_5, window_bounds = array<i64: 1, 64, 16>}, {transform_indices = @transform_6, window_bounds = array<i64: 1, 16, 16>}]} {
    %c0 = arith.constant 0 : index
    %c0_0 = arith.constant 0 : index
    %c0_1 = arith.constant 0 : index
    %0 = vector.load %arg5[%c0, %c0_0, %c0_1] : memref<1x64x16xf32, #tpu.memory_space<vmem>>, vector<1x64x16xf32>
    %1 = vector.shape_cast %0 : vector<1x64x16xf32> to vector<64x16xf32>
    %c0_2 = arith.constant 0 : index
    %c0_3 = arith.constant 0 : index
    %c0_4 = arith.constant 0 : index
    %2 = vector.load %arg6[%c0_2, %c0_3, %c0_4] : memref<1x64x16xf32, #tpu.memory_space<vmem>>, vector<1x64x16xf32>
    %3 = vector.shape_cast %2 : vector<1x64x16xf32> to vector<64x16xf32>
    %c0_5 = arith.constant 0 : index
    %c0_6 = arith.constant 0 : index
    %4 = vector.load %arg3[%c0_5, %c0_6] : memref<16x16xf32, #tpu.memory_space<vmem>>, vector<16x16xf32>
    %c0_7 = arith.constant 0 : index
    %c0_8 = arith.constant 0 : index
    %5 = vector.load %arg4[%c0_7, %c0_8] : memref<16x16xf32, #tpu.memory_space<vmem>>, vector<16x16xf32>
    %cst = arith.constant dense<0.000000e+00> : vector<64x16xf32>
    %6 = tpu.matmul %1, %4, %cst {dimension_numbers = #tpu.dot_dimension_numbers<[1], [0], [0], [1], [0, 0, 1, 1], [], []>} : vector<64x16xf32>, vector<16x16xf32>, vector<64x16xf32> -> vector<64x16xf32>
    %cst_9 = arith.constant dense<0.000000e+00> : vector<64x16xf32>
    %7 = tpu.matmul %3, %5, %cst_9 {dimension_numbers = #tpu.dot_dimension_numbers<[1], [0], [0], [1], [0, 0, 1, 1], [], []>} : vector<64x16xf32>, vector<16x16xf32>, vector<64x16xf32> -> vector<64x16xf32>
    %8 = arith.addf %1, %3 : vector<64x16xf32>
    %9 = arith.addf %4, %5 : vector<16x16xf32>
    %cst_10 = arith.constant dense<0.000000e+00> : vector<64x16xf32>
    %10 = tpu.matmul %8, %9, %cst_10 {dimension_numbers = #tpu.dot_dimension_numbers<[1], [0], [0], [1], [0, 0, 1, 1], [], []>} : vector<64x16xf32>, vector<16x16xf32>, vector<64x16xf32> -> vector<64x16xf32>
    %11 = arith.subf %6, %7 : vector<64x16xf32>
    %12 = arith.subf %10, %6 : vector<64x16xf32>
    %13 = arith.subf %12, %7 : vector<64x16xf32>
    %c0_11 = arith.constant 0 : index
    %c0_12 = arith.constant 0 : index
    %14 = vector.load %arg1[%c0_11, %c0_12] : memref<16x16xf32, #tpu.memory_space<vmem>>, vector<16x16xf32>
    %c0_13 = arith.constant 0 : index
    %c0_14 = arith.constant 0 : index
    %15 = vector.load %arg2[%c0_13, %c0_14] : memref<16x16xf32, #tpu.memory_space<vmem>>, vector<16x16xf32>
    %cst_15 = arith.constant 0.000000e+00 : f32
    %16 = vector.broadcast %cst_15 : f32 to vector<16x16xf32>
    %17 = vector.extract_strided_slice %11 {offsets = [0, 0], sizes = [16, 16], strides = [1, 1]} : vector<64x16xf32> to vector<16x16xf32>
    %18 = vector.extract_strided_slice %13 {offsets = [0, 0], sizes = [16, 16], strides = [1, 1]} : vector<64x16xf32> to vector<16x16xf32>
    %cst_16 = arith.constant dense<0.000000e+00> : vector<16x16xf32>
    %19 = tpu.matmul %14, %17, %cst_16 {dimension_numbers = #tpu.dot_dimension_numbers<[1], [0], [0], [1], [0, 0, 1, 1], [], []>} : vector<16x16xf32>, vector<16x16xf32>, vector<16x16xf32> -> vector<16x16xf32>
    %cst_17 = arith.constant dense<0.000000e+00> : vector<16x16xf32>
    %20 = tpu.matmul %15, %18, %cst_17 {dimension_numbers = #tpu.dot_dimension_numbers<[1], [0], [0], [1], [0, 0, 1, 1], [], []>} : vector<16x16xf32>, vector<16x16xf32>, vector<16x16xf32> -> vector<16x16xf32>
    %21 = arith.addf %14, %15 : vector<16x16xf32>
    %22 = arith.addf %17, %18 : vector<16x16xf32>
    %cst_18 = arith.constant dense<0.000000e+00> : vector<16x16xf32>
    %23 = tpu.matmul %21, %22, %cst_18 {dimension_numbers = #tpu.dot_dimension_numbers<[1], [0], [0], [1], [0, 0, 1, 1], [], []>} : vector<16x16xf32>, vector<16x16xf32>, vector<16x16xf32> -> vector<16x16xf32>
    %24 = arith.subf %19, %20 : vector<16x16xf32>
    %25 = arith.subf %23, %19 : vector<16x16xf32>
    %26 = arith.subf %25, %20 : vector<16x16xf32>
    %27 = arith.mulf %24, %24 : vector<16x16xf32>
    %28 = arith.addf %16, %27 : vector<16x16xf32>
    %29 = arith.mulf %26, %26 : vector<16x16xf32>
    %30 = arith.addf %28, %29 : vector<16x16xf32>
    %31 = vector.extract_strided_slice %11 {offsets = [16, 0], sizes = [16, 16], strides = [1, 1]} : vector<64x16xf32> to vector<16x16xf32>
    %32 = vector.extract_strided_slice %13 {offsets = [16, 0], sizes = [16, 16], strides = [1, 1]} : vector<64x16xf32> to vector<16x16xf32>
    %cst_19 = arith.constant dense<0.000000e+00> : vector<16x16xf32>
    %33 = tpu.matmul %14, %31, %cst_19 {dimension_numbers = #tpu.dot_dimension_numbers<[1], [0], [0], [1], [0, 0, 1, 1], [], []>} : vector<16x16xf32>, vector<16x16xf32>, vector<16x16xf32> -> vector<16x16xf32>
    %cst_20 = arith.constant dense<0.000000e+00> : vector<16x16xf32>
    %34 = tpu.matmul %15, %32, %cst_20 {dimension_numbers = #tpu.dot_dimension_numbers<[1], [0], [0], [1], [0, 0, 1, 1], [], []>} : vector<16x16xf32>, vector<16x16xf32>, vector<16x16xf32> -> vector<16x16xf32>
    %35 = arith.addf %14, %15 : vector<16x16xf32>
    %36 = arith.addf %31, %32 : vector<16x16xf32>
    %cst_21 = arith.constant dense<0.000000e+00> : vector<16x16xf32>
    %37 = tpu.matmul %35, %36, %cst_21 {dimension_numbers = #tpu.dot_dimension_numbers<[1], [0], [0], [1], [0, 0, 1, 1], [], []>} : vector<16x16xf32>, vector<16x16xf32>, vector<16x16xf32> -> vector<16x16xf32>
    %38 = arith.subf %33, %34 : vector<16x16xf32>
    %39 = arith.subf %37, %33 : vector<16x16xf32>
    %40 = arith.subf %39, %34 : vector<16x16xf32>
    %41 = arith.mulf %38, %38 : vector<16x16xf32>
    %42 = arith.addf %30, %41 : vector<16x16xf32>
    %43 = arith.mulf %40, %40 : vector<16x16xf32>
    %44 = arith.addf %42, %43 : vector<16x16xf32>
    %45 = vector.extract_strided_slice %11 {offsets = [32, 0], sizes = [16, 16], strides = [1, 1]} : vector<64x16xf32> to vector<16x16xf32>
    %46 = vector.extract_strided_slice %13 {offsets = [32, 0], sizes = [16, 16], strides = [1, 1]} : vector<64x16xf32> to vector<16x16xf32>
    %cst_22 = arith.constant dense<0.000000e+00> : vector<16x16xf32>
    %47 = tpu.matmul %14, %45, %cst_22 {dimension_numbers = #tpu.dot_dimension_numbers<[1], [0], [0], [1], [0, 0, 1, 1], [], []>} : vector<16x16xf32>, vector<16x16xf32>, vector<16x16xf32> -> vector<16x16xf32>
    %cst_23 = arith.constant dense<0.000000e+00> : vector<16x16xf32>
    %48 = tpu.matmul %15, %46, %cst_23 {dimension_numbers = #tpu.dot_dimension_numbers<[1], [0], [0], [1], [0, 0, 1, 1], [], []>} : vector<16x16xf32>, vector<16x16xf32>, vector<16x16xf32> -> vector<16x16xf32>
    %49 = arith.addf %14, %15 : vector<16x16xf32>
    %50 = arith.addf %45, %46 : vector<16x16xf32>
    %cst_24 = arith.constant dense<0.000000e+00> : vector<16x16xf32>
    %51 = tpu.matmul %49, %50, %cst_24 {dimension_numbers = #tpu.dot_dimension_numbers<[1], [0], [0], [1], [0, 0, 1, 1], [], []>} : vector<16x16xf32>, vector<16x16xf32>, vector<16x16xf32> -> vector<16x16xf32>
    %52 = arith.subf %47, %48 : vector<16x16xf32>
    %53 = arith.subf %51, %47 : vector<16x16xf32>
    %54 = arith.subf %53, %48 : vector<16x16xf32>
    %55 = arith.mulf %52, %52 : vector<16x16xf32>
    %56 = arith.addf %44, %55 : vector<16x16xf32>
    %57 = arith.mulf %54, %54 : vector<16x16xf32>
    %58 = arith.addf %56, %57 : vector<16x16xf32>
    %59 = vector.extract_strided_slice %11 {offsets = [48, 0], sizes = [16, 16], strides = [1, 1]} : vector<64x16xf32> to vector<16x16xf32>
    %60 = vector.extract_strided_slice %13 {offsets = [48, 0], sizes = [16, 16], strides = [1, 1]} : vector<64x16xf32> to vector<16x16xf32>
    %cst_25 = arith.constant dense<0.000000e+00> : vector<16x16xf32>
    %61 = tpu.matmul %14, %59, %cst_25 {dimension_numbers = #tpu.dot_dimension_numbers<[1], [0], [0], [1], [0, 0, 1, 1], [], []>} : vector<16x16xf32>, vector<16x16xf32>, vector<16x16xf32> -> vector<16x16xf32>
    %cst_26 = arith.constant dense<0.000000e+00> : vector<16x16xf32>
    %62 = tpu.matmul %15, %60, %cst_26 {dimension_numbers = #tpu.dot_dimension_numbers<[1], [0], [0], [1], [0, 0, 1, 1], [], []>} : vector<16x16xf32>, vector<16x16xf32>, vector<16x16xf32> -> vector<16x16xf32>
    %63 = arith.addf %14, %15 : vector<16x16xf32>
    %64 = arith.addf %59, %60 : vector<16x16xf32>
    %cst_27 = arith.constant dense<0.000000e+00> : vector<16x16xf32>
    %65 = tpu.matmul %63, %64, %cst_27 {dimension_numbers = #tpu.dot_dimension_numbers<[1], [0], [0], [1], [0, 0, 1, 1], [], []>} : vector<16x16xf32>, vector<16x16xf32>, vector<16x16xf32> -> vector<16x16xf32>
    %66 = arith.subf %61, %62 : vector<16x16xf32>
    %67 = arith.subf %65, %61 : vector<16x16xf32>
    %68 = arith.subf %67, %62 : vector<16x16xf32>
    %69 = arith.mulf %66, %66 : vector<16x16xf32>
    %70 = arith.addf %58, %69 : vector<16x16xf32>
    %71 = arith.mulf %68, %68 : vector<16x16xf32>
    %72 = arith.addf %70, %71 : vector<16x16xf32>
    %73 = math.sqrt %72 : vector<16x16xf32>
    %c0_28 = arith.constant 0 : index
    %c0_29 = arith.constant 0 : index
    %c0_30 = arith.constant 0 : index
    %74 = vector.load %arg7[%c0_28, %c0_29, %c0_30] : memref<1x16x16xf32, #tpu.memory_space<vmem>>, vector<1x16x16xf32>
    %75 = vector.shape_cast %74 : vector<1x16x16xf32> to vector<16x16xf32>
    %76 = vector.shape_cast %73 : vector<16x16xf32> to vector<1x16x16xf32>
    tpu.vector_store %arg7[%c0_28, %c0_29, %c0_30], %76 {strides = array<i32>} : memref<1x16x16xf32, #tpu.memory_space<vmem>>, vector<1x16x16xf32>,
    return
  }
  func.func @transform_0(%arg0: i32) -> (i32, i32) {
    %c0_i32 = arith.constant 0 : i32
    %c0_i32_0 = arith.constant 0 : i32
    %c0_i32_1 = arith.constant 0 : i32
    return %c0_i32, %c0_i32_0 : i32, i32
  }
  func.func @transform_1(%arg0: i32) -> (i32, i32) {
    %c0_i32 = arith.constant 0 : i32
    %c0_i32_0 = arith.constant 0 : i32
    %c0_i32_1 = arith.constant 0 : i32
    return %c0_i32, %c0_i32_0 : i32, i32
  }
  func.func @transform_2(%arg0: i32) -> (i32, i32) {
    %c0_i32 = arith.constant 0 : i32
    %c0_i32_0 = arith.constant 0 : i32
    %c0_i32_1 = arith.constant 0 : i32
    return %c0_i32, %c0_i32_0 : i32, i32
  }
  func.func @transform_3(%arg0: i32) -> (i32, i32) {
    %c0_i32 = arith.constant 0 : i32
    %c0_i32_0 = arith.constant 0 : i32
    %c0_i32_1 = arith.constant 0 : i32
    return %c0_i32, %c0_i32_0 : i32, i32
  }
  func.func @transform_4(%arg0: i32) -> (i32, i32, i32) {
    %c0_i32 = arith.constant 0 : i32
    %c0_i32_0 = arith.constant 0 : i32
    %c0_i32_1 = arith.constant 0 : i32
    return %arg0, %c0_i32, %c0_i32_0 : i32, i32, i32
  }
  func.func @transform_5(%arg0: i32) -> (i32, i32, i32) {
    %c0_i32 = arith.constant 0 : i32
    %c0_i32_0 = arith.constant 0 : i32
    %c0_i32_1 = arith.constant 0 : i32
    return %arg0, %c0_i32, %c0_i32_0 : i32, i32, i32
  }
  func.func @transform_6(%arg0: i32) -> (i32, i32, i32) {
    %c0_i32 = arith.constant 0 : i32
    %c0_i32_0 = arith.constant 0 : i32
    %c0_i32_1 = arith.constant 0 : i32
    return %arg0, %c0_i32, %c0_i32_0 : i32, i32, i32
  }
}

</mosaic_0001>

<llo_original>
// kernel: varnet_forward.13
$region0: #{varnet_forward.13}
  #allocation0 [shape = 'u32[]', space=smem, size = 0x4, offset = 0x4, fixed_abs, tag = 'smem constant byte address 0x4 - core index']
  #allocation1 [shape = 'u32[72,128]{1,0:T(1,128)}', space=vmem, size = 0x9000, scoped, tag = 'internal scratch']
  %s0 = inlined_call_operand.hbm [shape: f32[16,16], index: 0, kind: input, shape index: {}]
  %s1 = inlined_call_operand.hbm [shape: f32[16,16], index: 1, kind: input, shape index: {}]
  %s2 = inlined_call_operand.hbm [shape: f32[16,16], index: 2, kind: input, shape index: {}]
  %s3 = inlined_call_operand.hbm [shape: f32[16,16], index: 3, kind: input, shape index: {}]
  %s4 = inlined_call_operand.vmem [shape: f32[1,16], index: 4, kind: input, shape index: {}]
  %s5 = inlined_call_operand.vmem [shape: f32[2,64,16], index: 5, kind: input, shape index: {}]
  %s6 = inlined_call_operand.vmem [shape: f32[2,64,16], index: 6, kind: input, shape index: {}]
  %s7 = inlined_call_operand.vmem [shape: f32[2,64,16], index: 7, kind: output, shape index: {0}]
  %s8 = inlined_call_operand.vmem [shape: f32[2,64,16], index: 8, kind: output, shape index: {1}]
  %9 = xla_tuple %s7, %s8
  %s10 = sld [smem:[#allocation0]]
  $region85: #{varnet_forward.13} parent=0
    _
  %s12 = ssub.s32 1, %s10
  %s13 = scalar_select 0, %s12, %s10
  $region1: #{varnet_forward.13} parent=0
    #allocation2 [shape = 'u8[8192]{0}', space=vmem, size = 0x2000, scoped, tag = 'input window, operand 0, single buffered']
    #allocation3 [shape = 's32[2]{0}', space=sflag, size = 0x8, scoped, tag = 'scoped memory for varnet_forward.13']
    #allocation4 [shape = 'u8[8192]{0}', space=vmem, size = 0x2000, scoped, tag = 'input window, operand 1, single buffered']
    #allocation5 [shape = 's32[1]{0}', space=sflag, size = 0x4, scoped, tag = 'scoped memory for varnet_forward.13']
    #allocation6 [shape = 'u8[8192]{0}', space=vmem, size = 0x2000, scoped, tag = 'input window, operand 2, single buffered']
    #allocation7 [shape = 'u8[8192]{0}', space=vmem, size = 0x2000, scoped, tag = 'input window, operand 3, single buffered']
    #allocation8 [shape = 's32[1]{0}', space=sflag, size = 0x4, scoped, tag = 'scoped memory for varnet_forward.13']
    %14 = vsyncpa [#allocation3], 0
    %15 = vsyncpa [#allocation5], 0
    %16 = vsyncpa [#allocation8], 0
    loop: start=0, step=1, limit=4
    $region2: #{varnet_forward.13} parent=1 // loop_pre_header
      _
    $region3: #{varnet_forward.13} parent=1 // loop_header
      %s18 = sphi 0, %s22
      %p19 = scmp.ge.s32.totalorder %s18, 4
      %s26 = sphi 0, %s26
      %s28 = sphi 0, %s26
      %s29 = sphi 0, %s28
      %s43 = sphi 0, %s29
      %s47 = sphi 0, %s47
      %s49 = sphi 0, %s47
      %s50 = sphi 0, %s49
      %s64 = sphi 0, %s50
      %s68 = sphi 0, %s68
      %s70 = sphi 0, %s68
      %s71 = sphi 0, %s70
      %s85 = sphi 0, %s71
      %s89 = sphi 0, %s89
      %s91 = sphi 0, %s89
      %s92 = sphi 0, %s91
      %s106 = sphi 0, %s92
      %s110 = sphi 0, %s110
      %s112 = sphi 0, %s110
      %s113 = sphi 0, %s112
      %s127 = sphi 0, %s113
      %s133 = sphi 0, %s135
      %s136 = sphi 0, %s133
      %s137 = sphi 0, %s136
      %s153 = sphi 0, %s137
      %s159 = sphi 0, %s161
      %s162 = sphi 0, %s159
      %s163 = sphi 0, %s162
      %s179 = sphi 0, %s163
      %s185 = sphi 0, %s187
      %s188 = sphi 0, %s185
      %s189 = sphi 0, %s188
      %s205 = sphi 0, %s189
      %s211 = sphi 0, %s213
      %s214 = sphi 0, %s211
      %s215 = sphi 0, %s214
      %s231 = sphi 0, %s215
    $region4: #{varnet_forward.13} parent=1 // loop_header_branch
      %21 = sbr.rel (%p19) target = $region8
    $region5: #{varnet_forward.13} parent=1 // loop_body
      %s23 = ssub.s32 %s18, 1
      %s24 = ssub.s32 %s18, 2
      %s25 = sadd.s32 %s18, 1
      %s27 = sadd.s32 %s26, 1
      %p30 = scmp.eq.s32.totalorder %s18, 1
      %p31 = scmp.ne.s32.totalorder %s26, %s28
      %p32 = scmp.eq.s32.totalorder %s18, 0
      %p33 = por %p31, %p32
      %p34 = scmp.ne.s32.totalorder %s26, %s28
      %p35 = scmp.eq.s32.totalorder %s23, 1
      %p36 = por %p34, %p35
      %p37 = scmp.ne.s32.totalorder %s28, %s29
      %p38 = scmp.eq.s32.totalorder %s23, 0
      %p39 = por %p37, %p38
      %p40 = scmp.ne.s32.totalorder %s28, %s29
      %p41 = scmp.eq.s32.totalorder %s24, 1
      %p42 = por %p40, %p41
      %p44 = scmp.ne.s32.totalorder %s29, %s43
      %p45 = scmp.eq.s32.totalorder %s24, 0
      %p46 = por %p44, %p45
      %s48 = sadd.s32 %s47, 1
      %p51 = scmp.eq.s32.totalorder %s18, 1
      %p52 = scmp.ne.s32.totalorder %s47, %s49
      %p53 = scmp.eq.s32.totalorder %s18, 0
      %p54 = por %p52, %p53
      %p55 = scmp.ne.s32.totalorder %s47, %s49
      %p56 = scmp.eq.s32.totalorder %s23, 1
      %p57 = por %p55, %p56
      %p58 = scmp.ne.s32.totalorder %s49, %s50
      %p59 = scmp.eq.s32.totalorder %s23, 0
      %p60 = por %p58, %p59
      %p61 = scmp.ne.s32.totalorder %s49, %s50
      %p62 = scmp.eq.s32.totalorder %s24, 1
      %p63 = por %p61, %p62
      %p65 = scmp.ne.s32.totalorder %s50, %s64
      %p66 = scmp.eq.s32.totalorder %s24, 0
      %p67 = por %p65, %p66
      %s69 = sadd.s32 %s68, 1
      %p72 = scmp.eq.s32.totalorder %s18, 1
      %p73 = scmp.ne.s32.totalorder %s68, %s70
      %p74 = scmp.eq.s32.totalorder %s18, 0
      %p75 = por %p73, %p74
      %p76 = scmp.ne.s32.totalorder %s68, %s70
      %p77 = scmp.eq.s32.totalorder %s23, 1
      %p78 = por %p76, %p77
      %p79 = scmp.ne.s32.totalorder %s70, %s71
      %p80 = scmp.eq.s32.totalorder %s23, 0
      %p81 = por %p79, %p80
      %p82 = scmp.ne.s32.totalorder %s70, %s71
      %p83 = scmp.eq.s32.totalorder %s24, 1
      %p84 = por %p82, %p83
      %p86 = scmp.ne.s32.totalorder %s71, %s85
      %p87 = scmp.eq.s32.totalorder %s24, 0
      %p88 = por %p86, %p87
      %s90 = sadd.s32 %s89, 1
      %p93 = scmp.eq.s32.totalorder %s18, 1
      %p94 = scmp.ne.s32.totalorder %s89, %s91
      %p95 = scmp.eq.s32.totalorder %s18, 0
      %p96 = por %p94, %p95
      %p97 = scmp.ne.s32.totalorder %s89, %s91
      %p98 = scmp.eq.s32.totalorder %s23, 1
      %p99 = por %p97, %p98
      %p100 = scmp.ne.s32.totalorder %s91, %s92
      %p101 = scmp.eq.s32.totalorder %s23, 0
      %p102 = por %p100, %p101
      %p103 = scmp.ne.s32.totalorder %s91, %s92
      %p104 = scmp.eq.s32.totalorder %s24, 1
      %p105 = por %p103, %p104
      %p107 = scmp.ne.s32.totalorder %s92, %s106
      %p108 = scmp.eq.s32.totalorder %s24, 0
      %p109 = por %p107, %p108
      %s111 = sadd.s32 %s110, 1
      %p114 = scmp.eq.s32.totalorder %s18, 1
      %p115 = scmp.ne.s32.totalorder %s110, %s112
      %p116 = scmp.eq.s32.totalorder %s18, 0
      %p117 = por %p115, %p116
      %p118 = scmp.ne.s32.totalorder %s110, %s112
      %p119 = scmp.eq.s32.totalorder %s23, 1
      %p120 = por %p118, %p119
      %p121 = scmp.ne.s32.totalorder %s112, %s113
      %p122 = scmp.eq.s32.totalorder %s23, 0
      %p123 = por %p121, %p122
      %p124 = scmp.ne.s32.totalorder %s112, %s113
      %p125 = scmp.eq.s32.totalorder %s24, 1
      %p126 = por %p124, %p125
      %p128 = scmp.ne.s32.totalorder %s113, %s127
      %p129 = scmp.eq.s32.totalorder %s24, 0
      %p130 = por %p128, %p129
      %s131 = ssub.s32 %s18, %s25
      %p132 = scmp.eq.s32.totalorder %s131, 0
      %s134 = sadd.s32 %s133, 1
      %s135 = scalar_select %p132, %s133, %s134
      %p138 = pneg %p132
      %p139 = scmp.eq.s32.totalorder %s18, 1
      %p140 = por %p138, %p139
      %p141 = scmp.ne.s32.totalorder %s133, %s136
      %p142 = scmp.eq.s32.totalorder %s18, 0
      %p143 = por %p141, %p142
      %p144 = scmp.ne.s32.totalorder %s133, %s136
      %p145 = scmp.eq.s32.totalorder %s23, 1
      %p146 = por %p144, %p145
      %p147 = scmp.ne.s32.totalorder %s136, %s137
      %p148 = scmp.eq.s32.totalorder %s23, 0
      %p149 = por %p147, %p148
      %p150 = scmp.ne.s32.totalorder %s136, %s137
      %p151 = scmp.eq.s32.totalorder %s24, 1
      %p152 = por %p150, %p151
      %p154 = scmp.ne.s32.totalorder %s137, %s153
      %p155 = scmp.eq.s32.totalorder %s24, 0
      %p156 = por %p154, %p155
      %s157 = ssub.s32 %s18, %s25
      %p158 = scmp.eq.s32.totalorder %s157, 0
      %s160 = sadd.s32 %s159, 1
      %s161 = scalar_select %p158, %s159, %s160
      %p164 = pneg %p158
      %p165 = scmp.eq.s32.totalorder %s18, 1
      %p166 = por %p164, %p165
      %p167 = scmp.ne.s32.totalorder %s159, %s162
      %p168 = scmp.eq.s32.totalorder %s18, 0
      %p169 = por %p167, %p168
      %p170 = scmp.ne.s32.totalorder %s159, %s162
      %p171 = scmp.eq.s32.totalorder %s23, 1
      %p172 = por %p170, %p171
      %p173 = scmp.ne.s32.totalorder %s162, %s163
      %p174 = scmp.eq.s32.totalorder %s23, 0
      %p175 = por %p173, %p174
      %p176 = scmp.ne.s32.totalorder %s162, %s163
      %p177 = scmp.eq.s32.totalorder %s24, 1
      %p178 = por %p176, %p177
      %p180 = scmp.ne.s32.totalorder %s163, %s179
      %p181 = scmp.eq.s32.totalorder %s24, 0
      %p182 = por %p180, %p181
      %s183 = ssub.s32 %s18, %s25
      %p184 = scmp.eq.s32.totalorder %s183, 0
      %s186 = sadd.s32 %s185, 1
      %s187 = scalar_select %p184, %s185, %s186
      %p190 = pneg %p184
      %p191 = scmp.eq.s32.totalorder %s18, 1
      %p192 = por %p190, %p191
      %p193 = scmp.ne.s32.totalorder %s185, %s188
      %p194 = scmp.eq.s32.totalorder %s18, 0
      %p195 = por %p193, %p194
      %p196 = scmp.ne.s32.totalorder %s185, %s188
      %p197 = scmp.eq.s32.totalorder %s23, 1
      %p198 = por %p196, %p197
      %p199 = scmp.ne.s32.totalorder %s188, %s189
      %p200 = scmp.eq.s32.totalorder %s23, 0
      %p201 = por %p199, %p200
      %p202 = scmp.ne.s32.totalorder %s188, %s189
      %p203 = scmp.eq.s32.totalorder %s24, 1
      %p204 = por %p202, %p203
      %p206 = scmp.ne.s32.totalorder %s189, %s205
      %p207 = scmp.eq.s32.totalorder %s24, 0
      %p208 = por %p206, %p207
      %s209 = ssub.s32 %s18, %s25
      %p210 = scmp.eq.s32.totalorder %s209, 0
      %s212 = sadd.s32 %s211, 1
      %s213 = scalar_select %p210, %s211, %s212
      %p216 = pneg %p210
      %p217 = scmp.eq.s32.totalorder %s18, 1
      %p218 = por %p216, %p217
      %p219 = scmp.ne.s32.totalorder %s211, %s214
      %p220 = scmp.eq.s32.totalorder %s18, 0
      %p221 = por %p219, %p220
      %p222 = scmp.ne.s32.totalorder %s211, %s214
      %p223 = scmp.eq.s32.totalorder %s23, 1
      %p224 = por %p222, %p223
      %p225 = scmp.ne.s32.totalorder %s214, %s215
      %p226 = scmp.eq.s32.totalorder %s23, 0
      %p227 = por %p225, %p226
      %p228 = scmp.ne.s32.totalorder %s214, %s215
      %p229 = scmp.eq.s32.totalorder %s24, 1
      %p230 = por %p228, %p229
      %p232 = scmp.ne.s32.totalorder %s215, %s231
      %p233 = scmp.eq.s32.totalorder %s24, 0
      %p234 = por %p232, %p233
      %p235 = scmp.le.s32.totalorder 1, %s18
      %p236 = scmp.lt.s32.totalorder %s18, 3
      %p237 = pnand %p235, %p236
      %p238 = pneg %p237
      // Predicated region
      $region9: #{varnet_forward.13} parent=5 // pred_check
        _
      $region10: #{varnet_forward.13} parent=5 // pred_check_branch
        %240 = sbr.rel (%p237) target = $region12
      $region11: #{varnet_forward.13} parent=5 // pred_region
        %s241 = ssub.s32 %s18, 1
        // Predicated region
        $region13: #{varnet_forward.13} parent=11 // pred_check
          %p242 = pneg %p39
        $region14: #{varnet_forward.13} parent=11 // pred_check_branch
          %244 = sbr.rel (%p242) target = $region16
        $region15: #{varnet_forward.13} parent=11 // pred_region
          %246 = vsyncadd [#allocation3], 0
          %s247 = sshll.u32 %s0, 4
          %s248 = int_to_ptr.hbm [resolvable:$true] %s247
          %s249 = sshll.u32 [#allocation2], 4
          %s250 = int_to_ptr.vmem [resolvable:$true] %s249
          %255 = dma.hbm_to_vmem [thread:$0]  %s248, 256, %s250, [#allocation3], 128, 128, 8
        $region16: #{varnet_forward.13} parent=11 // pred_fallthru
          _
        // Predicated region
        $region17: #{varnet_forward.13} parent=11 // pred_check
          %p256 = pneg %p60
        $region18: #{varnet_forward.13} parent=11 // pred_check_branch
          %258 = sbr.rel (%p256) target = $region20
        $region19: #{varnet_forward.13} parent=11 // pred_region
          %260 = vsyncadd [#allocation5], 0
          %s261 = sshll.u32 %s1, 4
          %s262 = int_to_ptr.hbm [resolvable:$true] %s261
          %s263 = sshll.u32 [#allocation4], 4
          %s264 = int_to_ptr.vmem [resolvable:$true] %s263
          %269 = dma.hbm_to_vmem [thread:$0]  %s262, 256, %s264, [#allocation5], 128, 128, 8
        $region20: #{varnet_forward.13} parent=11 // pred_fallthru
          _
        // Predicated region
        $region21: #{varnet_forward.13} parent=11 // pred_check
          %p270 = pneg %p81
        $region22: #{varnet_forward.13} parent=11 // pred_check_branch
          %272 = sbr.rel (%p270) target = $region24
        $region23: #{varnet_forward.13} parent=11 // pred_region
          %274 = vsyncadd [#allocation5], 0
          %s275 = sshll.u32 %s2, 4
          %s276 = int_to_ptr.hbm [resolvable:$true] %s275
          %s277 = sshll.u32 [#allocation6], 4
          %s278 = int_to_ptr.vmem [resolvable:$true] %s277
          %283 = dma.hbm_to_vmem [thread:$0]  %s276, 256, %s278, [#allocation5], 128, 128, 8
        $region24: #{varnet_forward.13} parent=11 // pred_fallthru
          _
        // Predicated region
        $region25: #{varnet_forward.13} parent=11 // pred_check
          %p284 = pneg %p102
        $region26: #{varnet_forward.13} parent=11 // pred_check_branch
          %286 = sbr.rel (%p284) target = $region28
        $region27: #{varnet_forward.13} parent=11 // pred_region
          %288 = vsyncadd [#allocation8], 0
          %s289 = sshll.u32 %s3, 4
          %s290 = int_to_ptr.hbm [resolvable:$true] %s289
          %s291 = sshll.u32 [#allocation7], 4
          %s292 = int_to_ptr.vmem [resolvable:$true] %s291
          %297 = dma.hbm_to_vmem [thread:$0]  %s290, 256, %s292, [#allocation8], 128, 128, 8
        $region28: #{varnet_forward.13} parent=11 // pred_fallthru
          _
        // Predicated region
        $region29: #{varnet_forward.13} parent=11 // pred_check
          %p298 = pneg %p123
        $region30: #{varnet_forward.13} parent=11 // pred_check_branch
          %300 = sbr.rel (%p298) target = $region32
        $region31: #{varnet_forward.13} parent=11 // pred_region
          _
        $region32: #{varnet_forward.13} parent=11 // pred_fallthru
          _
      $region12: #{varnet_forward.13} parent=5 // pred_fallthru
        _
      %p301 = scmp.lt.s32.totalorder %s18, 2
      // Predicated region
      $region33: #{varnet_forward.13} parent=5 // pred_check
        %p302 = pneg %p301
      $region34: #{varnet_forward.13} parent=5 // pred_check_branch
        %304 = sbr.rel (%p302) target = $region36
      $region35: #{varnet_forward.13} parent=5 // pred_region
        // Predicated region
        $region37: #{varnet_forward.13} parent=35 // pred_check
          %p305 = pneg %p143
        $region38: #{varnet_forward.13} parent=35 // pred_check_branch
          %307 = sbr.rel (%p305) target = $region40
        $region39: #{varnet_forward.13} parent=35 // pred_region
          %p308 = scmp.lt.s32.totalorder %s18, 1
          %s309 = scalar_select %p308, %s18, 1
          %s310 = smul.addr %s309, 8
          %s311 = smul.addr %s310, 8
          %s312 = scalar_lea.vmem %s5, %s311
        $region40: #{varnet_forward.13} parent=35 // pred_fallthru
          _
        // Predicated region
        $region41: #{varnet_forward.13} parent=35 // pred_check
          %p313 = pneg %p169
        $region42: #{varnet_forward.13} parent=35 // pred_check_branch
          %315 = sbr.rel (%p313) target = $region44
        $region43: #{varnet_forward.13} parent=35 // pred_region
          %p316 = scmp.lt.s32.totalorder %s18, 1
          %s317 = scalar_select %p316, %s18, 1
          %s318 = smul.addr %s317, 8
          %s319 = smul.addr %s318, 8
          %s320 = scalar_lea.vmem %s6, %s319
        $region44: #{varnet_forward.13} parent=35 // pred_fallthru
          _
      $region36: #{varnet_forward.13} parent=5 // pred_fallthru
        _
      %p321 = scmp.le.s32.totalorder 1, %s18
      %p322 = scmp.lt.s32.totalorder %s18, 3
      %p323 = pnand %p321, %p322
      %p324 = pneg %p323
      // Predicated region
      $region45: #{varnet_forward.13} parent=5 // pred_check
        _
      $region46: #{varnet_forward.13} parent=5 // pred_check_branch
        %326 = sbr.rel (%p323) target = $region48
      $region47: #{varnet_forward.13} parent=5 // pred_region
        %s327 = ssub.s32 %s18, 1
        // Predicated region
        $region49: #{varnet_forward.13} parent=47 // pred_check
          %p328 = pneg %p39
        $region50: #{varnet_forward.13} parent=47 // pred_check_branch
          %330 = sbr.rel (%p328) target = $region52
        $region51: #{varnet_forward.13} parent=47 // pred_region
          %332 = dma.done [#allocation3], 256
        $region52: #{varnet_forward.13} parent=47 // pred_fallthru
          _
        // Predicated region
        $region53: #{varnet_forward.13} parent=47 // pred_check
          %p333 = pneg %p60
        $region54: #{varnet_forward.13} parent=47 // pred_check_branch
          %335 = sbr.rel (%p333) target = $region56
        $region55: #{varnet_forward.13} parent=47 // pred_region
          %337 = dma.done [#allocation5], 256
        $region56: #{varnet_forward.13} parent=47 // pred_fallthru
          _
        // Predicated region
        $region57: #{varnet_forward.13} parent=47 // pred_check
          %p338 = pneg %p81
        $region58: #{varnet_forward.13} parent=47 // pred_check_branch
          %340 = sbr.rel (%p338) target = $region60
        $region59: #{varnet_forward.13} parent=47 // pred_region
          %342 = dma.done [#allocation5], 256
        $region60: #{varnet_forward.13} parent=47 // pred_fallthru
          _
        // Predicated region
        $region61: #{varnet_forward.13} parent=47 // pred_check
          %p343 = pneg %p102
        $region62: #{varnet_forward.13} parent=47 // pred_check_branch
          %345 = sbr.rel (%p343) target = $region64
        $region63: #{varnet_forward.13} parent=47 // pred_region
          %347 = dma.done [#allocation8], 256
        $region64: #{varnet_forward.13} parent=47 // pred_fallthru
          _
        %p348 = pneg %p39
        %p349 = pneg %p36
        %p350 = pneg %p60
        %p351 = pneg %p57
        %p352 = pneg %p81
        %p353 = pneg %p78
        %p354 = pneg %p102
        %p355 = pneg %p99
        %p356 = pneg %p123
        %p357 = pneg %p120
        %p358 = scmp.lt.s32.totalorder %s23, 1
        %s359 = scalar_select %p358, %s23, 1
        %s360 = smul.addr %s359, 8
        %s361 = smul.addr %s360, 8
        %s362 = scalar_lea.vmem %s5, %s361
        %p363 = pneg %p149
        %p364 = pneg %p146
        %p365 = scmp.lt.s32.totalorder %s23, 1
        %s366 = scalar_select %p365, %s23, 1
        %s367 = smul.addr %s366, 8
        %s368 = smul.addr %s367, 8
        %s369 = scalar_lea.vmem %s6, %s368
        %p370 = pneg %p175
        %p371 = pneg %p172
        %p372 = pneg %p201
        %p373 = pneg %p198
        %p374 = scmp.lt.s32.totalorder %s23, 1
        %s375 = scalar_select %p374, %s23, 1
        %s376 = smul.addr %s375, 8
        %s377 = smul.addr %s376, 8
        %s378 = scalar_lea.vmem %s7, %s377
        %p379 = pneg %p227
        %p380 = pneg %p224
        %p381 = scmp.lt.s32.totalorder %s23, 1
        %s382 = scalar_select %p381, %s23, 1
        %s383 = smul.addr %s382, 8
        %s384 = smul.addr %s383, 8
        %s385 = scalar_lea.vmem %s8, %s384
        %p386 = scmp.lt.s32.totalorder %s23, 1
        %s387 = scalar_select %p386, %s23, 1
        %s388 = smul.addr %s387, 8
        %s389 = smul.addr %s388, 8
        %s390 = scalar_lea.vmem %s5, %s389
        %p391 = scmp.lt.s32.totalorder %s23, 1
        %s392 = scalar_select %p391, %s23, 1
        %s393 = smul.addr %s392, 8
        %s394 = smul.addr %s393, 8
        %s395 = scalar_lea.vmem %s6, %s394
        %p396 = scmp.lt.s32.totalorder %s23, 1
        %s397 = scalar_select %p396, %s23, 1
        %s398 = smul.addr %s397, 8
        %s399 = smul.addr %s398, 8
        %s400 = scalar_lea.vmem %s7, %s399
        %p401 = scmp.lt.s32.totalorder %s23, 1
        %s402 = scalar_select %p401, %s23, 1
        %s403 = smul.addr %s402, 8
        %s404 = smul.addr %s403, 8
        %s405 = scalar_lea.vmem %s8, %s404
        %v406 = vld [vmem:[%s4] sm:$0x1]
        %v407 = vld [vmem:[%s390] sm:$0xff]
        %v408 = vld [vmem:[%s390 + $0x8] sm:$0xff]
        %v409 = vld [vmem:[%s390 + $0x10] sm:$0xff]
        %v410 = vld [vmem:[%s390 + $0x18] sm:$0xff]
        %v411 = vld [vmem:[%s390 + $0x20] sm:$0xff]
        %v412 = vld [vmem:[%s390 + $0x28] sm:$0xff]
        %v413 = vld [vmem:[%s390 + $0x30] sm:$0xff]
        %v414 = vld [vmem:[%s390 + $0x38] sm:$0xff]
        %v416 = vperm.slane %v406, 0
        %v418 = vmul.f32 %v407, %v416
        %v419 = vmul.f32 %v408, %v416
        %v420 = vmul.f32 %v409, %v416
        %v421 = vmul.f32 %v410, %v416
        %v422 = vmul.f32 %v411, %v416
        %v423 = vmul.f32 %v412, %v416
        %v424 = vmul.f32 %v413, %v416
        %v425 = vmul.f32 %v414, %v416
        %v426 = vld [vmem:[%s395] sm:$0xff]
        %v427 = vld [vmem:[%s395 + $0x8] sm:$0xff]
        %v428 = vld [vmem:[%s395 + $0x10] sm:$0xff]
        %v429 = vld [vmem:[%s395 + $0x18] sm:$0xff]
        %v430 = vld [vmem:[%s395 + $0x20] sm:$0xff]
        %v431 = vld [vmem:[%s395 + $0x28] sm:$0xff]
        %v432 = vld [vmem:[%s395 + $0x30] sm:$0xff]
        %v433 = vld [vmem:[%s395 + $0x38] sm:$0xff]
        %v434 = vmul.f32 %v426, %v416
        %v435 = vmul.f32 %v427, %v416
        %v436 = vmul.f32 %v428, %v416
        %v437 = vmul.f32 %v429, %v416
        %v438 = vmul.f32 %v430, %v416
        %v439 = vmul.f32 %v431, %v416
        %v440 = vmul.f32 %v432, %v416
        %v441 = vmul.f32 %v433, %v416
        %v442 = vld [vmem:[#allocation6] sm:$0xff]
        %v443 = vld [vmem:[#allocation6 + $0x8] sm:$0xff]
        %v444 = vld [vmem:[#allocation7] sm:$0xff]
        %v445 = vld [vmem:[#allocation7 + $0x8] sm:$0xff]
        %vm446 = vcmask 130048
        %v448 = vsel %vm446, %v418, 0
        %v451 = vsel %vm446, %v419, 0
        %v454 = vsel %vm446, %v420, 0
        %v457 = vsel %vm446, %v421, 0
        %v460 = vsel %vm446, %v422, 0
        %v463 = vsel %vm446, %v423, 0
        %v466 = vsel %vm446, %v424, 0
        %v469 = vsel %vm446, %v425, 0
        %471 = vmatpush.msra.mxu0 0.0
        %472 = vmatpush.msra.mxu0 0.0
        %473 = vmatpush.msra.mxu0 0.0
        %474 = vmatpush.msra.mxu0 0.0
        %475 = vmatpush.msra.mxu0 0.0
        %476 = vmatpush.msra.mxu0 0.0
        %477 = vmatpush.msra.mxu0 0.0
        %478 = vmatpush.msra.mxu0 0.0
        %479 = vmatpush.msra.mxu0 0.0
        %480 = vmatpush.msra.mxu0 0.0
        %481 = vmatpush.msra.mxu0 0.0
        %482 = vmatpush.msra.mxu0 0.0
        %483 = vmatpush.msra.mxu0 0.0
        %484 = vmatpush.msra.mxu0 0.0
        %485 = vmatpush.msra.mxu0 %v443
        %486 = vmatpush.msra.mxu0 %v442
        %487 = vmatmul.f32.gmra.mxu0 %v448
        %v488 = vpop.f32.mrf.mxu0
        %v489 = vadd.f32 0.0, %v488
        %490 = vmatmul.f32.gmra.mxu0 %v451
        %v491 = vpop.f32.mrf.mxu0
        %v492 = vadd.f32 0.0, %v491
        %493 = vmatmul.f32.gmra.mxu0 %v454
        %v494 = vpop.f32.mrf.mxu0
        %v495 = vadd.f32 0.0, %v494
        %496 = vmatmul.f32.gmra.mxu0 %v457
        %v497 = vpop.f32.mrf.mxu0
        %v498 = vadd.f32 0.0, %v497
        %499 = vmatmul.f32.gmra.mxu0 %v460
        %v500 = vpop.f32.mrf.mxu0
        %v501 = vadd.f32 0.0, %v500
        %502 = vmatmul.f32.gmra.mxu0 %v463
        %v503 = vpop.f32.mrf.mxu0
        %v504 = vadd.f32 0.0, %v503
        %505 = vmatmul.f32.gmra.mxu0 %v466
        %v506 = vpop.f32.mrf.mxu0
        %v507 = vadd.f32 0.0, %v506
        %508 = vmatmul.f32.gmra.mxu0 %v469
        %v509 = vpop.f32.mrf.mxu0
        %v510 = vadd.f32 0.0, %v509
        %511 = vdwg.mxu0
        %v513 = vsel %vm446, %v434, 0
        %v516 = vsel %vm446, %v435, 0
        %v519 = vsel %vm446, %v436, 0
        %v522 = vsel %vm446, %v437, 0
        %v525 = vsel %vm446, %v438, 0
        %v528 = vsel %vm446, %v439, 0
        %v531 = vsel %vm446, %v440, 0
        %v534 = vsel %vm446, %v441, 0
        %536 = vmatpush.msra.mxu0 0.0
        %537 = vmatpush.msra.mxu0 0.0
        %538 = vmatpush.msra.mxu0 0.0
        %539 = vmatpush.msra.mxu0 0.0
        %540 = vmatpush.msra.mxu0 0.0
        %541 = vmatpush.msra.mxu0 0.0
        %542 = vmatpush.msra.mxu0 0.0
        %543 = vmatpush.msra.mxu0 0.0
        %544 = vmatpush.msra.mxu0 0.0
        %545 = vmatpush.msra.mxu0 0.0
        %546 = vmatpush.msra.mxu0 0.0
        %547 = vmatpush.msra.mxu0 0.0
        %548 = vmatpush.msra.mxu0 0.0
        %549 = vmatpush.msra.mxu0 0.0
        %550 = vmatpush.msra.mxu0 %v445
        %551 = vmatpush.msra.mxu0 %v444
        %552 = vmatmul.f32.gmra.mxu0 %v513
        %v553 = vpop.f32.mrf.mxu0
        %v554 = vadd.f32 0.0, %v553
        %555 = vmatmul.f32.gmra.mxu0 %v516
        %v556 = vpop.f32.mrf.mxu0
        %v557 = vadd.f32 0.0, %v556
        %558 = vmatmul.f32.gmra.mxu0 %v519
        %v559 = vpop.f32.mrf.mxu0
        %v560 = vadd.f32 0.0, %v559
        %561 = vmatmul.f32.gmra.mxu0 %v522
        %v562 = vpop.f32.mrf.mxu0
        %v563 = vadd.f32 0.0, %v562
        %564 = vmatmul.f32.gmra.mxu0 %v525
        %v565 = vpop.f32.mrf.mxu0
        %v566 = vadd.f32 0.0, %v565
        %567 = vmatmul.f32.gmra.mxu0 %v528
        %v568 = vpop.f32.mrf.mxu0
        %v569 = vadd.f32 0.0, %v568
        %570 = vmatmul.f32.gmra.mxu0 %v531
        %v571 = vpop.f32.mrf.mxu0
        %v572 = vadd.f32 0.0, %v571
        %573 = vmatmul.f32.gmra.mxu0 %v534
        %v574 = vpop.f32.mrf.mxu0
        %v575 = vadd.f32 0.0, %v574
        %576 = vdwg.mxu0
        %v577 = vadd.f32 %v418, %v434
        %v578 = vadd.f32 %v419, %v435
        %v579 = vadd.f32 %v420, %v436
        %v580 = vadd.f32 %v421, %v437
        %v581 = vadd.f32 %v422, %v438
        %v582 = vadd.f32 %v423, %v439
        %v583 = vadd.f32 %v424, %v440
        %v584 = vadd.f32 %v425, %v441
        %v585 = vadd.f32 %v442, %v444
        %v586 = vadd.f32 %v443, %v445
        %v588 = vsel %vm446, %v577, 0
        %v591 = vsel %vm446, %v578, 0
        %v594 = vsel %vm446, %v579, 0
        %v597 = vsel %vm446, %v580, 0
        %v600 = vsel %vm446, %v581, 0
        %v603 = vsel %vm446, %v582, 0
        %v606 = vsel %vm446, %v583, 0
        %v609 = vsel %vm446, %v584, 0
        %611 = vmatpush.msra.mxu0 0.0
        %612 = vmatpush.msra.mxu0 0.0
        %613 = vmatpush.msra.mxu0 0.0
        %614 = vmatpush.msra.mxu0 0.0
        %615 = vmatpush.msra.mxu0 0.0
        %616 = vmatpush.msra.mxu0 0.0
        %617 = vmatpush.msra.mxu0 0.0
        %618 = vmatpush.msra.mxu0 0.0
        %619 = vmatpush.msra.mxu0 0.0
        %620 = vmatpush.msra.mxu0 0.0
        %621 = vmatpush.msra.mxu0 0.0
        %622 = vmatpush.msra.mxu0 0.0
        %623 = vmatpush.msra.mxu0 0.0
        %624 = vmatpush.msra.mxu0 0.0
        %625 = vmatpush.msra.mxu0 %v586
        %626 = vmatpush.msra.mxu0 %v585
        %627 = vmatmul.f32.gmra.mxu0 %v588
        %v628 = vpop.f32.mrf.mxu0
        %v629 = vadd.f32 0.0, %v628
        %630 = vmatmul.f32.gmra.mxu0 %v591
        %v631 = vpop.f32.mrf.mxu0
        %v632 = vadd.f32 0.0, %v631
        %633 = vmatmul.f32.gmra.mxu0 %v594
        %v634 = vpop.f32.mrf.mxu0
        %v635 = vadd.f32 0.0, %v634
        %636 = vmatmul.f32.gmra.mxu0 %v597
        %v637 = vpop.f32.mrf.mxu0
        %v638 = vadd.f32 0.0, %v637
        %639 = vmatmul.f32.gmra.mxu0 %v600
        %v640 = vpop.f32.mrf.mxu0
        %v641 = vadd.f32 0.0, %v640
        %642 = vmatmul.f32.gmra.mxu0 %v603
        %v643 = vpop.f32.mrf.mxu0
        %v644 = vadd.f32 0.0, %v643
        %645 = vmatmul.f32.gmra.mxu0 %v606
        %v646 = vpop.f32.mrf.mxu0
        %v647 = vadd.f32 0.0, %v646
        %648 = vmatmul.f32.gmra.mxu0 %v609
        %v649 = vpop.f32.mrf.mxu0
        %v650 = vadd.f32 0.0, %v649
        %651 = vdwg.mxu0
        %v652 = vsub.f32 %v489, %v554
        %v653 = vsub.f32 %v492, %v557
        %v654 = vsub.f32 %v495, %v560
        %v655 = vsub.f32 %v498, %v563
        %v656 = vsub.f32 %v501, %v566
        %v657 = vsub.f32 %v504, %v569
        %v658 = vsub.f32 %v507, %v572
        %v659 = vsub.f32 %v510, %v575
        %v660 = vsub.f32 %v629, %v489
        %v661 = vsub.f32 %v632, %v492
        %v662 = vsub.f32 %v635, %v495
        %v663 = vsub.f32 %v638, %v498
        %v664 = vsub.f32 %v641, %v501
        %v665 = vsub.f32 %v644, %v504
        %v666 = vsub.f32 %v647, %v507
        %v667 = vsub.f32 %v650, %v510
        %v668 = vsub.f32 %v660, %v554
        %v669 = vsub.f32 %v661, %v557
        %v670 = vsub.f32 %v662, %v560
        %v671 = vsub.f32 %v663, %v563
        %v672 = vsub.f32 %v664, %v566
        %v673 = vsub.f32 %v665, %v569
        %v674 = vsub.f32 %v666, %v572
        %v675 = vsub.f32 %v667, %v575
        %v676 = vld [vmem:[#allocation2] sm:$0xff]
        %v677 = vld [vmem:[#allocation2 + $0x8] sm:$0xff]
        %v678 = vld [vmem:[#allocation4] sm:$0xff]
        %v679 = vld [vmem:[#allocation4 + $0x8] sm:$0xff]
        %v681 = vsel %vm446, %v676, 0
        %v684 = vsel %vm446, %v677, 0
        %686 = vmatpush.msra.mxu0 0.0
        %687 = vmatpush.msra.mxu0 0.0
        %688 = vmatpush.msra.mxu0 0.0
        %689 = vmatpush.msra.mxu0 0.0
        %690 = vmatpush.msra.mxu0 0.0
        %691 = vmatpush.msra.mxu0 0.0
        %692 = vmatpush.msra.mxu0 0.0
        %693 = vmatpush.msra.mxu0 0.0
        %694 = vmatpush.msra.mxu0 0.0
        %695 = vmatpush.msra.mxu0 0.0
        %696 = vmatpush.msra.mxu0 0.0
        %697 = vmatpush.msra.mxu0 0.0
        %698 = vmatpush.msra.mxu0 0.0
        %699 = vmatpush.msra.mxu0 0.0
        %700 = vmatpush.msra.mxu0 %v653
        %701 = vmatpush.msra.mxu0 %v652
        %702 = vmatmul.f32.gmra.mxu0 %v681
        %v703 = vpop.f32.mrf.mxu0
        %v704 = vadd.f32 0.0, %v703
        %705 = vmatmul.f32.gmra.mxu0 %v684
        %v706 = vpop.f32.mrf.mxu0
        %v707 = vadd.f32 0.0, %v706
        %708 = vdwg.mxu0
        %v710 = vsel %vm446, %v678, 0
        %v713 = vsel %vm446, %v679, 0
        %715 = vmatpush.msra.mxu0 0.0
        %716 = vmatpush.msra.mxu0 0.0
        %717 = vmatpush.msra.mxu0 0.0
        %718 = vmatpush.msra.mxu0 0.0
        %719 = vmatpush.msra.mxu0 0.0
        %720 = vmatpush.msra.mxu0 0.0
        %721 = vmatpush.msra.mxu0 0.0
        %722 = vmatpush.msra.mxu0 0.0
        %723 = vmatpush.msra.mxu0 0.0
        %724 = vmatpush.msra.mxu0 0.0
        %725 = vmatpush.msra.mxu0 0.0
        %726 = vmatpush.msra.mxu0 0.0
        %727 = vmatpush.msra.mxu0 0.0
        %728 = vmatpush.msra.mxu0 0.0
        %729 = vmatpush.msra.mxu0 %v669
        %730 = vmatpush.msra.mxu0 %v668
        %731 = vmatmul.f32.gmra.mxu0 %v710
        %v732 = vpop.f32.mrf.mxu0
        %v733 = vadd.f32 0.0, %v732
        %734 = vmatmul.f32.gmra.mxu0 %v713
        %v735 = vpop.f32.mrf.mxu0
        %v736 = vadd.f32 0.0, %v735
        %737 = vdwg.mxu0
        %v738 = vadd.f32 %v676, %v678
        %v739 = vadd.f32 %v677, %v679
        %v740 = vadd.f32 %v652, %v668
        %v741 = vadd.f32 %v653, %v669
        %v743 = vsel %vm446, %v738, 0
        %v746 = vsel %vm446, %v739, 0
        %748 = vmatpush.msra.mxu0 0.0
        %749 = vmatpush.msra.mxu0 0.0
        %750 = vmatpush.msra.mxu0 0.0
        %751 = vmatpush.msra.mxu0 0.0
        %752 = vmatpush.msra.mxu0 0.0
        %753 = vmatpush.msra.mxu0 0.0
        %754 = vmatpush.msra.mxu0 0.0
        %755 = vmatpush.msra.mxu0 0.0
        %756 = vmatpush.msra.mxu0 0.0
        %757 = vmatpush.msra.mxu0 0.0
        %758 = vmatpush.msra.mxu0 0.0
        %759 = vmatpush.msra.mxu0 0.0
        %760 = vmatpush.msra.mxu0 0.0
        %761 = vmatpush.msra.mxu0 0.0
        %762 = vmatpush.msra.mxu0 %v741
        %763 = vmatpush.msra.mxu0 %v740
        %764 = vmatmul.f32.gmra.mxu0 %v743
        %v765 = vpop.f32.mrf.mxu0
        %v766 = vadd.f32 0.0, %v765
        %767 = vmatmul.f32.gmra.mxu0 %v746
        %v768 = vpop.f32.mrf.mxu0
        %v769 = vadd.f32 0.0, %v768
        %770 = vdwg.mxu0
        %v771 = vsub.f32 %v704, %v733
        %v772 = vsub.f32 %v707, %v736
        %v773 = vsub.f32 %v766, %v704
        %v774 = vsub.f32 %v769, %v707
        %v775 = vsub.f32 %v773, %v733
        %v776 = vsub.f32 %v774, %v736
        %777 = vst.msk [vmem:[%s400] sm:$0xff] %vm446, %v771
        %778 = vst.msk [vmem:[%s400 + $0x8] sm:$0xff] %vm446, %v772
        %779 = vst.msk [vmem:[%s405] sm:$0xff] %vm446, %v775
        %780 = vst.msk [vmem:[%s405 + $0x8] sm:$0xff] %vm446, %v776
        %781 = vmatpush.msra.mxu0 0.0
        %782 = vmatpush.msra.mxu0 0.0
        %783 = vmatpush.msra.mxu0 0.0
        %784 = vmatpush.msra.mxu0 0.0
        %785 = vmatpush.msra.mxu0 0.0
        %786 = vmatpush.msra.mxu0 0.0
        %787 = vmatpush.msra.mxu0 0.0
        %788 = vmatpush.msra.mxu0 0.0
        %789 = vmatpush.msra.mxu0 0.0
        %790 = vmatpush.msra.mxu0 0.0
        %791 = vmatpush.msra.mxu0 0.0
        %792 = vmatpush.msra.mxu0 0.0
        %793 = vmatpush.msra.mxu0 0.0
        %794 = vmatpush.msra.mxu0 0.0
        %795 = vmatpush.msra.mxu0 %v655
        %796 = vmatpush.msra.mxu0 %v654
        %797 = vmatmul.f32.gmra.mxu0 %v681
        %v798 = vpop.f32.mrf.mxu0
        %v799 = vadd.f32 0.0, %v798
        %800 = vmatmul.f32.gmra.mxu0 %v684
        %v801 = vpop.f32.mrf.mxu0
        %v802 = vadd.f32 0.0, %v801
        %803 = vdwg.mxu0
        %804 = vmatpush.msra.mxu0 0.0
        %805 = vmatpush.msra.mxu0 0.0
        %806 = vmatpush.msra.mxu0 0.0
        %807 = vmatpush.msra.mxu0 0.0
        %808 = vmatpush.msra.mxu0 0.0
        %809 = vmatpush.msra.mxu0 0.0
        %810 = vmatpush.msra.mxu0 0.0
        %811 = vmatpush.msra.mxu0 0.0
        %812 = vmatpush.msra.mxu0 0.0
        %813 = vmatpush.msra.mxu0 0.0
        %814 = vmatpush.msra.mxu0 0.0
        %815 = vmatpush.msra.mxu0 0.0
        %816 = vmatpush.msra.mxu0 0.0
        %817 = vmatpush.msra.mxu0 0.0
        %818 = vmatpush.msra.mxu0 %v671
        %819 = vmatpush.msra.mxu0 %v670
        %820 = vmatmul.f32.gmra.mxu0 %v710
        %v821 = vpop.f32.mrf.mxu0
        %v822 = vadd.f32 0.0, %v821
        %823 = vmatmul.f32.gmra.mxu0 %v713
        %v824 = vpop.f32.mrf.mxu0
        %v825 = vadd.f32 0.0, %v824
        %826 = vdwg.mxu0
        %v827 = vadd.f32 %v654, %v670
        %v828 = vadd.f32 %v655, %v671
        %829 = vmatpush.msra.mxu0 0.0
        %830 = vmatpush.msra.mxu0 0.0
        %831 = vmatpush.msra.mxu0 0.0
        %832 = vmatpush.msra.mxu0 0.0
        %833 = vmatpush.msra.mxu0 0.0
        %834 = vmatpush.msra.mxu0 0.0
        %835 = vmatpush.msra.mxu0 0.0
        %836 = vmatpush.msra.mxu0 0.0
        %837 = vmatpush.msra.mxu0 0.0
        %838 = vmatpush.msra.mxu0 0.0
        %839 = vmatpush.msra.mxu0 0.0
        %840 = vmatpush.msra.mxu0 0.0
        %841 = vmatpush.msra.mxu0 0.0
        %842 = vmatpush.msra.mxu0 0.0
        %843 = vmatpush.msra.mxu0 %v828
        %844 = vmatpush.msra.mxu0 %v827
        %845 = vmatmul.f32.gmra.mxu0 %v743
        %v846 = vpop.f32.mrf.mxu0
        %v847 = vadd.f32 0.0, %v846
        %848 = vmatmul.f32.gmra.mxu0 %v746
        %v849 = vpop.f32.mrf.mxu0
        %v850 = vadd.f32 0.0, %v849
        %851 = vdwg.mxu0
        %v852 = vsub.f32 %v799, %v822
        %v853 = vsub.f32 %v802, %v825
        %v854 = vsub.f32 %v847, %v799
        %v855 = vsub.f32 %v850, %v802
        %v856 = vsub.f32 %v854, %v822
        %v857 = vsub.f32 %v855, %v825
        %858 = vst.msk [vmem:[%s400 + $0x10] sm:$0xff] %vm446, %v852
        %859 = vst.msk [vmem:[%s400 + $0x18] sm:$0xff] %vm446, %v853
        %860 = vst.msk [vmem:[%s405 + $0x10] sm:$0xff] %vm446, %v856
        %861 = vst.msk [vmem:[%s405 + $0x18] sm:$0xff] %vm446, %v857
        %862 = vmatpush.msra.mxu0 0.0
        %863 = vmatpush.msra.mxu0 0.0
        %864 = vmatpush.msra.mxu0 0.0
        %865 = vmatpush.msra.mxu0 0.0
        %866 = vmatpush.msra.mxu0 0.0
        %867 = vmatpush.msra.mxu0 0.0
        %868 = vmatpush.msra.mxu0 0.0
        %869 = vmatpush.msra.mxu0 0.0
        %870 = vmatpush.msra.mxu0 0.0
        %871 = vmatpush.msra.mxu0 0.0
        %872 = vmatpush.msra.mxu0 0.0
        %873 = vmatpush.msra.mxu0 0.0
        %874 = vmatpush.msra.mxu0 0.0
        %875 = vmatpush.msra.mxu0 0.0
        %876 = vmatpush.msra.mxu0 %v657
        %877 = vmatpush.msra.mxu0 %v656
        %878 = vmatmul.f32.gmra.mxu0 %v681
        %v879 = vpop.f32.mrf.mxu0
        %v880 = vadd.f32 0.0, %v879
        %881 = vmatmul.f32.gmra.mxu0 %v684
        %v882 = vpop.f32.mrf.mxu0
        %v883 = vadd.f32 0.0, %v882
        %884 = vdwg.mxu0
        %885 = vmatpush.msra.mxu0 0.0
        %886 = vmatpush.msra.mxu0 0.0
        %887 = vmatpush.msra.mxu0 0.0
        %888 = vmatpush.msra.mxu0 0.0
        %889 = vmatpush.msra.mxu0 0.0
        %890 = vmatpush.msra.mxu0 0.0
        %891 = vmatpush.msra.mxu0 0.0
        %892 = vmatpush.msra.mxu0 0.0
        %893 = vmatpush.msra.mxu0 0.0
        %894 = vmatpush.msra.mxu0 0.0
        %895 = vmatpush.msra.mxu0 0.0
        %896 = vmatpush.msra.mxu0 0.0
        %897 = vmatpush.msra.mxu0 0.0
        %898 = vmatpush.msra.mxu0 0.0
        %899 = vmatpush.msra.mxu0 %v673
        %900 = vmatpush.msra.mxu0 %v672
        %901 = vmatmul.f32.gmra.mxu0 %v710
        %v902 = vpop.f32.mrf.mxu0
        %v903 = vadd.f32 0.0, %v902
        %904 = vmatmul.f32.gmra.mxu0 %v713
        %v905 = vpop.f32.mrf.mxu0
        %v906 = vadd.f32 0.0, %v905
        %907 = vdwg.mxu0
        %v908 = vadd.f32 %v656, %v672
        %v909 = vadd.f32 %v657, %v673
        %910 = vmatpush.msra.mxu0 0.0
        %911 = vmatpush.msra.mxu0 0.0
        %912 = vmatpush.msra.mxu0 0.0
        %913 = vmatpush.msra.mxu0 0.0
        %914 = vmatpush.msra.mxu0 0.0
        %915 = vmatpush.msra.mxu0 0.0
        %916 = vmatpush.msra.mxu0 0.0
        %917 = vmatpush.msra.mxu0 0.0
        %918 = vmatpush.msra.mxu0 0.0
        %919 = vmatpush.msra.mxu0 0.0
        %920 = vmatpush.msra.mxu0 0.0
        %921 = vmatpush.msra.mxu0 0.0
        %922 = vmatpush.msra.mxu0 0.0
        %923 = vmatpush.msra.mxu0 0.0
        %924 = vmatpush.msra.mxu0 %v909
        %925 = vmatpush.msra.mxu0 %v908
        %926 = vmatmul.f32.gmra.mxu0 %v743
        %v927 = vpop.f32.mrf.mxu0
        %v928 = vadd.f32 0.0, %v927
        %929 = vmatmul.f32.gmra.mxu0 %v746
        %v930 = vpop.f32.mrf.mxu0
        %v931 = vadd.f32 0.0, %v930
        %932 = vdwg.mxu0
        %v933 = vsub.f32 %v880, %v903
        %v934 = vsub.f32 %v883, %v906
        %v935 = vsub.f32 %v928, %v880
        %v936 = vsub.f32 %v931, %v883
        %v937 = vsub.f32 %v935, %v903
        %v938 = vsub.f32 %v936, %v906
        %939 = vst.msk [vmem:[%s400 + $0x20] sm:$0xff] %vm446, %v933
        %940 = vst.msk [vmem:[%s400 + $0x28] sm:$0xff] %vm446, %v934
        %941 = vst.msk [vmem:[%s405 + $0x20] sm:$0xff] %vm446, %v937
        %942 = vst.msk [vmem:[%s405 + $0x28] sm:$0xff] %vm446, %v938
        %943 = vmatpush.msra.mxu0 0.0
        %944 = vmatpush.msra.mxu0 0.0
        %945 = vmatpush.msra.mxu0 0.0
        %946 = vmatpush.msra.mxu0 0.0
        %947 = vmatpush.msra.mxu0 0.0
        %948 = vmatpush.msra.mxu0 0.0
        %949 = vmatpush.msra.mxu0 0.0
        %950 = vmatpush.msra.mxu0 0.0
        %951 = vmatpush.msra.mxu0 0.0
        %952 = vmatpush.msra.mxu0 0.0
        %953 = vmatpush.msra.mxu0 0.0
        %954 = vmatpush.msra.mxu0 0.0
        %955 = vmatpush.msra.mxu0 0.0
        %956 = vmatpush.msra.mxu0 0.0
        %957 = vmatpush.msra.mxu0 %v659
        %958 = vmatpush.msra.mxu0 %v658
        %959 = vmatmul.f32.gmra.mxu0 %v681
        %v960 = vpop.f32.mrf.mxu0
        %v961 = vadd.f32 0.0, %v960
        %962 = vmatmul.f32.gmra.mxu0 %v684
        %v963 = vpop.f32.mrf.mxu0
        %v964 = vadd.f32 0.0, %v963
        %965 = vdwg.mxu0
        %966 = vmatpush.msra.mxu0 0.0
        %967 = vmatpush.msra.mxu0 0.0
        %968 = vmatpush.msra.mxu0 0.0
        %969 = vmatpush.msra.mxu0 0.0
        %970 = vmatpush.msra.mxu0 0.0
        %971 = vmatpush.msra.mxu0 0.0
        %972 = vmatpush.msra.mxu0 0.0
        %973 = vmatpush.msra.mxu0 0.0
        %974 = vmatpush.msra.mxu0 0.0
        %975 = vmatpush.msra.mxu0 0.0
        %976 = vmatpush.msra.mxu0 0.0
        %977 = vmatpush.msra.mxu0 0.0
        %978 = vmatpush.msra.mxu0 0.0
        %979 = vmatpush.msra.mxu0 0.0
        %980 = vmatpush.msra.mxu0 %v675
        %981 = vmatpush.msra.mxu0 %v674
        %982 = vmatmul.f32.gmra.mxu0 %v710
        %v983 = vpop.f32.mrf.mxu0
        %v984 = vadd.f32 0.0, %v983
        %985 = vmatmul.f32.gmra.mxu0 %v713
        %v986 = vpop.f32.mrf.mxu0
        %v987 = vadd.f32 0.0, %v986
        %988 = vdwg.mxu0
        %v989 = vadd.f32 %v658, %v674
        %v990 = vadd.f32 %v659, %v675
        %991 = vmatpush.msra.mxu0 0.0
        %992 = vmatpush.msra.mxu0 0.0
        %993 = vmatpush.msra.mxu0 0.0
        %994 = vmatpush.msra.mxu0 0.0
        %995 = vmatpush.msra.mxu0 0.0
        %996 = vmatpush.msra.mxu0 0.0
        %997 = vmatpush.msra.mxu0 0.0
        %998 = vmatpush.msra.mxu0 0.0
        %999 = vmatpush.msra.mxu0 0.0
        %1000 = vmatpush.msra.mxu0 0.0
        %1001 = vmatpush.msra.mxu0 0.0
        %1002 = vmatpush.msra.mxu0 0.0
        %1003 = vmatpush.msra.mxu0 0.0
        %1004 = vmatpush.msra.mxu0 0.0
        %1005 = vmatpush.msra.mxu0 %v990
        %1006 = vmatpush.msra.mxu0 %v989
        %1007 = vmatmul.f32.gmra.mxu0 %v743
        %v1008 = vpop.f32.mrf.mxu0
        %v1009 = vadd.f32 0.0, %v1008
        %1010 = vmatmul.f32.gmra.mxu0 %v746
        %v1011 = vpop.f32.mrf.mxu0
        %v1012 = vadd.f32 0.0, %v1011
        %1013 = vdwg.mxu0
        %v1014 = vsub.f32 %v961, %v984
        %v1015 = vsub.f32 %v964, %v987
        %v1016 = vsub.f32 %v1009, %v961
        %v1017 = vsub.f32 %v1012, %v964
        %v1018 = vsub.f32 %v1016, %v984
        %v1019 = vsub.f32 %v1017, %v987
        %1020 = vst.msk [vmem:[%s400 + $0x30] sm:$0xff] %vm446, %v1014
        %1021 = vst.msk [vmem:[%s400 + $0x38] sm:$0xff] %vm446, %v1015
        %1022 = vst.msk [vmem:[%s405 + $0x30] sm:$0xff] %vm446, %v1018
        %1023 = vst.msk [vmem:[%s405 + $0x38] sm:$0xff] %vm446, %v1019
        %p1024 = scmp.lt.s32.totalorder %s23, 1
        %s1025 = scalar_select %p1024, %s23, 1
        %s1026 = smul.addr %s1025, 8
        %s1027 = smul.addr %s1026, 8
        %s1028 = scalar_lea.vmem %s7, %s1027
        %p1029 = scmp.lt.s32.totalorder %s23, 1
        %s1030 = scalar_select %p1029, %s23, 1
        %s1031 = smul.addr %s1030, 8
        %s1032 = smul.addr %s1031, 8
        %s1033 = scalar_lea.vmem %s8, %s1032
        // Predicated region
        $region65: #{varnet_forward.13} parent=47 // pred_check
          %p1034 = pneg %p198
        $region66: #{varnet_forward.13} parent=47 // pred_check_branch
          %1036 = sbr.rel (%p1034) target = $region68
        $region67: #{varnet_forward.13} parent=47 // pred_region
          _
        $region68: #{varnet_forward.13} parent=47 // pred_fallthru
          _
        // Predicated region
        $region69: #{varnet_forward.13} parent=47 // pred_check
          %p1037 = pneg %p224
        $region70: #{varnet_forward.13} parent=47 // pred_check_branch
          %1039 = sbr.rel (%p1037) target = $region72
        $region71: #{varnet_forward.13} parent=47 // pred_region
          _
        $region72: #{varnet_forward.13} parent=47 // pred_fallthru
          _
      $region48: #{varnet_forward.13} parent=5 // pred_fallthru
        _
      %p1040 = scmp.le.s32.totalorder 2, %s18
      // Predicated region
      $region73: #{varnet_forward.13} parent=5 // pred_check
        %p1041 = pneg %p1040
      $region74: #{varnet_forward.13} parent=5 // pred_check_branch
        %1043 = sbr.rel (%p1041) target = $region76
      $region75: #{varnet_forward.13} parent=5 // pred_region
        %s1044 = ssub.s32 %s18, 2
        // Predicated region
        $region77: #{varnet_forward.13} parent=75 // pred_check
          %p1045 = pneg %p204
        $region78: #{varnet_forward.13} parent=75 // pred_check_branch
          %1047 = sbr.rel (%p1045) target = $region80
        $region79: #{varnet_forward.13} parent=75 // pred_region
          %p1048 = scmp.lt.s32.totalorder %s24, 1
          %s1049 = scalar_select %p1048, %s24, 1
          %s1050 = smul.addr %s1049, 8
          %s1051 = smul.addr %s1050, 8
          %s1052 = scalar_lea.vmem %s7, %s1051
        $region80: #{varnet_forward.13} parent=75 // pred_fallthru
          _
        // Predicated region
        $region81: #{varnet_forward.13} parent=75 // pred_check
          %p1053 = pneg %p230
        $region82: #{varnet_forward.13} parent=75 // pred_check_branch
          %1055 = sbr.rel (%p1053) target = $region84
        $region83: #{varnet_forward.13} parent=75 // pred_region
          %p1056 = scmp.lt.s32.totalorder %s24, 1
          %s1057 = scalar_select %p1056, %s24, 1
          %s1058 = smul.addr %s1057, 8
          %s1059 = smul.addr %s1058, 8
          %s1060 = scalar_lea.vmem %s8, %s1059
        $region84: #{varnet_forward.13} parent=75 // pred_fallthru
          _
      $region76: #{varnet_forward.13} parent=5 // pred_fallthru
        _
    $region6: #{varnet_forward.13} parent=1 // loop_footer
      %s22 = sadd.s32 1, %s18
    $region7: #{varnet_forward.13} parent=1 // loop_footer_branch
      %17 = sbr.rel target = $region3
    $region8: #{varnet_forward.13} parent=1 // loop_exit
      _
    %1061 = vsyncpa [#allocation3], 1
    %s1062 = scalar_lea.sflag [#allocation3], 1
    %1063 = vsyncpa %s1062, 1
    %1064 = vsyncpa [#allocation5], 1
    %1065 = vsyncpa [#allocation8], 1

// kernel: varnet_forward.14
$region0: #{varnet_forward.14}
  #allocation0 [shape = 'u32[]', space=smem, size = 0x4, offset = 0x4, fixed_abs, tag = 'smem constant byte address 0x4 - core index']
  #allocation1 [shape = 'u32[72,128]{1,0:T(1,128)}', space=vmem, size = 0x9000, scoped, tag = 'internal scratch']
  %s0 = inlined_call_operand.vmem [shape: f32[2048,18], index: 0, kind: input, shape index: {}]
  %s1 = inlined_call_operand.vmem [shape: f32[18,8], index: 1, kind: input, shape index: {}]
  %s2 = inlined_call_operand.vmem [shape: f32[1,8], index: 2, kind: input, shape index: {}]
  %s3 = inlined_call_operand.vmem [shape: f32[2048,8], index: 3, kind: output, shape index: {}]
  %s4 = sld [smem:[#allocation0]]
  $region45: #{varnet_forward.14} parent=0
    _
  %s6 = ssub.s32 1, %s4
  %s7 = scalar_select 0, %s6, %s4
  loop: start=0, step=1, limit=6
  $region2: #{varnet_forward.14} parent=0 // loop_pre_header
    _
  $region3: #{varnet_forward.14} parent=0 // loop_header
    %s9 = sphi 0, %s13
    %p10 = scmp.ge.s32.totalorder %s9, 6
    %s19 = sphi 0, %s21
    %s22 = sphi 0, %s19
    %s23 = sphi 0, %s22
    %s39 = sphi 0, %s23
    %s43 = sphi 0, %s43
    %s45 = sphi 0, %s43
    %s46 = sphi 0, %s45
    %s60 = sphi 0, %s46
    %s64 = sphi 0, %s64
    %s66 = sphi 0, %s64
    %s67 = sphi 0, %s66
    %s81 = sphi 0, %s67
    %s87 = sphi 0, %s89
    %s90 = sphi 0, %s87
    %s91 = sphi 0, %s90
    %s107 = sphi 0, %s91
  $region4: #{varnet_forward.14} parent=0 // loop_header_branch
    %12 = sbr.rel (%p10) target = $region8
  $region5: #{varnet_forward.14} parent=0 // loop_body
    %s14 = ssub.s32 %s9, 1
    %s15 = ssub.s32 %s9, 2
    %s16 = sadd.s32 %s9, 1
    %s17 = ssub.s32 %s9, %s16
    %p18 = scmp.eq.s32.totalorder %s17, 0
    %s20 = sadd.s32 %s19, 1
    %s21 = scalar_select %p18, %s19, %s20
    %p24 = pneg %p18
    %p25 = scmp.eq.s32.totalorder %s9, 3
    %p26 = por %p24, %p25
    %p27 = scmp.ne.s32.totalorder %s19, %s22
    %p28 = scmp.eq.s32.totalorder %s9, 0
    %p29 = por %p27, %p28
    %p30 = scmp.ne.s32.totalorder %s19, %s22
    %p31 = scmp.eq.s32.totalorder %s14, 3
    %p32 = por %p30, %p31
    %p33 = scmp.ne.s32.totalorder %s22, %s23
    %p34 = scmp.eq.s32.totalorder %s14, 0
    %p35 = por %p33, %p34
    %p36 = scmp.ne.s32.totalorder %s22, %s23
    %p37 = scmp.eq.s32.totalorder %s15, 3
    %p38 = por %p36, %p37
    %p40 = scmp.ne.s32.totalorder %s23, %s39
    %p41 = scmp.eq.s32.totalorder %s15, 0
    %p42 = por %p40, %p41
    %s44 = sadd.s32 %s43, 1
    %p47 = scmp.eq.s32.totalorder %s9, 3
    %p48 = scmp.ne.s32.totalorder %s43, %s45
    %p49 = scmp.eq.s32.totalorder %s9, 0
    %p50 = por %p48, %p49
    %p51 = scmp.ne.s32.totalorder %s43, %s45
    %p52 = scmp.eq.s32.totalorder %s14, 3
    %p53 = por %p51, %p52
    %p54 = scmp.ne.s32.totalorder %s45, %s46
    %p55 = scmp.eq.s32.totalorder %s14, 0
    %p56 = por %p54, %p55
    %p57 = scmp.ne.s32.totalorder %s45, %s46
    %p58 = scmp.eq.s32.totalorder %s15, 3
    %p59 = por %p57, %p58
    %p61 = scmp.ne.s32.totalorder %s46, %s60
    %p62 = scmp.eq.s32.totalorder %s15, 0
    %p63 = por %p61, %p62
    %s65 = sadd.s32 %s64, 1
    %p68 = scmp.eq.s32.totalorder %s9, 3
    %p69 = scmp.ne.s32.totalorder %s64, %s66
    %p70 = scmp.eq.s32.totalorder %s9, 0
    %p71 = por %p69, %p70
    %p72 = scmp.ne.s32.totalorder %s64, %s66
    %p73 = scmp.eq.s32.totalorder %s14, 3
    %p74 = por %p72, %p73
    %p75 = scmp.ne.s32.totalorder %s66, %s67
    %p76 = scmp.eq.s32.totalorder %s14, 0
    %p77 = por %p75, %p76
    %p78 = scmp.ne.s32.totalorder %s66, %s67
    %p79 = scmp.eq.s32.totalorder %s15, 3
    %p80 = por %p78, %p79
    %p82 = scmp.ne.s32.totalorder %s67, %s81
    %p83 = scmp.eq.s32.totalorder %s15, 0
    %p84 = por %p82, %p83
    %s85 = ssub.s32 %s9, %s16
    %p86 = scmp.eq.s32.totalorder %s85, 0
    %s88 = sadd.s32 %s87, 1
    %s89 = scalar_select %p86, %s87, %s88
    %p92 = pneg %p86
    %p93 = scmp.eq.s32.totalorder %s9, 3
    %p94 = por %p92, %p93
    %p95 = scmp.ne.s32.totalorder %s87, %s90
    %p96 = scmp.eq.s32.totalorder %s9, 0
    %p97 = por %p95, %p96
    %p98 = scmp.ne.s32.totalorder %s87, %s90
    %p99 = scmp.eq.s32.totalorder %s14, 3
    %p100 = por %p98, %p99
    %p101 = scmp.ne.s32.totalorder %s90, %s91
    %p102 = scmp.eq.s32.totalorder %s14, 0
    %p103 = por %p101, %p102
    %p104 = scmp.ne.s32.totalorder %s90, %s91
    %p105 = scmp.eq.s32.totalorder %s15, 3
    %p106 = por %p104, %p105
    %p108 = scmp.ne.s32.totalorder %s91, %s107
    %p109 = scmp.eq.s32.totalorder %s15, 0
    %p110 = por %p108, %p109
    %p111 = scmp.le.s32.totalorder 1, %s9
    %p112 = scmp.lt.s32.totalorder %s9, 5
    %p113 = pnand %p111, %p112
    %p114 = pneg %p113
    // Predicated region
    $region9: #{varnet_forward.14} parent=5 // pred_check
      _
    $region10: #{varnet_forward.14} parent=5 // pred_check_branch
      %116 = sbr.rel (%p113) target = $region12
    $region11: #{varnet_forward.14} parent=5 // pred_region
      %s117 = ssub.s32 %s9, 1
      // Predicated region
      $region13: #{varnet_forward.14} parent=11 // pred_check
        %p118 = pneg %p56
      $region14: #{varnet_forward.14} parent=11 // pred_check_branch
        %120 = sbr.rel (%p118) target = $region16
      $region15: #{varnet_forward.14} parent=11 // pred_region
        _
      $region16: #{varnet_forward.14} parent=11 // pred_fallthru
        _
      // Predicated region
      $region17: #{varnet_forward.14} parent=11 // pred_check
        %p121 = pneg %p77
      $region18: #{varnet_forward.14} parent=11 // pred_check_branch
        %123 = sbr.rel (%p121) target = $region20
      $region19: #{varnet_forward.14} parent=11 // pred_region
        _
      $region20: #{varnet_forward.14} parent=11 // pred_fallthru
        _
    $region12: #{varnet_forward.14} parent=5 // pred_fallthru
      _
    %p124 = scmp.lt.s32.totalorder %s9, 4
    // Predicated region
    $region21: #{varnet_forward.14} parent=5 // pred_check
      %p125 = pneg %p124
    $region22: #{varnet_forward.14} parent=5 // pred_check_branch
      %127 = sbr.rel (%p125) target = $region24
    $region23: #{varnet_forward.14} parent=5 // pred_region
      // Predicated region
      $region25: #{varnet_forward.14} parent=23 // pred_check
        %p128 = pneg %p29
      $region26: #{varnet_forward.14} parent=23 // pred_check_branch
        %130 = sbr.rel (%p128) target = $region28
      $region27: #{varnet_forward.14} parent=23 // pred_region
        %s131 = smul.u32 64, %s9
        %p132 = scmp.lt.s32.totalorder %s131, 255
        %s133 = scalar_select %p132, %s131, 255
        %s134 = smul.addr %s133, 8
        %s135 = scalar_lea.vmem %s0, %s134
        %s136 = smul.u32 64, %s9
      $region28: #{varnet_forward.14} parent=23 // pred_fallthru
        _
    $region24: #{varnet_forward.14} parent=5 // pred_fallthru
      _
    %p137 = scmp.le.s32.totalorder 1, %s9
    %p138 = scmp.lt.s32.totalorder %s9, 5
    %p139 = pnand %p137, %p138
    %p140 = pneg %p139
    // Predicated region
    $region29: #{varnet_forward.14} parent=5 // pred_check
      _
    $region30: #{varnet_forward.14} parent=5 // pred_check_branch
      %142 = sbr.rel (%p139) target = $region32
    $region31: #{varnet_forward.14} parent=5 // pred_region
      %s143 = ssub.s32 %s9, 1
      %s144 = smul.u32 64, %s14
      %p145 = scmp.lt.s32.totalorder %s144, 255
      %s146 = scalar_select %p145, %s144, 255
      %s147 = smul.addr %s146, 8
      %s148 = scalar_lea.vmem %s0, %s147
      %p149 = pneg %p35
      %p150 = pneg %p32
      %p151 = pneg %p56
      %p152 = pneg %p53
      %p153 = pneg %p77
      %p154 = pneg %p74
      %p155 = pneg %p103
      %p156 = pneg %p100
      %s157 = smul.u32 64, %s14
      %p158 = scmp.lt.s32.totalorder %s157, 255
      %s159 = scalar_select %p158, %s157, 255
      %s160 = smul.addr %s159, 8
      %s161 = scalar_lea.vmem %s3, %s160
      %s162 = smul.u32 64, %s14
      %p163 = scmp.lt.s32.totalorder %s162, 255
      %s164 = scalar_select %p163, %s162, 255
      %s165 = smul.addr %s164, 8
      %s166 = scalar_lea.vmem %s0, %s165
      %s167 = smul.u32 64, %s14
      %s168 = smul.u32 64, %s14
      %p169 = scmp.lt.s32.totalorder %s168, 255
      %s170 = scalar_select %p169, %s168, 255
      %s171 = smul.addr %s170, 8
      %s172 = scalar_lea.vmem %s3, %s171
      %s173 = smul.u32 64, %s14
      %v174 = vld [vmem:[%s166] sm:$0xff]
      %v175 = vld [vmem:[%s166 + $0x8] sm:$0xff]
      %v176 = vld [vmem:[%s166 + $0x10] sm:$0xff]
      %v177 = vld [vmem:[%s166 + $0x18] sm:$0xff]
      %v178 = vld [vmem:[%s166 + $0x20] sm:$0xff]
      %v179 = vld [vmem:[%s166 + $0x28] sm:$0xff]
      %v180 = vld [vmem:[%s166 + $0x30] sm:$0xff]
      %v181 = vld [vmem:[%s166 + $0x38] sm:$0xff]
      %v182 = vld [vmem:[%s166 + $0x40] sm:$0xff]
      %v183 = vld [vmem:[%s166 + $0x48] sm:$0xff]
      %v184 = vld [vmem:[%s166 + $0x50] sm:$0xff]
      %v185 = vld [vmem:[%s166 + $0x58] sm:$0xff]
      %v186 = vld [vmem:[%s166 + $0x60] sm:$0xff]
      %v187 = vld [vmem:[%s166 + $0x68] sm:$0xff]
      %v188 = vld [vmem:[%s166 + $0x70] sm:$0xff]
      %v189 = vld [vmem:[%s166 + $0x78] sm:$0xff]
      %v190 = vld [vmem:[%s166 + $0x80] sm:$0xff]
      %v191 = vld [vmem:[%s166 + $0x88] sm:$0xff]
      %v192 = vld [vmem:[%s166 + $0x90] sm:$0xff]
      %v193 = vld [vmem:[%s166 + $0x98] sm:$0xff]
      %v194 = vld [vmem:[%s166 + $0xa0] sm:$0xff]
      %v195 = vld [vmem:[%s166 + $0xa8] sm:$0xff]
      %v196 = vld [vmem:[%s166 + $0xb0] sm:$0xff]
      %v197 = vld [vmem:[%s166 + $0xb8] sm:$0xff]
      %v198 = vld [vmem:[%s166 + $0xc0] sm:$0xff]
      %v199 = vld [vmem:[%s166 + $0xc8] sm:$0xff]
      %v200 = vld [vmem:[%s166 + $0xd0] sm:$0xff]
      %v201 = vld [vmem:[%s166 + $0xd8] sm:$0xff]
      %v202 = vld [vmem:[%s166 + $0xe0] sm:$0xff]
      %v203 = vld [vmem:[%s166 + $0xe8] sm:$0xff]
      %v204 = vld [vmem:[%s166 + $0xf0] sm:$0xff]
      %v205 = vld [vmem:[%s166 + $0xf8] sm:$0xff]
      %v206 = vld [vmem:[%s166 + $0x100] sm:$0xff]
      %v207 = vld [vmem:[%s166 + $0x108] sm:$0xff]
      %v208 = vld [vmem:[%s166 + $0x110] sm:$0xff]
      %v209 = vld [vmem:[%s166 + $0x118] sm:$0xff]
      %v210 = vld [vmem:[%s166 + $0x120] sm:$0xff]
      %v211 = vld [vmem:[%s166 + $0x128] sm:$0xff]
      %v212 = vld [vmem:[%s166 + $0x130] sm:$0xff]
      %v213 = vld [vmem:[%s166 + $0x138] sm:$0xff]
      %v214 = vld [vmem:[%s166 + $0x140] sm:$0xff]
      %v215 = vld [vmem:[%s166 + $0x148] sm:$0xff]
      %v216 = vld [vmem:[%s166 + $0x150] sm:$0xff]
      %v217 = vld [vmem:[%s166 + $0x158] sm:$0xff]
      %v218 = vld [vmem:[%s166 + $0x160] sm:$0xff]
      %v219 = vld [vmem:[%s166 + $0x168] sm:$0xff]
      %v220 = vld [vmem:[%s166 + $0x170] sm:$0xff]
      %v221 = vld [vmem:[%s166 + $0x178] sm:$0xff]
      %v222 = vld [vmem:[%s166 + $0x180] sm:$0xff]
      %v223 = vld [vmem:[%s166 + $0x188] sm:$0xff]
      %v224 = vld [vmem:[%s166 + $0x190] sm:$0xff]
      %v225 = vld [vmem:[%s166 + $0x198] sm:$0xff]
      %v226 = vld [vmem:[%s166 + $0x1a0] sm:$0xff]
      %v227 = vld [vmem:[%s166 + $0x1a8] sm:$0xff]
      %v228 = vld [vmem:[%s166 + $0x1b0] sm:$0xff]
      %v229 = vld [vmem:[%s166 + $0x1b8] sm:$0xff]
      %v230 = vld [vmem:[%s166 + $0x1c0] sm:$0xff]
      %v231 = vld [vmem:[%s166 + $0x1c8] sm:$0xff]
      %v232 = vld [vmem:[%s166 + $0x1d0] sm:$0xff]
      %v233 = vld [vmem:[%s166 + $0x1d8] sm:$0xff]
      %v234 = vld [vmem:[%s166 + $0x1e0] sm:$0xff]
      %v235 = vld [vmem:[%s166 + $0x1e8] sm:$0xff]
      %v236 = vld [vmem:[%s166 + $0x1f0] sm:$0xff]
      %v237 = vld [vmem:[%s166 + $0x1f8] sm:$0xff]
      %v238 = vld [vmem:[%s1] sm:$0xff]
      %v239 = vld [vmem:[%s1 + $0x8] sm:$0xff]
      %v240 = vld [vmem:[%s1 + $0x10] sm:$0x3]
      %v241 = vld [vmem:[%s2] sm:$0x1]
      %v243 = vperm.slane %v241, 0
      %vm245 = vcmask 146432
      %v247 = vsel %vm245, %v174, 0
      %v250 = vsel %vm245, %v175, 0
      %v253 = vsel %vm245, %v176, 0
      %v256 = vsel %vm245, %v177, 0
      %v259 = vsel %vm245, %v178, 0
      %v262 = vsel %vm245, %v179, 0
      %v265 = vsel %vm245, %v180, 0
      %v268 = vsel %vm245, %v181, 0
      %v271 = vsel %vm245, %v182, 0
      %v274 = vsel %vm245, %v183, 0
      %v277 = vsel %vm245, %v184, 0
      %v280 = vsel %vm245, %v185, 0
      %v283 = vsel %vm245, %v186, 0
      %v286 = vsel %vm245, %v187, 0
      %v289 = vsel %vm245, %v188, 0
      %v292 = vsel %vm245, %v189, 0
      %v295 = vsel %vm245, %v190, 0
      %v298 = vsel %vm245, %v191, 0
      %v301 = vsel %vm245, %v192, 0
      %v304 = vsel %vm245, %v193, 0
      %v307 = vsel %vm245, %v194, 0
      %v310 = vsel %vm245, %v195, 0
      %v313 = vsel %vm245, %v196, 0
      %v316 = vsel %vm245, %v197, 0
      %v319 = vsel %vm245, %v198, 0
      %v322 = vsel %vm245, %v199, 0
      %v325 = vsel %vm245, %v200, 0
      %v328 = vsel %vm245, %v201, 0
      %v331 = vsel %vm245, %v202, 0
      %v334 = vsel %vm245, %v203, 0
      %v337 = vsel %vm245, %v204, 0
      %v340 = vsel %vm245, %v205, 0
      %v343 = vsel %vm245, %v206, 0
      %v346 = vsel %vm245, %v207, 0
      %v349 = vsel %vm245, %v208, 0
      %v352 = vsel %vm245, %v209, 0
      %v355 = vsel %vm245, %v210, 0
      %v358 = vsel %vm245, %v211, 0
      %v361 = vsel %vm245, %v212, 0
      %v364 = vsel %vm245, %v213, 0
      %v367 = vsel %vm245, %v214, 0
      %v370 = vsel %vm245, %v215, 0
      %v373 = vsel %vm245, %v216, 0
      %v376 = vsel %vm245, %v217, 0
      %v379 = vsel %vm245, %v218, 0
      %v382 = vsel %vm245, %v219, 0
      %v385 = vsel %vm245, %v220, 0
      %v388 = vsel %vm245, %v221, 0
      %v391 = vsel %vm245, %v222, 0
      %v394 = vsel %vm245, %v223, 0
      %v397 = vsel %vm245, %v224, 0
      %v400 = vsel %vm245, %v225, 0
      %v403 = vsel %vm245, %v226, 0
      %v406 = vsel %vm245, %v227, 0
      %v409 = vsel %vm245, %v228, 0
      %v412 = vsel %vm245, %v229, 0
      %v415 = vsel %vm245, %v230, 0
      %v418 = vsel %vm245, %v231, 0
      %v421 = vsel %vm245, %v232, 0
      %v424 = vsel %vm245, %v233, 0
      %v427 = vsel %vm245, %v234, 0
      %v430 = vsel %vm245, %v235, 0
      %v433 = vsel %vm245, %v236, 0
      %v436 = vsel %vm245, %v237, 0
      %vm438 = vcmask 1041408
      %v440 = vsel %vm438, %v240, 0
      %442 = vmatpush.msra.mxu0 0.0
      %443 = vmatpush.msra.mxu0 0.0
      %444 = vmatpush.msra.mxu0 0.0
      %445 = vmatpush.msra.mxu0 0.0
      %446 = vmatpush.msra.mxu0 0.0
      %447 = vmatpush.msra.mxu0 0.0
      %448 = vmatpush.msra.mxu0 0.0
      %449 = vmatpush.msra.mxu0 0.0
      %450 = vmatpush.msra.mxu0 0.0
      %451 = vmatpush.msra.mxu0 0.0
      %452 = vmatpush.msra.mxu0 0.0
      %453 = vmatpush.msra.mxu0 0.0
      %454 = vmatpush.msra.mxu0 0.0
      %455 = vmatpush.msra.mxu0 %v440
      %456 = vmatpush.msra.mxu0 %v239
      %457 = vmatpush.msra.mxu0 %v238
      %458 = vmatmul.f32.gmra.mxu0 %v247
      %v459 = vpop.f32.mrf.mxu0
      %v460 = vadd.f32 %v243, %v459
      %461 = vmatmul.f32.gmra.mxu0 %v250
      %v462 = vpop.f32.mrf.mxu0
      %v463 = vadd.f32 %v243, %v462
      %464 = vmatmul.f32.gmra.mxu0 %v253
      %v465 = vpop.f32.mrf.mxu0
      %v466 = vadd.f32 %v243, %v465
      %467 = vmatmul.f32.gmra.mxu0 %v256
      %v468 = vpop.f32.mrf.mxu0
      %v469 = vadd.f32 %v243, %v468
      %470 = vmatmul.f32.gmra.mxu0 %v259
      %v471 = vpop.f32.mrf.mxu0
      %v472 = vadd.f32 %v243, %v471
      %473 = vmatmul.f32.gmra.mxu0 %v262
      %v474 = vpop.f32.mrf.mxu0
      %v475 = vadd.f32 %v243, %v474
      %476 = vmatmul.f32.gmra.mxu0 %v265
      %v477 = vpop.f32.mrf.mxu0
      %v478 = vadd.f32 %v243, %v477
      %479 = vmatmul.f32.gmra.mxu0 %v268
      %v480 = vpop.f32.mrf.mxu0
      %v481 = vadd.f32 %v243, %v480
      %482 = vmatmul.f32.gmra.mxu0 %v271
      %v483 = vpop.f32.mrf.mxu0
      %v484 = vadd.f32 %v243, %v483
      %485 = vmatmul.f32.gmra.mxu0 %v274
      %v486 = vpop.f32.mrf.mxu0
      %v487 = vadd.f32 %v243, %v486
      %488 = vmatmul.f32.gmra.mxu0 %v277
      %v489 = vpop.f32.mrf.mxu0
      %v490 = vadd.f32 %v243, %v489
      %491 = vmatmul.f32.gmra.mxu0 %v280
      %v492 = vpop.f32.mrf.mxu0
      %v493 = vadd.f32 %v243, %v492
      %494 = vmatmul.f32.gmra.mxu0 %v283
      %v495 = vpop.f32.mrf.mxu0
      %v496 = vadd.f32 %v243, %v495
      %497 = vmatmul.f32.gmra.mxu0 %v286
      %v498 = vpop.f32.mrf.mxu0
      %v499 = vadd.f32 %v243, %v498
      %500 = vmatmul.f32.gmra.mxu0 %v289
      %v501 = vpop.f32.mrf.mxu0
      %v502 = vadd.f32 %v243, %v501
      %503 = vmatmul.f32.gmra.mxu0 %v292
      %v504 = vpop.f32.mrf.mxu0
      %v505 = vadd.f32 %v243, %v504
      %506 = vmatmul.f32.gmra.mxu0 %v295
      %v507 = vpop.f32.mrf.mxu0
      %v508 = vadd.f32 %v243, %v507
      %509 = vmatmul.f32.gmra.mxu0 %v298
      %v510 = vpop.f32.mrf.mxu0
      %v511 = vadd.f32 %v243, %v510
      %512 = vmatmul.f32.gmra.mxu0 %v301
      %v513 = vpop.f32.mrf.mxu0
      %v514 = vadd.f32 %v243, %v513
      %515 = vmatmul.f32.gmra.mxu0 %v304
      %v516 = vpop.f32.mrf.mxu0
      %v517 = vadd.f32 %v243, %v516
      %518 = vmatmul.f32.gmra.mxu0 %v307
      %v519 = vpop.f32.mrf.mxu0
      %v520 = vadd.f32 %v243, %v519
      %521 = vmatmul.f32.gmra.mxu0 %v310
      %v522 = vpop.f32.mrf.mxu0
      %v523 = vadd.f32 %v243, %v522
      %524 = vmatmul.f32.gmra.mxu0 %v313
      %v525 = vpop.f32.mrf.mxu0
      %v526 = vadd.f32 %v243, %v525
      %527 = vmatmul.f32.gmra.mxu0 %v316
      %v528 = vpop.f32.mrf.mxu0
      %v529 = vadd.f32 %v243, %v528
      %530 = vmatmul.f32.gmra.mxu0 %v319
      %v531 = vpop.f32.mrf.mxu0
      %v532 = vadd.f32 %v243, %v531
      %533 = vmatmul.f32.gmra.mxu0 %v322
      %v534 = vpop.f32.mrf.mxu0
      %v535 = vadd.f32 %v243, %v534
      %536 = vmatmul.f32.gmra.mxu0 %v325
      %v537 = vpop.f32.mrf.mxu0
      %v538 = vadd.f32 %v243, %v537
      %539 = vmatmul.f32.gmra.mxu0 %v328
      %v540 = vpop.f32.mrf.mxu0
      %v541 = vadd.f32 %v243, %v540
      %542 = vmatmul.f32.gmra.mxu0 %v331
      %v543 = vpop.f32.mrf.mxu0
      %v544 = vadd.f32 %v243, %v543
      %545 = vmatmul.f32.gmra.mxu0 %v334
      %v546 = vpop.f32.mrf.mxu0
      %v547 = vadd.f32 %v243, %v546
      %548 = vmatmul.f32.gmra.mxu0 %v337
      %v549 = vpop.f32.mrf.mxu0
      %v550 = vadd.f32 %v243, %v549
      %551 = vmatmul.f32.gmra.mxu0 %v340
      %v552 = vpop.f32.mrf.mxu0
      %v553 = vadd.f32 %v243, %v552
      %554 = vmatmul.f32.gmra.mxu0 %v343
      %v555 = vpop.f32.mrf.mxu0
      %v556 = vadd.f32 %v243, %v555
      %557 = vmatmul.f32.gmra.mxu0 %v346
      %v558 = vpop.f32.mrf.mxu0
      %v559 = vadd.f32 %v243, %v558
      %560 = vmatmul.f32.gmra.mxu0 %v349
      %v561 = vpop.f32.mrf.mxu0
      %v562 = vadd.f32 %v243, %v561
      %563 = vmatmul.f32.gmra.mxu0 %v352
      %v564 = vpop.f32.mrf.mxu0
      %v565 = vadd.f32 %v243, %v564
      %566 = vmatmul.f32.gmra.mxu0 %v355
      %v567 = vpop.f32.mrf.mxu0
      %v568 = vadd.f32 %v243, %v567
      %569 = vmatmul.f32.gmra.mxu0 %v358
      %v570 = vpop.f32.mrf.mxu0
      %v571 = vadd.f32 %v243, %v570
      %572 = vmatmul.f32.gmra.mxu0 %v361
      %v573 = vpop.f32.mrf.mxu0
      %v574 = vadd.f32 %v243, %v573
      %575 = vmatmul.f32.gmra.mxu0 %v364
      %v576 = vpop.f32.mrf.mxu0
      %v577 = vadd.f32 %v243, %v576
      %578 = vmatmul.f32.gmra.mxu0 %v367
      %v579 = vpop.f32.mrf.mxu0
      %v580 = vadd.f32 %v243, %v579
      %581 = vmatmul.f32.gmra.mxu0 %v370
      %v582 = vpop.f32.mrf.mxu0
      %v583 = vadd.f32 %v243, %v582
      %584 = vmatmul.f32.gmra.mxu0 %v373
      %v585 = vpop.f32.mrf.mxu0
      %v586 = vadd.f32 %v243, %v585
      %587 = vmatmul.f32.gmra.mxu0 %v376
      %v588 = vpop.f32.mrf.mxu0
      %v589 = vadd.f32 %v243, %v588
      %590 = vmatmul.f32.gmra.mxu0 %v379
      %v591 = vpop.f32.mrf.mxu0
      %v592 = vadd.f32 %v243, %v591
      %593 = vmatmul.f32.gmra.mxu0 %v382
      %v594 = vpop.f32.mrf.mxu0
      %v595 = vadd.f32 %v243, %v594
      %596 = vmatmul.f32.gmra.mxu0 %v385
      %v597 = vpop.f32.mrf.mxu0
      %v598 = vadd.f32 %v243, %v597
      %599 = vmatmul.f32.gmra.mxu0 %v388
      %v600 = vpop.f32.mrf.mxu0
      %v601 = vadd.f32 %v243, %v600
      %602 = vmatmul.f32.gmra.mxu0 %v391
      %v603 = vpop.f32.mrf.mxu0
      %v604 = vadd.f32 %v243, %v603
      %605 = vmatmul.f32.gmra.mxu0 %v394
      %v606 = vpop.f32.mrf.mxu0
      %v607 = vadd.f32 %v243, %v606
      %608 = vmatmul.f32.gmra.mxu0 %v397
      %v609 = vpop.f32.mrf.mxu0
      %v610 = vadd.f32 %v243, %v609
      %611 = vmatmul.f32.gmra.mxu0 %v400
      %v612 = vpop.f32.mrf.mxu0
      %v613 = vadd.f32 %v243, %v612
      %614 = vmatmul.f32.gmra.mxu0 %v403
      %v615 = vpop.f32.mrf.mxu0
      %v616 = vadd.f32 %v243, %v615
      %617 = vmatmul.f32.gmra.mxu0 %v406
      %v618 = vpop.f32.mrf.mxu0
      %v619 = vadd.f32 %v243, %v618
      %620 = vmatmul.f32.gmra.mxu0 %v409
      %v621 = vpop.f32.mrf.mxu0
      %v622 = vadd.f32 %v243, %v621
      %623 = vmatmul.f32.gmra.mxu0 %v412
      %v624 = vpop.f32.mrf.mxu0
      %v625 = vadd.f32 %v243, %v624
      %626 = vmatmul.f32.gmra.mxu0 %v415
      %v627 = vpop.f32.mrf.mxu0
      %v628 = vadd.f32 %v243, %v627
      %629 = vmatmul.f32.gmra.mxu0 %v418
      %v630 = vpop.f32.mrf.mxu0
      %v631 = vadd.f32 %v243, %v630
      %632 = vmatmul.f32.gmra.mxu0 %v421
      %v633 = vpop.f32.mrf.mxu0
      %v634 = vadd.f32 %v243, %v633
      %635 = vmatmul.f32.gmra.mxu0 %v424
      %v636 = vpop.f32.mrf.mxu0
      %v637 = vadd.f32 %v243, %v636
      %638 = vmatmul.f32.gmra.mxu0 %v427
      %v639 = vpop.f32.mrf.mxu0
      %v640 = vadd.f32 %v243, %v639
      %641 = vmatmul.f32.gmra.mxu0 %v430
      %v642 = vpop.f32.mrf.mxu0
      %v643 = vadd.f32 %v243, %v642
      %644 = vmatmul.f32.gmra.mxu0 %v433
      %v645 = vpop.f32.mrf.mxu0
      %v646 = vadd.f32 %v243, %v645
      %647 = vmatmul.f32.gmra.mxu0 %v436
      %v648 = vpop.f32.mrf.mxu0
      %v649 = vadd.f32 %v243, %v648
      %650 = vdwg.mxu0
      %v651 = vmax.f32 %v460, 0.0
      %v652 = vmax.f32 %v463, 0.0
      %v653 = vmax.f32 %v466, 0.0
      %v654 = vmax.f32 %v469, 0.0
      %v655 = vmax.f32 %v472, 0.0
      %v656 = vmax.f32 %v475, 0.0
      %v657 = vmax.f32 %v478, 0.0
      %v658 = vmax.f32 %v481, 0.0
      %v659 = vmax.f32 %v484, 0.0
      %v660 = vmax.f32 %v487, 0.0
      %v661 = vmax.f32 %v490, 0.0
      %v662 = vmax.f32 %v493, 0.0
      %v663 = vmax.f32 %v496, 0.0
      %v664 = vmax.f32 %v499, 0.0
      %v665 = vmax.f32 %v502, 0.0
      %v666 = vmax.f32 %v505, 0.0
      %v667 = vmax.f32 %v508, 0.0
      %v668 = vmax.f32 %v511, 0.0
      %v669 = vmax.f32 %v514, 0.0
      %v670 = vmax.f32 %v517, 0.0
      %v671 = vmax.f32 %v520, 0.0
      %v672 = vmax.f32 %v523, 0.0
      %v673 = vmax.f32 %v526, 0.0
      %v674 = vmax.f32 %v529, 0.0
      %v675 = vmax.f32 %v532, 0.0
      %v676 = vmax.f32 %v535, 0.0
      %v677 = vmax.f32 %v538, 0.0
      %v678 = vmax.f32 %v541, 0.0
      %v679 = vmax.f32 %v544, 0.0
      %v680 = vmax.f32 %v547, 0.0
      %v681 = vmax.f32 %v550, 0.0
      %v682 = vmax.f32 %v553, 0.0
      %v683 = vmax.f32 %v556, 0.0
      %v684 = vmax.f32 %v559, 0.0
      %v685 = vmax.f32 %v562, 0.0
      %v686 = vmax.f32 %v565, 0.0
      %v687 = vmax.f32 %v568, 0.0
      %v688 = vmax.f32 %v571, 0.0
      %v689 = vmax.f32 %v574, 0.0
      %v690 = vmax.f32 %v577, 0.0
      %v691 = vmax.f32 %v580, 0.0
      %v692 = vmax.f32 %v583, 0.0
      %v693 = vmax.f32 %v586, 0.0
      %v694 = vmax.f32 %v589, 0.0
      %v695 = vmax.f32 %v592, 0.0
      %v696 = vmax.f32 %v595, 0.0
      %v697 = vmax.f32 %v598, 0.0
      %v698 = vmax.f32 %v601, 0.0
      %v699 = vmax.f32 %v604, 0.0
      %v700 = vmax.f32 %v607, 0.0
      %v701 = vmax.f32 %v610, 0.0
      %v702 = vmax.f32 %v613, 0.0
      %v703 = vmax.f32 %v616, 0.0
      %v704 = vmax.f32 %v619, 0.0
      %v705 = vmax.f32 %v622, 0.0
      %v706 = vmax.f32 %v625, 0.0
      %v707 = vmax.f32 %v628, 0.0
      %v708 = vmax.f32 %v631, 0.0
      %v709 = vmax.f32 %v634, 0.0
      %v710 = vmax.f32 %v637, 0.0
      %v711 = vmax.f32 %v640, 0.0
      %v712 = vmax.f32 %v643, 0.0
      %v713 = vmax.f32 %v646, 0.0
      %v714 = vmax.f32 %v649, 0.0
      %vm715 = vcmask 64512
      %716 = vst.msk [vmem:[%s172] sm:$0xff] %vm715, %v651
      %717 = vst.msk [vmem:[%s172 + $0x8] sm:$0xff] %vm715, %v652
      %718 = vst.msk [vmem:[%s172 + $0x10] sm:$0xff] %vm715, %v653
      %719 = vst.msk [vmem:[%s172 + $0x18] sm:$0xff] %vm715, %v654
      %720 = vst.msk [vmem:[%s172 + $0x20] sm:$0xff] %vm715, %v655
      %721 = vst.msk [vmem:[%s172 + $0x28] sm:$0xff] %vm715, %v656
      %722 = vst.msk [vmem:[%s172 + $0x30] sm:$0xff] %vm715, %v657
      %723 = vst.msk [vmem:[%s172 + $0x38] sm:$0xff] %vm715, %v658
      %724 = vst.msk [vmem:[%s172 + $0x40] sm:$0xff] %vm715, %v659
      %725 = vst.msk [vmem:[%s172 + $0x48] sm:$0xff] %vm715, %v660
      %726 = vst.msk [vmem:[%s172 + $0x50] sm:$0xff] %vm715, %v661
      %727 = vst.msk [vmem:[%s172 + $0x58] sm:$0xff] %vm715, %v662
      %728 = vst.msk [vmem:[%s172 + $0x60] sm:$0xff] %vm715, %v663
      %729 = vst.msk [vmem:[%s172 + $0x68] sm:$0xff] %vm715, %v664
      %730 = vst.msk [vmem:[%s172 + $0x70] sm:$0xff] %vm715, %v665
      %731 = vst.msk [vmem:[%s172 + $0x78] sm:$0xff] %vm715, %v666
      %732 = vst.msk [vmem:[%s172 + $0x80] sm:$0xff] %vm715, %v667
      %733 = vst.msk [vmem:[%s172 + $0x88] sm:$0xff] %vm715, %v668
      %734 = vst.msk [vmem:[%s172 + $0x90] sm:$0xff] %vm715, %v669
      %735 = vst.msk [vmem:[%s172 + $0x98] sm:$0xff] %vm715, %v670
      %736 = vst.msk [vmem:[%s172 + $0xa0] sm:$0xff] %vm715, %v671
      %737 = vst.msk [vmem:[%s172 + $0xa8] sm:$0xff] %vm715, %v672
      %738 = vst.msk [vmem:[%s172 + $0xb0] sm:$0xff] %vm715, %v673
      %739 = vst.msk [vmem:[%s172 + $0xb8] sm:$0xff] %vm715, %v674
      %740 = vst.msk [vmem:[%s172 + $0xc0] sm:$0xff] %vm715, %v675
      %741 = vst.msk [vmem:[%s172 + $0xc8] sm:$0xff] %vm715, %v676
      %742 = vst.msk [vmem:[%s172 + $0xd0] sm:$0xff] %vm715, %v677
      %743 = vst.msk [vmem:[%s172 + $0xd8] sm:$0xff] %vm715, %v678
      %744 = vst.msk [vmem:[%s172 + $0xe0] sm:$0xff] %vm715, %v679
      %745 = vst.msk [vmem:[%s172 + $0xe8] sm:$0xff] %vm715, %v680
      %746 = vst.msk [vmem:[%s172 + $0xf0] sm:$0xff] %vm715, %v681
      %747 = vst.msk [vmem:[%s172 + $0xf8] sm:$0xff] %vm715, %v682
      %748 = vst.msk [vmem:[%s172 + $0x100] sm:$0xff] %vm715, %v683
      %749 = vst.msk [vmem:[%s172 + $0x108] sm:$0xff] %vm715, %v684
      %750 = vst.msk [vmem:[%s172 + $0x110] sm:$0xff] %vm715, %v685
      %751 = vst.msk [vmem:[%s172 + $0x118] sm:$0xff] %vm715, %v686
      %752 = vst.msk [vmem:[%s172 + $0x120] sm:$0xff] %vm715, %v687
      %753 = vst.msk [vmem:[%s172 + $0x128] sm:$0xff] %vm715, %v688
      %754 = vst.msk [vmem:[%s172 + $0x130] sm:$0xff] %vm715, %v689
      %755 = vst.msk [vmem:[%s172 + $0x138] sm:$0xff] %vm715, %v690
      %756 = vst.msk [vmem:[%s172 + $0x140] sm:$0xff] %vm715, %v691
      %757 = vst.msk [vmem:[%s172 + $0x148] sm:$0xff] %vm715, %v692
      %758 = vst.msk [vmem:[%s172 + $0x150] sm:$0xff] %vm715, %v693
      %759 = vst.msk [vmem:[%s172 + $0x158] sm:$0xff] %vm715, %v694
      %760 = vst.msk [vmem:[%s172 + $0x160] sm:$0xff] %vm715, %v695
      %761 = vst.msk [vmem:[%s172 + $0x168] sm:$0xff] %vm715, %v696
      %762 = vst.msk [vmem:[%s172 + $0x170] sm:$0xff] %vm715, %v697
      %763 = vst.msk [vmem:[%s172 + $0x178] sm:$0xff] %vm715, %v698
      %764 = vst.msk [vmem:[%s172 + $0x180] sm:$0xff] %vm715, %v699
      %765 = vst.msk [vmem:[%s172 + $0x188] sm:$0xff] %vm715, %v700
      %766 = vst.msk [vmem:[%s172 + $0x190] sm:$0xff] %vm715, %v701
      %767 = vst.msk [vmem:[%s172 + $0x198] sm:$0xff] %vm715, %v702
      %768 = vst.msk [vmem:[%s172 + $0x1a0] sm:$0xff] %vm715, %v703
      %769 = vst.msk [vmem:[%s172 + $0x1a8] sm:$0xff] %vm715, %v704
      %770 = vst.msk [vmem:[%s172 + $0x1b0] sm:$0xff] %vm715, %v705
      %771 = vst.msk [vmem:[%s172 + $0x1b8] sm:$0xff] %vm715, %v706
      %772 = vst.msk [vmem:[%s172 + $0x1c0] sm:$0xff] %vm715, %v707
      %773 = vst.msk [vmem:[%s172 + $0x1c8] sm:$0xff] %vm715, %v708
      %774 = vst.msk [vmem:[%s172 + $0x1d0] sm:$0xff] %vm715, %v709
      %775 = vst.msk [vmem:[%s172 + $0x1d8] sm:$0xff] %vm715, %v710
      %776 = vst.msk [vmem:[%s172 + $0x1e0] sm:$0xff] %vm715, %v711
      %777 = vst.msk [vmem:[%s172 + $0x1e8] sm:$0xff] %vm715, %v712
      %778 = vst.msk [vmem:[%s172 + $0x1f0] sm:$0xff] %vm715, %v713
      %779 = vst.msk [vmem:[%s172 + $0x1f8] sm:$0xff] %vm715, %v714
      %s780 = smul.u32 64, %s14
      %p781 = scmp.lt.s32.totalorder %s780, 255
      %s782 = scalar_select %p781, %s780, 255
      %s783 = smul.addr %s782, 8
      %s784 = scalar_lea.vmem %s3, %s783
      // Predicated region
      $region33: #{varnet_forward.14} parent=31 // pred_check
        %p785 = pneg %p100
      $region34: #{varnet_forward.14} parent=31 // pred_check_branch
        %787 = sbr.rel (%p785) target = $region36
      $region35: #{varnet_forward.14} parent=31 // pred_region
        %s788 = smul.u32 64, %s14
      $region36: #{varnet_forward.14} parent=31 // pred_fallthru
        _
    $region32: #{varnet_forward.14} parent=5 // pred_fallthru
      _
    %p789 = scmp.le.s32.totalorder 2, %s9
    // Predicated region
    $region37: #{varnet_forward.14} parent=5 // pred_check
      %p790 = pneg %p789
    $region38: #{varnet_forward.14} parent=5 // pred_check_branch
      %792 = sbr.rel (%p790) target = $region40
    $region39: #{varnet_forward.14} parent=5 // pred_region
      %s793 = ssub.s32 %s9, 2
      // Predicated region
      $region41: #{varnet_forward.14} parent=39 // pred_check
        %p794 = pneg %p106
      $region42: #{varnet_forward.14} parent=39 // pred_check_branch
        %796 = sbr.rel (%p794) target = $region44
      $region43: #{varnet_forward.14} parent=39 // pred_region
        %s797 = smul.u32 64, %s15
        %p798 = scmp.lt.s32.totalorder %s797, 255
        %s799 = scalar_select %p798, %s797, 255
        %s800 = smul.addr %s799, 8
        %s801 = scalar_lea.vmem %s3, %s800
      $region44: #{varnet_forward.14} parent=39 // pred_fallthru
        _
    $region40: #{varnet_forward.14} parent=5 // pred_fallthru
      _
  $region6: #{varnet_forward.14} parent=0 // loop_footer
    %s13 = sadd.s32 1, %s9
  $region7: #{varnet_forward.14} parent=0 // loop_footer_branch
    %8 = sbr.rel target = $region3
  $region8: #{varnet_forward.14} parent=0 // loop_exit
    _

// kernel: varnet_forward.15
$region0: #{varnet_forward.15}
  #allocation0 [shape = 'u32[]', space=smem, size = 0x4, offset = 0x4, fixed_abs, tag = 'smem constant byte address 0x4 - core index']
  #allocation1 [shape = 'u32[72,128]{1,0:T(1,128)}', space=vmem, size = 0x9000, scoped, tag = 'internal scratch']
  %s0 = inlined_call_operand.vmem [shape: f32[2048,72], index: 0, kind: input, shape index: {}]
  %s1 = inlined_call_operand.vmem [shape: f32[72,2], index: 1, kind: input, shape index: {}]
  %s2 = inlined_call_operand.vmem [shape: f32[1,2], index: 2, kind: input, shape index: {}]
  %s3 = inlined_call_operand.vmem [shape: f32[2048,2], index: 3, kind: output, shape index: {}]
  %s4 = sld [smem:[#allocation0]]
  $region45: #{varnet_forward.15} parent=0
    _
  %s6 = ssub.s32 1, %s4
  %s7 = scalar_select 0, %s6, %s4
  loop: start=0, step=1, limit=6
  $region2: #{varnet_forward.15} parent=0 // loop_pre_header
    _
  $region3: #{varnet_forward.15} parent=0 // loop_header
    %s9 = sphi 0, %s13
    %p10 = scmp.ge.s32.totalorder %s9, 6
    %s19 = sphi 0, %s21
    %s22 = sphi 0, %s19
    %s23 = sphi 0, %s22
    %s39 = sphi 0, %s23
    %s43 = sphi 0, %s43
    %s45 = sphi 0, %s43
    %s46 = sphi 0, %s45
    %s60 = sphi 0, %s46
    %s64 = sphi 0, %s64
    %s66 = sphi 0, %s64
    %s67 = sphi 0, %s66
    %s81 = sphi 0, %s67
    %s87 = sphi 0, %s89
    %s90 = sphi 0, %s87
    %s91 = sphi 0, %s90
    %s107 = sphi 0, %s91
  $region4: #{varnet_forward.15} parent=0 // loop_header_branch
    %12 = sbr.rel (%p10) target = $region8
  $region5: #{varnet_forward.15} parent=0 // loop_body
    %s14 = ssub.s32 %s9, 1
    %s15 = ssub.s32 %s9, 2
    %s16 = sadd.s32 %s9, 1
    %s17 = ssub.s32 %s9, %s16
    %p18 = scmp.eq.s32.totalorder %s17, 0
    %s20 = sadd.s32 %s19, 1
    %s21 = scalar_select %p18, %s19, %s20
    %p24 = pneg %p18
    %p25 = scmp.eq.s32.totalorder %s9, 3
    %p26 = por %p24, %p25
    %p27 = scmp.ne.s32.totalorder %s19, %s22
    %p28 = scmp.eq.s32.totalorder %s9, 0
    %p29 = por %p27, %p28
    %p30 = scmp.ne.s32.totalorder %s19, %s22
    %p31 = scmp.eq.s32.totalorder %s14, 3
    %p32 = por %p30, %p31
    %p33 = scmp.ne.s32.totalorder %s22, %s23
    %p34 = scmp.eq.s32.totalorder %s14, 0
    %p35 = por %p33, %p34
    %p36 = scmp.ne.s32.totalorder %s22, %s23
    %p37 = scmp.eq.s32.totalorder %s15, 3
    %p38 = por %p36, %p37
    %p40 = scmp.ne.s32.totalorder %s23, %s39
    %p41 = scmp.eq.s32.totalorder %s15, 0
    %p42 = por %p40, %p41
    %s44 = sadd.s32 %s43, 1
    %p47 = scmp.eq.s32.totalorder %s9, 3
    %p48 = scmp.ne.s32.totalorder %s43, %s45
    %p49 = scmp.eq.s32.totalorder %s9, 0
    %p50 = por %p48, %p49
    %p51 = scmp.ne.s32.totalorder %s43, %s45
    %p52 = scmp.eq.s32.totalorder %s14, 3
    %p53 = por %p51, %p52
    %p54 = scmp.ne.s32.totalorder %s45, %s46
    %p55 = scmp.eq.s32.totalorder %s14, 0
    %p56 = por %p54, %p55
    %p57 = scmp.ne.s32.totalorder %s45, %s46
    %p58 = scmp.eq.s32.totalorder %s15, 3
    %p59 = por %p57, %p58
    %p61 = scmp.ne.s32.totalorder %s46, %s60
    %p62 = scmp.eq.s32.totalorder %s15, 0
    %p63 = por %p61, %p62
    %s65 = sadd.s32 %s64, 1
    %p68 = scmp.eq.s32.totalorder %s9, 3
    %p69 = scmp.ne.s32.totalorder %s64, %s66
    %p70 = scmp.eq.s32.totalorder %s9, 0
    %p71 = por %p69, %p70
    %p72 = scmp.ne.s32.totalorder %s64, %s66
    %p73 = scmp.eq.s32.totalorder %s14, 3
    %p74 = por %p72, %p73
    %p75 = scmp.ne.s32.totalorder %s66, %s67
    %p76 = scmp.eq.s32.totalorder %s14, 0
    %p77 = por %p75, %p76
    %p78 = scmp.ne.s32.totalorder %s66, %s67
    %p79 = scmp.eq.s32.totalorder %s15, 3
    %p80 = por %p78, %p79
    %p82 = scmp.ne.s32.totalorder %s67, %s81
    %p83 = scmp.eq.s32.totalorder %s15, 0
    %p84 = por %p82, %p83
    %s85 = ssub.s32 %s9, %s16
    %p86 = scmp.eq.s32.totalorder %s85, 0
    %s88 = sadd.s32 %s87, 1
    %s89 = scalar_select %p86, %s87, %s88
    %p92 = pneg %p86
    %p93 = scmp.eq.s32.totalorder %s9, 3
    %p94 = por %p92, %p93
    %p95 = scmp.ne.s32.totalorder %s87, %s90
    %p96 = scmp.eq.s32.totalorder %s9, 0
    %p97 = por %p95, %p96
    %p98 = scmp.ne.s32.totalorder %s87, %s90
    %p99 = scmp.eq.s32.totalorder %s14, 3
    %p100 = por %p98, %p99
    %p101 = scmp.ne.s32.totalorder %s90, %s91
    %p102 = scmp.eq.s32.totalorder %s14, 0
    %p103 = por %p101, %p102
    %p104 = scmp.ne.s32.totalorder %s90, %s91
    %p105 = scmp.eq.s32.totalorder %s15, 3
    %p106 = por %p104, %p105
    %p108 = scmp.ne.s32.totalorder %s91, %s107
    %p109 = scmp.eq.s32.totalorder %s15, 0
    %p110 = por %p108, %p109
    %p111 = scmp.le.s32.totalorder 1, %s9
    %p112 = scmp.lt.s32.totalorder %s9, 5
    %p113 = pnand %p111, %p112
    %p114 = pneg %p113
    // Predicated region
    $region9: #{varnet_forward.15} parent=5 // pred_check
      _
    $region10: #{varnet_forward.15} parent=5 // pred_check_branch
      %116 = sbr.rel (%p113) target = $region12
    $region11: #{varnet_forward.15} parent=5 // pred_region
      %s117 = ssub.s32 %s9, 1
      // Predicated region
      $region13: #{varnet_forward.15} parent=11 // pred_check
        %p118 = pneg %p56
      $region14: #{varnet_forward.15} parent=11 // pred_check_branch
        %120 = sbr.rel (%p118) target = $region16
      $region15: #{varnet_forward.15} parent=11 // pred_region
        _
      $region16: #{varnet_forward.15} parent=11 // pred_fallthru
        _
      // Predicated region
      $region17: #{varnet_forward.15} parent=11 // pred_check
        %p121 = pneg %p77
      $region18: #{varnet_forward.15} parent=11 // pred_check_branch
        %123 = sbr.rel (%p121) target = $region20
      $region19: #{varnet_forward.15} parent=11 // pred_region
        _
      $region20: #{varnet_forward.15} parent=11 // pred_fallthru
        _
    $region12: #{varnet_forward.15} parent=5 // pred_fallthru
      _
    %p124 = scmp.lt.s32.totalorder %s9, 4
    // Predicated region
    $region21: #{varnet_forward.15} parent=5 // pred_check
      %p125 = pneg %p124
    $region22: #{varnet_forward.15} parent=5 // pred_check_branch
      %127 = sbr.rel (%p125) target = $region24
    $region23: #{varnet_forward.15} parent=5 // pred_region
      // Predicated region
      $region25: #{varnet_forward.15} parent=23 // pred_check
        %p128 = pneg %p29
      $region26: #{varnet_forward.15} parent=23 // pred_check_branch
        %130 = sbr.rel (%p128) target = $region28
      $region27: #{varnet_forward.15} parent=23 // pred_region
        %s131 = smul.u32 64, %s9
        %p132 = scmp.lt.s32.totalorder %s131, 255
        %s133 = scalar_select %p132, %s131, 255
        %s134 = smul.addr %s133, 8
        %s135 = scalar_lea.vmem %s0, %s134
        %s136 = smul.u32 64, %s9
      $region28: #{varnet_forward.15} parent=23 // pred_fallthru
        _
    $region24: #{varnet_forward.15} parent=5 // pred_fallthru
      _
    %p137 = scmp.le.s32.totalorder 1, %s9
    %p138 = scmp.lt.s32.totalorder %s9, 5
    %p139 = pnand %p137, %p138
    %p140 = pneg %p139
    // Predicated region
    $region29: #{varnet_forward.15} parent=5 // pred_check
      _
    $region30: #{varnet_forward.15} parent=5 // pred_check_branch
      %142 = sbr.rel (%p139) target = $region32
    $region31: #{varnet_forward.15} parent=5 // pred_region
      %s143 = ssub.s32 %s9, 1
      %s144 = smul.u32 64, %s14
      %p145 = scmp.lt.s32.totalorder %s144, 255
      %s146 = scalar_select %p145, %s144, 255
      %s147 = smul.addr %s146, 8
      %s148 = scalar_lea.vmem %s0, %s147
      %p149 = pneg %p35
      %p150 = pneg %p32
      %p151 = pneg %p56
      %p152 = pneg %p53
      %p153 = pneg %p77
      %p154 = pneg %p74
      %p155 = pneg %p103
      %p156 = pneg %p100
      %s157 = smul.u32 64, %s14
      %p158 = scmp.lt.s32.totalorder %s157, 255
      %s159 = scalar_select %p158, %s157, 255
      %s160 = smul.addr %s159, 8
      %s161 = scalar_lea.vmem %s3, %s160
      %s162 = smul.u32 64, %s14
      %p163 = scmp.lt.s32.totalorder %s162, 255
      %s164 = scalar_select %p163, %s162, 255
      %s165 = smul.addr %s164, 8
      %s166 = scalar_lea.vmem %s0, %s165
      %s167 = smul.u32 64, %s14
      %s168 = smul.u32 64, %s14
      %p169 = scmp.lt.s32.totalorder %s168, 255
      %s170 = scalar_select %p169, %s168, 255
      %s171 = smul.addr %s170, 8
      %s172 = scalar_lea.vmem %s3, %s171
      %s173 = smul.u32 64, %s14
      %v174 = vld [vmem:[%s166] sm:$0xff]
      %v175 = vld [vmem:[%s166 + $0x8] sm:$0xff]
      %v176 = vld [vmem:[%s166 + $0x10] sm:$0xff]
      %v177 = vld [vmem:[%s166 + $0x18] sm:$0xff]
      %v178 = vld [vmem:[%s166 + $0x20] sm:$0xff]
      %v179 = vld [vmem:[%s166 + $0x28] sm:$0xff]
      %v180 = vld [vmem:[%s166 + $0x30] sm:$0xff]
      %v181 = vld [vmem:[%s166 + $0x38] sm:$0xff]
      %v182 = vld [vmem:[%s166 + $0x40] sm:$0xff]
      %v183 = vld [vmem:[%s166 + $0x48] sm:$0xff]
      %v184 = vld [vmem:[%s166 + $0x50] sm:$0xff]
      %v185 = vld [vmem:[%s166 + $0x58] sm:$0xff]
      %v186 = vld [vmem:[%s166 + $0x60] sm:$0xff]
      %v187 = vld [vmem:[%s166 + $0x68] sm:$0xff]
      %v188 = vld [vmem:[%s166 + $0x70] sm:$0xff]
      %v189 = vld [vmem:[%s166 + $0x78] sm:$0xff]
      %v190 = vld [vmem:[%s166 + $0x80] sm:$0xff]
      %v191 = vld [vmem:[%s166 + $0x88] sm:$0xff]
      %v192 = vld [vmem:[%s166 + $0x90] sm:$0xff]
      %v193 = vld [vmem:[%s166 + $0x98] sm:$0xff]
      %v194 = vld [vmem:[%s166 + $0xa0] sm:$0xff]
      %v195 = vld [vmem:[%s166 + $0xa8] sm:$0xff]
      %v196 = vld [vmem:[%s166 + $0xb0] sm:$0xff]
      %v197 = vld [vmem:[%s166 + $0xb8] sm:$0xff]
      %v198 = vld [vmem:[%s166 + $0xc0] sm:$0xff]
      %v199 = vld [vmem:[%s166 + $0xc8] sm:$0xff]
      %v200 = vld [vmem:[%s166 + $0xd0] sm:$0xff]
      %v201 = vld [vmem:[%s166 + $0xd8] sm:$0xff]
      %v202 = vld [vmem:[%s166 + $0xe0] sm:$0xff]
      %v203 = vld [vmem:[%s166 + $0xe8] sm:$0xff]
      %v204 = vld [vmem:[%s166 + $0xf0] sm:$0xff]
      %v205 = vld [vmem:[%s166 + $0xf8] sm:$0xff]
      %v206 = vld [vmem:[%s166 + $0x100] sm:$0xff]
      %v207 = vld [vmem:[%s166 + $0x108] sm:$0xff]
      %v208 = vld [vmem:[%s166 + $0x110] sm:$0xff]
      %v209 = vld [vmem:[%s166 + $0x118] sm:$0xff]
      %v210 = vld [vmem:[%s166 + $0x120] sm:$0xff]
      %v211 = vld [vmem:[%s166 + $0x128] sm:$0xff]
      %v212 = vld [vmem:[%s166 + $0x130] sm:$0xff]
      %v213 = vld [vmem:[%s166 + $0x138] sm:$0xff]
      %v214 = vld [vmem:[%s166 + $0x140] sm:$0xff]
      %v215 = vld [vmem:[%s166 + $0x148] sm:$0xff]
      %v216 = vld [vmem:[%s166 + $0x150] sm:$0xff]
      %v217 = vld [vmem:[%s166 + $0x158] sm:$0xff]
      %v218 = vld [vmem:[%s166 + $0x160] sm:$0xff]
      %v219 = vld [vmem:[%s166 + $0x168] sm:$0xff]
      %v220 = vld [vmem:[%s166 + $0x170] sm:$0xff]
      %v221 = vld [vmem:[%s166 + $0x178] sm:$0xff]
      %v222 = vld [vmem:[%s166 + $0x180] sm:$0xff]
      %v223 = vld [vmem:[%s166 + $0x188] sm:$0xff]
      %v224 = vld [vmem:[%s166 + $0x190] sm:$0xff]
      %v225 = vld [vmem:[%s166 + $0x198] sm:$0xff]
      %v226 = vld [vmem:[%s166 + $0x1a0] sm:$0xff]
      %v227 = vld [vmem:[%s166 + $0x1a8] sm:$0xff]
      %v228 = vld [vmem:[%s166 + $0x1b0] sm:$0xff]
      %v229 = vld [vmem:[%s166 + $0x1b8] sm:$0xff]
      %v230 = vld [vmem:[%s166 + $0x1c0] sm:$0xff]
      %v231 = vld [vmem:[%s166 + $0x1c8] sm:$0xff]
      %v232 = vld [vmem:[%s166 + $0x1d0] sm:$0xff]
      %v233 = vld [vmem:[%s166 + $0x1d8] sm:$0xff]
      %v234 = vld [vmem:[%s166 + $0x1e0] sm:$0xff]
      %v235 = vld [vmem:[%s166 + $0x1e8] sm:$0xff]
      %v236 = vld [vmem:[%s166 + $0x1f0] sm:$0xff]
      %v237 = vld [vmem:[%s166 + $0x1f8] sm:$0xff]
      %v238 = vld [vmem:[%s1] sm:$0xff]
      %v239 = vld [vmem:[%s1 + $0x8] sm:$0xff]
      %v240 = vld [vmem:[%s1 + $0x10] sm:$0xff]
      %v241 = vld [vmem:[%s1 + $0x18] sm:$0xff]
      %v242 = vld [vmem:[%s1 + $0x20] sm:$0xff]
      %v243 = vld [vmem:[%s1 + $0x28] sm:$0xff]
      %v244 = vld [vmem:[%s1 + $0x30] sm:$0xff]
      %v245 = vld [vmem:[%s1 + $0x38] sm:$0xff]
      %v246 = vld [vmem:[%s1 + $0x40] sm:$0xff]
      %v247 = vld [vmem:[%s2] sm:$0x1]
      %v249 = vperm.slane %v247, 0
      %vm251 = vcmask 588800
      %v253 = vsel %vm251, %v174, 0
      %v256 = vsel %vm251, %v175, 0
      %v259 = vsel %vm251, %v176, 0
      %v262 = vsel %vm251, %v177, 0
      %v265 = vsel %vm251, %v178, 0
      %v268 = vsel %vm251, %v179, 0
      %v271 = vsel %vm251, %v180, 0
      %v274 = vsel %vm251, %v181, 0
      %v277 = vsel %vm251, %v182, 0
      %v280 = vsel %vm251, %v183, 0
      %v283 = vsel %vm251, %v184, 0
      %v286 = vsel %vm251, %v185, 0
      %v289 = vsel %vm251, %v186, 0
      %v292 = vsel %vm251, %v187, 0
      %v295 = vsel %vm251, %v188, 0
      %v298 = vsel %vm251, %v189, 0
      %v301 = vsel %vm251, %v190, 0
      %v304 = vsel %vm251, %v191, 0
      %v307 = vsel %vm251, %v192, 0
      %v310 = vsel %vm251, %v193, 0
      %v313 = vsel %vm251, %v194, 0
      %v316 = vsel %vm251, %v195, 0
      %v319 = vsel %vm251, %v196, 0
      %v322 = vsel %vm251, %v197, 0
      %v325 = vsel %vm251, %v198, 0
      %v328 = vsel %vm251, %v199, 0
      %v331 = vsel %vm251, %v200, 0
      %v334 = vsel %vm251, %v201, 0
      %v337 = vsel %vm251, %v202, 0
      %v340 = vsel %vm251, %v203, 0
      %v343 = vsel %vm251, %v204, 0
      %v346 = vsel %vm251, %v205, 0
      %v349 = vsel %vm251, %v206, 0
      %v352 = vsel %vm251, %v207, 0
      %v355 = vsel %vm251, %v208, 0
      %v358 = vsel %vm251, %v209, 0
      %v361 = vsel %vm251, %v210, 0
      %v364 = vsel %vm251, %v211, 0
      %v367 = vsel %vm251, %v212, 0
      %v370 = vsel %vm251, %v213, 0
      %v373 = vsel %vm251, %v214, 0
      %v376 = vsel %vm251, %v215, 0
      %v379 = vsel %vm251, %v216, 0
      %v382 = vsel %vm251, %v217, 0
      %v385 = vsel %vm251, %v218, 0
      %v388 = vsel %vm251, %v219, 0
      %v391 = vsel %vm251, %v220, 0
      %v394 = vsel %vm251, %v221, 0
      %v397 = vsel %vm251, %v222, 0
      %v400 = vsel %vm251, %v223, 0
      %v403 = vsel %vm251, %v224, 0
      %v406 = vsel %vm251, %v225, 0
      %v409 = vsel %vm251, %v226, 0
      %v412 = vsel %vm251, %v227, 0
      %v415 = vsel %vm251, %v228, 0
      %v418 = vsel %vm251, %v229, 0
      %v421 = vsel %vm251, %v230, 0
      %v424 = vsel %vm251, %v231, 0
      %v427 = vsel %vm251, %v232, 0
      %v430 = vsel %vm251, %v233, 0
      %v433 = vsel %vm251, %v234, 0
      %v436 = vsel %vm251, %v235, 0
      %v439 = vsel %vm251, %v236, 0
      %v442 = vsel %vm251, %v237, 0
      %444 = vmatpush.msra.mxu0 0.0
      %445 = vmatpush.msra.mxu0 0.0
      %446 = vmatpush.msra.mxu0 0.0
      %447 = vmatpush.msra.mxu0 0.0
      %448 = vmatpush.msra.mxu0 0.0
      %449 = vmatpush.msra.mxu0 0.0
      %450 = vmatpush.msra.mxu0 0.0
      %451 = vmatpush.msra.mxu0 %v246
      %452 = vmatpush.msra.mxu0 %v245
      %453 = vmatpush.msra.mxu0 %v244
      %454 = vmatpush.msra.mxu0 %v243
      %455 = vmatpush.msra.mxu0 %v242
      %456 = vmatpush.msra.mxu0 %v241
      %457 = vmatpush.msra.mxu0 %v240
      %458 = vmatpush.msra.mxu0 %v239
      %459 = vmatpush.msra.mxu0 %v238
      %460 = vmatmul.f32.gmra.mxu0 %v253
      %v461 = vpop.f32.mrf.mxu0
      %v462 = vadd.f32 %v249, %v461
      %463 = vmatmul.f32.gmra.mxu0 %v256
      %v464 = vpop.f32.mrf.mxu0
      %v465 = vadd.f32 %v249, %v464
      %466 = vmatmul.f32.gmra.mxu0 %v259
      %v467 = vpop.f32.mrf.mxu0
      %v468 = vadd.f32 %v249, %v467
      %469 = vmatmul.f32.gmra.mxu0 %v262
      %v470 = vpop.f32.mrf.mxu0
      %v471 = vadd.f32 %v249, %v470
      %472 = vmatmul.f32.gmra.mxu0 %v265
      %v473 = vpop.f32.mrf.mxu0
      %v474 = vadd.f32 %v249, %v473
      %475 = vmatmul.f32.gmra.mxu0 %v268
      %v476 = vpop.f32.mrf.mxu0
      %v477 = vadd.f32 %v249, %v476
      %478 = vmatmul.f32.gmra.mxu0 %v271
      %v479 = vpop.f32.mrf.mxu0
      %v480 = vadd.f32 %v249, %v479
      %481 = vmatmul.f32.gmra.mxu0 %v274
      %v482 = vpop.f32.mrf.mxu0
      %v483 = vadd.f32 %v249, %v482
      %484 = vmatmul.f32.gmra.mxu0 %v277
      %v485 = vpop.f32.mrf.mxu0
      %v486 = vadd.f32 %v249, %v485
      %487 = vmatmul.f32.gmra.mxu0 %v280
      %v488 = vpop.f32.mrf.mxu0
      %v489 = vadd.f32 %v249, %v488
      %490 = vmatmul.f32.gmra.mxu0 %v283
      %v491 = vpop.f32.mrf.mxu0
      %v492 = vadd.f32 %v249, %v491
      %493 = vmatmul.f32.gmra.mxu0 %v286
      %v494 = vpop.f32.mrf.mxu0
      %v495 = vadd.f32 %v249, %v494
      %496 = vmatmul.f32.gmra.mxu0 %v289
      %v497 = vpop.f32.mrf.mxu0
      %v498 = vadd.f32 %v249, %v497
      %499 = vmatmul.f32.gmra.mxu0 %v292
      %v500 = vpop.f32.mrf.mxu0
      %v501 = vadd.f32 %v249, %v500
      %502 = vmatmul.f32.gmra.mxu0 %v295
      %v503 = vpop.f32.mrf.mxu0
      %v504 = vadd.f32 %v249, %v503
      %505 = vmatmul.f32.gmra.mxu0 %v298
      %v506 = vpop.f32.mrf.mxu0
      %v507 = vadd.f32 %v249, %v506
      %508 = vmatmul.f32.gmra.mxu0 %v301
      %v509 = vpop.f32.mrf.mxu0
      %v510 = vadd.f32 %v249, %v509
      %511 = vmatmul.f32.gmra.mxu0 %v304
      %v512 = vpop.f32.mrf.mxu0
      %v513 = vadd.f32 %v249, %v512
      %514 = vmatmul.f32.gmra.mxu0 %v307
      %v515 = vpop.f32.mrf.mxu0
      %v516 = vadd.f32 %v249, %v515
      %517 = vmatmul.f32.gmra.mxu0 %v310
      %v518 = vpop.f32.mrf.mxu0
      %v519 = vadd.f32 %v249, %v518
      %520 = vmatmul.f32.gmra.mxu0 %v313
      %v521 = vpop.f32.mrf.mxu0
      %v522 = vadd.f32 %v249, %v521
      %523 = vmatmul.f32.gmra.mxu0 %v316
      %v524 = vpop.f32.mrf.mxu0
      %v525 = vadd.f32 %v249, %v524
      %526 = vmatmul.f32.gmra.mxu0 %v319
      %v527 = vpop.f32.mrf.mxu0
      %v528 = vadd.f32 %v249, %v527
      %529 = vmatmul.f32.gmra.mxu0 %v322
      %v530 = vpop.f32.mrf.mxu0
      %v531 = vadd.f32 %v249, %v530
      %532 = vmatmul.f32.gmra.mxu0 %v325
      %v533 = vpop.f32.mrf.mxu0
      %v534 = vadd.f32 %v249, %v533
      %535 = vmatmul.f32.gmra.mxu0 %v328
      %v536 = vpop.f32.mrf.mxu0
      %v537 = vadd.f32 %v249, %v536
      %538 = vmatmul.f32.gmra.mxu0 %v331
      %v539 = vpop.f32.mrf.mxu0
      %v540 = vadd.f32 %v249, %v539
      %541 = vmatmul.f32.gmra.mxu0 %v334
      %v542 = vpop.f32.mrf.mxu0
      %v543 = vadd.f32 %v249, %v542
      %544 = vmatmul.f32.gmra.mxu0 %v337
      %v545 = vpop.f32.mrf.mxu0
      %v546 = vadd.f32 %v249, %v545
      %547 = vmatmul.f32.gmra.mxu0 %v340
      %v548 = vpop.f32.mrf.mxu0
      %v549 = vadd.f32 %v249, %v548
      %550 = vmatmul.f32.gmra.mxu0 %v343
      %v551 = vpop.f32.mrf.mxu0
      %v552 = vadd.f32 %v249, %v551
      %553 = vmatmul.f32.gmra.mxu0 %v346
      %v554 = vpop.f32.mrf.mxu0
      %v555 = vadd.f32 %v249, %v554
      %556 = vmatmul.f32.gmra.mxu0 %v349
      %v557 = vpop.f32.mrf.mxu0
      %v558 = vadd.f32 %v249, %v557
      %559 = vmatmul.f32.gmra.mxu0 %v352
      %v560 = vpop.f32.mrf.mxu0
      %v561 = vadd.f32 %v249, %v560
      %562 = vmatmul.f32.gmra.mxu0 %v355
      %v563 = vpop.f32.mrf.mxu0
      %v564 = vadd.f32 %v249, %v563
      %565 = vmatmul.f32.gmra.mxu0 %v358
      %v566 = vpop.f32.mrf.mxu0
      %v567 = vadd.f32 %v249, %v566
      %568 = vmatmul.f32.gmra.mxu0 %v361
      %v569 = vpop.f32.mrf.mxu0
      %v570 = vadd.f32 %v249, %v569
      %571 = vmatmul.f32.gmra.mxu0 %v364
      %v572 = vpop.f32.mrf.mxu0
      %v573 = vadd.f32 %v249, %v572
      %574 = vmatmul.f32.gmra.mxu0 %v367
      %v575 = vpop.f32.mrf.mxu0
      %v576 = vadd.f32 %v249, %v575
      %577 = vmatmul.f32.gmra.mxu0 %v370
      %v578 = vpop.f32.mrf.mxu0
      %v579 = vadd.f32 %v249, %v578
      %580 = vmatmul.f32.gmra.mxu0 %v373
      %v581 = vpop.f32.mrf.mxu0
      %v582 = vadd.f32 %v249, %v581
      %583 = vmatmul.f32.gmra.mxu0 %v376
      %v584 = vpop.f32.mrf.mxu0
      %v585 = vadd.f32 %v249, %v584
      %586 = vmatmul.f32.gmra.mxu0 %v379
      %v587 = vpop.f32.mrf.mxu0
      %v588 = vadd.f32 %v249, %v587
      %589 = vmatmul.f32.gmra.mxu0 %v382
      %v590 = vpop.f32.mrf.mxu0
      %v591 = vadd.f32 %v249, %v590
      %592 = vmatmul.f32.gmra.mxu0 %v385
      %v593 = vpop.f32.mrf.mxu0
      %v594 = vadd.f32 %v249, %v593
      %595 = vmatmul.f32.gmra.mxu0 %v388
      %v596 = vpop.f32.mrf.mxu0
      %v597 = vadd.f32 %v249, %v596
      %598 = vmatmul.f32.gmra.mxu0 %v391
      %v599 = vpop.f32.mrf.mxu0
      %v600 = vadd.f32 %v249, %v599
      %601 = vmatmul.f32.gmra.mxu0 %v394
      %v602 = vpop.f32.mrf.mxu0
      %v603 = vadd.f32 %v249, %v602
      %604 = vmatmul.f32.gmra.mxu0 %v397
      %v605 = vpop.f32.mrf.mxu0
      %v606 = vadd.f32 %v249, %v605
      %607 = vmatmul.f32.gmra.mxu0 %v400
      %v608 = vpop.f32.mrf.mxu0
      %v609 = vadd.f32 %v249, %v608
      %610 = vmatmul.f32.gmra.mxu0 %v403
      %v611 = vpop.f32.mrf.mxu0
      %v612 = vadd.f32 %v249, %v611
      %613 = vmatmul.f32.gmra.mxu0 %v406
      %v614 = vpop.f32.mrf.mxu0
      %v615 = vadd.f32 %v249, %v614
      %616 = vmatmul.f32.gmra.mxu0 %v409
      %v617 = vpop.f32.mrf.mxu0
      %v618 = vadd.f32 %v249, %v617
      %619 = vmatmul.f32.gmra.mxu0 %v412
      %v620 = vpop.f32.mrf.mxu0
      %v621 = vadd.f32 %v249, %v620
      %622 = vmatmul.f32.gmra.mxu0 %v415
      %v623 = vpop.f32.mrf.mxu0
      %v624 = vadd.f32 %v249, %v623
      %625 = vmatmul.f32.gmra.mxu0 %v418
      %v626 = vpop.f32.mrf.mxu0
      %v627 = vadd.f32 %v249, %v626
      %628 = vmatmul.f32.gmra.mxu0 %v421
      %v629 = vpop.f32.mrf.mxu0
      %v630 = vadd.f32 %v249, %v629
      %631 = vmatmul.f32.gmra.mxu0 %v424
      %v632 = vpop.f32.mrf.mxu0
      %v633 = vadd.f32 %v249, %v632
      %634 = vmatmul.f32.gmra.mxu0 %v427
      %v635 = vpop.f32.mrf.mxu0
      %v636 = vadd.f32 %v249, %v635
      %637 = vmatmul.f32.gmra.mxu0 %v430
      %v638 = vpop.f32.mrf.mxu0
      %v639 = vadd.f32 %v249, %v638
      %640 = vmatmul.f32.gmra.mxu0 %v433
      %v641 = vpop.f32.mrf.mxu0
      %v642 = vadd.f32 %v249, %v641
      %643 = vmatmul.f32.gmra.mxu0 %v436
      %v644 = vpop.f32.mrf.mxu0
      %v645 = vadd.f32 %v249, %v644
      %646 = vmatmul.f32.gmra.mxu0 %v439
      %v647 = vpop.f32.mrf.mxu0
      %v648 = vadd.f32 %v249, %v647
      %649 = vmatmul.f32.gmra.mxu0 %v442
      %v650 = vpop.f32.mrf.mxu0
      %v651 = vadd.f32 %v249, %v650
      %652 = vdwg.mxu0
      %vm653 = vcmask 15360
      %654 = vst.msk [vmem:[%s172] sm:$0xff] %vm653, %v462
      %655 = vst.msk [vmem:[%s172 + $0x8] sm:$0xff] %vm653, %v465
      %656 = vst.msk [vmem:[%s172 + $0x10] sm:$0xff] %vm653, %v468
      %657 = vst.msk [vmem:[%s172 + $0x18] sm:$0xff] %vm653, %v471
      %658 = vst.msk [vmem:[%s172 + $0x20] sm:$0xff] %vm653, %v474
      %659 = vst.msk [vmem:[%s172 + $0x28] sm:$0xff] %vm653, %v477
      %660 = vst.msk [vmem:[%s172 + $0x30] sm:$0xff] %vm653, %v480
      %661 = vst.msk [vmem:[%s172 + $0x38] sm:$0xff] %vm653, %v483
      %662 = vst.msk [vmem:[%s172 + $0x40] sm:$0xff] %vm653, %v486
      %663 = vst.msk [vmem:[%s172 + $0x48] sm:$0xff] %vm653, %v489
      %664 = vst.msk [vmem:[%s172 + $0x50] sm:$0xff] %vm653, %v492
      %665 = vst.msk [vmem:[%s172 + $0x58] sm:$0xff] %vm653, %v495
      %666 = vst.msk [vmem:[%s172 + $0x60] sm:$0xff] %vm653, %v498
      %667 = vst.msk [vmem:[%s172 + $0x68] sm:$0xff] %vm653, %v501
      %668 = vst.msk [vmem:[%s172 + $0x70] sm:$0xff] %vm653, %v504
      %669 = vst.msk [vmem:[%s172 + $0x78] sm:$0xff] %vm653, %v507
      %670 = vst.msk [vmem:[%s172 + $0x80] sm:$0xff] %vm653, %v510
      %671 = vst.msk [vmem:[%s172 + $0x88] sm:$0xff] %vm653, %v513
      %672 = vst.msk [vmem:[%s172 + $0x90] sm:$0xff] %vm653, %v516
      %673 = vst.msk [vmem:[%s172 + $0x98] sm:$0xff] %vm653, %v519
      %674 = vst.msk [vmem:[%s172 + $0xa0] sm:$0xff] %vm653, %v522
      %675 = vst.msk [vmem:[%s172 + $0xa8] sm:$0xff] %vm653, %v525
      %676 = vst.msk [vmem:[%s172 + $0xb0] sm:$0xff] %vm653, %v528
      %677 = vst.msk [vmem:[%s172 + $0xb8] sm:$0xff] %vm653, %v531
      %678 = vst.msk [vmem:[%s172 + $0xc0] sm:$0xff] %vm653, %v534
      %679 = vst.msk [vmem:[%s172 + $0xc8] sm:$0xff] %vm653, %v537
      %680 = vst.msk [vmem:[%s172 + $0xd0] sm:$0xff] %vm653, %v540
      %681 = vst.msk [vmem:[%s172 + $0xd8] sm:$0xff] %vm653, %v543
      %682 = vst.msk [vmem:[%s172 + $0xe0] sm:$0xff] %vm653, %v546
      %683 = vst.msk [vmem:[%s172 + $0xe8] sm:$0xff] %vm653, %v549
      %684 = vst.msk [vmem:[%s172 + $0xf0] sm:$0xff] %vm653, %v552
      %685 = vst.msk [vmem:[%s172 + $0xf8] sm:$0xff] %vm653, %v555
      %686 = vst.msk [vmem:[%s172 + $0x100] sm:$0xff] %vm653, %v558
      %687 = vst.msk [vmem:[%s172 + $0x108] sm:$0xff] %vm653, %v561
      %688 = vst.msk [vmem:[%s172 + $0x110] sm:$0xff] %vm653, %v564
      %689 = vst.msk [vmem:[%s172 + $0x118] sm:$0xff] %vm653, %v567
      %690 = vst.msk [vmem:[%s172 + $0x120] sm:$0xff] %vm653, %v570
      %691 = vst.msk [vmem:[%s172 + $0x128] sm:$0xff] %vm653, %v573
      %692 = vst.msk [vmem:[%s172 + $0x130] sm:$0xff] %vm653, %v576
      %693 = vst.msk [vmem:[%s172 + $0x138] sm:$0xff] %vm653, %v579
      %694 = vst.msk [vmem:[%s172 + $0x140] sm:$0xff] %vm653, %v582
      %695 = vst.msk [vmem:[%s172 + $0x148] sm:$0xff] %vm653, %v585
      %696 = vst.msk [vmem:[%s172 + $0x150] sm:$0xff] %vm653, %v588
      %697 = vst.msk [vmem:[%s172 + $0x158] sm:$0xff] %vm653, %v591
      %698 = vst.msk [vmem:[%s172 + $0x160] sm:$0xff] %vm653, %v594
      %699 = vst.msk [vmem:[%s172 + $0x168] sm:$0xff] %vm653, %v597
      %700 = vst.msk [vmem:[%s172 + $0x170] sm:$0xff] %vm653, %v600
      %701 = vst.msk [vmem:[%s172 + $0x178] sm:$0xff] %vm653, %v603
      %702 = vst.msk [vmem:[%s172 + $0x180] sm:$0xff] %vm653, %v606
      %703 = vst.msk [vmem:[%s172 + $0x188] sm:$0xff] %vm653, %v609
      %704 = vst.msk [vmem:[%s172 + $0x190] sm:$0xff] %vm653, %v612
      %705 = vst.msk [vmem:[%s172 + $0x198] sm:$0xff] %vm653, %v615
      %706 = vst.msk [vmem:[%s172 + $0x1a0] sm:$0xff] %vm653, %v618
      %707 = vst.msk [vmem:[%s172 + $0x1a8] sm:$0xff] %vm653, %v621
      %708 = vst.msk [vmem:[%s172 + $0x1b0] sm:$0xff] %vm653, %v624
      %709 = vst.msk [vmem:[%s172 + $0x1b8] sm:$0xff] %vm653, %v627
      %710 = vst.msk [vmem:[%s172 + $0x1c0] sm:$0xff] %vm653, %v630
      %711 = vst.msk [vmem:[%s172 + $0x1c8] sm:$0xff] %vm653, %v633
      %712 = vst.msk [vmem:[%s172 + $0x1d0] sm:$0xff] %vm653, %v636
      %713 = vst.msk [vmem:[%s172 + $0x1d8] sm:$0xff] %vm653, %v639
      %714 = vst.msk [vmem:[%s172 + $0x1e0] sm:$0xff] %vm653, %v642
      %715 = vst.msk [vmem:[%s172 + $0x1e8] sm:$0xff] %vm653, %v645
      %716 = vst.msk [vmem:[%s172 + $0x1f0] sm:$0xff] %vm653, %v648
      %717 = vst.msk [vmem:[%s172 + $0x1f8] sm:$0xff] %vm653, %v651
      %s718 = smul.u32 64, %s14
      %p719 = scmp.lt.s32.totalorder %s718, 255
      %s720 = scalar_select %p719, %s718, 255
      %s721 = smul.addr %s720, 8
      %s722 = scalar_lea.vmem %s3, %s721
      // Predicated region
      $region33: #{varnet_forward.15} parent=31 // pred_check
        %p723 = pneg %p100
      $region34: #{varnet_forward.15} parent=31 // pred_check_branch
        %725 = sbr.rel (%p723) target = $region36
      $region35: #{varnet_forward.15} parent=31 // pred_region
        %s726 = smul.u32 64, %s14
      $region36: #{varnet_forward.15} parent=31 // pred_fallthru
        _
    $region32: #{varnet_forward.15} parent=5 // pred_fallthru
      _
    %p727 = scmp.le.s32.totalorder 2, %s9
    // Predicated region
    $region37: #{varnet_forward.15} parent=5 // pred_check
      %p728 = pneg %p727
    $region38: #{varnet_forward.15} parent=5 // pred_check_branch
      %730 = sbr.rel (%p728) target = $region40
    $region39: #{varnet_forward.15} parent=5 // pred_region
      %s731 = ssub.s32 %s9, 2
      // Predicated region
      $region41: #{varnet_forward.15} parent=39 // pred_check
        %p732 = pneg %p106
      $region42: #{varnet_forward.15} parent=39 // pred_check_branch
        %734 = sbr.rel (%p732) target = $region44
      $region43: #{varnet_forward.15} parent=39 // pred_region
        %s735 = smul.u32 64, %s15
        %p736 = scmp.lt.s32.totalorder %s735, 255
        %s737 = scalar_select %p736, %s735, 255
        %s738 = smul.addr %s737, 8
        %s739 = scalar_lea.vmem %s3, %s738
      $region44: #{varnet_forward.15} parent=39 // pred_fallthru
        _
    $region40: #{varnet_forward.15} parent=5 // pred_fallthru
      _
  $region6: #{varnet_forward.15} parent=0 // loop_footer
    %s13 = sadd.s32 1, %s9
  $region7: #{varnet_forward.15} parent=0 // loop_footer_branch
    %8 = sbr.rel target = $region3
  $region8: #{varnet_forward.15} parent=0 // loop_exit
    _

// kernel: varnet_forward.16
$region0: #{varnet_forward.16}
  #allocation0 [shape = 'u32[]', space=smem, size = 0x4, offset = 0x4, fixed_abs, tag = 'smem constant byte address 0x4 - core index']
  #allocation1 [shape = 'u32[72,128]{1,0:T(1,128)}', space=vmem, size = 0x9000, scoped, tag = 'internal scratch']
  %s0 = inlined_call_operand.vmem [shape: f32[2,64,16], index: 0, kind: input, shape index: {}]
  %s1 = inlined_call_operand.vmem [shape: f32[2,64,16], index: 1, kind: input, shape index: {}]
  %s2 = inlined_call_operand.vmem [shape: f32[2,64,16], index: 2, kind: output, shape index: {0}]
  %s3 = inlined_call_operand.vmem [shape: f32[2,64,16], index: 3, kind: output, shape index: {1}]
  %4 = xla_tuple %s2, %s3
  %s5 = sld [smem:[#allocation0]]
  $region49: #{varnet_forward.16} parent=0
    _
  %s7 = ssub.s32 1, %s5
  %s8 = scalar_select 0, %s7, %s5
  loop: start=0, step=1, limit=4
  $region2: #{varnet_forward.16} parent=0 // loop_pre_header
    _
  $region3: #{varnet_forward.16} parent=0 // loop_header
    %s10 = sphi 0, %s14
    %p11 = scmp.ge.s32.totalorder %s10, 4
    %s20 = sphi 0, %s22
    %s23 = sphi 0, %s20
    %s24 = sphi 0, %s23
    %s40 = sphi 0, %s24
    %s46 = sphi 0, %s48
    %s49 = sphi 0, %s46
    %s50 = sphi 0, %s49
    %s66 = sphi 0, %s50
    %s72 = sphi 0, %s74
    %s75 = sphi 0, %s72
    %s76 = sphi 0, %s75
    %s92 = sphi 0, %s76
    %s98 = sphi 0, %s100
    %s101 = sphi 0, %s98
    %s102 = sphi 0, %s101
    %s118 = sphi 0, %s102
  $region4: #{varnet_forward.16} parent=0 // loop_header_branch
    %13 = sbr.rel (%p11) target = $region8
  $region5: #{varnet_forward.16} parent=0 // loop_body
    %s15 = ssub.s32 %s10, 1
    %s16 = ssub.s32 %s10, 2
    %s17 = sadd.s32 %s10, 1
    %s18 = ssub.s32 %s10, %s17
    %p19 = scmp.eq.s32.totalorder %s18, 0
    %s21 = sadd.s32 %s20, 1
    %s22 = scalar_select %p19, %s20, %s21
    %p25 = pneg %p19
    %p26 = scmp.eq.s32.totalorder %s10, 1
    %p27 = por %p25, %p26
    %p28 = scmp.ne.s32.totalorder %s20, %s23
    %p29 = scmp.eq.s32.totalorder %s10, 0
    %p30 = por %p28, %p29
    %p31 = scmp.ne.s32.totalorder %s20, %s23
    %p32 = scmp.eq.s32.totalorder %s15, 1
    %p33 = por %p31, %p32
    %p34 = scmp.ne.s32.totalorder %s23, %s24
    %p35 = scmp.eq.s32.totalorder %s15, 0
    %p36 = por %p34, %p35
    %p37 = scmp.ne.s32.totalorder %s23, %s24
    %p38 = scmp.eq.s32.totalorder %s16, 1
    %p39 = por %p37, %p38
    %p41 = scmp.ne.s32.totalorder %s24, %s40
    %p42 = scmp.eq.s32.totalorder %s16, 0
    %p43 = por %p41, %p42
    %s44 = ssub.s32 %s10, %s17
    %p45 = scmp.eq.s32.totalorder %s44, 0
    %s47 = sadd.s32 %s46, 1
    %s48 = scalar_select %p45, %s46, %s47
    %p51 = pneg %p45
    %p52 = scmp.eq.s32.totalorder %s10, 1
    %p53 = por %p51, %p52
    %p54 = scmp.ne.s32.totalorder %s46, %s49
    %p55 = scmp.eq.s32.totalorder %s10, 0
    %p56 = por %p54, %p55
    %p57 = scmp.ne.s32.totalorder %s46, %s49
    %p58 = scmp.eq.s32.totalorder %s15, 1
    %p59 = por %p57, %p58
    %p60 = scmp.ne.s32.totalorder %s49, %s50
    %p61 = scmp.eq.s32.totalorder %s15, 0
    %p62 = por %p60, %p61
    %p63 = scmp.ne.s32.totalorder %s49, %s50
    %p64 = scmp.eq.s32.totalorder %s16, 1
    %p65 = por %p63, %p64
    %p67 = scmp.ne.s32.totalorder %s50, %s66
    %p68 = scmp.eq.s32.totalorder %s16, 0
    %p69 = por %p67, %p68
    %s70 = ssub.s32 %s10, %s17
    %p71 = scmp.eq.s32.totalorder %s70, 0
    %s73 = sadd.s32 %s72, 1
    %s74 = scalar_select %p71, %s72, %s73
    %p77 = pneg %p71
    %p78 = scmp.eq.s32.totalorder %s10, 1
    %p79 = por %p77, %p78
    %p80 = scmp.ne.s32.totalorder %s72, %s75
    %p81 = scmp.eq.s32.totalorder %s10, 0
    %p82 = por %p80, %p81
    %p83 = scmp.ne.s32.totalorder %s72, %s75
    %p84 = scmp.eq.s32.totalorder %s15, 1
    %p85 = por %p83, %p84
    %p86 = scmp.ne.s32.totalorder %s75, %s76
    %p87 = scmp.eq.s32.totalorder %s15, 0
    %p88 = por %p86, %p87
    %p89 = scmp.ne.s32.totalorder %s75, %s76
    %p90 = scmp.eq.s32.totalorder %s16, 1
    %p91 = por %p89, %p90
    %p93 = scmp.ne.s32.totalorder %s76, %s92
    %p94 = scmp.eq.s32.totalorder %s16, 0
    %p95 = por %p93, %p94
    %s96 = ssub.s32 %s10, %s17
    %p97 = scmp.eq.s32.totalorder %s96, 0
    %s99 = sadd.s32 %s98, 1
    %s100 = scalar_select %p97, %s98, %s99
    %p103 = pneg %p97
    %p104 = scmp.eq.s32.totalorder %s10, 1
    %p105 = por %p103, %p104
    %p106 = scmp.ne.s32.totalorder %s98, %s101
    %p107 = scmp.eq.s32.totalorder %s10, 0
    %p108 = por %p106, %p107
    %p109 = scmp.ne.s32.totalorder %s98, %s101
    %p110 = scmp.eq.s32.totalorder %s15, 1
    %p111 = por %p109, %p110
    %p112 = scmp.ne.s32.totalorder %s101, %s102
    %p113 = scmp.eq.s32.totalorder %s15, 0
    %p114 = por %p112, %p113
    %p115 = scmp.ne.s32.totalorder %s101, %s102
    %p116 = scmp.eq.s32.totalorder %s16, 1
    %p117 = por %p115, %p116
    %p119 = scmp.ne.s32.totalorder %s102, %s118
    %p120 = scmp.eq.s32.totalorder %s16, 0
    %p121 = por %p119, %p120
    %p122 = scmp.le.s32.totalorder 1, %s10
    %p123 = scmp.lt.s32.totalorder %s10, 3
    %p124 = pnand %p122, %p123
    %p125 = pneg %p124
    // Predicated region
    $region9: #{varnet_forward.16} parent=5 // pred_check
      _
    $region10: #{varnet_forward.16} parent=5 // pred_check_branch
      %127 = sbr.rel (%p124) target = $region12
    $region11: #{varnet_forward.16} parent=5 // pred_region
      %s128 = ssub.s32 %s10, 1
    $region12: #{varnet_forward.16} parent=5 // pred_fallthru
      _
    %p129 = scmp.lt.s32.totalorder %s10, 2
    // Predicated region
    $region13: #{varnet_forward.16} parent=5 // pred_check
      %p130 = pneg %p129
    $region14: #{varnet_forward.16} parent=5 // pred_check_branch
      %132 = sbr.rel (%p130) target = $region16
    $region15: #{varnet_forward.16} parent=5 // pred_region
      // Predicated region
      $region17: #{varnet_forward.16} parent=15 // pred_check
        %p133 = pneg %p30
      $region18: #{varnet_forward.16} parent=15 // pred_check_branch
        %135 = sbr.rel (%p133) target = $region20
      $region19: #{varnet_forward.16} parent=15 // pred_region
        %p136 = scmp.lt.s32.totalorder %s10, 1
        %s137 = scalar_select %p136, %s10, 1
        %s138 = smul.addr %s137, 8
        %s139 = smul.addr %s138, 8
        %s140 = scalar_lea.vmem %s0, %s139
      $region20: #{varnet_forward.16} parent=15 // pred_fallthru
        _
      // Predicated region
      $region21: #{varnet_forward.16} parent=15 // pred_check
        %p141 = pneg %p56
      $region22: #{varnet_forward.16} parent=15 // pred_check_branch
        %143 = sbr.rel (%p141) target = $region24
      $region23: #{varnet_forward.16} parent=15 // pred_region
        %p144 = scmp.lt.s32.totalorder %s10, 1
        %s145 = scalar_select %p144, %s10, 1
        %s146 = smul.addr %s145, 8
        %s147 = smul.addr %s146, 8
        %s148 = scalar_lea.vmem %s1, %s147
      $region24: #{varnet_forward.16} parent=15 // pred_fallthru
        _
    $region16: #{varnet_forward.16} parent=5 // pred_fallthru
      _
    %p149 = scmp.le.s32.totalorder 1, %s10
    %p150 = scmp.lt.s32.totalorder %s10, 3
    %p151 = pnand %p149, %p150
    %p152 = pneg %p151
    // Predicated region
    $region25: #{varnet_forward.16} parent=5 // pred_check
      _
    $region26: #{varnet_forward.16} parent=5 // pred_check_branch
      %154 = sbr.rel (%p151) target = $region28
    $region27: #{varnet_forward.16} parent=5 // pred_region
      %s155 = ssub.s32 %s10, 1
      %p156 = scmp.lt.s32.totalorder %s15, 1
      %s157 = scalar_select %p156, %s15, 1
      %s158 = smul.addr %s157, 8
      %s159 = smul.addr %s158, 8
      %s160 = scalar_lea.vmem %s0, %s159
      %p161 = pneg %p36
      %p162 = pneg %p33
      %p163 = scmp.lt.s32.totalorder %s15, 1
      %s164 = scalar_select %p163, %s15, 1
      %s165 = smul.addr %s164, 8
      %s166 = smul.addr %s165, 8
      %s167 = scalar_lea.vmem %s1, %s166
      %p168 = pneg %p62
      %p169 = pneg %p59
      %p170 = pneg %p88
      %p171 = pneg %p85
      %p172 = scmp.lt.s32.totalorder %s15, 1
      %s173 = scalar_select %p172, %s15, 1
      %s174 = smul.addr %s173, 8
      %s175 = smul.addr %s174, 8
      %s176 = scalar_lea.vmem %s2, %s175
      %p177 = pneg %p114
      %p178 = pneg %p111
      %p179 = scmp.lt.s32.totalorder %s15, 1
      %s180 = scalar_select %p179, %s15, 1
      %s181 = smul.addr %s180, 8
      %s182 = smul.addr %s181, 8
      %s183 = scalar_lea.vmem %s3, %s182
      %p184 = scmp.lt.s32.totalorder %s15, 1
      %s185 = scalar_select %p184, %s15, 1
      %s186 = smul.addr %s185, 8
      %s187 = smul.addr %s186, 8
      %s188 = scalar_lea.vmem %s0, %s187
      %p189 = scmp.lt.s32.totalorder %s15, 1
      %s190 = scalar_select %p189, %s15, 1
      %s191 = smul.addr %s190, 8
      %s192 = smul.addr %s191, 8
      %s193 = scalar_lea.vmem %s1, %s192
      %p194 = scmp.lt.s32.totalorder %s15, 1
      %s195 = scalar_select %p194, %s15, 1
      %s196 = smul.addr %s195, 8
      %s197 = smul.addr %s196, 8
      %s198 = scalar_lea.vmem %s2, %s197
      %p199 = scmp.lt.s32.totalorder %s15, 1
      %s200 = scalar_select %p199, %s15, 1
      %s201 = smul.addr %s200, 8
      %s202 = smul.addr %s201, 8
      %s203 = scalar_lea.vmem %s3, %s202
      %v204 = vld [vmem:[%s188] sm:$0xff]
      %v205 = vld [vmem:[%s188 + $0x8] sm:$0xff]
      %v206 = vld [vmem:[%s188 + $0x10] sm:$0xff]
      %v207 = vld [vmem:[%s188 + $0x18] sm:$0xff]
      %v208 = vld [vmem:[%s188 + $0x20] sm:$0xff]
      %v209 = vld [vmem:[%s188 + $0x28] sm:$0xff]
      %v210 = vld [vmem:[%s188 + $0x30] sm:$0xff]
      %v211 = vld [vmem:[%s188 + $0x38] sm:$0xff]
      %v212 = vld [vmem:[%s193] sm:$0xff]
      %v213 = vld [vmem:[%s193 + $0x8] sm:$0xff]
      %v214 = vld [vmem:[%s193 + $0x10] sm:$0xff]
      %v215 = vld [vmem:[%s193 + $0x18] sm:$0xff]
      %v216 = vld [vmem:[%s193 + $0x20] sm:$0xff]
      %v217 = vld [vmem:[%s193 + $0x28] sm:$0xff]
      %v218 = vld [vmem:[%s193 + $0x30] sm:$0xff]
      %v219 = vld [vmem:[%s193 + $0x38] sm:$0xff]
      %v220 = vmul.f32 %v204, %v204
      %v221 = vmul.f32 %v205, %v205
      %v222 = vadd.f32 %v220, 0.0
      %v223 = vadd.f32 %v221, 0.0
      %v224 = vmul.f32 %v212, %v212
      %v225 = vmul.f32 %v213, %v213
      %v226 = vadd.f32 %v222, %v224
      %v227 = vadd.f32 %v223, %v225
      %v228 = vmul.f32 %v206, %v206
      %v229 = vmul.f32 %v207, %v207
      %v230 = vadd.f32 %v226, %v228
      %v231 = vadd.f32 %v227, %v229
      %v232 = vmul.f32 %v214, %v214
      %v233 = vmul.f32 %v215, %v215
      %v234 = vadd.f32 %v230, %v232
      %v235 = vadd.f32 %v231, %v233
      %v236 = vmul.f32 %v208, %v208
      %v237 = vmul.f32 %v209, %v209
      %v238 = vadd.f32 %v234, %v236
      %v239 = vadd.f32 %v235, %v237
      %v240 = vmul.f32 %v216, %v216
      %v241 = vmul.f32 %v217, %v217
      %v242 = vadd.f32 %v238, %v240
      %v243 = vadd.f32 %v239, %v241
      %v244 = vmul.f32 %v210, %v210
      %v245 = vmul.f32 %v211, %v211
      %v246 = vadd.f32 %v242, %v244
      %v247 = vadd.f32 %v243, %v245
      %v248 = vmul.f32 %v218, %v218
      %v249 = vmul.f32 %v219, %v219
      %v250 = vadd.f32 %v246, %v248
      %v251 = vadd.f32 %v247, %v249
      %v252 = vadd.f32 %v250, 1e-12
      %v253 = vadd.f32 %v251, 1e-12
      %v254 = vrsqrt.pop %v252
      %v255 = vmul.f32 %v254, %v252
      %v256 = vmul.f32 %v255, %v254
      %v257 = vmul.f32 0.5, %v256
      %v258 = vsub.f32 1.5, %v257
      %v259 = vmul.f32 %v254, %v258
      %vm260 = vweird.f32 %v252
      %vm261 = vweird.f32 %v254
      %vm262 = vmor %vm260, %vm261
      %v263 = vsel %vm262, %v254, %v259
      %v264 = vrsqrt.pop %v253
      %v265 = vmul.f32 %v264, %v253
      %v266 = vmul.f32 %v265, %v264
      %v267 = vmul.f32 0.5, %v266
      %v268 = vsub.f32 1.5, %v267
      %v269 = vmul.f32 %v264, %v268
      %vm270 = vweird.f32 %v253
      %vm271 = vweird.f32 %v264
      %vm272 = vmor %vm270, %vm271
      %v273 = vsel %vm272, %v264, %v269
      %v274 = vmul.f32 %v204, %v263
      %v275 = vmul.f32 %v205, %v273
      %vm276 = vcmask 130048
      %277 = vst.msk [vmem:[%s198] sm:$0xff] %vm276, %v274
      %278 = vst.msk [vmem:[%s198 + $0x8] sm:$0xff] %vm276, %v275
      %v279 = vmul.f32 %v212, %v263
      %v280 = vmul.f32 %v213, %v273
      %281 = vst.msk [vmem:[%s203] sm:$0xff] %vm276, %v279
      %282 = vst.msk [vmem:[%s203 + $0x8] sm:$0xff] %vm276, %v280
      %v283 = vmul.f32 %v206, %v263
      %v284 = vmul.f32 %v207, %v273
      %285 = vst.msk [vmem:[%s198 + $0x10] sm:$0xff] %vm276, %v283
      %286 = vst.msk [vmem:[%s198 + $0x18] sm:$0xff] %vm276, %v284
      %v287 = vmul.f32 %v214, %v263
      %v288 = vmul.f32 %v215, %v273
      %289 = vst.msk [vmem:[%s203 + $0x10] sm:$0xff] %vm276, %v287
      %290 = vst.msk [vmem:[%s203 + $0x18] sm:$0xff] %vm276, %v288
      %v291 = vmul.f32 %v208, %v263
      %v292 = vmul.f32 %v209, %v273
      %293 = vst.msk [vmem:[%s198 + $0x20] sm:$0xff] %vm276, %v291
      %294 = vst.msk [vmem:[%s198 + $0x28] sm:$0xff] %vm276, %v292
      %v295 = vmul.f32 %v216, %v263
      %v296 = vmul.f32 %v217, %v273
      %297 = vst.msk [vmem:[%s203 + $0x20] sm:$0xff] %vm276, %v295
      %298 = vst.msk [vmem:[%s203 + $0x28] sm:$0xff] %vm276, %v296
      %v299 = vmul.f32 %v210, %v263
      %v300 = vmul.f32 %v211, %v273
      %301 = vst.msk [vmem:[%s198 + $0x30] sm:$0xff] %vm276, %v299
      %302 = vst.msk [vmem:[%s198 + $0x38] sm:$0xff] %vm276, %v300
      %v303 = vmul.f32 %v218, %v263
      %v304 = vmul.f32 %v219, %v273
      %305 = vst.msk [vmem:[%s203 + $0x30] sm:$0xff] %vm276, %v303
      %306 = vst.msk [vmem:[%s203 + $0x38] sm:$0xff] %vm276, %v304
      %p307 = scmp.lt.s32.totalorder %s15, 1
      %s308 = scalar_select %p307, %s15, 1
      %s309 = smul.addr %s308, 8
      %s310 = smul.addr %s309, 8
      %s311 = scalar_lea.vmem %s2, %s310
      %p312 = scmp.lt.s32.totalorder %s15, 1
      %s313 = scalar_select %p312, %s15, 1
      %s314 = smul.addr %s313, 8
      %s315 = smul.addr %s314, 8
      %s316 = scalar_lea.vmem %s3, %s315
      // Predicated region
      $region29: #{varnet_forward.16} parent=27 // pred_check
        %p317 = pneg %p85
      $region30: #{varnet_forward.16} parent=27 // pred_check_branch
        %319 = sbr.rel (%p317) target = $region32
      $region31: #{varnet_forward.16} parent=27 // pred_region
        _
      $region32: #{varnet_forward.16} parent=27 // pred_fallthru
        _
      // Predicated region
      $region33: #{varnet_forward.16} parent=27 // pred_check
        %p320 = pneg %p111
      $region34: #{varnet_forward.16} parent=27 // pred_check_branch
        %322 = sbr.rel (%p320) target = $region36
      $region35: #{varnet_forward.16} parent=27 // pred_region
        _
      $region36: #{varnet_forward.16} parent=27 // pred_fallthru
        _
    $region28: #{varnet_forward.16} parent=5 // pred_fallthru
      _
    %p323 = scmp.le.s32.totalorder 2, %s10
    // Predicated region
    $region37: #{varnet_forward.16} parent=5 // pred_check
      %p324 = pneg %p323
    $region38: #{varnet_forward.16} parent=5 // pred_check_branch
      %326 = sbr.rel (%p324) target = $region40
    $region39: #{varnet_forward.16} parent=5 // pred_region
      %s327 = ssub.s32 %s10, 2
      // Predicated region
      $region41: #{varnet_forward.16} parent=39 // pred_check
        %p328 = pneg %p91
      $region42: #{varnet_forward.16} parent=39 // pred_check_branch
        %330 = sbr.rel (%p328) target = $region44
      $region43: #{varnet_forward.16} parent=39 // pred_region
        %p331 = scmp.lt.s32.totalorder %s16, 1
        %s332 = scalar_select %p331, %s16, 1
        %s333 = smul.addr %s332, 8
        %s334 = smul.addr %s333, 8
        %s335 = scalar_lea.vmem %s2, %s334
      $region44: #{varnet_forward.16} parent=39 // pred_fallthru
        _
      // Predicated region
      $region45: #{varnet_forward.16} parent=39 // pred_check
        %p336 = pneg %p117
      $region46: #{varnet_forward.16} parent=39 // pred_check_branch
        %338 = sbr.rel (%p336) target = $region48
      $region47: #{varnet_forward.16} parent=39 // pred_region
        %p339 = scmp.lt.s32.totalorder %s16, 1
        %s340 = scalar_select %p339, %s16, 1
        %s341 = smul.addr %s340, 8
        %s342 = smul.addr %s341, 8
        %s343 = scalar_lea.vmem %s3, %s342
      $region48: #{varnet_forward.16} parent=39 // pred_fallthru
        _
    $region40: #{varnet_forward.16} parent=5 // pred_fallthru
      _
  $region6: #{varnet_forward.16} parent=0 // loop_footer
    %s14 = sadd.s32 1, %s10
  $region7: #{varnet_forward.16} parent=0 // loop_footer_branch
    %9 = sbr.rel target = $region3
  $region8: #{varnet_forward.16} parent=0 // loop_exit
    _

// kernel: varnet_forward.17
$region0: #{varnet_forward.17}
  #allocation0 [shape = 'u32[]', space=smem, size = 0x4, offset = 0x4, fixed_abs, tag = 'smem constant byte address 0x4 - core index']
  #allocation1 [shape = 'u32[72,128]{1,0:T(1,128)}', space=vmem, size = 0x9000, scoped, tag = 'internal scratch']
  %s0 = inlined_call_operand.vmem [shape: f32[16,16], index: 0, kind: input, shape index: {}]
  %s1 = inlined_call_operand.vmem [shape: f32[16,16], index: 1, kind: input, shape index: {}]
  %s2 = inlined_call_operand.vmem [shape: f32[16,16], index: 2, kind: input, shape index: {}]
  %s3 = inlined_call_operand.vmem [shape: f32[16,16], index: 3, kind: input, shape index: {}]
  %s4 = inlined_call_operand.vmem [shape: f32[2,64,16], index: 4, kind: input, shape index: {}]
  %s5 = inlined_call_operand.vmem [shape: f32[2,64,16], index: 5, kind: input, shape index: {}]
  %s6 = inlined_call_operand.vmem [shape: f32[2,64,16], index: 6, kind: input, shape index: {}]
  %s7 = inlined_call_operand.vmem [shape: f32[2,64,16], index: 7, kind: input, shape index: {}]
  %s8 = inlined_call_operand.vmem [shape: f32[2,16,16], index: 8, kind: output, shape index: {0}]
  %s9 = inlined_call_operand.vmem [shape: f32[2,16,16], index: 9, kind: output, shape index: {1}]
  %10 = xla_tuple %s8, %s9
  %s11 = sld [smem:[#allocation0]]
  $region73: #{varnet_forward.17} parent=0
    _
  %s13 = ssub.s32 1, %s11
  %s14 = scalar_select 0, %s13, %s11
  loop: start=0, step=1, limit=4
  $region2: #{varnet_forward.17} parent=0 // loop_pre_header
    _
  $region3: #{varnet_forward.17} parent=0 // loop_header
    %s16 = sphi 0, %s20
    %p17 = scmp.ge.s32.totalorder %s16, 4
    %s24 = sphi 0, %s24
    %s26 = sphi 0, %s24
    %s27 = sphi 0, %s26
    %s41 = sphi 0, %s27
    %s45 = sphi 0, %s45
    %s47 = sphi 0, %s45
    %s48 = sphi 0, %s47
    %s62 = sphi 0, %s48
    %s66 = sphi 0, %s66
    %s68 = sphi 0, %s66
    %s69 = sphi 0, %s68
    %s83 = sphi 0, %s69
    %s87 = sphi 0, %s87
    %s89 = sphi 0, %s87
    %s90 = sphi 0, %s89
    %s104 = sphi 0, %s90
    %s110 = sphi 0, %s112
    %s113 = sphi 0, %s110
    %s114 = sphi 0, %s113
    %s130 = sphi 0, %s114
    %s136 = sphi 0, %s138
    %s139 = sphi 0, %s136
    %s140 = sphi 0, %s139
    %s156 = sphi 0, %s140
    %s162 = sphi 0, %s164
    %s165 = sphi 0, %s162
    %s166 = sphi 0, %s165
    %s182 = sphi 0, %s166
    %s188 = sphi 0, %s190
    %s191 = sphi 0, %s188
    %s192 = sphi 0, %s191
    %s208 = sphi 0, %s192
    %s214 = sphi 0, %s216
    %s217 = sphi 0, %s214
    %s218 = sphi 0, %s217
    %s234 = sphi 0, %s218
    %s240 = sphi 0, %s242
    %s243 = sphi 0, %s240
    %s244 = sphi 0, %s243
    %s260 = sphi 0, %s244
  $region4: #{varnet_forward.17} parent=0 // loop_header_branch
    %19 = sbr.rel (%p17) target = $region8
  $region5: #{varnet_forward.17} parent=0 // loop_body
    %s21 = ssub.s32 %s16, 1
    %s22 = ssub.s32 %s16, 2
    %s23 = sadd.s32 %s16, 1
    %s25 = sadd.s32 %s24, 1
    %p28 = scmp.eq.s32.totalorder %s16, 1
    %p29 = scmp.ne.s32.totalorder %s24, %s26
    %p30 = scmp.eq.s32.totalorder %s16, 0
    %p31 = por %p29, %p30
    %p32 = scmp.ne.s32.totalorder %s24, %s26
    %p33 = scmp.eq.s32.totalorder %s21, 1
    %p34 = por %p32, %p33
    %p35 = scmp.ne.s32.totalorder %s26, %s27
    %p36 = scmp.eq.s32.totalorder %s21, 0
    %p37 = por %p35, %p36
    %p38 = scmp.ne.s32.totalorder %s26, %s27
    %p39 = scmp.eq.s32.totalorder %s22, 1
    %p40 = por %p38, %p39
    %p42 = scmp.ne.s32.totalorder %s27, %s41
    %p43 = scmp.eq.s32.totalorder %s22, 0
    %p44 = por %p42, %p43
    %s46 = sadd.s32 %s45, 1
    %p49 = scmp.eq.s32.totalorder %s16, 1
    %p50 = scmp.ne.s32.totalorder %s45, %s47
    %p51 = scmp.eq.s32.totalorder %s16, 0
    %p52 = por %p50, %p51
    %p53 = scmp.ne.s32.totalorder %s45, %s47
    %p54 = scmp.eq.s32.totalorder %s21, 1
    %p55 = por %p53, %p54
    %p56 = scmp.ne.s32.totalorder %s47, %s48
    %p57 = scmp.eq.s32.totalorder %s21, 0
    %p58 = por %p56, %p57
    %p59 = scmp.ne.s32.totalorder %s47, %s48
    %p60 = scmp.eq.s32.totalorder %s22, 1
    %p61 = por %p59, %p60
    %p63 = scmp.ne.s32.totalorder %s48, %s62
    %p64 = scmp.eq.s32.totalorder %s22, 0
    %p65 = por %p63, %p64
    %s67 = sadd.s32 %s66, 1
    %p70 = scmp.eq.s32.totalorder %s16, 1
    %p71 = scmp.ne.s32.totalorder %s66, %s68
    %p72 = scmp.eq.s32.totalorder %s16, 0
    %p73 = por %p71, %p72
    %p74 = scmp.ne.s32.totalorder %s66, %s68
    %p75 = scmp.eq.s32.totalorder %s21, 1
    %p76 = por %p74, %p75
    %p77 = scmp.ne.s32.totalorder %s68, %s69
    %p78 = scmp.eq.s32.totalorder %s21, 0
    %p79 = por %p77, %p78
    %p80 = scmp.ne.s32.totalorder %s68, %s69
    %p81 = scmp.eq.s32.totalorder %s22, 1
    %p82 = por %p80, %p81
    %p84 = scmp.ne.s32.totalorder %s69, %s83
    %p85 = scmp.eq.s32.totalorder %s22, 0
    %p86 = por %p84, %p85
    %s88 = sadd.s32 %s87, 1
    %p91 = scmp.eq.s32.totalorder %s16, 1
    %p92 = scmp.ne.s32.totalorder %s87, %s89
    %p93 = scmp.eq.s32.totalorder %s16, 0
    %p94 = por %p92, %p93
    %p95 = scmp.ne.s32.totalorder %s87, %s89
    %p96 = scmp.eq.s32.totalorder %s21, 1
    %p97 = por %p95, %p96
    %p98 = scmp.ne.s32.totalorder %s89, %s90
    %p99 = scmp.eq.s32.totalorder %s21, 0
    %p100 = por %p98, %p99
    %p101 = scmp.ne.s32.totalorder %s89, %s90
    %p102 = scmp.eq.s32.totalorder %s22, 1
    %p103 = por %p101, %p102
    %p105 = scmp.ne.s32.totalorder %s90, %s104
    %p106 = scmp.eq.s32.totalorder %s22, 0
    %p107 = por %p105, %p106
    %s108 = ssub.s32 %s16, %s23
    %p109 = scmp.eq.s32.totalorder %s108, 0
    %s111 = sadd.s32 %s110, 1
    %s112 = scalar_select %p109, %s110, %s111
    %p115 = pneg %p109
    %p116 = scmp.eq.s32.totalorder %s16, 1
    %p117 = por %p115, %p116
    %p118 = scmp.ne.s32.totalorder %s110, %s113
    %p119 = scmp.eq.s32.totalorder %s16, 0
    %p120 = por %p118, %p119
    %p121 = scmp.ne.s32.totalorder %s110, %s113
    %p122 = scmp.eq.s32.totalorder %s21, 1
    %p123 = por %p121, %p122
    %p124 = scmp.ne.s32.totalorder %s113, %s114
    %p125 = scmp.eq.s32.totalorder %s21, 0
    %p126 = por %p124, %p125
    %p127 = scmp.ne.s32.totalorder %s113, %s114
    %p128 = scmp.eq.s32.totalorder %s22, 1
    %p129 = por %p127, %p128
    %p131 = scmp.ne.s32.totalorder %s114, %s130
    %p132 = scmp.eq.s32.totalorder %s22, 0
    %p133 = por %p131, %p132
    %s134 = ssub.s32 %s16, %s23
    %p135 = scmp.eq.s32.totalorder %s134, 0
    %s137 = sadd.s32 %s136, 1
    %s138 = scalar_select %p135, %s136, %s137
    %p141 = pneg %p135
    %p142 = scmp.eq.s32.totalorder %s16, 1
    %p143 = por %p141, %p142
    %p144 = scmp.ne.s32.totalorder %s136, %s139
    %p145 = scmp.eq.s32.totalorder %s16, 0
    %p146 = por %p144, %p145
    %p147 = scmp.ne.s32.totalorder %s136, %s139
    %p148 = scmp.eq.s32.totalorder %s21, 1
    %p149 = por %p147, %p148
    %p150 = scmp.ne.s32.totalorder %s139, %s140
    %p151 = scmp.eq.s32.totalorder %s21, 0
    %p152 = por %p150, %p151
    %p153 = scmp.ne.s32.totalorder %s139, %s140
    %p154 = scmp.eq.s32.totalorder %s22, 1
    %p155 = por %p153, %p154
    %p157 = scmp.ne.s32.totalorder %s140, %s156
    %p158 = scmp.eq.s32.totalorder %s22, 0
    %p159 = por %p157, %p158
    %s160 = ssub.s32 %s16, %s23
    %p161 = scmp.eq.s32.totalorder %s160, 0
    %s163 = sadd.s32 %s162, 1
    %s164 = scalar_select %p161, %s162, %s163
    %p167 = pneg %p161
    %p168 = scmp.eq.s32.totalorder %s16, 1
    %p169 = por %p167, %p168
    %p170 = scmp.ne.s32.totalorder %s162, %s165
    %p171 = scmp.eq.s32.totalorder %s16, 0
    %p172 = por %p170, %p171
    %p173 = scmp.ne.s32.totalorder %s162, %s165
    %p174 = scmp.eq.s32.totalorder %s21, 1
    %p175 = por %p173, %p174
    %p176 = scmp.ne.s32.totalorder %s165, %s166
    %p177 = scmp.eq.s32.totalorder %s21, 0
    %p178 = por %p176, %p177
    %p179 = scmp.ne.s32.totalorder %s165, %s166
    %p180 = scmp.eq.s32.totalorder %s22, 1
    %p181 = por %p179, %p180
    %p183 = scmp.ne.s32.totalorder %s166, %s182
    %p184 = scmp.eq.s32.totalorder %s22, 0
    %p185 = por %p183, %p184
    %s186 = ssub.s32 %s16, %s23
    %p187 = scmp.eq.s32.totalorder %s186, 0
    %s189 = sadd.s32 %s188, 1
    %s190 = scalar_select %p187, %s188, %s189
    %p193 = pneg %p187
    %p194 = scmp.eq.s32.totalorder %s16, 1
    %p195 = por %p193, %p194
    %p196 = scmp.ne.s32.totalorder %s188, %s191
    %p197 = scmp.eq.s32.totalorder %s16, 0
    %p198 = por %p196, %p197
    %p199 = scmp.ne.s32.totalorder %s188, %s191
    %p200 = scmp.eq.s32.totalorder %s21, 1
    %p201 = por %p199, %p200
    %p202 = scmp.ne.s32.totalorder %s191, %s192
    %p203 = scmp.eq.s32.totalorder %s21, 0
    %p204 = por %p202, %p203
    %p205 = scmp.ne.s32.totalorder %s191, %s192
    %p206 = scmp.eq.s32.totalorder %s22, 1
    %p207 = por %p205, %p206
    %p209 = scmp.ne.s32.totalorder %s192, %s208
    %p210 = scmp.eq.s32.totalorder %s22, 0
    %p211 = por %p209, %p210
    %s212 = ssub.s32 %s16, %s23
    %p213 = scmp.eq.s32.totalorder %s212, 0
    %s215 = sadd.s32 %s214, 1
    %s216 = scalar_select %p213, %s214, %s215
    %p219 = pneg %p213
    %p220 = scmp.eq.s32.totalorder %s16, 1
    %p221 = por %p219, %p220
    %p222 = scmp.ne.s32.totalorder %s214, %s217
    %p223 = scmp.eq.s32.totalorder %s16, 0
    %p224 = por %p222, %p223
    %p225 = scmp.ne.s32.totalorder %s214, %s217
    %p226 = scmp.eq.s32.totalorder %s21, 1
    %p227 = por %p225, %p226
    %p228 = scmp.ne.s32.totalorder %s217, %s218
    %p229 = scmp.eq.s32.totalorder %s21, 0
    %p230 = por %p228, %p229
    %p231 = scmp.ne.s32.totalorder %s217, %s218
    %p232 = scmp.eq.s32.totalorder %s22, 1
    %p233 = por %p231, %p232
    %p235 = scmp.ne.s32.totalorder %s218, %s234
    %p236 = scmp.eq.s32.totalorder %s22, 0
    %p237 = por %p235, %p236
    %s238 = ssub.s32 %s16, %s23
    %p239 = scmp.eq.s32.totalorder %s238, 0
    %s241 = sadd.s32 %s240, 1
    %s242 = scalar_select %p239, %s240, %s241
    %p245 = pneg %p239
    %p246 = scmp.eq.s32.totalorder %s16, 1
    %p247 = por %p245, %p246
    %p248 = scmp.ne.s32.totalorder %s240, %s243
    %p249 = scmp.eq.s32.totalorder %s16, 0
    %p250 = por %p248, %p249
    %p251 = scmp.ne.s32.totalorder %s240, %s243
    %p252 = scmp.eq.s32.totalorder %s21, 1
    %p253 = por %p251, %p252
    %p254 = scmp.ne.s32.totalorder %s243, %s244
    %p255 = scmp.eq.s32.totalorder %s21, 0
    %p256 = por %p254, %p255
    %p257 = scmp.ne.s32.totalorder %s243, %s244
    %p258 = scmp.eq.s32.totalorder %s22, 1
    %p259 = por %p257, %p258
    %p261 = scmp.ne.s32.totalorder %s244, %s260
    %p262 = scmp.eq.s32.totalorder %s22, 0
    %p263 = por %p261, %p262
    %p264 = scmp.le.s32.totalorder 1, %s16
    %p265 = scmp.lt.s32.totalorder %s16, 3
    %p266 = pnand %p264, %p265
    %p267 = pneg %p266
    // Predicated region
    $region9: #{varnet_forward.17} parent=5 // pred_check
      _
    $region10: #{varnet_forward.17} parent=5 // pred_check_branch
      %269 = sbr.rel (%p266) target = $region12
    $region11: #{varnet_forward.17} parent=5 // pred_region
      %s270 = ssub.s32 %s16, 1
      // Predicated region
      $region13: #{varnet_forward.17} parent=11 // pred_check
        %p271 = pneg %p37
      $region14: #{varnet_forward.17} parent=11 // pred_check_branch
        %273 = sbr.rel (%p271) target = $region16
      $region15: #{varnet_forward.17} parent=11 // pred_region
        _
      $region16: #{varnet_forward.17} parent=11 // pred_fallthru
        _
      // Predicated region
      $region17: #{varnet_forward.17} parent=11 // pred_check
        %p274 = pneg %p58
      $region18: #{varnet_forward.17} parent=11 // pred_check_branch
        %276 = sbr.rel (%p274) target = $region20
      $region19: #{varnet_forward.17} parent=11 // pred_region
        _
      $region20: #{varnet_forward.17} parent=11 // pred_fallthru
        _
      // Predicated region
      $region21: #{varnet_forward.17} parent=11 // pred_check
        %p277 = pneg %p79
      $region22: #{varnet_forward.17} parent=11 // pred_check_branch
        %279 = sbr.rel (%p277) target = $region24
      $region23: #{varnet_forward.17} parent=11 // pred_region
        _
      $region24: #{varnet_forward.17} parent=11 // pred_fallthru
        _
      // Predicated region
      $region25: #{varnet_forward.17} parent=11 // pred_check
        %p280 = pneg %p100
      $region26: #{varnet_forward.17} parent=11 // pred_check_branch
        %282 = sbr.rel (%p280) target = $region28
      $region27: #{varnet_forward.17} parent=11 // pred_region
        _
      $region28: #{varnet_forward.17} parent=11 // pred_fallthru
        _
    $region12: #{varnet_forward.17} parent=5 // pred_fallthru
      _
    %p283 = scmp.lt.s32.totalorder %s16, 2
    // Predicated region
    $region29: #{varnet_forward.17} parent=5 // pred_check
      %p284 = pneg %p283
    $region30: #{varnet_forward.17} parent=5 // pred_check_branch
      %286 = sbr.rel (%p284) target = $region32
    $region31: #{varnet_forward.17} parent=5 // pred_region
      // Predicated region
      $region33: #{varnet_forward.17} parent=31 // pred_check
        %p287 = pneg %p120
      $region34: #{varnet_forward.17} parent=31 // pred_check_branch
        %289 = sbr.rel (%p287) target = $region36
      $region35: #{varnet_forward.17} parent=31 // pred_region
        %p290 = scmp.lt.s32.totalorder %s16, 1
        %s291 = scalar_select %p290, %s16, 1
        %s292 = smul.addr %s291, 8
        %s293 = smul.addr %s292, 8
        %s294 = scalar_lea.vmem %s4, %s293
      $region36: #{varnet_forward.17} parent=31 // pred_fallthru
        _
      // Predicated region
      $region37: #{varnet_forward.17} parent=31 // pred_check
        %p295 = pneg %p146
      $region38: #{varnet_forward.17} parent=31 // pred_check_branch
        %297 = sbr.rel (%p295) target = $region40
      $region39: #{varnet_forward.17} parent=31 // pred_region
        %p298 = scmp.lt.s32.totalorder %s16, 1
        %s299 = scalar_select %p298, %s16, 1
        %s300 = smul.addr %s299, 8
        %s301 = smul.addr %s300, 8
        %s302 = scalar_lea.vmem %s5, %s301
      $region40: #{varnet_forward.17} parent=31 // pred_fallthru
        _
      // Predicated region
      $region41: #{varnet_forward.17} parent=31 // pred_check
        %p303 = pneg %p172
      $region42: #{varnet_forward.17} parent=31 // pred_check_branch
        %305 = sbr.rel (%p303) target = $region44
      $region43: #{varnet_forward.17} parent=31 // pred_region
        %p306 = scmp.lt.s32.totalorder %s16, 1
        %s307 = scalar_select %p306, %s16, 1
        %s308 = smul.addr %s307, 8
        %s309 = smul.addr %s308, 8
        %s310 = scalar_lea.vmem %s6, %s309
      $region44: #{varnet_forward.17} parent=31 // pred_fallthru
        _
      // Predicated region
      $region45: #{varnet_forward.17} parent=31 // pred_check
        %p311 = pneg %p198
      $region46: #{varnet_forward.17} parent=31 // pred_check_branch
        %313 = sbr.rel (%p311) target = $region48
      $region47: #{varnet_forward.17} parent=31 // pred_region
        %p314 = scmp.lt.s32.totalorder %s16, 1
        %s315 = scalar_select %p314, %s16, 1
        %s316 = smul.addr %s315, 8
        %s317 = smul.addr %s316, 8
        %s318 = scalar_lea.vmem %s7, %s317
      $region48: #{varnet_forward.17} parent=31 // pred_fallthru
        _
    $region32: #{varnet_forward.17} parent=5 // pred_fallthru
      _
    %p319 = scmp.le.s32.totalorder 1, %s16
    %p320 = scmp.lt.s32.totalorder %s16, 3
    %p321 = pnand %p319, %p320
    %p322 = pneg %p321
    // Predicated region
    $region49: #{varnet_forward.17} parent=5 // pred_check
      _
    $region50: #{varnet_forward.17} parent=5 // pred_check_branch
      %324 = sbr.rel (%p321) target = $region52
    $region51: #{varnet_forward.17} parent=5 // pred_region
      %s325 = ssub.s32 %s16, 1
      %p326 = pneg %p37
      %p327 = pneg %p34
      %p328 = pneg %p58
      %p329 = pneg %p55
      %p330 = pneg %p79
      %p331 = pneg %p76
      %p332 = pneg %p100
      %p333 = pneg %p97
      %p334 = scmp.lt.s32.totalorder %s21, 1
      %s335 = scalar_select %p334, %s21, 1
      %s336 = smul.addr %s335, 8
      %s337 = smul.addr %s336, 8
      %s338 = scalar_lea.vmem %s4, %s337
      %p339 = pneg %p126
      %p340 = pneg %p123
      %p341 = scmp.lt.s32.totalorder %s21, 1
      %s342 = scalar_select %p341, %s21, 1
      %s343 = smul.addr %s342, 8
      %s344 = smul.addr %s343, 8
      %s345 = scalar_lea.vmem %s5, %s344
      %p346 = pneg %p152
      %p347 = pneg %p149
      %p348 = scmp.lt.s32.totalorder %s21, 1
      %s349 = scalar_select %p348, %s21, 1
      %s350 = smul.addr %s349, 8
      %s351 = smul.addr %s350, 8
      %s352 = scalar_lea.vmem %s6, %s351
      %p353 = pneg %p178
      %p354 = pneg %p175
      %p355 = scmp.lt.s32.totalorder %s21, 1
      %s356 = scalar_select %p355, %s21, 1
      %s357 = smul.addr %s356, 8
      %s358 = smul.addr %s357, 8
      %s359 = scalar_lea.vmem %s7, %s358
      %p360 = pneg %p204
      %p361 = pneg %p201
      %p362 = pneg %p230
      %p363 = pneg %p227
      %p364 = scmp.lt.s32.totalorder %s21, 1
      %s365 = scalar_select %p364, %s21, 1
      %s366 = smul.addr %s365, 2
      %s367 = smul.addr %s366, 8
      %s368 = scalar_lea.vmem %s8, %s367
      %p369 = pneg %p256
      %p370 = pneg %p253
      %p371 = scmp.lt.s32.totalorder %s21, 1
      %s372 = scalar_select %p371, %s21, 1
      %s373 = smul.addr %s372, 2
      %s374 = smul.addr %s373, 8
      %s375 = scalar_lea.vmem %s9, %s374
      %p376 = scmp.lt.s32.totalorder %s21, 1
      %s377 = scalar_select %p376, %s21, 1
      %s378 = smul.addr %s377, 8
      %s379 = smul.addr %s378, 8
      %s380 = scalar_lea.vmem %s4, %s379
      %p381 = scmp.lt.s32.totalorder %s21, 1
      %s382 = scalar_select %p381, %s21, 1
      %s383 = smul.addr %s382, 8
      %s384 = smul.addr %s383, 8
      %s385 = scalar_lea.vmem %s5, %s384
      %p386 = scmp.lt.s32.totalorder %s21, 1
      %s387 = scalar_select %p386, %s21, 1
      %s388 = smul.addr %s387, 8
      %s389 = smul.addr %s388, 8
      %s390 = scalar_lea.vmem %s6, %s389
      %p391 = scmp.lt.s32.totalorder %s21, 1
      %s392 = scalar_select %p391, %s21, 1
      %s393 = smul.addr %s392, 8
      %s394 = smul.addr %s393, 8
      %s395 = scalar_lea.vmem %s7, %s394
      %p396 = scmp.lt.s32.totalorder %s21, 1
      %s397 = scalar_select %p396, %s21, 1
      %s398 = smul.addr %s397, 2
      %s399 = smul.addr %s398, 8
      %s400 = scalar_lea.vmem %s8, %s399
      %p401 = scmp.lt.s32.totalorder %s21, 1
      %s402 = scalar_select %p401, %s21, 1
      %s403 = smul.addr %s402, 2
      %s404 = smul.addr %s403, 8
      %s405 = scalar_lea.vmem %s9, %s404
      %v406 = vld [vmem:[%s380] sm:$0xff]
      %v407 = vld [vmem:[%s380 + $0x8] sm:$0xff]
      %v408 = vld [vmem:[%s380 + $0x10] sm:$0xff]
      %v409 = vld [vmem:[%s380 + $0x18] sm:$0xff]
      %v410 = vld [vmem:[%s380 + $0x20] sm:$0xff]
      %v411 = vld [vmem:[%s380 + $0x28] sm:$0xff]
      %v412 = vld [vmem:[%s380 + $0x30] sm:$0xff]
      %v413 = vld [vmem:[%s380 + $0x38] sm:$0xff]
      %v414 = vld [vmem:[%s385] sm:$0xff]
      %v415 = vld [vmem:[%s385 + $0x8] sm:$0xff]
      %v416 = vld [vmem:[%s385 + $0x10] sm:$0xff]
      %v417 = vld [vmem:[%s385 + $0x18] sm:$0xff]
      %v418 = vld [vmem:[%s385 + $0x20] sm:$0xff]
      %v419 = vld [vmem:[%s385 + $0x28] sm:$0xff]
      %v420 = vld [vmem:[%s385 + $0x30] sm:$0xff]
      %v421 = vld [vmem:[%s385 + $0x38] sm:$0xff]
      %v422 = vld [vmem:[%s2] sm:$0xff]
      %v423 = vld [vmem:[%s2 + $0x8] sm:$0xff]
      %v424 = vld [vmem:[%s3] sm:$0xff]
      %v425 = vld [vmem:[%s3 + $0x8] sm:$0xff]
      %vm426 = vcmask 130048
      %v428 = vsel %vm426, %v406, 0
      %v431 = vsel %vm426, %v407, 0
      %v434 = vsel %vm426, %v408, 0
      %v437 = vsel %vm426, %v409, 0
      %v440 = vsel %vm426, %v410, 0
      %v443 = vsel %vm426, %v411, 0
      %v446 = vsel %vm426, %v412, 0
      %v449 = vsel %vm426, %v413, 0
      %451 = vmatpush.msra.mxu0 0.0
      %452 = vmatpush.msra.mxu0 0.0
      %453 = vmatpush.msra.mxu0 0.0
      %454 = vmatpush.msra.mxu0 0.0
      %455 = vmatpush.msra.mxu0 0.0
      %456 = vmatpush.msra.mxu0 0.0
      %457 = vmatpush.msra.mxu0 0.0
      %458 = vmatpush.msra.mxu0 0.0
      %459 = vmatpush.msra.mxu0 0.0
      %460 = vmatpush.msra.mxu0 0.0
      %461 = vmatpush.msra.mxu0 0.0
      %462 = vmatpush.msra.mxu0 0.0
      %463 = vmatpush.msra.mxu0 0.0
      %464 = vmatpush.msra.mxu0 0.0
      %465 = vmatpush.msra.mxu0 %v423
      %466 = vmatpush.msra.mxu0 %v422
      %467 = vmatmul.f32.gmra.mxu0 %v428
      %v468 = vpop.f32.mrf.mxu0
      %v469 = vadd.f32 0.0, %v468
      %470 = vmatmul.f32.gmra.mxu0 %v431
      %v471 = vpop.f32.mrf.mxu0
      %v472 = vadd.f32 0.0, %v471
      %473 = vmatmul.f32.gmra.mxu0 %v434
      %v474 = vpop.f32.mrf.mxu0
      %v475 = vadd.f32 0.0, %v474
      %476 = vmatmul.f32.gmra.mxu0 %v437
      %v477 = vpop.f32.mrf.mxu0
      %v478 = vadd.f32 0.0, %v477
      %479 = vmatmul.f32.gmra.mxu0 %v440
      %v480 = vpop.f32.mrf.mxu0
      %v481 = vadd.f32 0.0, %v480
      %482 = vmatmul.f32.gmra.mxu0 %v443
      %v483 = vpop.f32.mrf.mxu0
      %v484 = vadd.f32 0.0, %v483
      %485 = vmatmul.f32.gmra.mxu0 %v446
      %v486 = vpop.f32.mrf.mxu0
      %v487 = vadd.f32 0.0, %v486
      %488 = vmatmul.f32.gmra.mxu0 %v449
      %v489 = vpop.f32.mrf.mxu0
      %v490 = vadd.f32 0.0, %v489
      %491 = vdwg.mxu0
      %v493 = vsel %vm426, %v414, 0
      %v496 = vsel %vm426, %v415, 0
      %v499 = vsel %vm426, %v416, 0
      %v502 = vsel %vm426, %v417, 0
      %v505 = vsel %vm426, %v418, 0
      %v508 = vsel %vm426, %v419, 0
      %v511 = vsel %vm426, %v420, 0
      %v514 = vsel %vm426, %v421, 0
      %516 = vmatpush.msra.mxu0 0.0
      %517 = vmatpush.msra.mxu0 0.0
      %518 = vmatpush.msra.mxu0 0.0
      %519 = vmatpush.msra.mxu0 0.0
      %520 = vmatpush.msra.mxu0 0.0
      %521 = vmatpush.msra.mxu0 0.0
      %522 = vmatpush.msra.mxu0 0.0
      %523 = vmatpush.msra.mxu0 0.0
      %524 = vmatpush.msra.mxu0 0.0
      %525 = vmatpush.msra.mxu0 0.0
      %526 = vmatpush.msra.mxu0 0.0
      %527 = vmatpush.msra.mxu0 0.0
      %528 = vmatpush.msra.mxu0 0.0
      %529 = vmatpush.msra.mxu0 0.0
      %530 = vmatpush.msra.mxu0 %v425
      %531 = vmatpush.msra.mxu0 %v424
      %532 = vmatmul.f32.gmra.mxu0 %v493
      %v533 = vpop.f32.mrf.mxu0
      %v534 = vadd.f32 0.0, %v533
      %535 = vmatmul.f32.gmra.mxu0 %v496
      %v536 = vpop.f32.mrf.mxu0
      %v537 = vadd.f32 0.0, %v536
      %538 = vmatmul.f32.gmra.mxu0 %v499
      %v539 = vpop.f32.mrf.mxu0
      %v540 = vadd.f32 0.0, %v539
      %541 = vmatmul.f32.gmra.mxu0 %v502
      %v542 = vpop.f32.mrf.mxu0
      %v543 = vadd.f32 0.0, %v542
      %544 = vmatmul.f32.gmra.mxu0 %v505
      %v545 = vpop.f32.mrf.mxu0
      %v546 = vadd.f32 0.0, %v545
      %547 = vmatmul.f32.gmra.mxu0 %v508
      %v548 = vpop.f32.mrf.mxu0
      %v549 = vadd.f32 0.0, %v548
      %550 = vmatmul.f32.gmra.mxu0 %v511
      %v551 = vpop.f32.mrf.mxu0
      %v552 = vadd.f32 0.0, %v551
      %553 = vmatmul.f32.gmra.mxu0 %v514
      %v554 = vpop.f32.mrf.mxu0
      %v555 = vadd.f32 0.0, %v554
      %556 = vdwg.mxu0
      %v557 = vadd.f32 %v406, %v414
      %v558 = vadd.f32 %v407, %v415
      %v559 = vadd.f32 %v408, %v416
      %v560 = vadd.f32 %v409, %v417
      %v561 = vadd.f32 %v410, %v418
      %v562 = vadd.f32 %v411, %v419
      %v563 = vadd.f32 %v412, %v420
      %v564 = vadd.f32 %v413, %v421
      %v565 = vadd.f32 %v422, %v424
      %v566 = vadd.f32 %v423, %v425
      %v568 = vsel %vm426, %v557, 0
      %v571 = vsel %vm426, %v558, 0
      %v574 = vsel %vm426, %v559, 0
      %v577 = vsel %vm426, %v560, 0
      %v580 = vsel %vm426, %v561, 0
      %v583 = vsel %vm426, %v562, 0
      %v586 = vsel %vm426, %v563, 0
      %v589 = vsel %vm426, %v564, 0
      %591 = vmatpush.msra.mxu0 0.0
      %592 = vmatpush.msra.mxu0 0.0
      %593 = vmatpush.msra.mxu0 0.0
      %594 = vmatpush.msra.mxu0 0.0
      %595 = vmatpush.msra.mxu0 0.0
      %596 = vmatpush.msra.mxu0 0.0
      %597 = vmatpush.msra.mxu0 0.0
      %598 = vmatpush.msra.mxu0 0.0
      %599 = vmatpush.msra.mxu0 0.0
      %600 = vmatpush.msra.mxu0 0.0
      %601 = vmatpush.msra.mxu0 0.0
      %602 = vmatpush.msra.mxu0 0.0
      %603 = vmatpush.msra.mxu0 0.0
      %604 = vmatpush.msra.mxu0 0.0
      %605 = vmatpush.msra.mxu0 %v566
      %606 = vmatpush.msra.mxu0 %v565
      %607 = vmatmul.f32.gmra.mxu0 %v568
      %v608 = vpop.f32.mrf.mxu0
      %v609 = vadd.f32 0.0, %v608
      %610 = vmatmul.f32.gmra.mxu0 %v571
      %v611 = vpop.f32.mrf.mxu0
      %v612 = vadd.f32 0.0, %v611
      %613 = vmatmul.f32.gmra.mxu0 %v574
      %v614 = vpop.f32.mrf.mxu0
      %v615 = vadd.f32 0.0, %v614
      %616 = vmatmul.f32.gmra.mxu0 %v577
      %v617 = vpop.f32.mrf.mxu0
      %v618 = vadd.f32 0.0, %v617
      %619 = vmatmul.f32.gmra.mxu0 %v580
      %v620 = vpop.f32.mrf.mxu0
      %v621 = vadd.f32 0.0, %v620
      %622 = vmatmul.f32.gmra.mxu0 %v583
      %v623 = vpop.f32.mrf.mxu0
      %v624 = vadd.f32 0.0, %v623
      %625 = vmatmul.f32.gmra.mxu0 %v586
      %v626 = vpop.f32.mrf.mxu0
      %v627 = vadd.f32 0.0, %v626
      %628 = vmatmul.f32.gmra.mxu0 %v589
      %v629 = vpop.f32.mrf.mxu0
      %v630 = vadd.f32 0.0, %v629
      %631 = vdwg.mxu0
      %v632 = vsub.f32 %v469, %v534
      %v633 = vsub.f32 %v472, %v537
      %v634 = vsub.f32 %v475, %v540
      %v635 = vsub.f32 %v478, %v543
      %v636 = vsub.f32 %v481, %v546
      %v637 = vsub.f32 %v484, %v549
      %v638 = vsub.f32 %v487, %v552
      %v639 = vsub.f32 %v490, %v555
      %v640 = vsub.f32 %v609, %v469
      %v641 = vsub.f32 %v612, %v472
      %v642 = vsub.f32 %v615, %v475
      %v643 = vsub.f32 %v618, %v478
      %v644 = vsub.f32 %v621, %v481
      %v645 = vsub.f32 %v624, %v484
      %v646 = vsub.f32 %v627, %v487
      %v647 = vsub.f32 %v630, %v490
      %v648 = vsub.f32 %v640, %v534
      %v649 = vsub.f32 %v641, %v537
      %v650 = vsub.f32 %v642, %v540
      %v651 = vsub.f32 %v643, %v543
      %v652 = vsub.f32 %v644, %v546
      %v653 = vsub.f32 %v645, %v549
      %v654 = vsub.f32 %v646, %v552
      %v655 = vsub.f32 %v647, %v555
      %v656 = vld [vmem:[%s0] sm:$0xff]
      %v657 = vld [vmem:[%s0 + $0x8] sm:$0xff]
      %v658 = vld [vmem:[%s1] sm:$0xff]
      %v659 = vld [vmem:[%s1 + $0x8] sm:$0xff]
      %v660 = vld [vmem:[%s390] sm:$0xff]
      %v661 = vld [vmem:[%s390 + $0x8] sm:$0xff]
      %v662 = vld [vmem:[%s390 + $0x10] sm:$0xff]
      %v663 = vld [vmem:[%s390 + $0x18] sm:$0xff]
      %v664 = vld [vmem:[%s390 + $0x20] sm:$0xff]
      %v665 = vld [vmem:[%s390 + $0x28] sm:$0xff]
      %v666 = vld [vmem:[%s390 + $0x30] sm:$0xff]
      %v667 = vld [vmem:[%s390 + $0x38] sm:$0xff]
      %v668 = vld [vmem:[%s395] sm:$0xff]
      %v669 = vld [vmem:[%s395 + $0x8] sm:$0xff]
      %v670 = vld [vmem:[%s395 + $0x10] sm:$0xff]
      %v671 = vld [vmem:[%s395 + $0x18] sm:$0xff]
      %v672 = vld [vmem:[%s395 + $0x20] sm:$0xff]
      %v673 = vld [vmem:[%s395 + $0x28] sm:$0xff]
      %v674 = vld [vmem:[%s395 + $0x30] sm:$0xff]
      %v675 = vld [vmem:[%s395 + $0x38] sm:$0xff]
      %v677 = vsel %vm426, %v656, 0
      %v680 = vsel %vm426, %v657, 0
      %682 = vmatpush.msra.mxu0 0.0
      %683 = vmatpush.msra.mxu0 0.0
      %684 = vmatpush.msra.mxu0 0.0
      %685 = vmatpush.msra.mxu0 0.0
      %686 = vmatpush.msra.mxu0 0.0
      %687 = vmatpush.msra.mxu0 0.0
      %688 = vmatpush.msra.mxu0 0.0
      %689 = vmatpush.msra.mxu0 0.0
      %690 = vmatpush.msra.mxu0 0.0
      %691 = vmatpush.msra.mxu0 0.0
      %692 = vmatpush.msra.mxu0 0.0
      %693 = vmatpush.msra.mxu0 0.0
      %694 = vmatpush.msra.mxu0 0.0
      %695 = vmatpush.msra.mxu0 0.0
      %696 = vmatpush.msra.mxu0 %v633
      %697 = vmatpush.msra.mxu0 %v632
      %698 = vmatmul.f32.gmra.mxu0 %v677
      %v699 = vpop.f32.mrf.mxu0
      %v700 = vadd.f32 0.0, %v699
      %701 = vmatmul.f32.gmra.mxu0 %v680
      %v702 = vpop.f32.mrf.mxu0
      %v703 = vadd.f32 0.0, %v702
      %704 = vdwg.mxu0
      %v706 = vsel %vm426, %v658, 0
      %v709 = vsel %vm426, %v659, 0
      %711 = vmatpush.msra.mxu0 0.0
      %712 = vmatpush.msra.mxu0 0.0
      %713 = vmatpush.msra.mxu0 0.0
      %714 = vmatpush.msra.mxu0 0.0
      %715 = vmatpush.msra.mxu0 0.0
      %716 = vmatpush.msra.mxu0 0.0
      %717 = vmatpush.msra.mxu0 0.0
      %718 = vmatpush.msra.mxu0 0.0
      %719 = vmatpush.msra.mxu0 0.0
      %720 = vmatpush.msra.mxu0 0.0
      %721 = vmatpush.msra.mxu0 0.0
      %722 = vmatpush.msra.mxu0 0.0
      %723 = vmatpush.msra.mxu0 0.0
      %724 = vmatpush.msra.mxu0 0.0
      %725 = vmatpush.msra.mxu0 %v649
      %726 = vmatpush.msra.mxu0 %v648
      %727 = vmatmul.f32.gmra.mxu0 %v706
      %v728 = vpop.f32.mrf.mxu0
      %v729 = vadd.f32 0.0, %v728
      %730 = vmatmul.f32.gmra.mxu0 %v709
      %v731 = vpop.f32.mrf.mxu0
      %v732 = vadd.f32 0.0, %v731
      %733 = vdwg.mxu0
      %v734 = vadd.f32 %v656, %v658
      %v735 = vadd.f32 %v657, %v659
      %v736 = vadd.f32 %v632, %v648
      %v737 = vadd.f32 %v633, %v649
      %v739 = vsel %vm426, %v734, 0
      %v742 = vsel %vm426, %v735, 0
      %744 = vmatpush.msra.mxu0 0.0
      %745 = vmatpush.msra.mxu0 0.0
      %746 = vmatpush.msra.mxu0 0.0
      %747 = vmatpush.msra.mxu0 0.0
      %748 = vmatpush.msra.mxu0 0.0
      %749 = vmatpush.msra.mxu0 0.0
      %750 = vmatpush.msra.mxu0 0.0
      %751 = vmatpush.msra.mxu0 0.0
      %752 = vmatpush.msra.mxu0 0.0
      %753 = vmatpush.msra.mxu0 0.0
      %754 = vmatpush.msra.mxu0 0.0
      %755 = vmatpush.msra.mxu0 0.0
      %756 = vmatpush.msra.mxu0 0.0
      %757 = vmatpush.msra.mxu0 0.0
      %758 = vmatpush.msra.mxu0 %v737
      %759 = vmatpush.msra.mxu0 %v736
      %760 = vmatmul.f32.gmra.mxu0 %v739
      %v761 = vpop.f32.mrf.mxu0
      %v762 = vadd.f32 0.0, %v761
      %763 = vmatmul.f32.gmra.mxu0 %v742
      %v764 = vpop.f32.mrf.mxu0
      %v765 = vadd.f32 0.0, %v764
      %766 = vdwg.mxu0
      %v767 = vsub.f32 %v700, %v729
      %v768 = vsub.f32 %v703, %v732
      %v769 = vsub.f32 %v762, %v700
      %v770 = vsub.f32 %v765, %v703
      %v771 = vsub.f32 %v769, %v729
      %v772 = vsub.f32 %v770, %v732
      %v773 = vmul.f32 %v767, %v660
      %v774 = vmul.f32 %v768, %v661
      %v775 = vadd.f32 %v773, 0.0
      %v776 = vadd.f32 %v774, 0.0
      %v777 = vmul.f32 %v771, %v668
      %v778 = vmul.f32 %v772, %v669
      %v779 = vadd.f32 %v775, %v777
      %v780 = vadd.f32 %v776, %v778
      %v781 = vmul.f32 %v771, %v660
      %v782 = vmul.f32 %v772, %v661
      %v783 = vadd.f32 %v781, 0.0
      %v784 = vadd.f32 %v782, 0.0
      %v785 = vmul.f32 %v767, %v668
      %v786 = vmul.f32 %v768, %v669
      %v787 = vsub.f32 %v783, %v785
      %v788 = vsub.f32 %v784, %v786
      %789 = vmatpush.msra.mxu0 0.0
      %790 = vmatpush.msra.mxu0 0.0
      %791 = vmatpush.msra.mxu0 0.0
      %792 = vmatpush.msra.mxu0 0.0
      %793 = vmatpush.msra.mxu0 0.0
      %794 = vmatpush.msra.mxu0 0.0
      %795 = vmatpush.msra.mxu0 0.0
      %796 = vmatpush.msra.mxu0 0.0
      %797 = vmatpush.msra.mxu0 0.0
      %798 = vmatpush.msra.mxu0 0.0
      %799 = vmatpush.msra.mxu0 0.0
      %800 = vmatpush.msra.mxu0 0.0
      %801 = vmatpush.msra.mxu0 0.0
      %802 = vmatpush.msra.mxu0 0.0
      %803 = vmatpush.msra.mxu0 %v635
      %804 = vmatpush.msra.mxu0 %v634
      %805 = vmatmul.f32.gmra.mxu0 %v677
      %v806 = vpop.f32.mrf.mxu0
      %v807 = vadd.f32 0.0, %v806
      %808 = vmatmul.f32.gmra.mxu0 %v680
      %v809 = vpop.f32.mrf.mxu0
      %v810 = vadd.f32 0.0, %v809
      %811 = vdwg.mxu0
      %812 = vmatpush.msra.mxu0 0.0
      %813 = vmatpush.msra.mxu0 0.0
      %814 = vmatpush.msra.mxu0 0.0
      %815 = vmatpush.msra.mxu0 0.0
      %816 = vmatpush.msra.mxu0 0.0
      %817 = vmatpush.msra.mxu0 0.0
      %818 = vmatpush.msra.mxu0 0.0
      %819 = vmatpush.msra.mxu0 0.0
      %820 = vmatpush.msra.mxu0 0.0
      %821 = vmatpush.msra.mxu0 0.0
      %822 = vmatpush.msra.mxu0 0.0
      %823 = vmatpush.msra.mxu0 0.0
      %824 = vmatpush.msra.mxu0 0.0
      %825 = vmatpush.msra.mxu0 0.0
      %826 = vmatpush.msra.mxu0 %v651
      %827 = vmatpush.msra.mxu0 %v650
      %828 = vmatmul.f32.gmra.mxu0 %v706
      %v829 = vpop.f32.mrf.mxu0
      %v830 = vadd.f32 0.0, %v829
      %831 = vmatmul.f32.gmra.mxu0 %v709
      %v832 = vpop.f32.mrf.mxu0
      %v833 = vadd.f32 0.0, %v832
      %834 = vdwg.mxu0
      %v835 = vadd.f32 %v634, %v650
      %v836 = vadd.f32 %v635, %v651
      %837 = vmatpush.msra.mxu0 0.0
      %838 = vmatpush.msra.mxu0 0.0
      %839 = vmatpush.msra.mxu0 0.0
      %840 = vmatpush.msra.mxu0 0.0
      %841 = vmatpush.msra.mxu0 0.0
      %842 = vmatpush.msra.mxu0 0.0
      %843 = vmatpush.msra.mxu0 0.0
      %844 = vmatpush.msra.mxu0 0.0
      %845 = vmatpush.msra.mxu0 0.0
      %846 = vmatpush.msra.mxu0 0.0
      %847 = vmatpush.msra.mxu0 0.0
      %848 = vmatpush.msra.mxu0 0.0
      %849 = vmatpush.msra.mxu0 0.0
      %850 = vmatpush.msra.mxu0 0.0
      %851 = vmatpush.msra.mxu0 %v836
      %852 = vmatpush.msra.mxu0 %v835
      %853 = vmatmul.f32.gmra.mxu0 %v739
      %v854 = vpop.f32.mrf.mxu0
      %v855 = vadd.f32 0.0, %v854
      %856 = vmatmul.f32.gmra.mxu0 %v742
      %v857 = vpop.f32.mrf.mxu0
      %v858 = vadd.f32 0.0, %v857
      %859 = vdwg.mxu0
      %v860 = vsub.f32 %v807, %v830
      %v861 = vsub.f32 %v810, %v833
      %v862 = vsub.f32 %v855, %v807
      %v863 = vsub.f32 %v858, %v810
      %v864 = vsub.f32 %v862, %v830
      %v865 = vsub.f32 %v863, %v833
      %v866 = vmul.f32 %v860, %v662
      %v867 = vmul.f32 %v861, %v663
      %v868 = vadd.f32 %v779, %v866
      %v869 = vadd.f32 %v780, %v867
      %v870 = vmul.f32 %v864, %v670
      %v871 = vmul.f32 %v865, %v671
      %v872 = vadd.f32 %v868, %v870
      %v873 = vadd.f32 %v869, %v871
      %v874 = vmul.f32 %v864, %v662
      %v875 = vmul.f32 %v865, %v663
      %v876 = vadd.f32 %v787, %v874
      %v877 = vadd.f32 %v788, %v875
      %v878 = vmul.f32 %v860, %v670
      %v879 = vmul.f32 %v861, %v671
      %v880 = vsub.f32 %v876, %v878
      %v881 = vsub.f32 %v877, %v879
      %882 = vmatpush.msra.mxu0 0.0
      %883 = vmatpush.msra.mxu0 0.0
      %884 = vmatpush.msra.mxu0 0.0
      %885 = vmatpush.msra.mxu0 0.0
      %886 = vmatpush.msra.mxu0 0.0
      %887 = vmatpush.msra.mxu0 0.0
      %888 = vmatpush.msra.mxu0 0.0
      %889 = vmatpush.msra.mxu0 0.0
      %890 = vmatpush.msra.mxu0 0.0
      %891 = vmatpush.msra.mxu0 0.0
      %892 = vmatpush.msra.mxu0 0.0
      %893 = vmatpush.msra.mxu0 0.0
      %894 = vmatpush.msra.mxu0 0.0
      %895 = vmatpush.msra.mxu0 0.0
      %896 = vmatpush.msra.mxu0 %v637
      %897 = vmatpush.msra.mxu0 %v636
      %898 = vmatmul.f32.gmra.mxu0 %v677
      %v899 = vpop.f32.mrf.mxu0
      %v900 = vadd.f32 0.0, %v899
      %901 = vmatmul.f32.gmra.mxu0 %v680
      %v902 = vpop.f32.mrf.mxu0
      %v903 = vadd.f32 0.0, %v902
      %904 = vdwg.mxu0
      %905 = vmatpush.msra.mxu0 0.0
      %906 = vmatpush.msra.mxu0 0.0
      %907 = vmatpush.msra.mxu0 0.0
      %908 = vmatpush.msra.mxu0 0.0
      %909 = vmatpush.msra.mxu0 0.0
      %910 = vmatpush.msra.mxu0 0.0
      %911 = vmatpush.msra.mxu0 0.0
      %912 = vmatpush.msra.mxu0 0.0
      %913 = vmatpush.msra.mxu0 0.0
      %914 = vmatpush.msra.mxu0 0.0
      %915 = vmatpush.msra.mxu0 0.0
      %916 = vmatpush.msra.mxu0 0.0
      %917 = vmatpush.msra.mxu0 0.0
      %918 = vmatpush.msra.mxu0 0.0
      %919 = vmatpush.msra.mxu0 %v653
      %920 = vmatpush.msra.mxu0 %v652
      %921 = vmatmul.f32.gmra.mxu0 %v706
      %v922 = vpop.f32.mrf.mxu0
      %v923 = vadd.f32 0.0, %v922
      %924 = vmatmul.f32.gmra.mxu0 %v709
      %v925 = vpop.f32.mrf.mxu0
      %v926 = vadd.f32 0.0, %v925
      %927 = vdwg.mxu0
      %v928 = vadd.f32 %v636, %v652
      %v929 = vadd.f32 %v637, %v653
      %930 = vmatpush.msra.mxu0 0.0
      %931 = vmatpush.msra.mxu0 0.0
      %932 = vmatpush.msra.mxu0 0.0
      %933 = vmatpush.msra.mxu0 0.0
      %934 = vmatpush.msra.mxu0 0.0
      %935 = vmatpush.msra.mxu0 0.0
      %936 = vmatpush.msra.mxu0 0.0
      %937 = vmatpush.msra.mxu0 0.0
      %938 = vmatpush.msra.mxu0 0.0
      %939 = vmatpush.msra.mxu0 0.0
      %940 = vmatpush.msra.mxu0 0.0
      %941 = vmatpush.msra.mxu0 0.0
      %942 = vmatpush.msra.mxu0 0.0
      %943 = vmatpush.msra.mxu0 0.0
      %944 = vmatpush.msra.mxu0 %v929
      %945 = vmatpush.msra.mxu0 %v928
      %946 = vmatmul.f32.gmra.mxu0 %v739
      %v947 = vpop.f32.mrf.mxu0
      %v948 = vadd.f32 0.0, %v947
      %949 = vmatmul.f32.gmra.mxu0 %v742
      %v950 = vpop.f32.mrf.mxu0
      %v951 = vadd.f32 0.0, %v950
      %952 = vdwg.mxu0
      %v953 = vsub.f32 %v900, %v923
      %v954 = vsub.f32 %v903, %v926
      %v955 = vsub.f32 %v948, %v900
      %v956 = vsub.f32 %v951, %v903
      %v957 = vsub.f32 %v955, %v923
      %v958 = vsub.f32 %v956, %v926
      %v959 = vmul.f32 %v953, %v664
      %v960 = vmul.f32 %v954, %v665
      %v961 = vadd.f32 %v872, %v959
      %v962 = vadd.f32 %v873, %v960
      %v963 = vmul.f32 %v957, %v672
      %v964 = vmul.f32 %v958, %v673
      %v965 = vadd.f32 %v961, %v963
      %v966 = vadd.f32 %v962, %v964
      %v967 = vmul.f32 %v957, %v664
      %v968 = vmul.f32 %v958, %v665
      %v969 = vadd.f32 %v880, %v967
      %v970 = vadd.f32 %v881, %v968
      %v971 = vmul.f32 %v953, %v672
      %v972 = vmul.f32 %v954, %v673
      %v973 = vsub.f32 %v969, %v971
      %v974 = vsub.f32 %v970, %v972
      %975 = vmatpush.msra.mxu0 0.0
      %976 = vmatpush.msra.mxu0 0.0
      %977 = vmatpush.msra.mxu0 0.0
      %978 = vmatpush.msra.mxu0 0.0
      %979 = vmatpush.msra.mxu0 0.0
      %980 = vmatpush.msra.mxu0 0.0
      %981 = vmatpush.msra.mxu0 0.0
      %982 = vmatpush.msra.mxu0 0.0
      %983 = vmatpush.msra.mxu0 0.0
      %984 = vmatpush.msra.mxu0 0.0
      %985 = vmatpush.msra.mxu0 0.0
      %986 = vmatpush.msra.mxu0 0.0
      %987 = vmatpush.msra.mxu0 0.0
      %988 = vmatpush.msra.mxu0 0.0
      %989 = vmatpush.msra.mxu0 %v639
      %990 = vmatpush.msra.mxu0 %v638
      %991 = vmatmul.f32.gmra.mxu0 %v677
      %v992 = vpop.f32.mrf.mxu0
      %v993 = vadd.f32 0.0, %v992
      %994 = vmatmul.f32.gmra.mxu0 %v680
      %v995 = vpop.f32.mrf.mxu0
      %v996 = vadd.f32 0.0, %v995
      %997 = vdwg.mxu0
      %998 = vmatpush.msra.mxu0 0.0
      %999 = vmatpush.msra.mxu0 0.0
      %1000 = vmatpush.msra.mxu0 0.0
      %1001 = vmatpush.msra.mxu0 0.0
      %1002 = vmatpush.msra.mxu0 0.0
      %1003 = vmatpush.msra.mxu0 0.0
      %1004 = vmatpush.msra.mxu0 0.0
      %1005 = vmatpush.msra.mxu0 0.0
      %1006 = vmatpush.msra.mxu0 0.0
      %1007 = vmatpush.msra.mxu0 0.0
      %1008 = vmatpush.msra.mxu0 0.0
      %1009 = vmatpush.msra.mxu0 0.0
      %1010 = vmatpush.msra.mxu0 0.0
      %1011 = vmatpush.msra.mxu0 0.0
      %1012 = vmatpush.msra.mxu0 %v655
      %1013 = vmatpush.msra.mxu0 %v654
      %1014 = vmatmul.f32.gmra.mxu0 %v706
      %v1015 = vpop.f32.mrf.mxu0
      %v1016 = vadd.f32 0.0, %v1015
      %1017 = vmatmul.f32.gmra.mxu0 %v709
      %v1018 = vpop.f32.mrf.mxu0
      %v1019 = vadd.f32 0.0, %v1018
      %1020 = vdwg.mxu0
      %v1021 = vadd.f32 %v638, %v654
      %v1022 = vadd.f32 %v639, %v655
      %1023 = vmatpush.msra.mxu0 0.0
      %1024 = vmatpush.msra.mxu0 0.0
      %1025 = vmatpush.msra.mxu0 0.0
      %1026 = vmatpush.msra.mxu0 0.0
      %1027 = vmatpush.msra.mxu0 0.0
      %1028 = vmatpush.msra.mxu0 0.0
      %1029 = vmatpush.msra.mxu0 0.0
      %1030 = vmatpush.msra.mxu0 0.0
      %1031 = vmatpush.msra.mxu0 0.0
      %1032 = vmatpush.msra.mxu0 0.0
      %1033 = vmatpush.msra.mxu0 0.0
      %1034 = vmatpush.msra.mxu0 0.0
      %1035 = vmatpush.msra.mxu0 0.0
      %1036 = vmatpush.msra.mxu0 0.0
      %1037 = vmatpush.msra.mxu0 %v1022
      %1038 = vmatpush.msra.mxu0 %v1021
      %1039 = vmatmul.f32.gmra.mxu0 %v739
      %v1040 = vpop.f32.mrf.mxu0
      %v1041 = vadd.f32 0.0, %v1040
      %1042 = vmatmul.f32.gmra.mxu0 %v742
      %v1043 = vpop.f32.mrf.mxu0
      %v1044 = vadd.f32 0.0, %v1043
      %1045 = vdwg.mxu0
      %v1046 = vsub.f32 %v993, %v1016
      %v1047 = vsub.f32 %v996, %v1019
      %v1048 = vsub.f32 %v1041, %v993
      %v1049 = vsub.f32 %v1044, %v996
      %v1050 = vsub.f32 %v1048, %v1016
      %v1051 = vsub.f32 %v1049, %v1019
      %v1052 = vmul.f32 %v1046, %v666
      %v1053 = vmul.f32 %v1047, %v667
      %v1054 = vadd.f32 %v965, %v1052
      %v1055 = vadd.f32 %v966, %v1053
      %v1056 = vmul.f32 %v1050, %v674
      %v1057 = vmul.f32 %v1051, %v675
      %v1058 = vadd.f32 %v1054, %v1056
      %v1059 = vadd.f32 %v1055, %v1057
      %v1060 = vmul.f32 %v1050, %v666
      %v1061 = vmul.f32 %v1051, %v667
      %v1062 = vadd.f32 %v973, %v1060
      %v1063 = vadd.f32 %v974, %v1061
      %v1064 = vmul.f32 %v1046, %v674
      %v1065 = vmul.f32 %v1047, %v675
      %v1066 = vsub.f32 %v1062, %v1064
      %v1067 = vsub.f32 %v1063, %v1065
      %1068 = vst.msk [vmem:[%s400] sm:$0xff] %vm426, %v1058
      %1069 = vst.msk [vmem:[%s400 + $0x8] sm:$0xff] %vm426, %v1059
      %1070 = vst.msk [vmem:[%s405] sm:$0xff] %vm426, %v1066
      %1071 = vst.msk [vmem:[%s405 + $0x8] sm:$0xff] %vm426, %v1067
      %p1072 = scmp.lt.s32.totalorder %s21, 1
      %s1073 = scalar_select %p1072, %s21, 1
      %s1074 = smul.addr %s1073, 2
      %s1075 = smul.addr %s1074, 8
      %s1076 = scalar_lea.vmem %s8, %s1075
      %p1077 = scmp.lt.s32.totalorder %s21, 1
      %s1078 = scalar_select %p1077, %s21, 1
      %s1079 = smul.addr %s1078, 2
      %s1080 = smul.addr %s1079, 8
      %s1081 = scalar_lea.vmem %s9, %s1080
      // Predicated region
      $region53: #{varnet_forward.17} parent=51 // pred_check
        %p1082 = pneg %p227
      $region54: #{varnet_forward.17} parent=51 // pred_check_branch
        %1084 = sbr.rel (%p1082) target = $region56
      $region55: #{varnet_forward.17} parent=51 // pred_region
        _
      $region56: #{varnet_forward.17} parent=51 // pred_fallthru
        _
      // Predicated region
      $region57: #{varnet_forward.17} parent=51 // pred_check
        %p1085 = pneg %p253
      $region58: #{varnet_forward.17} parent=51 // pred_check_branch
        %1087 = sbr.rel (%p1085) target = $region60
      $region59: #{varnet_forward.17} parent=51 // pred_region
        _
      $region60: #{varnet_forward.17} parent=51 // pred_fallthru
        _
    $region52: #{varnet_forward.17} parent=5 // pred_fallthru
      _
    %p1088 = scmp.le.s32.totalorder 2, %s16
    // Predicated region
    $region61: #{varnet_forward.17} parent=5 // pred_check
      %p1089 = pneg %p1088
    $region62: #{varnet_forward.17} parent=5 // pred_check_branch
      %1091 = sbr.rel (%p1089) target = $region64
    $region63: #{varnet_forward.17} parent=5 // pred_region
      %s1092 = ssub.s32 %s16, 2
      // Predicated region
      $region65: #{varnet_forward.17} parent=63 // pred_check
        %p1093 = pneg %p233
      $region66: #{varnet_forward.17} parent=63 // pred_check_branch
        %1095 = sbr.rel (%p1093) target = $region68
      $region67: #{varnet_forward.17} parent=63 // pred_region
        %p1096 = scmp.lt.s32.totalorder %s22, 1
        %s1097 = scalar_select %p1096, %s22, 1
        %s1098 = smul.addr %s1097, 2
        %s1099 = smul.addr %s1098, 8
        %s1100 = scalar_lea.vmem %s8, %s1099
      $region68: #{varnet_forward.17} parent=63 // pred_fallthru
        _
      // Predicated region
      $region69: #{varnet_forward.17} parent=63 // pred_check
        %p1101 = pneg %p259
      $region70: #{varnet_forward.17} parent=63 // pred_check_branch
        %1103 = sbr.rel (%p1101) target = $region72
      $region71: #{varnet_forward.17} parent=63 // pred_region
        %p1104 = scmp.lt.s32.totalorder %s22, 1
        %s1105 = scalar_select %p1104, %s22, 1
        %s1106 = smul.addr %s1105, 2
        %s1107 = smul.addr %s1106, 8
        %s1108 = scalar_lea.vmem %s9, %s1107
      $region72: #{varnet_forward.17} parent=63 // pred_fallthru
        _
    $region64: #{varnet_forward.17} parent=5 // pred_fallthru
      _
  $region6: #{varnet_forward.17} parent=0 // loop_footer
    %s20 = sadd.s32 1, %s16
  $region7: #{varnet_forward.17} parent=0 // loop_footer_branch
    %15 = sbr.rel target = $region3
  $region8: #{varnet_forward.17} parent=0 // loop_exit
    _

// kernel: varnet_forward.18
$region0: #{varnet_forward.18}
  #allocation0 [shape = 'u32[]', space=smem, size = 0x4, offset = 0x4, fixed_abs, tag = 'smem constant byte address 0x4 - core index']
  #allocation1 [shape = 'u32[72,128]{1,0:T(1,128)}', space=vmem, size = 0x9000, scoped, tag = 'internal scratch']
  %s0 = inlined_call_operand.vmem [shape: f32[512,18], index: 0, kind: input, shape index: {}]
  %s1 = inlined_call_operand.vmem [shape: f32[18,8], index: 1, kind: input, shape index: {}]
  %s2 = inlined_call_operand.vmem [shape: f32[1,8], index: 2, kind: input, shape index: {}]
  %s3 = inlined_call_operand.vmem [shape: f32[512,8], index: 3, kind: output, shape index: {}]
  %s4 = sld [smem:[#allocation0]]
  $region22: #{varnet_forward.18} parent=0
    _
  %s6 = ssub.s32 1, %s4
  %s7 = scalar_select 0, %s6, %s4
  // Predicated region
  $region2: #{varnet_forward.18} parent=0 // pred_check
    _
  $region3: #{varnet_forward.18} parent=0 // pred_check_branch
    %9 = sbr.rel (0) target = $region5
  $region4: #{varnet_forward.18} parent=0 // pred_region
    _
  $region5: #{varnet_forward.18} parent=0 // pred_fallthru
    _
  // Predicated region
  $region6: #{varnet_forward.18} parent=0 // pred_check
    _
  $region7: #{varnet_forward.18} parent=0 // pred_check_branch
    %11 = sbr.rel (0) target = $region9
  $region8: #{varnet_forward.18} parent=0 // pred_region
    _
  $region9: #{varnet_forward.18} parent=0 // pred_fallthru
    _
  // Predicated region
  $region10: #{varnet_forward.18} parent=0 // pred_check
    _
  $region11: #{varnet_forward.18} parent=0 // pred_check_branch
    %13 = sbr.rel (0) target = $region13
  $region12: #{varnet_forward.18} parent=0 // pred_region
    _
  $region13: #{varnet_forward.18} parent=0 // pred_fallthru
    _
  %v14 = vld [vmem:[%s0] sm:$0xff]
  %v15 = vld [vmem:[%s0 + $0x8] sm:$0xff]
  %v16 = vld [vmem:[%s0 + $0x10] sm:$0xff]
  %v17 = vld [vmem:[%s0 + $0x18] sm:$0xff]
  %v18 = vld [vmem:[%s0 + $0x20] sm:$0xff]
  %v19 = vld [vmem:[%s0 + $0x28] sm:$0xff]
  %v20 = vld [vmem:[%s0 + $0x30] sm:$0xff]
  %v21 = vld [vmem:[%s0 + $0x38] sm:$0xff]
  %v22 = vld [vmem:[%s0 + $0x40] sm:$0xff]
  %v23 = vld [vmem:[%s0 + $0x48] sm:$0xff]
  %v24 = vld [vmem:[%s0 + $0x50] sm:$0xff]
  %v25 = vld [vmem:[%s0 + $0x58] sm:$0xff]
  %v26 = vld [vmem:[%s0 + $0x60] sm:$0xff]
  %v27 = vld [vmem:[%s0 + $0x68] sm:$0xff]
  %v28 = vld [vmem:[%s0 + $0x70] sm:$0xff]
  %v29 = vld [vmem:[%s0 + $0x78] sm:$0xff]
  %v30 = vld [vmem:[%s0 + $0x80] sm:$0xff]
  %v31 = vld [vmem:[%s0 + $0x88] sm:$0xff]
  %v32 = vld [vmem:[%s0 + $0x90] sm:$0xff]
  %v33 = vld [vmem:[%s0 + $0x98] sm:$0xff]
  %v34 = vld [vmem:[%s0 + $0xa0] sm:$0xff]
  %v35 = vld [vmem:[%s0 + $0xa8] sm:$0xff]
  %v36 = vld [vmem:[%s0 + $0xb0] sm:$0xff]
  %v37 = vld [vmem:[%s0 + $0xb8] sm:$0xff]
  %v38 = vld [vmem:[%s0 + $0xc0] sm:$0xff]
  %v39 = vld [vmem:[%s0 + $0xc8] sm:$0xff]
  %v40 = vld [vmem:[%s0 + $0xd0] sm:$0xff]
  %v41 = vld [vmem:[%s0 + $0xd8] sm:$0xff]
  %v42 = vld [vmem:[%s0 + $0xe0] sm:$0xff]
  %v43 = vld [vmem:[%s0 + $0xe8] sm:$0xff]
  %v44 = vld [vmem:[%s0 + $0xf0] sm:$0xff]
  %v45 = vld [vmem:[%s0 + $0xf8] sm:$0xff]
  %v46 = vld [vmem:[%s0 + $0x100] sm:$0xff]
  %v47 = vld [vmem:[%s0 + $0x108] sm:$0xff]
  %v48 = vld [vmem:[%s0 + $0x110] sm:$0xff]
  %v49 = vld [vmem:[%s0 + $0x118] sm:$0xff]
  %v50 = vld [vmem:[%s0 + $0x120] sm:$0xff]
  %v51 = vld [vmem:[%s0 + $0x128] sm:$0xff]
  %v52 = vld [vmem:[%s0 + $0x130] sm:$0xff]
  %v53 = vld [vmem:[%s0 + $0x138] sm:$0xff]
  %v54 = vld [vmem:[%s0 + $0x140] sm:$0xff]
  %v55 = vld [vmem:[%s0 + $0x148] sm:$0xff]
  %v56 = vld [vmem:[%s0 + $0x150] sm:$0xff]
  %v57 = vld [vmem:[%s0 + $0x158] sm:$0xff]
  %v58 = vld [vmem:[%s0 + $0x160] sm:$0xff]
  %v59 = vld [vmem:[%s0 + $0x168] sm:$0xff]
  %v60 = vld [vmem:[%s0 + $0x170] sm:$0xff]
  %v61 = vld [vmem:[%s0 + $0x178] sm:$0xff]
  %v62 = vld [vmem:[%s0 + $0x180] sm:$0xff]
  %v63 = vld [vmem:[%s0 + $0x188] sm:$0xff]
  %v64 = vld [vmem:[%s0 + $0x190] sm:$0xff]
  %v65 = vld [vmem:[%s0 + $0x198] sm:$0xff]
  %v66 = vld [vmem:[%s0 + $0x1a0] sm:$0xff]
  %v67 = vld [vmem:[%s0 + $0x1a8] sm:$0xff]
  %v68 = vld [vmem:[%s0 + $0x1b0] sm:$0xff]
  %v69 = vld [vmem:[%s0 + $0x1b8] sm:$0xff]
  %v70 = vld [vmem:[%s0 + $0x1c0] sm:$0xff]
  %v71 = vld [vmem:[%s0 + $0x1c8] sm:$0xff]
  %v72 = vld [vmem:[%s0 + $0x1d0] sm:$0xff]
  %v73 = vld [vmem:[%s0 + $0x1d8] sm:$0xff]
  %v74 = vld [vmem:[%s0 + $0x1e0] sm:$0xff]
  %v75 = vld [vmem:[%s0 + $0x1e8] sm:$0xff]
  %v76 = vld [vmem:[%s0 + $0x1f0] sm:$0xff]
  %v77 = vld [vmem:[%s0 + $0x1f8] sm:$0xff]
  %v78 = vld [vmem:[%s1] sm:$0xff]
  %v79 = vld [vmem:[%s1 + $0x8] sm:$0xff]
  %v80 = vld [vmem:[%s1 + $0x10] sm:$0x3]
  %v81 = vld [vmem:[%s2] sm:$0x1]
  %v83 = vperm.slane %v81, 0
  %vm85 = vcmask 146432
  %v87 = vsel %vm85, %v14, 0
  %v90 = vsel %vm85, %v15, 0
  %v93 = vsel %vm85, %v16, 0
  %v96 = vsel %vm85, %v17, 0
  %v99 = vsel %vm85, %v18, 0
  %v102 = vsel %vm85, %v19, 0
  %v105 = vsel %vm85, %v20, 0
  %v108 = vsel %vm85, %v21, 0
  %v111 = vsel %vm85, %v22, 0
  %v114 = vsel %vm85, %v23, 0
  %v117 = vsel %vm85, %v24, 0
  %v120 = vsel %vm85, %v25, 0
  %v123 = vsel %vm85, %v26, 0
  %v126 = vsel %vm85, %v27, 0
  %v129 = vsel %vm85, %v28, 0
  %v132 = vsel %vm85, %v29, 0
  %v135 = vsel %vm85, %v30, 0
  %v138 = vsel %vm85, %v31, 0
  %v141 = vsel %vm85, %v32, 0
  %v144 = vsel %vm85, %v33, 0
  %v147 = vsel %vm85, %v34, 0
  %v150 = vsel %vm85, %v35, 0
  %v153 = vsel %vm85, %v36, 0
  %v156 = vsel %vm85, %v37, 0
  %v159 = vsel %vm85, %v38, 0
  %v162 = vsel %vm85, %v39, 0
  %v165 = vsel %vm85, %v40, 0
  %v168 = vsel %vm85, %v41, 0
  %v171 = vsel %vm85, %v42, 0
  %v174 = vsel %vm85, %v43, 0
  %v177 = vsel %vm85, %v44, 0
  %v180 = vsel %vm85, %v45, 0
  %v183 = vsel %vm85, %v46, 0
  %v186 = vsel %vm85, %v47, 0
  %v189 = vsel %vm85, %v48, 0
  %v192 = vsel %vm85, %v49, 0
  %v195 = vsel %vm85, %v50, 0
  %v198 = vsel %vm85, %v51, 0
  %v201 = vsel %vm85, %v52, 0
  %v204 = vsel %vm85, %v53, 0
  %v207 = vsel %vm85, %v54, 0
  %v210 = vsel %vm85, %v55, 0
  %v213 = vsel %vm85, %v56, 0
  %v216 = vsel %vm85, %v57, 0
  %v219 = vsel %vm85, %v58, 0
  %v222 = vsel %vm85, %v59, 0
  %v225 = vsel %vm85, %v60, 0
  %v228 = vsel %vm85, %v61, 0
  %v231 = vsel %vm85, %v62, 0
  %v234 = vsel %vm85, %v63, 0
  %v237 = vsel %vm85, %v64, 0
  %v240 = vsel %vm85, %v65, 0
  %v243 = vsel %vm85, %v66, 0
  %v246 = vsel %vm85, %v67, 0
  %v249 = vsel %vm85, %v68, 0
  %v252 = vsel %vm85, %v69, 0
  %v255 = vsel %vm85, %v70, 0
  %v258 = vsel %vm85, %v71, 0
  %v261 = vsel %vm85, %v72, 0
  %v264 = vsel %vm85, %v73, 0
  %v267 = vsel %vm85, %v74, 0
  %v270 = vsel %vm85, %v75, 0
  %v273 = vsel %vm85, %v76, 0
  %v276 = vsel %vm85, %v77, 0
  %vm278 = vcmask 1041408
  %v280 = vsel %vm278, %v80, 0
  %282 = vmatpush.msra.mxu0 0.0
  %283 = vmatpush.msra.mxu0 0.0
  %284 = vmatpush.msra.mxu0 0.0
  %285 = vmatpush.msra.mxu0 0.0
  %286 = vmatpush.msra.mxu0 0.0
  %287 = vmatpush.msra.mxu0 0.0
  %288 = vmatpush.msra.mxu0 0.0
  %289 = vmatpush.msra.mxu0 0.0
  %290 = vmatpush.msra.mxu0 0.0
  %291 = vmatpush.msra.mxu0 0.0
  %292 = vmatpush.msra.mxu0 0.0
  %293 = vmatpush.msra.mxu0 0.0
  %294 = vmatpush.msra.mxu0 0.0
  %295 = vmatpush.msra.mxu0 %v280
  %296 = vmatpush.msra.mxu0 %v79
  %297 = vmatpush.msra.mxu0 %v78
  %298 = vmatmul.f32.gmra.mxu0 %v87
  %v299 = vpop.f32.mrf.mxu0
  %v300 = vadd.f32 %v83, %v299
  %301 = vmatmul.f32.gmra.mxu0 %v90
  %v302 = vpop.f32.mrf.mxu0
  %v303 = vadd.f32 %v83, %v302
  %304 = vmatmul.f32.gmra.mxu0 %v93
  %v305 = vpop.f32.mrf.mxu0
  %v306 = vadd.f32 %v83, %v305
  %307 = vmatmul.f32.gmra.mxu0 %v96
  %v308 = vpop.f32.mrf.mxu0
  %v309 = vadd.f32 %v83, %v308
  %310 = vmatmul.f32.gmra.mxu0 %v99
  %v311 = vpop.f32.mrf.mxu0
  %v312 = vadd.f32 %v83, %v311
  %313 = vmatmul.f32.gmra.mxu0 %v102
  %v314 = vpop.f32.mrf.mxu0
  %v315 = vadd.f32 %v83, %v314
  %316 = vmatmul.f32.gmra.mxu0 %v105
  %v317 = vpop.f32.mrf.mxu0
  %v318 = vadd.f32 %v83, %v317
  %319 = vmatmul.f32.gmra.mxu0 %v108
  %v320 = vpop.f32.mrf.mxu0
  %v321 = vadd.f32 %v83, %v320
  %322 = vmatmul.f32.gmra.mxu0 %v111
  %v323 = vpop.f32.mrf.mxu0
  %v324 = vadd.f32 %v83, %v323
  %325 = vmatmul.f32.gmra.mxu0 %v114
  %v326 = vpop.f32.mrf.mxu0
  %v327 = vadd.f32 %v83, %v326
  %328 = vmatmul.f32.gmra.mxu0 %v117
  %v329 = vpop.f32.mrf.mxu0
  %v330 = vadd.f32 %v83, %v329
  %331 = vmatmul.f32.gmra.mxu0 %v120
  %v332 = vpop.f32.mrf.mxu0
  %v333 = vadd.f32 %v83, %v332
  %334 = vmatmul.f32.gmra.mxu0 %v123
  %v335 = vpop.f32.mrf.mxu0
  %v336 = vadd.f32 %v83, %v335
  %337 = vmatmul.f32.gmra.mxu0 %v126
  %v338 = vpop.f32.mrf.mxu0
  %v339 = vadd.f32 %v83, %v338
  %340 = vmatmul.f32.gmra.mxu0 %v129
  %v341 = vpop.f32.mrf.mxu0
  %v342 = vadd.f32 %v83, %v341
  %343 = vmatmul.f32.gmra.mxu0 %v132
  %v344 = vpop.f32.mrf.mxu0
  %v345 = vadd.f32 %v83, %v344
  %346 = vmatmul.f32.gmra.mxu0 %v135
  %v347 = vpop.f32.mrf.mxu0
  %v348 = vadd.f32 %v83, %v347
  %349 = vmatmul.f32.gmra.mxu0 %v138
  %v350 = vpop.f32.mrf.mxu0
  %v351 = vadd.f32 %v83, %v350
  %352 = vmatmul.f32.gmra.mxu0 %v141
  %v353 = vpop.f32.mrf.mxu0
  %v354 = vadd.f32 %v83, %v353
  %355 = vmatmul.f32.gmra.mxu0 %v144
  %v356 = vpop.f32.mrf.mxu0
  %v357 = vadd.f32 %v83, %v356
  %358 = vmatmul.f32.gmra.mxu0 %v147
  %v359 = vpop.f32.mrf.mxu0
  %v360 = vadd.f32 %v83, %v359
  %361 = vmatmul.f32.gmra.mxu0 %v150
  %v362 = vpop.f32.mrf.mxu0
  %v363 = vadd.f32 %v83, %v362
  %364 = vmatmul.f32.gmra.mxu0 %v153
  %v365 = vpop.f32.mrf.mxu0
  %v366 = vadd.f32 %v83, %v365
  %367 = vmatmul.f32.gmra.mxu0 %v156
  %v368 = vpop.f32.mrf.mxu0
  %v369 = vadd.f32 %v83, %v368
  %370 = vmatmul.f32.gmra.mxu0 %v159
  %v371 = vpop.f32.mrf.mxu0
  %v372 = vadd.f32 %v83, %v371
  %373 = vmatmul.f32.gmra.mxu0 %v162
  %v374 = vpop.f32.mrf.mxu0
  %v375 = vadd.f32 %v83, %v374
  %376 = vmatmul.f32.gmra.mxu0 %v165
  %v377 = vpop.f32.mrf.mxu0
  %v378 = vadd.f32 %v83, %v377
  %379 = vmatmul.f32.gmra.mxu0 %v168
  %v380 = vpop.f32.mrf.mxu0
  %v381 = vadd.f32 %v83, %v380
  %382 = vmatmul.f32.gmra.mxu0 %v171
  %v383 = vpop.f32.mrf.mxu0
  %v384 = vadd.f32 %v83, %v383
  %385 = vmatmul.f32.gmra.mxu0 %v174
  %v386 = vpop.f32.mrf.mxu0
  %v387 = vadd.f32 %v83, %v386
  %388 = vmatmul.f32.gmra.mxu0 %v177
  %v389 = vpop.f32.mrf.mxu0
  %v390 = vadd.f32 %v83, %v389
  %391 = vmatmul.f32.gmra.mxu0 %v180
  %v392 = vpop.f32.mrf.mxu0
  %v393 = vadd.f32 %v83, %v392
  %394 = vmatmul.f32.gmra.mxu0 %v183
  %v395 = vpop.f32.mrf.mxu0
  %v396 = vadd.f32 %v83, %v395
  %397 = vmatmul.f32.gmra.mxu0 %v186
  %v398 = vpop.f32.mrf.mxu0
  %v399 = vadd.f32 %v83, %v398
  %400 = vmatmul.f32.gmra.mxu0 %v189
  %v401 = vpop.f32.mrf.mxu0
  %v402 = vadd.f32 %v83, %v401
  %403 = vmatmul.f32.gmra.mxu0 %v192
  %v404 = vpop.f32.mrf.mxu0
  %v405 = vadd.f32 %v83, %v404
  %406 = vmatmul.f32.gmra.mxu0 %v195
  %v407 = vpop.f32.mrf.mxu0
  %v408 = vadd.f32 %v83, %v407
  %409 = vmatmul.f32.gmra.mxu0 %v198
  %v410 = vpop.f32.mrf.mxu0
  %v411 = vadd.f32 %v83, %v410
  %412 = vmatmul.f32.gmra.mxu0 %v201
  %v413 = vpop.f32.mrf.mxu0
  %v414 = vadd.f32 %v83, %v413
  %415 = vmatmul.f32.gmra.mxu0 %v204
  %v416 = vpop.f32.mrf.mxu0
  %v417 = vadd.f32 %v83, %v416
  %418 = vmatmul.f32.gmra.mxu0 %v207
  %v419 = vpop.f32.mrf.mxu0
  %v420 = vadd.f32 %v83, %v419
  %421 = vmatmul.f32.gmra.mxu0 %v210
  %v422 = vpop.f32.mrf.mxu0
  %v423 = vadd.f32 %v83, %v422
  %424 = vmatmul.f32.gmra.mxu0 %v213
  %v425 = vpop.f32.mrf.mxu0
  %v426 = vadd.f32 %v83, %v425
  %427 = vmatmul.f32.gmra.mxu0 %v216
  %v428 = vpop.f32.mrf.mxu0
  %v429 = vadd.f32 %v83, %v428
  %430 = vmatmul.f32.gmra.mxu0 %v219
  %v431 = vpop.f32.mrf.mxu0
  %v432 = vadd.f32 %v83, %v431
  %433 = vmatmul.f32.gmra.mxu0 %v222
  %v434 = vpop.f32.mrf.mxu0
  %v435 = vadd.f32 %v83, %v434
  %436 = vmatmul.f32.gmra.mxu0 %v225
  %v437 = vpop.f32.mrf.mxu0
  %v438 = vadd.f32 %v83, %v437
  %439 = vmatmul.f32.gmra.mxu0 %v228
  %v440 = vpop.f32.mrf.mxu0
  %v441 = vadd.f32 %v83, %v440
  %442 = vmatmul.f32.gmra.mxu0 %v231
  %v443 = vpop.f32.mrf.mxu0
  %v444 = vadd.f32 %v83, %v443
  %445 = vmatmul.f32.gmra.mxu0 %v234
  %v446 = vpop.f32.mrf.mxu0
  %v447 = vadd.f32 %v83, %v446
  %448 = vmatmul.f32.gmra.mxu0 %v237
  %v449 = vpop.f32.mrf.mxu0
  %v450 = vadd.f32 %v83, %v449
  %451 = vmatmul.f32.gmra.mxu0 %v240
  %v452 = vpop.f32.mrf.mxu0
  %v453 = vadd.f32 %v83, %v452
  %454 = vmatmul.f32.gmra.mxu0 %v243
  %v455 = vpop.f32.mrf.mxu0
  %v456 = vadd.f32 %v83, %v455
  %457 = vmatmul.f32.gmra.mxu0 %v246
  %v458 = vpop.f32.mrf.mxu0
  %v459 = vadd.f32 %v83, %v458
  %460 = vmatmul.f32.gmra.mxu0 %v249
  %v461 = vpop.f32.mrf.mxu0
  %v462 = vadd.f32 %v83, %v461
  %463 = vmatmul.f32.gmra.mxu0 %v252
  %v464 = vpop.f32.mrf.mxu0
  %v465 = vadd.f32 %v83, %v464
  %466 = vmatmul.f32.gmra.mxu0 %v255
  %v467 = vpop.f32.mrf.mxu0
  %v468 = vadd.f32 %v83, %v467
  %469 = vmatmul.f32.gmra.mxu0 %v258
  %v470 = vpop.f32.mrf.mxu0
  %v471 = vadd.f32 %v83, %v470
  %472 = vmatmul.f32.gmra.mxu0 %v261
  %v473 = vpop.f32.mrf.mxu0
  %v474 = vadd.f32 %v83, %v473
  %475 = vmatmul.f32.gmra.mxu0 %v264
  %v476 = vpop.f32.mrf.mxu0
  %v477 = vadd.f32 %v83, %v476
  %478 = vmatmul.f32.gmra.mxu0 %v267
  %v479 = vpop.f32.mrf.mxu0
  %v480 = vadd.f32 %v83, %v479
  %481 = vmatmul.f32.gmra.mxu0 %v270
  %v482 = vpop.f32.mrf.mxu0
  %v483 = vadd.f32 %v83, %v482
  %484 = vmatmul.f32.gmra.mxu0 %v273
  %v485 = vpop.f32.mrf.mxu0
  %v486 = vadd.f32 %v83, %v485
  %487 = vmatmul.f32.gmra.mxu0 %v276
  %v488 = vpop.f32.mrf.mxu0
  %v489 = vadd.f32 %v83, %v488
  %490 = vdwg.mxu0
  %v491 = vmax.f32 %v300, 0.0
  %v492 = vmax.f32 %v303, 0.0
  %v493 = vmax.f32 %v306, 0.0
  %v494 = vmax.f32 %v309, 0.0
  %v495 = vmax.f32 %v312, 0.0
  %v496 = vmax.f32 %v315, 0.0
  %v497 = vmax.f32 %v318, 0.0
  %v498 = vmax.f32 %v321, 0.0
  %v499 = vmax.f32 %v324, 0.0
  %v500 = vmax.f32 %v327, 0.0
  %v501 = vmax.f32 %v330, 0.0
  %v502 = vmax.f32 %v333, 0.0
  %v503 = vmax.f32 %v336, 0.0
  %v504 = vmax.f32 %v339, 0.0
  %v505 = vmax.f32 %v342, 0.0
  %v506 = vmax.f32 %v345, 0.0
  %v507 = vmax.f32 %v348, 0.0
  %v508 = vmax.f32 %v351, 0.0
  %v509 = vmax.f32 %v354, 0.0
  %v510 = vmax.f32 %v357, 0.0
  %v511 = vmax.f32 %v360, 0.0
  %v512 = vmax.f32 %v363, 0.0
  %v513 = vmax.f32 %v366, 0.0
  %v514 = vmax.f32 %v369, 0.0
  %v515 = vmax.f32 %v372, 0.0
  %v516 = vmax.f32 %v375, 0.0
  %v517 = vmax.f32 %v378, 0.0
  %v518 = vmax.f32 %v381, 0.0
  %v519 = vmax.f32 %v384, 0.0
  %v520 = vmax.f32 %v387, 0.0
  %v521 = vmax.f32 %v390, 0.0
  %v522 = vmax.f32 %v393, 0.0
  %v523 = vmax.f32 %v396, 0.0
  %v524 = vmax.f32 %v399, 0.0
  %v525 = vmax.f32 %v402, 0.0
  %v526 = vmax.f32 %v405, 0.0
  %v527 = vmax.f32 %v408, 0.0
  %v528 = vmax.f32 %v411, 0.0
  %v529 = vmax.f32 %v414, 0.0
  %v530 = vmax.f32 %v417, 0.0
  %v531 = vmax.f32 %v420, 0.0
  %v532 = vmax.f32 %v423, 0.0
  %v533 = vmax.f32 %v426, 0.0
  %v534 = vmax.f32 %v429, 0.0
  %v535 = vmax.f32 %v432, 0.0
  %v536 = vmax.f32 %v435, 0.0
  %v537 = vmax.f32 %v438, 0.0
  %v538 = vmax.f32 %v441, 0.0
  %v539 = vmax.f32 %v444, 0.0
  %v540 = vmax.f32 %v447, 0.0
  %v541 = vmax.f32 %v450, 0.0
  %v542 = vmax.f32 %v453, 0.0
  %v543 = vmax.f32 %v456, 0.0
  %v544 = vmax.f32 %v459, 0.0
  %v545 = vmax.f32 %v462, 0.0
  %v546 = vmax.f32 %v465, 0.0
  %v547 = vmax.f32 %v468, 0.0
  %v548 = vmax.f32 %v471, 0.0
  %v549 = vmax.f32 %v474, 0.0
  %v550 = vmax.f32 %v477, 0.0
  %v551 = vmax.f32 %v480, 0.0
  %v552 = vmax.f32 %v483, 0.0
  %v553 = vmax.f32 %v486, 0.0
  %v554 = vmax.f32 %v489, 0.0
  %vm555 = vcmask 64512
  %556 = vst.msk [vmem:[%s3] sm:$0xff] %vm555, %v491
  %557 = vst.msk [vmem:[%s3 + $0x8] sm:$0xff] %vm555, %v492
  %558 = vst.msk [vmem:[%s3 + $0x10] sm:$0xff] %vm555, %v493
  %559 = vst.msk [vmem:[%s3 + $0x18] sm:$0xff] %vm555, %v494
  %560 = vst.msk [vmem:[%s3 + $0x20] sm:$0xff] %vm555, %v495
  %561 = vst.msk [vmem:[%s3 + $0x28] sm:$0xff] %vm555, %v496
  %562 = vst.msk [vmem:[%s3 + $0x30] sm:$0xff] %vm555, %v497
  %563 = vst.msk [vmem:[%s3 + $0x38] sm:$0xff] %vm555, %v498
  %564 = vst.msk [vmem:[%s3 + $0x40] sm:$0xff] %vm555, %v499
  %565 = vst.msk [vmem:[%s3 + $0x48] sm:$0xff] %vm555, %v500
  %566 = vst.msk [vmem:[%s3 + $0x50] sm:$0xff] %vm555, %v501
  %567 = vst.msk [vmem:[%s3 + $0x58] sm:$0xff] %vm555, %v502
  %568 = vst.msk [vmem:[%s3 + $0x60] sm:$0xff] %vm555, %v503
  %569 = vst.msk [vmem:[%s3 + $0x68] sm:$0xff] %vm555, %v504
  %570 = vst.msk [vmem:[%s3 + $0x70] sm:$0xff] %vm555, %v505
  %571 = vst.msk [vmem:[%s3 + $0x78] sm:$0xff] %vm555, %v506
  %572 = vst.msk [vmem:[%s3 + $0x80] sm:$0xff] %vm555, %v507
  %573 = vst.msk [vmem:[%s3 + $0x88] sm:$0xff] %vm555, %v508
  %574 = vst.msk [vmem:[%s3 + $0x90] sm:$0xff] %vm555, %v509
  %575 = vst.msk [vmem:[%s3 + $0x98] sm:$0xff] %vm555, %v510
  %576 = vst.msk [vmem:[%s3 + $0xa0] sm:$0xff] %vm555, %v511
  %577 = vst.msk [vmem:[%s3 + $0xa8] sm:$0xff] %vm555, %v512
  %578 = vst.msk [vmem:[%s3 + $0xb0] sm:$0xff] %vm555, %v513
  %579 = vst.msk [vmem:[%s3 + $0xb8] sm:$0xff] %vm555, %v514
  %580 = vst.msk [vmem:[%s3 + $0xc0] sm:$0xff] %vm555, %v515
  %581 = vst.msk [vmem:[%s3 + $0xc8] sm:$0xff] %vm555, %v516
  %582 = vst.msk [vmem:[%s3 + $0xd0] sm:$0xff] %vm555, %v517
  %583 = vst.msk [vmem:[%s3 + $0xd8] sm:$0xff] %vm555, %v518
  %584 = vst.msk [vmem:[%s3 + $0xe0] sm:$0xff] %vm555, %v519
  %585 = vst.msk [vmem:[%s3 + $0xe8] sm:$0xff] %vm555, %v520
  %586 = vst.msk [vmem:[%s3 + $0xf0] sm:$0xff] %vm555, %v521
  %587 = vst.msk [vmem:[%s3 + $0xf8] sm:$0xff] %vm555, %v522
  %588 = vst.msk [vmem:[%s3 + $0x100] sm:$0xff] %vm555, %v523
  %589 = vst.msk [vmem:[%s3 + $0x108] sm:$0xff] %vm555, %v524
  %590 = vst.msk [vmem:[%s3 + $0x110] sm:$0xff] %vm555, %v525
  %591 = vst.msk [vmem:[%s3 + $0x118] sm:$0xff] %vm555, %v526
  %592 = vst.msk [vmem:[%s3 + $0x120] sm:$0xff] %vm555, %v527
  %593 = vst.msk [vmem:[%s3 + $0x128] sm:$0xff] %vm555, %v528
  %594 = vst.msk [vmem:[%s3 + $0x130] sm:$0xff] %vm555, %v529
  %595 = vst.msk [vmem:[%s3 + $0x138] sm:$0xff] %vm555, %v530
  %596 = vst.msk [vmem:[%s3 + $0x140] sm:$0xff] %vm555, %v531
  %597 = vst.msk [vmem:[%s3 + $0x148] sm:$0xff] %vm555, %v532
  %598 = vst.msk [vmem:[%s3 + $0x150] sm:$0xff] %vm555, %v533
  %599 = vst.msk [vmem:[%s3 + $0x158] sm:$0xff] %vm555, %v534
  %600 = vst.msk [vmem:[%s3 + $0x160] sm:$0xff] %vm555, %v535
  %601 = vst.msk [vmem:[%s3 + $0x168] sm:$0xff] %vm555, %v536
  %602 = vst.msk [vmem:[%s3 + $0x170] sm:$0xff] %vm555, %v537
  %603 = vst.msk [vmem:[%s3 + $0x178] sm:$0xff] %vm555, %v538
  %604 = vst.msk [vmem:[%s3 + $0x180] sm:$0xff] %vm555, %v539
  %605 = vst.msk [vmem:[%s3 + $0x188] sm:$0xff] %vm555, %v540
  %606 = vst.msk [vmem:[%s3 + $0x190] sm:$0xff] %vm555, %v541
  %607 = vst.msk [vmem:[%s3 + $0x198] sm:$0xff] %vm555, %v542
  %608 = vst.msk [vmem:[%s3 + $0x1a0] sm:$0xff] %vm555, %v543
  %609 = vst.msk [vmem:[%s3 + $0x1a8] sm:$0xff] %vm555, %v544
  %610 = vst.msk [vmem:[%s3 + $0x1b0] sm:$0xff] %vm555, %v545
  %611 = vst.msk [vmem:[%s3 + $0x1b8] sm:$0xff] %vm555, %v546
  %612 = vst.msk [vmem:[%s3 + $0x1c0] sm:$0xff] %vm555, %v547
  %613 = vst.msk [vmem:[%s3 + $0x1c8] sm:$0xff] %vm555, %v548
  %614 = vst.msk [vmem:[%s3 + $0x1d0] sm:$0xff] %vm555, %v549
  %615 = vst.msk [vmem:[%s3 + $0x1d8] sm:$0xff] %vm555, %v550
  %616 = vst.msk [vmem:[%s3 + $0x1e0] sm:$0xff] %vm555, %v551
  %617 = vst.msk [vmem:[%s3 + $0x1e8] sm:$0xff] %vm555, %v552
  %618 = vst.msk [vmem:[%s3 + $0x1f0] sm:$0xff] %vm555, %v553
  %619 = vst.msk [vmem:[%s3 + $0x1f8] sm:$0xff] %vm555, %v554
  // Predicated region
  $region14: #{varnet_forward.18} parent=0 // pred_check
    _
  $region15: #{varnet_forward.18} parent=0 // pred_check_branch
    %621 = sbr.rel (0) target = $region17
  $region16: #{varnet_forward.18} parent=0 // pred_region
    _
  $region17: #{varnet_forward.18} parent=0 // pred_fallthru
    _
  // Predicated region
  $region18: #{varnet_forward.18} parent=0 // pred_check
    _
  $region19: #{varnet_forward.18} parent=0 // pred_check_branch
    %623 = sbr.rel (0) target = $region21
  $region20: #{varnet_forward.18} parent=0 // pred_region
    _
  $region21: #{varnet_forward.18} parent=0 // pred_fallthru
    _

// kernel: varnet_forward.19
$region0: #{varnet_forward.19}
  #allocation0 [shape = 'u32[]', space=smem, size = 0x4, offset = 0x4, fixed_abs, tag = 'smem constant byte address 0x4 - core index']
  #allocation1 [shape = 'u32[72,128]{1,0:T(1,128)}', space=vmem, size = 0x9000, scoped, tag = 'internal scratch']
  %s0 = inlined_call_operand.vmem [shape: f32[512,72], index: 0, kind: input, shape index: {}]
  %s1 = inlined_call_operand.vmem [shape: f32[72,2], index: 1, kind: input, shape index: {}]
  %s2 = inlined_call_operand.vmem [shape: f32[1,2], index: 2, kind: input, shape index: {}]
  %s3 = inlined_call_operand.vmem [shape: f32[512,2], index: 3, kind: output, shape index: {}]
  %s4 = sld [smem:[#allocation0]]
  $region22: #{varnet_forward.19} parent=0
    _
  %s6 = ssub.s32 1, %s4
  %s7 = scalar_select 0, %s6, %s4
  // Predicated region
  $region2: #{varnet_forward.19} parent=0 // pred_check
    _
  $region3: #{varnet_forward.19} parent=0 // pred_check_branch
    %9 = sbr.rel (0) target = $region5
  $region4: #{varnet_forward.19} parent=0 // pred_region
    _
  $region5: #{varnet_forward.19} parent=0 // pred_fallthru
    _
  // Predicated region
  $region6: #{varnet_forward.19} parent=0 // pred_check
    _
  $region7: #{varnet_forward.19} parent=0 // pred_check_branch
    %11 = sbr.rel (0) target = $region9
  $region8: #{varnet_forward.19} parent=0 // pred_region
    _
  $region9: #{varnet_forward.19} parent=0 // pred_fallthru
    _
  // Predicated region
  $region10: #{varnet_forward.19} parent=0 // pred_check
    _
  $region11: #{varnet_forward.19} parent=0 // pred_check_branch
    %13 = sbr.rel (0) target = $region13
  $region12: #{varnet_forward.19} parent=0 // pred_region
    _
  $region13: #{varnet_forward.19} parent=0 // pred_fallthru
    _
  %v14 = vld [vmem:[%s0] sm:$0xff]
  %v15 = vld [vmem:[%s0 + $0x8] sm:$0xff]
  %v16 = vld [vmem:[%s0 + $0x10] sm:$0xff]
  %v17 = vld [vmem:[%s0 + $0x18] sm:$0xff]
  %v18 = vld [vmem:[%s0 + $0x20] sm:$0xff]
  %v19 = vld [vmem:[%s0 + $0x28] sm:$0xff]
  %v20 = vld [vmem:[%s0 + $0x30] sm:$0xff]
  %v21 = vld [vmem:[%s0 + $0x38] sm:$0xff]
  %v22 = vld [vmem:[%s0 + $0x40] sm:$0xff]
  %v23 = vld [vmem:[%s0 + $0x48] sm:$0xff]
  %v24 = vld [vmem:[%s0 + $0x50] sm:$0xff]
  %v25 = vld [vmem:[%s0 + $0x58] sm:$0xff]
  %v26 = vld [vmem:[%s0 + $0x60] sm:$0xff]
  %v27 = vld [vmem:[%s0 + $0x68] sm:$0xff]
  %v28 = vld [vmem:[%s0 + $0x70] sm:$0xff]
  %v29 = vld [vmem:[%s0 + $0x78] sm:$0xff]
  %v30 = vld [vmem:[%s0 + $0x80] sm:$0xff]
  %v31 = vld [vmem:[%s0 + $0x88] sm:$0xff]
  %v32 = vld [vmem:[%s0 + $0x90] sm:$0xff]
  %v33 = vld [vmem:[%s0 + $0x98] sm:$0xff]
  %v34 = vld [vmem:[%s0 + $0xa0] sm:$0xff]
  %v35 = vld [vmem:[%s0 + $0xa8] sm:$0xff]
  %v36 = vld [vmem:[%s0 + $0xb0] sm:$0xff]
  %v37 = vld [vmem:[%s0 + $0xb8] sm:$0xff]
  %v38 = vld [vmem:[%s0 + $0xc0] sm:$0xff]
  %v39 = vld [vmem:[%s0 + $0xc8] sm:$0xff]
  %v40 = vld [vmem:[%s0 + $0xd0] sm:$0xff]
  %v41 = vld [vmem:[%s0 + $0xd8] sm:$0xff]
  %v42 = vld [vmem:[%s0 + $0xe0] sm:$0xff]
  %v43 = vld [vmem:[%s0 + $0xe8] sm:$0xff]
  %v44 = vld [vmem:[%s0 + $0xf0] sm:$0xff]
  %v45 = vld [vmem:[%s0 + $0xf8] sm:$0xff]
  %v46 = vld [vmem:[%s0 + $0x100] sm:$0xff]
  %v47 = vld [vmem:[%s0 + $0x108] sm:$0xff]
  %v48 = vld [vmem:[%s0 + $0x110] sm:$0xff]
  %v49 = vld [vmem:[%s0 + $0x118] sm:$0xff]
  %v50 = vld [vmem:[%s0 + $0x120] sm:$0xff]
  %v51 = vld [vmem:[%s0 + $0x128] sm:$0xff]
  %v52 = vld [vmem:[%s0 + $0x130] sm:$0xff]
  %v53 = vld [vmem:[%s0 + $0x138] sm:$0xff]
  %v54 = vld [vmem:[%s0 + $0x140] sm:$0xff]
  %v55 = vld [vmem:[%s0 + $0x148] sm:$0xff]
  %v56 = vld [vmem:[%s0 + $0x150] sm:$0xff]
  %v57 = vld [vmem:[%s0 + $0x158] sm:$0xff]
  %v58 = vld [vmem:[%s0 + $0x160] sm:$0xff]
  %v59 = vld [vmem:[%s0 + $0x168] sm:$0xff]
  %v60 = vld [vmem:[%s0 + $0x170] sm:$0xff]
  %v61 = vld [vmem:[%s0 + $0x178] sm:$0xff]
  %v62 = vld [vmem:[%s0 + $0x180] sm:$0xff]
  %v63 = vld [vmem:[%s0 + $0x188] sm:$0xff]
  %v64 = vld [vmem:[%s0 + $0x190] sm:$0xff]
  %v65 = vld [vmem:[%s0 + $0x198] sm:$0xff]
  %v66 = vld [vmem:[%s0 + $0x1a0] sm:$0xff]
  %v67 = vld [vmem:[%s0 + $0x1a8] sm:$0xff]
  %v68 = vld [vmem:[%s0 + $0x1b0] sm:$0xff]
  %v69 = vld [vmem:[%s0 + $0x1b8] sm:$0xff]
  %v70 = vld [vmem:[%s0 + $0x1c0] sm:$0xff]
  %v71 = vld [vmem:[%s0 + $0x1c8] sm:$0xff]
  %v72 = vld [vmem:[%s0 + $0x1d0] sm:$0xff]
  %v73 = vld [vmem:[%s0 + $0x1d8] sm:$0xff]
  %v74 = vld [vmem:[%s0 + $0x1e0] sm:$0xff]
  %v75 = vld [vmem:[%s0 + $0x1e8] sm:$0xff]
  %v76 = vld [vmem:[%s0 + $0x1f0] sm:$0xff]
  %v77 = vld [vmem:[%s0 + $0x1f8] sm:$0xff]
  %v78 = vld [vmem:[%s1] sm:$0xff]
  %v79 = vld [vmem:[%s1 + $0x8] sm:$0xff]
  %v80 = vld [vmem:[%s1 + $0x10] sm:$0xff]
  %v81 = vld [vmem:[%s1 + $0x18] sm:$0xff]
  %v82 = vld [vmem:[%s1 + $0x20] sm:$0xff]
  %v83 = vld [vmem:[%s1 + $0x28] sm:$0xff]
  %v84 = vld [vmem:[%s1 + $0x30] sm:$0xff]
  %v85 = vld [vmem:[%s1 + $0x38] sm:$0xff]
  %v86 = vld [vmem:[%s1 + $0x40] sm:$0xff]
  %v87 = vld [vmem:[%s2] sm:$0x1]
  %v89 = vperm.slane %v87, 0
  %vm91 = vcmask 588800
  %v93 = vsel %vm91, %v14, 0
  %v96 = vsel %vm91, %v15, 0
  %v99 = vsel %vm91, %v16, 0
  %v102 = vsel %vm91, %v17, 0
  %v105 = vsel %vm91, %v18, 0
  %v108 = vsel %vm91, %v19, 0
  %v111 = vsel %vm91, %v20, 0
  %v114 = vsel %vm91, %v21, 0
  %v117 = vsel %vm91, %v22, 0
  %v120 = vsel %vm91, %v23, 0
  %v123 = vsel %vm91, %v24, 0
  %v126 = vsel %vm91, %v25, 0
  %v129 = vsel %vm91, %v26, 0
  %v132 = vsel %vm91, %v27, 0
  %v135 = vsel %vm91, %v28, 0
  %v138 = vsel %vm91, %v29, 0
  %v141 = vsel %vm91, %v30, 0
  %v144 = vsel %vm91, %v31, 0
  %v147 = vsel %vm91, %v32, 0
  %v150 = vsel %vm91, %v33, 0
  %v153 = vsel %vm91, %v34, 0
  %v156 = vsel %vm91, %v35, 0
  %v159 = vsel %vm91, %v36, 0
  %v162 = vsel %vm91, %v37, 0
  %v165 = vsel %vm91, %v38, 0
  %v168 = vsel %vm91, %v39, 0
  %v171 = vsel %vm91, %v40, 0
  %v174 = vsel %vm91, %v41, 0
  %v177 = vsel %vm91, %v42, 0
  %v180 = vsel %vm91, %v43, 0
  %v183 = vsel %vm91, %v44, 0
  %v186 = vsel %vm91, %v45, 0
  %v189 = vsel %vm91, %v46, 0
  %v192 = vsel %vm91, %v47, 0
  %v195 = vsel %vm91, %v48, 0
  %v198 = vsel %vm91, %v49, 0
  %v201 = vsel %vm91, %v50, 0
  %v204 = vsel %vm91, %v51, 0
  %v207 = vsel %vm91, %v52, 0
  %v210 = vsel %vm91, %v53, 0
  %v213 = vsel %vm91, %v54, 0
  %v216 = vsel %vm91, %v55, 0
  %v219 = vsel %vm91, %v56, 0
  %v222 = vsel %vm91, %v57, 0
  %v225 = vsel %vm91, %v58, 0
  %v228 = vsel %vm91, %v59, 0
  %v231 = vsel %vm91, %v60, 0
  %v234 = vsel %vm91, %v61, 0
  %v237 = vsel %vm91, %v62, 0
  %v240 = vsel %vm91, %v63, 0
  %v243 = vsel %vm91, %v64, 0
  %v246 = vsel %vm91, %v65, 0
  %v249 = vsel %vm91, %v66, 0
  %v252 = vsel %vm91, %v67, 0
  %v255 = vsel %vm91, %v68, 0
  %v258 = vsel %vm91, %v69, 0
  %v261 = vsel %vm91, %v70, 0
  %v264 = vsel %vm91, %v71, 0
  %v267 = vsel %vm91, %v72, 0
  %v270 = vsel %vm91, %v73, 0
  %v273 = vsel %vm91, %v74, 0
  %v276 = vsel %vm91, %v75, 0
  %v279 = vsel %vm91, %v76, 0
  %v282 = vsel %vm91, %v77, 0
  %284 = vmatpush.msra.mxu0 0.0
  %285 = vmatpush.msra.mxu0 0.0
  %286 = vmatpush.msra.mxu0 0.0
  %287 = vmatpush.msra.mxu0 0.0
  %288 = vmatpush.msra.mxu0 0.0
  %289 = vmatpush.msra.mxu0 0.0
  %290 = vmatpush.msra.mxu0 0.0
  %291 = vmatpush.msra.mxu0 %v86
  %292 = vmatpush.msra.mxu0 %v85
  %293 = vmatpush.msra.mxu0 %v84
  %294 = vmatpush.msra.mxu0 %v83
  %295 = vmatpush.msra.mxu0 %v82
  %296 = vmatpush.msra.mxu0 %v81
  %297 = vmatpush.msra.mxu0 %v80
  %298 = vmatpush.msra.mxu0 %v79
  %299 = vmatpush.msra.mxu0 %v78
  %300 = vmatmul.f32.gmra.mxu0 %v93
  %v301 = vpop.f32.mrf.mxu0
  %v302 = vadd.f32 %v89, %v301
  %303 = vmatmul.f32.gmra.mxu0 %v96
  %v304 = vpop.f32.mrf.mxu0
  %v305 = vadd.f32 %v89, %v304
  %306 = vmatmul.f32.gmra.mxu0 %v99
  %v307 = vpop.f32.mrf.mxu0
  %v308 = vadd.f32 %v89, %v307
  %309 = vmatmul.f32.gmra.mxu0 %v102
  %v310 = vpop.f32.mrf.mxu0
  %v311 = vadd.f32 %v89, %v310
  %312 = vmatmul.f32.gmra.mxu0 %v105
  %v313 = vpop.f32.mrf.mxu0
  %v314 = vadd.f32 %v89, %v313
  %315 = vmatmul.f32.gmra.mxu0 %v108
  %v316 = vpop.f32.mrf.mxu0
  %v317 = vadd.f32 %v89, %v316
  %318 = vmatmul.f32.gmra.mxu0 %v111
  %v319 = vpop.f32.mrf.mxu0
  %v320 = vadd.f32 %v89, %v319
  %321 = vmatmul.f32.gmra.mxu0 %v114
  %v322 = vpop.f32.mrf.mxu0
  %v323 = vadd.f32 %v89, %v322
  %324 = vmatmul.f32.gmra.mxu0 %v117
  %v325 = vpop.f32.mrf.mxu0
  %v326 = vadd.f32 %v89, %v325
  %327 = vmatmul.f32.gmra.mxu0 %v120
  %v328 = vpop.f32.mrf.mxu0
  %v329 = vadd.f32 %v89, %v328
  %330 = vmatmul.f32.gmra.mxu0 %v123
  %v331 = vpop.f32.mrf.mxu0
  %v332 = vadd.f32 %v89, %v331
  %333 = vmatmul.f32.gmra.mxu0 %v126
  %v334 = vpop.f32.mrf.mxu0
  %v335 = vadd.f32 %v89, %v334
  %336 = vmatmul.f32.gmra.mxu0 %v129
  %v337 = vpop.f32.mrf.mxu0
  %v338 = vadd.f32 %v89, %v337
  %339 = vmatmul.f32.gmra.mxu0 %v132
  %v340 = vpop.f32.mrf.mxu0
  %v341 = vadd.f32 %v89, %v340
  %342 = vmatmul.f32.gmra.mxu0 %v135
  %v343 = vpop.f32.mrf.mxu0
  %v344 = vadd.f32 %v89, %v343
  %345 = vmatmul.f32.gmra.mxu0 %v138
  %v346 = vpop.f32.mrf.mxu0
  %v347 = vadd.f32 %v89, %v346
  %348 = vmatmul.f32.gmra.mxu0 %v141
  %v349 = vpop.f32.mrf.mxu0
  %v350 = vadd.f32 %v89, %v349
  %351 = vmatmul.f32.gmra.mxu0 %v144
  %v352 = vpop.f32.mrf.mxu0
  %v353 = vadd.f32 %v89, %v352
  %354 = vmatmul.f32.gmra.mxu0 %v147
  %v355 = vpop.f32.mrf.mxu0
  %v356 = vadd.f32 %v89, %v355
  %357 = vmatmul.f32.gmra.mxu0 %v150
  %v358 = vpop.f32.mrf.mxu0
  %v359 = vadd.f32 %v89, %v358
  %360 = vmatmul.f32.gmra.mxu0 %v153
  %v361 = vpop.f32.mrf.mxu0
  %v362 = vadd.f32 %v89, %v361
  %363 = vmatmul.f32.gmra.mxu0 %v156
  %v364 = vpop.f32.mrf.mxu0
  %v365 = vadd.f32 %v89, %v364
  %366 = vmatmul.f32.gmra.mxu0 %v159
  %v367 = vpop.f32.mrf.mxu0
  %v368 = vadd.f32 %v89, %v367
  %369 = vmatmul.f32.gmra.mxu0 %v162
  %v370 = vpop.f32.mrf.mxu0
  %v371 = vadd.f32 %v89, %v370
  %372 = vmatmul.f32.gmra.mxu0 %v165
  %v373 = vpop.f32.mrf.mxu0
  %v374 = vadd.f32 %v89, %v373
  %375 = vmatmul.f32.gmra.mxu0 %v168
  %v376 = vpop.f32.mrf.mxu0
  %v377 = vadd.f32 %v89, %v376
  %378 = vmatmul.f32.gmra.mxu0 %v171
  %v379 = vpop.f32.mrf.mxu0
  %v380 = vadd.f32 %v89, %v379
  %381 = vmatmul.f32.gmra.mxu0 %v174
  %v382 = vpop.f32.mrf.mxu0
  %v383 = vadd.f32 %v89, %v382
  %384 = vmatmul.f32.gmra.mxu0 %v177
  %v385 = vpop.f32.mrf.mxu0
  %v386 = vadd.f32 %v89, %v385
  %387 = vmatmul.f32.gmra.mxu0 %v180
  %v388 = vpop.f32.mrf.mxu0
  %v389 = vadd.f32 %v89, %v388
  %390 = vmatmul.f32.gmra.mxu0 %v183
  %v391 = vpop.f32.mrf.mxu0
  %v392 = vadd.f32 %v89, %v391
  %393 = vmatmul.f32.gmra.mxu0 %v186
  %v394 = vpop.f32.mrf.mxu0
  %v395 = vadd.f32 %v89, %v394
  %396 = vmatmul.f32.gmra.mxu0 %v189
  %v397 = vpop.f32.mrf.mxu0
  %v398 = vadd.f32 %v89, %v397
  %399 = vmatmul.f32.gmra.mxu0 %v192
  %v400 = vpop.f32.mrf.mxu0
  %v401 = vadd.f32 %v89, %v400
  %402 = vmatmul.f32.gmra.mxu0 %v195
  %v403 = vpop.f32.mrf.mxu0
  %v404 = vadd.f32 %v89, %v403
  %405 = vmatmul.f32.gmra.mxu0 %v198
  %v406 = vpop.f32.mrf.mxu0
  %v407 = vadd.f32 %v89, %v406
  %408 = vmatmul.f32.gmra.mxu0 %v201
  %v409 = vpop.f32.mrf.mxu0
  %v410 = vadd.f32 %v89, %v409
  %411 = vmatmul.f32.gmra.mxu0 %v204
  %v412 = vpop.f32.mrf.mxu0
  %v413 = vadd.f32 %v89, %v412
  %414 = vmatmul.f32.gmra.mxu0 %v207
  %v415 = vpop.f32.mrf.mxu0
  %v416 = vadd.f32 %v89, %v415
  %417 = vmatmul.f32.gmra.mxu0 %v210
  %v418 = vpop.f32.mrf.mxu0
  %v419 = vadd.f32 %v89, %v418
  %420 = vmatmul.f32.gmra.mxu0 %v213
  %v421 = vpop.f32.mrf.mxu0
  %v422 = vadd.f32 %v89, %v421
  %423 = vmatmul.f32.gmra.mxu0 %v216
  %v424 = vpop.f32.mrf.mxu0
  %v425 = vadd.f32 %v89, %v424
  %426 = vmatmul.f32.gmra.mxu0 %v219
  %v427 = vpop.f32.mrf.mxu0
  %v428 = vadd.f32 %v89, %v427
  %429 = vmatmul.f32.gmra.mxu0 %v222
  %v430 = vpop.f32.mrf.mxu0
  %v431 = vadd.f32 %v89, %v430
  %432 = vmatmul.f32.gmra.mxu0 %v225
  %v433 = vpop.f32.mrf.mxu0
  %v434 = vadd.f32 %v89, %v433
  %435 = vmatmul.f32.gmra.mxu0 %v228
  %v436 = vpop.f32.mrf.mxu0
  %v437 = vadd.f32 %v89, %v436
  %438 = vmatmul.f32.gmra.mxu0 %v231
  %v439 = vpop.f32.mrf.mxu0
  %v440 = vadd.f32 %v89, %v439
  %441 = vmatmul.f32.gmra.mxu0 %v234
  %v442 = vpop.f32.mrf.mxu0
  %v443 = vadd.f32 %v89, %v442
  %444 = vmatmul.f32.gmra.mxu0 %v237
  %v445 = vpop.f32.mrf.mxu0
  %v446 = vadd.f32 %v89, %v445
  %447 = vmatmul.f32.gmra.mxu0 %v240
  %v448 = vpop.f32.mrf.mxu0
  %v449 = vadd.f32 %v89, %v448
  %450 = vmatmul.f32.gmra.mxu0 %v243
  %v451 = vpop.f32.mrf.mxu0
  %v452 = vadd.f32 %v89, %v451
  %453 = vmatmul.f32.gmra.mxu0 %v246
  %v454 = vpop.f32.mrf.mxu0
  %v455 = vadd.f32 %v89, %v454
  %456 = vmatmul.f32.gmra.mxu0 %v249
  %v457 = vpop.f32.mrf.mxu0
  %v458 = vadd.f32 %v89, %v457
  %459 = vmatmul.f32.gmra.mxu0 %v252
  %v460 = vpop.f32.mrf.mxu0
  %v461 = vadd.f32 %v89, %v460
  %462 = vmatmul.f32.gmra.mxu0 %v255
  %v463 = vpop.f32.mrf.mxu0
  %v464 = vadd.f32 %v89, %v463
  %465 = vmatmul.f32.gmra.mxu0 %v258
  %v466 = vpop.f32.mrf.mxu0
  %v467 = vadd.f32 %v89, %v466
  %468 = vmatmul.f32.gmra.mxu0 %v261
  %v469 = vpop.f32.mrf.mxu0
  %v470 = vadd.f32 %v89, %v469
  %471 = vmatmul.f32.gmra.mxu0 %v264
  %v472 = vpop.f32.mrf.mxu0
  %v473 = vadd.f32 %v89, %v472
  %474 = vmatmul.f32.gmra.mxu0 %v267
  %v475 = vpop.f32.mrf.mxu0
  %v476 = vadd.f32 %v89, %v475
  %477 = vmatmul.f32.gmra.mxu0 %v270
  %v478 = vpop.f32.mrf.mxu0
  %v479 = vadd.f32 %v89, %v478
  %480 = vmatmul.f32.gmra.mxu0 %v273
  %v481 = vpop.f32.mrf.mxu0
  %v482 = vadd.f32 %v89, %v481
  %483 = vmatmul.f32.gmra.mxu0 %v276
  %v484 = vpop.f32.mrf.mxu0
  %v485 = vadd.f32 %v89, %v484
  %486 = vmatmul.f32.gmra.mxu0 %v279
  %v487 = vpop.f32.mrf.mxu0
  %v488 = vadd.f32 %v89, %v487
  %489 = vmatmul.f32.gmra.mxu0 %v282
  %v490 = vpop.f32.mrf.mxu0
  %v491 = vadd.f32 %v89, %v490
  %492 = vdwg.mxu0
  %vm493 = vcmask 15360
  %494 = vst.msk [vmem:[%s3] sm:$0xff] %vm493, %v302
  %495 = vst.msk [vmem:[%s3 + $0x8] sm:$0xff] %vm493, %v305
  %496 = vst.msk [vmem:[%s3 + $0x10] sm:$0xff] %vm493, %v308
  %497 = vst.msk [vmem:[%s3 + $0x18] sm:$0xff] %vm493, %v311
  %498 = vst.msk [vmem:[%s3 + $0x20] sm:$0xff] %vm493, %v314
  %499 = vst.msk [vmem:[%s3 + $0x28] sm:$0xff] %vm493, %v317
  %500 = vst.msk [vmem:[%s3 + $0x30] sm:$0xff] %vm493, %v320
  %501 = vst.msk [vmem:[%s3 + $0x38] sm:$0xff] %vm493, %v323
  %502 = vst.msk [vmem:[%s3 + $0x40] sm:$0xff] %vm493, %v326
  %503 = vst.msk [vmem:[%s3 + $0x48] sm:$0xff] %vm493, %v329
  %504 = vst.msk [vmem:[%s3 + $0x50] sm:$0xff] %vm493, %v332
  %505 = vst.msk [vmem:[%s3 + $0x58] sm:$0xff] %vm493, %v335
  %506 = vst.msk [vmem:[%s3 + $0x60] sm:$0xff] %vm493, %v338
  %507 = vst.msk [vmem:[%s3 + $0x68] sm:$0xff] %vm493, %v341
  %508 = vst.msk [vmem:[%s3 + $0x70] sm:$0xff] %vm493, %v344
  %509 = vst.msk [vmem:[%s3 + $0x78] sm:$0xff] %vm493, %v347
  %510 = vst.msk [vmem:[%s3 + $0x80] sm:$0xff] %vm493, %v350
  %511 = vst.msk [vmem:[%s3 + $0x88] sm:$0xff] %vm493, %v353
  %512 = vst.msk [vmem:[%s3 + $0x90] sm:$0xff] %vm493, %v356
  %513 = vst.msk [vmem:[%s3 + $0x98] sm:$0xff] %vm493, %v359
  %514 = vst.msk [vmem:[%s3 + $0xa0] sm:$0xff] %vm493, %v362
  %515 = vst.msk [vmem:[%s3 + $0xa8] sm:$0xff] %vm493, %v365
  %516 = vst.msk [vmem:[%s3 + $0xb0] sm:$0xff] %vm493, %v368
  %517 = vst.msk [vmem:[%s3 + $0xb8] sm:$0xff] %vm493, %v371
  %518 = vst.msk [vmem:[%s3 + $0xc0] sm:$0xff] %vm493, %v374
  %519 = vst.msk [vmem:[%s3 + $0xc8] sm:$0xff] %vm493, %v377
  %520 = vst.msk [vmem:[%s3 + $0xd0] sm:$0xff] %vm493, %v380
  %521 = vst.msk [vmem:[%s3 + $0xd8] sm:$0xff] %vm493, %v383
  %522 = vst.msk [vmem:[%s3 + $0xe0] sm:$0xff] %vm493, %v386
  %523 = vst.msk [vmem:[%s3 + $0xe8] sm:$0xff] %vm493, %v389
  %524 = vst.msk [vmem:[%s3 + $0xf0] sm:$0xff] %vm493, %v392
  %525 = vst.msk [vmem:[%s3 + $0xf8] sm:$0xff] %vm493, %v395
  %526 = vst.msk [vmem:[%s3 + $0x100] sm:$0xff] %vm493, %v398
  %527 = vst.msk [vmem:[%s3 + $0x108] sm:$0xff] %vm493, %v401
  %528 = vst.msk [vmem:[%s3 + $0x110] sm:$0xff] %vm493, %v404
  %529 = vst.msk [vmem:[%s3 + $0x118] sm:$0xff] %vm493, %v407
  %530 = vst.msk [vmem:[%s3 + $0x120] sm:$0xff] %vm493, %v410
  %531 = vst.msk [vmem:[%s3 + $0x128] sm:$0xff] %vm493, %v413
  %532 = vst.msk [vmem:[%s3 + $0x130] sm:$0xff] %vm493, %v416
  %533 = vst.msk [vmem:[%s3 + $0x138] sm:$0xff] %vm493, %v419
  %534 = vst.msk [vmem:[%s3 + $0x140] sm:$0xff] %vm493, %v422
  %535 = vst.msk [vmem:[%s3 + $0x148] sm:$0xff] %vm493, %v425
  %536 = vst.msk [vmem:[%s3 + $0x150] sm:$0xff] %vm493, %v428
  %537 = vst.msk [vmem:[%s3 + $0x158] sm:$0xff] %vm493, %v431
  %538 = vst.msk [vmem:[%s3 + $0x160] sm:$0xff] %vm493, %v434
  %539 = vst.msk [vmem:[%s3 + $0x168] sm:$0xff] %vm493, %v437
  %540 = vst.msk [vmem:[%s3 + $0x170] sm:$0xff] %vm493, %v440
  %541 = vst.msk [vmem:[%s3 + $0x178] sm:$0xff] %vm493, %v443
  %542 = vst.msk [vmem:[%s3 + $0x180] sm:$0xff] %vm493, %v446
  %543 = vst.msk [vmem:[%s3 + $0x188] sm:$0xff] %vm493, %v449
  %544 = vst.msk [vmem:[%s3 + $0x190] sm:$0xff] %vm493, %v452
  %545 = vst.msk [vmem:[%s3 + $0x198] sm:$0xff] %vm493, %v455
  %546 = vst.msk [vmem:[%s3 + $0x1a0] sm:$0xff] %vm493, %v458
  %547 = vst.msk [vmem:[%s3 + $0x1a8] sm:$0xff] %vm493, %v461
  %548 = vst.msk [vmem:[%s3 + $0x1b0] sm:$0xff] %vm493, %v464
  %549 = vst.msk [vmem:[%s3 + $0x1b8] sm:$0xff] %vm493, %v467
  %550 = vst.msk [vmem:[%s3 + $0x1c0] sm:$0xff] %vm493, %v470
  %551 = vst.msk [vmem:[%s3 + $0x1c8] sm:$0xff] %vm493, %v473
  %552 = vst.msk [vmem:[%s3 + $0x1d0] sm:$0xff] %vm493, %v476
  %553 = vst.msk [vmem:[%s3 + $0x1d8] sm:$0xff] %vm493, %v479
  %554 = vst.msk [vmem:[%s3 + $0x1e0] sm:$0xff] %vm493, %v482
  %555 = vst.msk [vmem:[%s3 + $0x1e8] sm:$0xff] %vm493, %v485
  %556 = vst.msk [vmem:[%s3 + $0x1f0] sm:$0xff] %vm493, %v488
  %557 = vst.msk [vmem:[%s3 + $0x1f8] sm:$0xff] %vm493, %v491
  // Predicated region
  $region14: #{varnet_forward.19} parent=0 // pred_check
    _
  $region15: #{varnet_forward.19} parent=0 // pred_check_branch
    %559 = sbr.rel (0) target = $region17
  $region16: #{varnet_forward.19} parent=0 // pred_region
    _
  $region17: #{varnet_forward.19} parent=0 // pred_fallthru
    _
  // Predicated region
  $region18: #{varnet_forward.19} parent=0 // pred_check
    _
  $region19: #{varnet_forward.19} parent=0 // pred_check_branch
    %561 = sbr.rel (0) target = $region21
  $region20: #{varnet_forward.19} parent=0 // pred_region
    _
  $region21: #{varnet_forward.19} parent=0 // pred_fallthru
    _

// kernel: varnet_forward.20
$region0: #{varnet_forward.20}
  #allocation0 [shape = 'u32[]', space=smem, size = 0x4, offset = 0x4, fixed_abs, tag = 'smem constant byte address 0x4 - core index']
  #allocation1 [shape = 'u32[72,128]{1,0:T(1,128)}', space=vmem, size = 0x9000, scoped, tag = 'internal scratch']
  #allocation2 [shape = 'f32[64,16]{1,0:T(8,128)}', space=vmem, size = 0x8000, scoped, tag = 'scratch operand']
  #allocation3 [shape = 'f32[64,16]{1,0:T(8,128)}', space=vmem, size = 0x8000, scoped, tag = 'scratch operand']
  #allocation4 [shape = 'f32[1]{0:T(128)S(6)}', space=smem, size = 0x200, scoped, tag = 'scoped memory for varnet_forward.20']
  %s0 = inlined_call_operand.<no memory space> [shape: f32[1], index: 0, kind: input, shape index: {}]
  %s1 = inlined_call_operand.vmem [shape: f32[16,16], index: 1, kind: input, shape index: {}]
  %s2 = inlined_call_operand.vmem [shape: f32[16,16], index: 2, kind: input, shape index: {}]
  %s3 = inlined_call_operand.vmem [shape: f32[16,16], index: 3, kind: input, shape index: {}]
  %s4 = inlined_call_operand.vmem [shape: f32[16,16], index: 4, kind: input, shape index: {}]
  %s5 = inlined_call_operand.vmem [shape: f32[1,16], index: 5, kind: input, shape index: {}]
  %s6 = inlined_call_operand.vmem [shape: f32[2,16,16], index: 6, kind: input, shape index: {}]
  %s7 = inlined_call_operand.vmem [shape: f32[2,16,16], index: 7, kind: input, shape index: {}]
  %s8 = inlined_call_operand.vmem [shape: f32[2,64,16], index: 8, kind: input, shape index: {}]
  %s9 = inlined_call_operand.vmem [shape: f32[2,64,16], index: 9, kind: input, shape index: {}]
  %s10 = inlined_call_operand.vmem [shape: f32[2,64,16], index: 10, kind: input, shape index: {}, may-alias: {10,12}]
  %s11 = inlined_call_operand.vmem [shape: f32[2,64,16], index: 11, kind: input, shape index: {}, may-alias: {11,13}]
  %s12 = inlined_call_operand.vmem [shape: f32[2,64,16], index: 12, kind: input, shape index: {}, may-alias: {10,12}]
  %s13 = inlined_call_operand.vmem [shape: f32[2,64,16], index: 13, kind: input, shape index: {}, may-alias: {11,13}]
  %s14 = inlined_call_operand.vmem [shape: f32[2,64,16], index: 14, kind: output, shape index: {0}]
  %s15 = inlined_call_operand.vmem [shape: f32[2,64,16], index: 15, kind: output, shape index: {1}]
  %16 = xla_tuple %s14, %s15
  %s17 = sld [smem:[#allocation0]]
  $region97: #{varnet_forward.20} parent=0
    _
  %s19 = ssub.s32 1, %s17
  %s20 = scalar_select 0, %s19, %s17
  %21 = sst [smem:[#allocation4]] %s0
  loop: start=0, step=1, limit=4
  $region2: #{varnet_forward.20} parent=0 // loop_pre_header
    _
  $region3: #{varnet_forward.20} parent=0 // loop_header
    %s23 = sphi 0, %s27
    %p24 = scmp.ge.s32.totalorder %s23, 4
    %s31 = sphi 0, %s31
    %s33 = sphi 0, %s31
    %s34 = sphi 0, %s33
    %s48 = sphi 0, %s34
    %s52 = sphi 0, %s52
    %s54 = sphi 0, %s52
    %s55 = sphi 0, %s54
    %s69 = sphi 0, %s55
    %s73 = sphi 0, %s73
    %s75 = sphi 0, %s73
    %s76 = sphi 0, %s75
    %s90 = sphi 0, %s76
    %s94 = sphi 0, %s94
    %s96 = sphi 0, %s94
    %s97 = sphi 0, %s96
    %s111 = sphi 0, %s97
    %s115 = sphi 0, %s115
    %s117 = sphi 0, %s115
    %s118 = sphi 0, %s117
    %s132 = sphi 0, %s118
    %s136 = sphi 0, %s136
    %s138 = sphi 0, %s136
    %s139 = sphi 0, %s138
    %s153 = sphi 0, %s139
    %s159 = sphi 0, %s161
    %s162 = sphi 0, %s159
    %s163 = sphi 0, %s162
    %s179 = sphi 0, %s163
    %s185 = sphi 0, %s187
    %s188 = sphi 0, %s185
    %s189 = sphi 0, %s188
    %s205 = sphi 0, %s189
    %s211 = sphi 0, %s213
    %s214 = sphi 0, %s211
    %s215 = sphi 0, %s214
    %s231 = sphi 0, %s215
    %s237 = sphi 0, %s239
    %s240 = sphi 0, %s237
    %s241 = sphi 0, %s240
    %s257 = sphi 0, %s241
    %s263 = sphi 0, %s265
    %s266 = sphi 0, %s263
    %s267 = sphi 0, %s266
    %s283 = sphi 0, %s267
    %s289 = sphi 0, %s291
    %s292 = sphi 0, %s289
    %s293 = sphi 0, %s292
    %s309 = sphi 0, %s293
    %s315 = sphi 0, %s317
    %s318 = sphi 0, %s315
    %s319 = sphi 0, %s318
    %s335 = sphi 0, %s319
    %s341 = sphi 0, %s343
    %s344 = sphi 0, %s341
    %s345 = sphi 0, %s344
    %s361 = sphi 0, %s345
    %s367 = sphi 0, %s369
    %s370 = sphi 0, %s367
    %s371 = sphi 0, %s370
    %s387 = sphi 0, %s371
    %s393 = sphi 0, %s395
    %s396 = sphi 0, %s393
    %s397 = sphi 0, %s396
    %s413 = sphi 0, %s397
  $region4: #{varnet_forward.20} parent=0 // loop_header_branch
    %26 = sbr.rel (%p24) target = $region8
  $region5: #{varnet_forward.20} parent=0 // loop_body
    %s28 = ssub.s32 %s23, 1
    %s29 = ssub.s32 %s23, 2
    %s30 = sadd.s32 %s23, 1
    %s32 = sadd.s32 %s31, 1
    %p35 = scmp.eq.s32.totalorder %s23, 1
    %p36 = scmp.ne.s32.totalorder %s31, %s33
    %p37 = scmp.eq.s32.totalorder %s23, 0
    %p38 = por %p36, %p37
    %p39 = scmp.ne.s32.totalorder %s31, %s33
    %p40 = scmp.eq.s32.totalorder %s28, 1
    %p41 = por %p39, %p40
    %p42 = scmp.ne.s32.totalorder %s33, %s34
    %p43 = scmp.eq.s32.totalorder %s28, 0
    %p44 = por %p42, %p43
    %p45 = scmp.ne.s32.totalorder %s33, %s34
    %p46 = scmp.eq.s32.totalorder %s29, 1
    %p47 = por %p45, %p46
    %p49 = scmp.ne.s32.totalorder %s34, %s48
    %p50 = scmp.eq.s32.totalorder %s29, 0
    %p51 = por %p49, %p50
    %s53 = sadd.s32 %s52, 1
    %p56 = scmp.eq.s32.totalorder %s23, 1
    %p57 = scmp.ne.s32.totalorder %s52, %s54
    %p58 = scmp.eq.s32.totalorder %s23, 0
    %p59 = por %p57, %p58
    %p60 = scmp.ne.s32.totalorder %s52, %s54
    %p61 = scmp.eq.s32.totalorder %s28, 1
    %p62 = por %p60, %p61
    %p63 = scmp.ne.s32.totalorder %s54, %s55
    %p64 = scmp.eq.s32.totalorder %s28, 0
    %p65 = por %p63, %p64
    %p66 = scmp.ne.s32.totalorder %s54, %s55
    %p67 = scmp.eq.s32.totalorder %s29, 1
    %p68 = por %p66, %p67
    %p70 = scmp.ne.s32.totalorder %s55, %s69
    %p71 = scmp.eq.s32.totalorder %s29, 0
    %p72 = por %p70, %p71
    %s74 = sadd.s32 %s73, 1
    %p77 = scmp.eq.s32.totalorder %s23, 1
    %p78 = scmp.ne.s32.totalorder %s73, %s75
    %p79 = scmp.eq.s32.totalorder %s23, 0
    %p80 = por %p78, %p79
    %p81 = scmp.ne.s32.totalorder %s73, %s75
    %p82 = scmp.eq.s32.totalorder %s28, 1
    %p83 = por %p81, %p82
    %p84 = scmp.ne.s32.totalorder %s75, %s76
    %p85 = scmp.eq.s32.totalorder %s28, 0
    %p86 = por %p84, %p85
    %p87 = scmp.ne.s32.totalorder %s75, %s76
    %p88 = scmp.eq.s32.totalorder %s29, 1
    %p89 = por %p87, %p88
    %p91 = scmp.ne.s32.totalorder %s76, %s90
    %p92 = scmp.eq.s32.totalorder %s29, 0
    %p93 = por %p91, %p92
    %s95 = sadd.s32 %s94, 1
    %p98 = scmp.eq.s32.totalorder %s23, 1
    %p99 = scmp.ne.s32.totalorder %s94, %s96
    %p100 = scmp.eq.s32.totalorder %s23, 0
    %p101 = por %p99, %p100
    %p102 = scmp.ne.s32.totalorder %s94, %s96
    %p103 = scmp.eq.s32.totalorder %s28, 1
    %p104 = por %p102, %p103
    %p105 = scmp.ne.s32.totalorder %s96, %s97
    %p106 = scmp.eq.s32.totalorder %s28, 0
    %p107 = por %p105, %p106
    %p108 = scmp.ne.s32.totalorder %s96, %s97
    %p109 = scmp.eq.s32.totalorder %s29, 1
    %p110 = por %p108, %p109
    %p112 = scmp.ne.s32.totalorder %s97, %s111
    %p113 = scmp.eq.s32.totalorder %s29, 0
    %p114 = por %p112, %p113
    %s116 = sadd.s32 %s115, 1
    %p119 = scmp.eq.s32.totalorder %s23, 1
    %p120 = scmp.ne.s32.totalorder %s115, %s117
    %p121 = scmp.eq.s32.totalorder %s23, 0
    %p122 = por %p120, %p121
    %p123 = scmp.ne.s32.totalorder %s115, %s117
    %p124 = scmp.eq.s32.totalorder %s28, 1
    %p125 = por %p123, %p124
    %p126 = scmp.ne.s32.totalorder %s117, %s118
    %p127 = scmp.eq.s32.totalorder %s28, 0
    %p128 = por %p126, %p127
    %p129 = scmp.ne.s32.totalorder %s117, %s118
    %p130 = scmp.eq.s32.totalorder %s29, 1
    %p131 = por %p129, %p130
    %p133 = scmp.ne.s32.totalorder %s118, %s132
    %p134 = scmp.eq.s32.totalorder %s29, 0
    %p135 = por %p133, %p134
    %s137 = sadd.s32 %s136, 1
    %p140 = scmp.eq.s32.totalorder %s23, 1
    %p141 = scmp.ne.s32.totalorder %s136, %s138
    %p142 = scmp.eq.s32.totalorder %s23, 0
    %p143 = por %p141, %p142
    %p144 = scmp.ne.s32.totalorder %s136, %s138
    %p145 = scmp.eq.s32.totalorder %s28, 1
    %p146 = por %p144, %p145
    %p147 = scmp.ne.s32.totalorder %s138, %s139
    %p148 = scmp.eq.s32.totalorder %s28, 0
    %p149 = por %p147, %p148
    %p150 = scmp.ne.s32.totalorder %s138, %s139
    %p151 = scmp.eq.s32.totalorder %s29, 1
    %p152 = por %p150, %p151
    %p154 = scmp.ne.s32.totalorder %s139, %s153
    %p155 = scmp.eq.s32.totalorder %s29, 0
    %p156 = por %p154, %p155
    %s157 = ssub.s32 %s23, %s30
    %p158 = scmp.eq.s32.totalorder %s157, 0
    %s160 = sadd.s32 %s159, 1
    %s161 = scalar_select %p158, %s159, %s160
    %p164 = pneg %p158
    %p165 = scmp.eq.s32.totalorder %s23, 1
    %p166 = por %p164, %p165
    %p167 = scmp.ne.s32.totalorder %s159, %s162
    %p168 = scmp.eq.s32.totalorder %s23, 0
    %p169 = por %p167, %p168
    %p170 = scmp.ne.s32.totalorder %s159, %s162
    %p171 = scmp.eq.s32.totalorder %s28, 1
    %p172 = por %p170, %p171
    %p173 = scmp.ne.s32.totalorder %s162, %s163
    %p174 = scmp.eq.s32.totalorder %s28, 0
    %p175 = por %p173, %p174
    %p176 = scmp.ne.s32.totalorder %s162, %s163
    %p177 = scmp.eq.s32.totalorder %s29, 1
    %p178 = por %p176, %p177
    %p180 = scmp.ne.s32.totalorder %s163, %s179
    %p181 = scmp.eq.s32.totalorder %s29, 0
    %p182 = por %p180, %p181
    %s183 = ssub.s32 %s23, %s30
    %p184 = scmp.eq.s32.totalorder %s183, 0
    %s186 = sadd.s32 %s185, 1
    %s187 = scalar_select %p184, %s185, %s186
    %p190 = pneg %p184
    %p191 = scmp.eq.s32.totalorder %s23, 1
    %p192 = por %p190, %p191
    %p193 = scmp.ne.s32.totalorder %s185, %s188
    %p194 = scmp.eq.s32.totalorder %s23, 0
    %p195 = por %p193, %p194
    %p196 = scmp.ne.s32.totalorder %s185, %s188
    %p197 = scmp.eq.s32.totalorder %s28, 1
    %p198 = por %p196, %p197
    %p199 = scmp.ne.s32.totalorder %s188, %s189
    %p200 = scmp.eq.s32.totalorder %s28, 0
    %p201 = por %p199, %p200
    %p202 = scmp.ne.s32.totalorder %s188, %s189
    %p203 = scmp.eq.s32.totalorder %s29, 1
    %p204 = por %p202, %p203
    %p206 = scmp.ne.s32.totalorder %s189, %s205
    %p207 = scmp.eq.s32.totalorder %s29, 0
    %p208 = por %p206, %p207
    %s209 = ssub.s32 %s23, %s30
    %p210 = scmp.eq.s32.totalorder %s209, 0
    %s212 = sadd.s32 %s211, 1
    %s213 = scalar_select %p210, %s211, %s212
    %p216 = pneg %p210
    %p217 = scmp.eq.s32.totalorder %s23, 1
    %p218 = por %p216, %p217
    %p219 = scmp.ne.s32.totalorder %s211, %s214
    %p220 = scmp.eq.s32.totalorder %s23, 0
    %p221 = por %p219, %p220
    %p222 = scmp.ne.s32.totalorder %s211, %s214
    %p223 = scmp.eq.s32.totalorder %s28, 1
    %p224 = por %p222, %p223
    %p225 = scmp.ne.s32.totalorder %s214, %s215
    %p226 = scmp.eq.s32.totalorder %s28, 0
    %p227 = por %p225, %p226
    %p228 = scmp.ne.s32.totalorder %s214, %s215
    %p229 = scmp.eq.s32.totalorder %s29, 1
    %p230 = por %p228, %p229
    %p232 = scmp.ne.s32.totalorder %s215, %s231
    %p233 = scmp.eq.s32.totalorder %s29, 0
    %p234 = por %p232, %p233
    %s235 = ssub.s32 %s23, %s30
    %p236 = scmp.eq.s32.totalorder %s235, 0
    %s238 = sadd.s32 %s237, 1
    %s239 = scalar_select %p236, %s237, %s238
    %p242 = pneg %p236
    %p243 = scmp.eq.s32.totalorder %s23, 1
    %p244 = por %p242, %p243
    %p245 = scmp.ne.s32.totalorder %s237, %s240
    %p246 = scmp.eq.s32.totalorder %s23, 0
    %p247 = por %p245, %p246
    %p248 = scmp.ne.s32.totalorder %s237, %s240
    %p249 = scmp.eq.s32.totalorder %s28, 1
    %p250 = por %p248, %p249
    %p251 = scmp.ne.s32.totalorder %s240, %s241
    %p252 = scmp.eq.s32.totalorder %s28, 0
    %p253 = por %p251, %p252
    %p254 = scmp.ne.s32.totalorder %s240, %s241
    %p255 = scmp.eq.s32.totalorder %s29, 1
    %p256 = por %p254, %p255
    %p258 = scmp.ne.s32.totalorder %s241, %s257
    %p259 = scmp.eq.s32.totalorder %s29, 0
    %p260 = por %p258, %p259
    %s261 = ssub.s32 %s23, %s30
    %p262 = scmp.eq.s32.totalorder %s261, 0
    %s264 = sadd.s32 %s263, 1
    %s265 = scalar_select %p262, %s263, %s264
    %p268 = pneg %p262
    %p269 = scmp.eq.s32.totalorder %s23, 1
    %p270 = por %p268, %p269
    %p271 = scmp.ne.s32.totalorder %s263, %s266
    %p272 = scmp.eq.s32.totalorder %s23, 0
    %p273 = por %p271, %p272
    %p274 = scmp.ne.s32.totalorder %s263, %s266
    %p275 = scmp.eq.s32.totalorder %s28, 1
    %p276 = por %p274, %p275
    %p277 = scmp.ne.s32.totalorder %s266, %s267
    %p278 = scmp.eq.s32.totalorder %s28, 0
    %p279 = por %p277, %p278
    %p280 = scmp.ne.s32.totalorder %s266, %s267
    %p281 = scmp.eq.s32.totalorder %s29, 1
    %p282 = por %p280, %p281
    %p284 = scmp.ne.s32.totalorder %s267, %s283
    %p285 = scmp.eq.s32.totalorder %s29, 0
    %p286 = por %p284, %p285
    %s287 = ssub.s32 %s23, %s30
    %p288 = scmp.eq.s32.totalorder %s287, 0
    %s290 = sadd.s32 %s289, 1
    %s291 = scalar_select %p288, %s289, %s290
    %p294 = pneg %p288
    %p295 = scmp.eq.s32.totalorder %s23, 1
    %p296 = por %p294, %p295
    %p297 = scmp.ne.s32.totalorder %s289, %s292
    %p298 = scmp.eq.s32.totalorder %s23, 0
    %p299 = por %p297, %p298
    %p300 = scmp.ne.s32.totalorder %s289, %s292
    %p301 = scmp.eq.s32.totalorder %s28, 1
    %p302 = por %p300, %p301
    %p303 = scmp.ne.s32.totalorder %s292, %s293
    %p304 = scmp.eq.s32.totalorder %s28, 0
    %p305 = por %p303, %p304
    %p306 = scmp.ne.s32.totalorder %s292, %s293
    %p307 = scmp.eq.s32.totalorder %s29, 1
    %p308 = por %p306, %p307
    %p310 = scmp.ne.s32.totalorder %s293, %s309
    %p311 = scmp.eq.s32.totalorder %s29, 0
    %p312 = por %p310, %p311
    %s313 = ssub.s32 %s23, %s30
    %p314 = scmp.eq.s32.totalorder %s313, 0
    %s316 = sadd.s32 %s315, 1
    %s317 = scalar_select %p314, %s315, %s316
    %p320 = pneg %p314
    %p321 = scmp.eq.s32.totalorder %s23, 1
    %p322 = por %p320, %p321
    %p323 = scmp.ne.s32.totalorder %s315, %s318
    %p324 = scmp.eq.s32.totalorder %s23, 0
    %p325 = por %p323, %p324
    %p326 = scmp.ne.s32.totalorder %s315, %s318
    %p327 = scmp.eq.s32.totalorder %s28, 1
    %p328 = por %p326, %p327
    %p329 = scmp.ne.s32.totalorder %s318, %s319
    %p330 = scmp.eq.s32.totalorder %s28, 0
    %p331 = por %p329, %p330
    %p332 = scmp.ne.s32.totalorder %s318, %s319
    %p333 = scmp.eq.s32.totalorder %s29, 1
    %p334 = por %p332, %p333
    %p336 = scmp.ne.s32.totalorder %s319, %s335
    %p337 = scmp.eq.s32.totalorder %s29, 0
    %p338 = por %p336, %p337
    %s339 = ssub.s32 %s23, %s30
    %p340 = scmp.eq.s32.totalorder %s339, 0
    %s342 = sadd.s32 %s341, 1
    %s343 = scalar_select %p340, %s341, %s342
    %p346 = pneg %p340
    %p347 = scmp.eq.s32.totalorder %s23, 1
    %p348 = por %p346, %p347
    %p349 = scmp.ne.s32.totalorder %s341, %s344
    %p350 = scmp.eq.s32.totalorder %s23, 0
    %p351 = por %p349, %p350
    %p352 = scmp.ne.s32.totalorder %s341, %s344
    %p353 = scmp.eq.s32.totalorder %s28, 1
    %p354 = por %p352, %p353
    %p355 = scmp.ne.s32.totalorder %s344, %s345
    %p356 = scmp.eq.s32.totalorder %s28, 0
    %p357 = por %p355, %p356
    %p358 = scmp.ne.s32.totalorder %s344, %s345
    %p359 = scmp.eq.s32.totalorder %s29, 1
    %p360 = por %p358, %p359
    %p362 = scmp.ne.s32.totalorder %s345, %s361
    %p363 = scmp.eq.s32.totalorder %s29, 0
    %p364 = por %p362, %p363
    %s365 = ssub.s32 %s23, %s30
    %p366 = scmp.eq.s32.totalorder %s365, 0
    %s368 = sadd.s32 %s367, 1
    %s369 = scalar_select %p366, %s367, %s368
    %p372 = pneg %p366
    %p373 = scmp.eq.s32.totalorder %s23, 1
    %p374 = por %p372, %p373
    %p375 = scmp.ne.s32.totalorder %s367, %s370
    %p376 = scmp.eq.s32.totalorder %s23, 0
    %p377 = por %p375, %p376
    %p378 = scmp.ne.s32.totalorder %s367, %s370
    %p379 = scmp.eq.s32.totalorder %s28, 1
    %p380 = por %p378, %p379
    %p381 = scmp.ne.s32.totalorder %s370, %s371
    %p382 = scmp.eq.s32.totalorder %s28, 0
    %p383 = por %p381, %p382
    %p384 = scmp.ne.s32.totalorder %s370, %s371
    %p385 = scmp.eq.s32.totalorder %s29, 1
    %p386 = por %p384, %p385
    %p388 = scmp.ne.s32.totalorder %s371, %s387
    %p389 = scmp.eq.s32.totalorder %s29, 0
    %p390 = por %p388, %p389
    %s391 = ssub.s32 %s23, %s30
    %p392 = scmp.eq.s32.totalorder %s391, 0
    %s394 = sadd.s32 %s393, 1
    %s395 = scalar_select %p392, %s393, %s394
    %p398 = pneg %p392
    %p399 = scmp.eq.s32.totalorder %s23, 1
    %p400 = por %p398, %p399
    %p401 = scmp.ne.s32.totalorder %s393, %s396
    %p402 = scmp.eq.s32.totalorder %s23, 0
    %p403 = por %p401, %p402
    %p404 = scmp.ne.s32.totalorder %s393, %s396
    %p405 = scmp.eq.s32.totalorder %s28, 1
    %p406 = por %p404, %p405
    %p407 = scmp.ne.s32.totalorder %s396, %s397
    %p408 = scmp.eq.s32.totalorder %s28, 0
    %p409 = por %p407, %p408
    %p410 = scmp.ne.s32.totalorder %s396, %s397
    %p411 = scmp.eq.s32.totalorder %s29, 1
    %p412 = por %p410, %p411
    %p414 = scmp.ne.s32.totalorder %s397, %s413
    %p415 = scmp.eq.s32.totalorder %s29, 0
    %p416 = por %p414, %p415
    %p417 = scmp.le.s32.totalorder 1, %s23
    %p418 = scmp.lt.s32.totalorder %s23, 3
    %p419 = pnand %p417, %p418
    %p420 = pneg %p419
    // Predicated region
    $region9: #{varnet_forward.20} parent=5 // pred_check
      _
    $region10: #{varnet_forward.20} parent=5 // pred_check_branch
      %422 = sbr.rel (%p419) target = $region12
    $region11: #{varnet_forward.20} parent=5 // pred_region
      %s423 = ssub.s32 %s23, 1
      // Predicated region
      $region13: #{varnet_forward.20} parent=11 // pred_check
        %p424 = pneg %p44
      $region14: #{varnet_forward.20} parent=11 // pred_check_branch
        %426 = sbr.rel (%p424) target = $region16
      $region15: #{varnet_forward.20} parent=11 // pred_region
        _
      $region16: #{varnet_forward.20} parent=11 // pred_fallthru
        _
      // Predicated region
      $region17: #{varnet_forward.20} parent=11 // pred_check
        %p427 = pneg %p65
      $region18: #{varnet_forward.20} parent=11 // pred_check_branch
        %429 = sbr.rel (%p427) target = $region20
      $region19: #{varnet_forward.20} parent=11 // pred_region
        _
      $region20: #{varnet_forward.20} parent=11 // pred_fallthru
        _
      // Predicated region
      $region21: #{varnet_forward.20} parent=11 // pred_check
        %p430 = pneg %p86
      $region22: #{varnet_forward.20} parent=11 // pred_check_branch
        %432 = sbr.rel (%p430) target = $region24
      $region23: #{varnet_forward.20} parent=11 // pred_region
        _
      $region24: #{varnet_forward.20} parent=11 // pred_fallthru
        _
      // Predicated region
      $region25: #{varnet_forward.20} parent=11 // pred_check
        %p433 = pneg %p107
      $region26: #{varnet_forward.20} parent=11 // pred_check_branch
        %435 = sbr.rel (%p433) target = $region28
      $region27: #{varnet_forward.20} parent=11 // pred_region
        _
      $region28: #{varnet_forward.20} parent=11 // pred_fallthru
        _
      // Predicated region
      $region29: #{varnet_forward.20} parent=11 // pred_check
        %p436 = pneg %p128
      $region30: #{varnet_forward.20} parent=11 // pred_check_branch
        %438 = sbr.rel (%p436) target = $region32
      $region31: #{varnet_forward.20} parent=11 // pred_region
        _
      $region32: #{varnet_forward.20} parent=11 // pred_fallthru
        _
      // Predicated region
      $region33: #{varnet_forward.20} parent=11 // pred_check
        %p439 = pneg %p149
      $region34: #{varnet_forward.20} parent=11 // pred_check_branch
        %441 = sbr.rel (%p439) target = $region36
      $region35: #{varnet_forward.20} parent=11 // pred_region
        _
      $region36: #{varnet_forward.20} parent=11 // pred_fallthru
        _
    $region12: #{varnet_forward.20} parent=5 // pred_fallthru
      _
    %p442 = scmp.lt.s32.totalorder %s23, 2
    // Predicated region
    $region37: #{varnet_forward.20} parent=5 // pred_check
      %p443 = pneg %p442
    $region38: #{varnet_forward.20} parent=5 // pred_check_branch
      %445 = sbr.rel (%p443) target = $region40
    $region39: #{varnet_forward.20} parent=5 // pred_region
      // Predicated region
      $region41: #{varnet_forward.20} parent=39 // pred_check
        %p446 = pneg %p169
      $region42: #{varnet_forward.20} parent=39 // pred_check_branch
        %448 = sbr.rel (%p446) target = $region44
      $region43: #{varnet_forward.20} parent=39 // pred_region
        %p449 = scmp.lt.s32.totalorder %s23, 1
        %s450 = scalar_select %p449, %s23, 1
        %s451 = smul.addr %s450, 2
        %s452 = smul.addr %s451, 8
        %s453 = scalar_lea.vmem %s6, %s452
      $region44: #{varnet_forward.20} parent=39 // pred_fallthru
        _
      // Predicated region
      $region45: #{varnet_forward.20} parent=39 // pred_check
        %p454 = pneg %p195
      $region46: #{varnet_forward.20} parent=39 // pred_check_branch
        %456 = sbr.rel (%p454) target = $region48
      $region47: #{varnet_forward.20} parent=39 // pred_region
        %p457 = scmp.lt.s32.totalorder %s23, 1
        %s458 = scalar_select %p457, %s23, 1
        %s459 = smul.addr %s458, 2
        %s460 = smul.addr %s459, 8
        %s461 = scalar_lea.vmem %s7, %s460
      $region48: #{varnet_forward.20} parent=39 // pred_fallthru
        _
      // Predicated region
      $region49: #{varnet_forward.20} parent=39 // pred_check
        %p462 = pneg %p221
      $region50: #{varnet_forward.20} parent=39 // pred_check_branch
        %464 = sbr.rel (%p462) target = $region52
      $region51: #{varnet_forward.20} parent=39 // pred_region
        %p465 = scmp.lt.s32.totalorder %s23, 1
        %s466 = scalar_select %p465, %s23, 1
        %s467 = smul.addr %s466, 8
        %s468 = smul.addr %s467, 8
        %s469 = scalar_lea.vmem %s8, %s468
      $region52: #{varnet_forward.20} parent=39 // pred_fallthru
        _
      // Predicated region
      $region53: #{varnet_forward.20} parent=39 // pred_check
        %p470 = pneg %p247
      $region54: #{varnet_forward.20} parent=39 // pred_check_branch
        %472 = sbr.rel (%p470) target = $region56
      $region55: #{varnet_forward.20} parent=39 // pred_region
        %p473 = scmp.lt.s32.totalorder %s23, 1
        %s474 = scalar_select %p473, %s23, 1
        %s475 = smul.addr %s474, 8
        %s476 = smul.addr %s475, 8
        %s477 = scalar_lea.vmem %s9, %s476
      $region56: #{varnet_forward.20} parent=39 // pred_fallthru
        _
      // Predicated region
      $region57: #{varnet_forward.20} parent=39 // pred_check
        %p478 = pneg %p273
      $region58: #{varnet_forward.20} parent=39 // pred_check_branch
        %480 = sbr.rel (%p478) target = $region60
      $region59: #{varnet_forward.20} parent=39 // pred_region
        %p481 = scmp.lt.s32.totalorder %s23, 1
        %s482 = scalar_select %p481, %s23, 1
        %s483 = smul.addr %s482, 8
        %s484 = smul.addr %s483, 8
        %s485 = scalar_lea.vmem %s10, %s484
      $region60: #{varnet_forward.20} parent=39 // pred_fallthru
        _
      // Predicated region
      $region61: #{varnet_forward.20} parent=39 // pred_check
        %p486 = pneg %p299
      $region62: #{varnet_forward.20} parent=39 // pred_check_branch
        %488 = sbr.rel (%p486) target = $region64
      $region63: #{varnet_forward.20} parent=39 // pred_region
        %p489 = scmp.lt.s32.totalorder %s23, 1
        %s490 = scalar_select %p489, %s23, 1
        %s491 = smul.addr %s490, 8
        %s492 = smul.addr %s491, 8
        %s493 = scalar_lea.vmem %s11, %s492
      $region64: #{varnet_forward.20} parent=39 // pred_fallthru
        _
      // Predicated region
      $region65: #{varnet_forward.20} parent=39 // pred_check
        %p494 = pneg %p325
      $region66: #{varnet_forward.20} parent=39 // pred_check_branch
        %496 = sbr.rel (%p494) target = $region68
      $region67: #{varnet_forward.20} parent=39 // pred_region
        %p497 = scmp.lt.s32.totalorder %s23, 1
        %s498 = scalar_select %p497, %s23, 1
        %s499 = smul.addr %s498, 8
        %s500 = smul.addr %s499, 8
        %s501 = scalar_lea.vmem %s12, %s500
      $region68: #{varnet_forward.20} parent=39 // pred_fallthru
        _
      // Predicated region
      $region69: #{varnet_forward.20} parent=39 // pred_check
        %p502 = pneg %p351
      $region70: #{varnet_forward.20} parent=39 // pred_check_branch
        %504 = sbr.rel (%p502) target = $region72
      $region71: #{varnet_forward.20} parent=39 // pred_region
        %p505 = scmp.lt.s32.totalorder %s23, 1
        %s506 = scalar_select %p505, %s23, 1
        %s507 = smul.addr %s506, 8
        %s508 = smul.addr %s507, 8
        %s509 = scalar_lea.vmem %s13, %s508
      $region72: #{varnet_forward.20} parent=39 // pred_fallthru
        _
    $region40: #{varnet_forward.20} parent=5 // pred_fallthru
      _
    %p510 = scmp.le.s32.totalorder 1, %s23
    %p511 = scmp.lt.s32.totalorder %s23, 3
    %p512 = pnand %p510, %p511
    %p513 = pneg %p512
    // Predicated region
    $region73: #{varnet_forward.20} parent=5 // pred_check
      _
    $region74: #{varnet_forward.20} parent=5 // pred_check_branch
      %515 = sbr.rel (%p512) target = $region76
    $region75: #{varnet_forward.20} parent=5 // pred_region
      %s516 = ssub.s32 %s23, 1
      %p517 = pneg %p44
      %p518 = pneg %p41
      %p519 = pneg %p65
      %p520 = pneg %p62
      %p521 = pneg %p86
      %p522 = pneg %p83
      %p523 = pneg %p107
      %p524 = pneg %p104
      %p525 = pneg %p128
      %p526 = pneg %p125
      %p527 = pneg %p149
      %p528 = pneg %p146
      %p529 = scmp.lt.s32.totalorder %s28, 1
      %s530 = scalar_select %p529, %s28, 1
      %s531 = smul.addr %s530, 2
      %s532 = smul.addr %s531, 8
      %s533 = scalar_lea.vmem %s6, %s532
      %p534 = pneg %p175
      %p535 = pneg %p172
      %p536 = scmp.lt.s32.totalorder %s28, 1
      %s537 = scalar_select %p536, %s28, 1
      %s538 = smul.addr %s537, 2
      %s539 = smul.addr %s538, 8
      %s540 = scalar_lea.vmem %s7, %s539
      %p541 = pneg %p201
      %p542 = pneg %p198
      %p543 = scmp.lt.s32.totalorder %s28, 1
      %s544 = scalar_select %p543, %s28, 1
      %s545 = smul.addr %s544, 8
      %s546 = smul.addr %s545, 8
      %s547 = scalar_lea.vmem %s8, %s546
      %p548 = pneg %p227
      %p549 = pneg %p224
      %p550 = scmp.lt.s32.totalorder %s28, 1
      %s551 = scalar_select %p550, %s28, 1
      %s552 = smul.addr %s551, 8
      %s553 = smul.addr %s552, 8
      %s554 = scalar_lea.vmem %s9, %s553
      %p555 = pneg %p253
      %p556 = pneg %p250
      %p557 = scmp.lt.s32.totalorder %s28, 1
      %s558 = scalar_select %p557, %s28, 1
      %s559 = smul.addr %s558, 8
      %s560 = smul.addr %s559, 8
      %s561 = scalar_lea.vmem %s10, %s560
      %p562 = pneg %p279
      %p563 = pneg %p276
      %p564 = scmp.lt.s32.totalorder %s28, 1
      %s565 = scalar_select %p564, %s28, 1
      %s566 = smul.addr %s565, 8
      %s567 = smul.addr %s566, 8
      %s568 = scalar_lea.vmem %s11, %s567
      %p569 = pneg %p305
      %p570 = pneg %p302
      %p571 = scmp.lt.s32.totalorder %s28, 1
      %s572 = scalar_select %p571, %s28, 1
      %s573 = smul.addr %s572, 8
      %s574 = smul.addr %s573, 8
      %s575 = scalar_lea.vmem %s12, %s574
      %p576 = pneg %p331
      %p577 = pneg %p328
      %p578 = scmp.lt.s32.totalorder %s28, 1
      %s579 = scalar_select %p578, %s28, 1
      %s580 = smul.addr %s579, 8
      %s581 = smul.addr %s580, 8
      %s582 = scalar_lea.vmem %s13, %s581
      %p583 = pneg %p357
      %p584 = pneg %p354
      %p585 = pneg %p383
      %p586 = pneg %p380
      %p587 = scmp.lt.s32.totalorder %s28, 1
      %s588 = scalar_select %p587, %s28, 1
      %s589 = smul.addr %s588, 8
      %s590 = smul.addr %s589, 8
      %s591 = scalar_lea.vmem %s14, %s590
      %p592 = pneg %p409
      %p593 = pneg %p406
      %p594 = scmp.lt.s32.totalorder %s28, 1
      %s595 = scalar_select %p594, %s28, 1
      %s596 = smul.addr %s595, 8
      %s597 = smul.addr %s596, 8
      %s598 = scalar_lea.vmem %s15, %s597
      %p599 = scmp.lt.s32.totalorder %s28, 1
      %s600 = scalar_select %p599, %s28, 1
      %s601 = smul.addr %s600, 2
      %s602 = smul.addr %s601, 8
      %s603 = scalar_lea.vmem %s6, %s602
      %p604 = scmp.lt.s32.totalorder %s28, 1
      %s605 = scalar_select %p604, %s28, 1
      %s606 = smul.addr %s605, 2
      %s607 = smul.addr %s606, 8
      %s608 = scalar_lea.vmem %s7, %s607
      %p609 = scmp.lt.s32.totalorder %s28, 1
      %s610 = scalar_select %p609, %s28, 1
      %s611 = smul.addr %s610, 8
      %s612 = smul.addr %s611, 8
      %s613 = scalar_lea.vmem %s8, %s612
      %p614 = scmp.lt.s32.totalorder %s28, 1
      %s615 = scalar_select %p614, %s28, 1
      %s616 = smul.addr %s615, 8
      %s617 = smul.addr %s616, 8
      %s618 = scalar_lea.vmem %s9, %s617
      %p619 = scmp.lt.s32.totalorder %s28, 1
      %s620 = scalar_select %p619, %s28, 1
      %s621 = smul.addr %s620, 8
      %s622 = smul.addr %s621, 8
      %s623 = scalar_lea.vmem %s10, %s622
      %p624 = scmp.lt.s32.totalorder %s28, 1
      %s625 = scalar_select %p624, %s28, 1
      %s626 = smul.addr %s625, 8
      %s627 = smul.addr %s626, 8
      %s628 = scalar_lea.vmem %s11, %s627
      %p629 = scmp.lt.s32.totalorder %s28, 1
      %s630 = scalar_select %p629, %s28, 1
      %s631 = smul.addr %s630, 8
      %s632 = smul.addr %s631, 8
      %s633 = scalar_lea.vmem %s12, %s632
      %p634 = scmp.lt.s32.totalorder %s28, 1
      %s635 = scalar_select %p634, %s28, 1
      %s636 = smul.addr %s635, 8
      %s637 = smul.addr %s636, 8
      %s638 = scalar_lea.vmem %s13, %s637
      %p639 = scmp.lt.s32.totalorder %s28, 1
      %s640 = scalar_select %p639, %s28, 1
      %s641 = smul.addr %s640, 8
      %s642 = smul.addr %s641, 8
      %s643 = scalar_lea.vmem %s14, %s642
      %p644 = scmp.lt.s32.totalorder %s28, 1
      %s645 = scalar_select %p644, %s28, 1
      %s646 = smul.addr %s645, 8
      %s647 = smul.addr %s646, 8
      %s648 = scalar_lea.vmem %s15, %s647
      %v649 = vld [vmem:[%s1] sm:$0xff]
      %v650 = vld [vmem:[%s1 + $0x8] sm:$0xff]
      %v651 = vld [vmem:[%s2] sm:$0xff]
      %v652 = vld [vmem:[%s2 + $0x8] sm:$0xff]
      %v653 = vld [vmem:[%s603] sm:$0xff]
      %v654 = vld [vmem:[%s603 + $0x8] sm:$0xff]
      %v655 = vld [vmem:[%s608] sm:$0xff]
      %v656 = vld [vmem:[%s608 + $0x8] sm:$0xff]
      %v657 = vld [vmem:[%s613] sm:$0xff]
      %v658 = vld [vmem:[%s613 + $0x8] sm:$0xff]
      %v659 = vld [vmem:[%s613 + $0x10] sm:$0xff]
      %v660 = vld [vmem:[%s613 + $0x18] sm:$0xff]
      %v661 = vld [vmem:[%s613 + $0x20] sm:$0xff]
      %v662 = vld [vmem:[%s613 + $0x28] sm:$0xff]
      %v663 = vld [vmem:[%s613 + $0x30] sm:$0xff]
      %v664 = vld [vmem:[%s613 + $0x38] sm:$0xff]
      %v665 = vld [vmem:[%s618] sm:$0xff]
      %v666 = vld [vmem:[%s618 + $0x8] sm:$0xff]
      %v667 = vld [vmem:[%s618 + $0x10] sm:$0xff]
      %v668 = vld [vmem:[%s618 + $0x18] sm:$0xff]
      %v669 = vld [vmem:[%s618 + $0x20] sm:$0xff]
      %v670 = vld [vmem:[%s618 + $0x28] sm:$0xff]
      %v671 = vld [vmem:[%s618 + $0x30] sm:$0xff]
      %v672 = vld [vmem:[%s618 + $0x38] sm:$0xff]
      %v673 = vmul.f32 %v653, %v657
      %v674 = vmul.f32 %v654, %v658
      %v675 = vmul.f32 %v655, %v665
      %v676 = vmul.f32 %v656, %v666
      %v677 = vsub.f32 %v673, %v675
      %v678 = vsub.f32 %v674, %v676
      %v679 = vmul.f32 %v653, %v665
      %v680 = vmul.f32 %v654, %v666
      %v681 = vmul.f32 %v655, %v657
      %v682 = vmul.f32 %v656, %v658
      %v683 = vadd.f32 %v679, %v681
      %v684 = vadd.f32 %v680, %v682
      %vm685 = vcmask 130048
      %v687 = vsel %vm685, %v649, 0
      %v690 = vsel %vm685, %v650, 0
      %692 = vmatpush.msra.mxu0 0.0
      %693 = vmatpush.msra.mxu0 0.0
      %694 = vmatpush.msra.mxu0 0.0
      %695 = vmatpush.msra.mxu0 0.0
      %696 = vmatpush.msra.mxu0 0.0
      %697 = vmatpush.msra.mxu0 0.0
      %698 = vmatpush.msra.mxu0 0.0
      %699 = vmatpush.msra.mxu0 0.0
      %700 = vmatpush.msra.mxu0 0.0
      %701 = vmatpush.msra.mxu0 0.0
      %702 = vmatpush.msra.mxu0 0.0
      %703 = vmatpush.msra.mxu0 0.0
      %704 = vmatpush.msra.mxu0 0.0
      %705 = vmatpush.msra.mxu0 0.0
      %706 = vmatpush.msra.mxu0 %v678
      %707 = vmatpush.msra.mxu0 %v677
      %708 = vmatmul.f32.gmra.mxu0 %v687
      %v709 = vpop.f32.mrf.mxu0
      %v710 = vadd.f32 0.0, %v709
      %711 = vmatmul.f32.gmra.mxu0 %v690
      %v712 = vpop.f32.mrf.mxu0
      %v713 = vadd.f32 0.0, %v712
      %714 = vdwg.mxu0
      %v716 = vsel %vm685, %v651, 0
      %v719 = vsel %vm685, %v652, 0
      %721 = vmatpush.msra.mxu0 0.0
      %722 = vmatpush.msra.mxu0 0.0
      %723 = vmatpush.msra.mxu0 0.0
      %724 = vmatpush.msra.mxu0 0.0
      %725 = vmatpush.msra.mxu0 0.0
      %726 = vmatpush.msra.mxu0 0.0
      %727 = vmatpush.msra.mxu0 0.0
      %728 = vmatpush.msra.mxu0 0.0
      %729 = vmatpush.msra.mxu0 0.0
      %730 = vmatpush.msra.mxu0 0.0
      %731 = vmatpush.msra.mxu0 0.0
      %732 = vmatpush.msra.mxu0 0.0
      %733 = vmatpush.msra.mxu0 0.0
      %734 = vmatpush.msra.mxu0 0.0
      %735 = vmatpush.msra.mxu0 %v684
      %736 = vmatpush.msra.mxu0 %v683
      %737 = vmatmul.f32.gmra.mxu0 %v716
      %v738 = vpop.f32.mrf.mxu0
      %v739 = vadd.f32 0.0, %v738
      %740 = vmatmul.f32.gmra.mxu0 %v719
      %v741 = vpop.f32.mrf.mxu0
      %v742 = vadd.f32 0.0, %v741
      %743 = vdwg.mxu0
      %v744 = vadd.f32 %v649, %v651
      %v745 = vadd.f32 %v650, %v652
      %v746 = vadd.f32 %v677, %v683
      %v747 = vadd.f32 %v678, %v684
      %v749 = vsel %vm685, %v744, 0
      %v752 = vsel %vm685, %v745, 0
      %754 = vmatpush.msra.mxu0 0.0
      %755 = vmatpush.msra.mxu0 0.0
      %756 = vmatpush.msra.mxu0 0.0
      %757 = vmatpush.msra.mxu0 0.0
      %758 = vmatpush.msra.mxu0 0.0
      %759 = vmatpush.msra.mxu0 0.0
      %760 = vmatpush.msra.mxu0 0.0
      %761 = vmatpush.msra.mxu0 0.0
      %762 = vmatpush.msra.mxu0 0.0
      %763 = vmatpush.msra.mxu0 0.0
      %764 = vmatpush.msra.mxu0 0.0
      %765 = vmatpush.msra.mxu0 0.0
      %766 = vmatpush.msra.mxu0 0.0
      %767 = vmatpush.msra.mxu0 0.0
      %768 = vmatpush.msra.mxu0 %v747
      %769 = vmatpush.msra.mxu0 %v746
      %770 = vmatmul.f32.gmra.mxu0 %v749
      %v771 = vpop.f32.mrf.mxu0
      %v772 = vadd.f32 0.0, %v771
      %773 = vmatmul.f32.gmra.mxu0 %v752
      %v774 = vpop.f32.mrf.mxu0
      %v775 = vadd.f32 0.0, %v774
      %776 = vdwg.mxu0
      %v777 = vsub.f32 %v710, %v739
      %v778 = vsub.f32 %v713, %v742
      %v779 = vsub.f32 %v772, %v710
      %v780 = vsub.f32 %v775, %v713
      %v781 = vsub.f32 %v779, %v739
      %v782 = vsub.f32 %v780, %v742
      %783 = vst.msk [vmem:[#allocation2] sm:$0xff] %vm685, %v777
      %784 = vst.msk [vmem:[#allocation2 + $0x8] sm:$0xff] %vm685, %v778
      %785 = vst.msk [vmem:[#allocation3] sm:$0xff] %vm685, %v781
      %786 = vst.msk [vmem:[#allocation3 + $0x8] sm:$0xff] %vm685, %v782
      %v787 = vmul.f32 %v653, %v659
      %v788 = vmul.f32 %v654, %v660
      %v789 = vmul.f32 %v655, %v667
      %v790 = vmul.f32 %v656, %v668
      %v791 = vsub.f32 %v787, %v789
      %v792 = vsub.f32 %v788, %v790
      %v793 = vmul.f32 %v653, %v667
      %v794 = vmul.f32 %v654, %v668
      %v795 = vmul.f32 %v655, %v659
      %v796 = vmul.f32 %v656, %v660
      %v797 = vadd.f32 %v793, %v795
      %v798 = vadd.f32 %v794, %v796
      %799 = vmatpush.msra.mxu0 0.0
      %800 = vmatpush.msra.mxu0 0.0
      %801 = vmatpush.msra.mxu0 0.0
      %802 = vmatpush.msra.mxu0 0.0
      %803 = vmatpush.msra.mxu0 0.0
      %804 = vmatpush.msra.mxu0 0.0
      %805 = vmatpush.msra.mxu0 0.0
      %806 = vmatpush.msra.mxu0 0.0
      %807 = vmatpush.msra.mxu0 0.0
      %808 = vmatpush.msra.mxu0 0.0
      %809 = vmatpush.msra.mxu0 0.0
      %810 = vmatpush.msra.mxu0 0.0
      %811 = vmatpush.msra.mxu0 0.0
      %812 = vmatpush.msra.mxu0 0.0
      %813 = vmatpush.msra.mxu0 %v792
      %814 = vmatpush.msra.mxu0 %v791
      %815 = vmatmul.f32.gmra.mxu0 %v687
      %v816 = vpop.f32.mrf.mxu0
      %v817 = vadd.f32 0.0, %v816
      %818 = vmatmul.f32.gmra.mxu0 %v690
      %v819 = vpop.f32.mrf.mxu0
      %v820 = vadd.f32 0.0, %v819
      %821 = vdwg.mxu0
      %822 = vmatpush.msra.mxu0 0.0
      %823 = vmatpush.msra.mxu0 0.0
      %824 = vmatpush.msra.mxu0 0.0
      %825 = vmatpush.msra.mxu0 0.0
      %826 = vmatpush.msra.mxu0 0.0
      %827 = vmatpush.msra.mxu0 0.0
      %828 = vmatpush.msra.mxu0 0.0
      %829 = vmatpush.msra.mxu0 0.0
      %830 = vmatpush.msra.mxu0 0.0
      %831 = vmatpush.msra.mxu0 0.0
      %832 = vmatpush.msra.mxu0 0.0
      %833 = vmatpush.msra.mxu0 0.0
      %834 = vmatpush.msra.mxu0 0.0
      %835 = vmatpush.msra.mxu0 0.0
      %836 = vmatpush.msra.mxu0 %v798
      %837 = vmatpush.msra.mxu0 %v797
      %838 = vmatmul.f32.gmra.mxu0 %v716
      %v839 = vpop.f32.mrf.mxu0
      %v840 = vadd.f32 0.0, %v839
      %841 = vmatmul.f32.gmra.mxu0 %v719
      %v842 = vpop.f32.mrf.mxu0
      %v843 = vadd.f32 0.0, %v842
      %844 = vdwg.mxu0
      %v845 = vadd.f32 %v791, %v797
      %v846 = vadd.f32 %v792, %v798
      %847 = vmatpush.msra.mxu0 0.0
      %848 = vmatpush.msra.mxu0 0.0
      %849 = vmatpush.msra.mxu0 0.0
      %850 = vmatpush.msra.mxu0 0.0
      %851 = vmatpush.msra.mxu0 0.0
      %852 = vmatpush.msra.mxu0 0.0
      %853 = vmatpush.msra.mxu0 0.0
      %854 = vmatpush.msra.mxu0 0.0
      %855 = vmatpush.msra.mxu0 0.0
      %856 = vmatpush.msra.mxu0 0.0
      %857 = vmatpush.msra.mxu0 0.0
      %858 = vmatpush.msra.mxu0 0.0
      %859 = vmatpush.msra.mxu0 0.0
      %860 = vmatpush.msra.mxu0 0.0
      %861 = vmatpush.msra.mxu0 %v846
      %862 = vmatpush.msra.mxu0 %v845
      %863 = vmatmul.f32.gmra.mxu0 %v749
      %v864 = vpop.f32.mrf.mxu0
      %v865 = vadd.f32 0.0, %v864
      %866 = vmatmul.f32.gmra.mxu0 %v752
      %v867 = vpop.f32.mrf.mxu0
      %v868 = vadd.f32 0.0, %v867
      %869 = vdwg.mxu0
      %v870 = vsub.f32 %v817, %v840
      %v871 = vsub.f32 %v820, %v843
      %v872 = vsub.f32 %v865, %v817
      %v873 = vsub.f32 %v868, %v820
      %v874 = vsub.f32 %v872, %v840
      %v875 = vsub.f32 %v873, %v843
      %876 = vst.msk [vmem:[#allocation2 + $0x10] sm:$0xff] %vm685, %v870
      %877 = vst.msk [vmem:[#allocation2 + $0x18] sm:$0xff] %vm685, %v871
      %878 = vst.msk [vmem:[#allocation3 + $0x10] sm:$0xff] %vm685, %v874
      %879 = vst.msk [vmem:[#allocation3 + $0x18] sm:$0xff] %vm685, %v875
      %v880 = vmul.f32 %v653, %v661
      %v881 = vmul.f32 %v654, %v662
      %v882 = vmul.f32 %v655, %v669
      %v883 = vmul.f32 %v656, %v670
      %v884 = vsub.f32 %v880, %v882
      %v885 = vsub.f32 %v881, %v883
      %v886 = vmul.f32 %v653, %v669
      %v887 = vmul.f32 %v654, %v670
      %v888 = vmul.f32 %v655, %v661
      %v889 = vmul.f32 %v656, %v662
      %v890 = vadd.f32 %v886, %v888
      %v891 = vadd.f32 %v887, %v889
      %892 = vmatpush.msra.mxu0 0.0
      %893 = vmatpush.msra.mxu0 0.0
      %894 = vmatpush.msra.mxu0 0.0
      %895 = vmatpush.msra.mxu0 0.0
      %896 = vmatpush.msra.mxu0 0.0
      %897 = vmatpush.msra.mxu0 0.0
      %898 = vmatpush.msra.mxu0 0.0
      %899 = vmatpush.msra.mxu0 0.0
      %900 = vmatpush.msra.mxu0 0.0
      %901 = vmatpush.msra.mxu0 0.0
      %902 = vmatpush.msra.mxu0 0.0
      %903 = vmatpush.msra.mxu0 0.0
      %904 = vmatpush.msra.mxu0 0.0
      %905 = vmatpush.msra.mxu0 0.0
      %906 = vmatpush.msra.mxu0 %v885
      %907 = vmatpush.msra.mxu0 %v884
      %908 = vmatmul.f32.gmra.mxu0 %v687
      %v909 = vpop.f32.mrf.mxu0
      %v910 = vadd.f32 0.0, %v909
      %911 = vmatmul.f32.gmra.mxu0 %v690
      %v912 = vpop.f32.mrf.mxu0
      %v913 = vadd.f32 0.0, %v912
      %914 = vdwg.mxu0
      %915 = vmatpush.msra.mxu0 0.0
      %916 = vmatpush.msra.mxu0 0.0
      %917 = vmatpush.msra.mxu0 0.0
      %918 = vmatpush.msra.mxu0 0.0
      %919 = vmatpush.msra.mxu0 0.0
      %920 = vmatpush.msra.mxu0 0.0
      %921 = vmatpush.msra.mxu0 0.0
      %922 = vmatpush.msra.mxu0 0.0
      %923 = vmatpush.msra.mxu0 0.0
      %924 = vmatpush.msra.mxu0 0.0
      %925 = vmatpush.msra.mxu0 0.0
      %926 = vmatpush.msra.mxu0 0.0
      %927 = vmatpush.msra.mxu0 0.0
      %928 = vmatpush.msra.mxu0 0.0
      %929 = vmatpush.msra.mxu0 %v891
      %930 = vmatpush.msra.mxu0 %v890
      %931 = vmatmul.f32.gmra.mxu0 %v716
      %v932 = vpop.f32.mrf.mxu0
      %v933 = vadd.f32 0.0, %v932
      %934 = vmatmul.f32.gmra.mxu0 %v719
      %v935 = vpop.f32.mrf.mxu0
      %v936 = vadd.f32 0.0, %v935
      %937 = vdwg.mxu0
      %v938 = vadd.f32 %v884, %v890
      %v939 = vadd.f32 %v885, %v891
      %940 = vmatpush.msra.mxu0 0.0
      %941 = vmatpush.msra.mxu0 0.0
      %942 = vmatpush.msra.mxu0 0.0
      %943 = vmatpush.msra.mxu0 0.0
      %944 = vmatpush.msra.mxu0 0.0
      %945 = vmatpush.msra.mxu0 0.0
      %946 = vmatpush.msra.mxu0 0.0
      %947 = vmatpush.msra.mxu0 0.0
      %948 = vmatpush.msra.mxu0 0.0
      %949 = vmatpush.msra.mxu0 0.0
      %950 = vmatpush.msra.mxu0 0.0
      %951 = vmatpush.msra.mxu0 0.0
      %952 = vmatpush.msra.mxu0 0.0
      %953 = vmatpush.msra.mxu0 0.0
      %954 = vmatpush.msra.mxu0 %v939
      %955 = vmatpush.msra.mxu0 %v938
      %956 = vmatmul.f32.gmra.mxu0 %v749
      %v957 = vpop.f32.mrf.mxu0
      %v958 = vadd.f32 0.0, %v957
      %959 = vmatmul.f32.gmra.mxu0 %v752
      %v960 = vpop.f32.mrf.mxu0
      %v961 = vadd.f32 0.0, %v960
      %962 = vdwg.mxu0
      %v963 = vsub.f32 %v910, %v933
      %v964 = vsub.f32 %v913, %v936
      %v965 = vsub.f32 %v958, %v910
      %v966 = vsub.f32 %v961, %v913
      %v967 = vsub.f32 %v965, %v933
      %v968 = vsub.f32 %v966, %v936
      %969 = vst.msk [vmem:[#allocation2 + $0x20] sm:$0xff] %vm685, %v963
      %970 = vst.msk [vmem:[#allocation2 + $0x28] sm:$0xff] %vm685, %v964
      %971 = vst.msk [vmem:[#allocation3 + $0x20] sm:$0xff] %vm685, %v967
      %972 = vst.msk [vmem:[#allocation3 + $0x28] sm:$0xff] %vm685, %v968
      %v973 = vmul.f32 %v653, %v663
      %v974 = vmul.f32 %v654, %v664
      %v975 = vmul.f32 %v655, %v671
      %v976 = vmul.f32 %v656, %v672
      %v977 = vsub.f32 %v973, %v975
      %v978 = vsub.f32 %v974, %v976
      %v979 = vmul.f32 %v653, %v671
      %v980 = vmul.f32 %v654, %v672
      %v981 = vmul.f32 %v655, %v663
      %v982 = vmul.f32 %v656, %v664
      %v983 = vadd.f32 %v979, %v981
      %v984 = vadd.f32 %v980, %v982
      %985 = vmatpush.msra.mxu0 0.0
      %986 = vmatpush.msra.mxu0 0.0
      %987 = vmatpush.msra.mxu0 0.0
      %988 = vmatpush.msra.mxu0 0.0
      %989 = vmatpush.msra.mxu0 0.0
      %990 = vmatpush.msra.mxu0 0.0
      %991 = vmatpush.msra.mxu0 0.0
      %992 = vmatpush.msra.mxu0 0.0
      %993 = vmatpush.msra.mxu0 0.0
      %994 = vmatpush.msra.mxu0 0.0
      %995 = vmatpush.msra.mxu0 0.0
      %996 = vmatpush.msra.mxu0 0.0
      %997 = vmatpush.msra.mxu0 0.0
      %998 = vmatpush.msra.mxu0 0.0
      %999 = vmatpush.msra.mxu0 %v978
      %1000 = vmatpush.msra.mxu0 %v977
      %1001 = vmatmul.f32.gmra.mxu0 %v687
      %v1002 = vpop.f32.mrf.mxu0
      %v1003 = vadd.f32 0.0, %v1002
      %1004 = vmatmul.f32.gmra.mxu0 %v690
      %v1005 = vpop.f32.mrf.mxu0
      %v1006 = vadd.f32 0.0, %v1005
      %1007 = vdwg.mxu0
      %1008 = vmatpush.msra.mxu0 0.0
      %1009 = vmatpush.msra.mxu0 0.0
      %1010 = vmatpush.msra.mxu0 0.0
      %1011 = vmatpush.msra.mxu0 0.0
      %1012 = vmatpush.msra.mxu0 0.0
      %1013 = vmatpush.msra.mxu0 0.0
      %1014 = vmatpush.msra.mxu0 0.0
      %1015 = vmatpush.msra.mxu0 0.0
      %1016 = vmatpush.msra.mxu0 0.0
      %1017 = vmatpush.msra.mxu0 0.0
      %1018 = vmatpush.msra.mxu0 0.0
      %1019 = vmatpush.msra.mxu0 0.0
      %1020 = vmatpush.msra.mxu0 0.0
      %1021 = vmatpush.msra.mxu0 0.0
      %1022 = vmatpush.msra.mxu0 %v984
      %1023 = vmatpush.msra.mxu0 %v983
      %1024 = vmatmul.f32.gmra.mxu0 %v716
      %v1025 = vpop.f32.mrf.mxu0
      %v1026 = vadd.f32 0.0, %v1025
      %1027 = vmatmul.f32.gmra.mxu0 %v719
      %v1028 = vpop.f32.mrf.mxu0
      %v1029 = vadd.f32 0.0, %v1028
      %1030 = vdwg.mxu0
      %v1031 = vadd.f32 %v977, %v983
      %v1032 = vadd.f32 %v978, %v984
      %1033 = vmatpush.msra.mxu0 0.0
      %1034 = vmatpush.msra.mxu0 0.0
      %1035 = vmatpush.msra.mxu0 0.0
      %1036 = vmatpush.msra.mxu0 0.0
      %1037 = vmatpush.msra.mxu0 0.0
      %1038 = vmatpush.msra.mxu0 0.0
      %1039 = vmatpush.msra.mxu0 0.0
      %1040 = vmatpush.msra.mxu0 0.0
      %1041 = vmatpush.msra.mxu0 0.0
      %1042 = vmatpush.msra.mxu0 0.0
      %1043 = vmatpush.msra.mxu0 0.0
      %1044 = vmatpush.msra.mxu0 0.0
      %1045 = vmatpush.msra.mxu0 0.0
      %1046 = vmatpush.msra.mxu0 0.0
      %1047 = vmatpush.msra.mxu0 %v1032
      %1048 = vmatpush.msra.mxu0 %v1031
      %1049 = vmatmul.f32.gmra.mxu0 %v749
      %v1050 = vpop.f32.mrf.mxu0
      %v1051 = vadd.f32 0.0, %v1050
      %1052 = vmatmul.f32.gmra.mxu0 %v752
      %v1053 = vpop.f32.mrf.mxu0
      %v1054 = vadd.f32 0.0, %v1053
      %1055 = vdwg.mxu0
      %v1056 = vsub.f32 %v1003, %v1026
      %v1057 = vsub.f32 %v1006, %v1029
      %v1058 = vsub.f32 %v1051, %v1003
      %v1059 = vsub.f32 %v1054, %v1006
      %v1060 = vsub.f32 %v1058, %v1026
      %v1061 = vsub.f32 %v1059, %v1029
      %1062 = vst.msk [vmem:[#allocation2 + $0x30] sm:$0xff] %vm685, %v1056
      %1063 = vst.msk [vmem:[#allocation2 + $0x38] sm:$0xff] %vm685, %v1057
      %1064 = vst.msk [vmem:[#allocation3 + $0x30] sm:$0xff] %vm685, %v1060
      %1065 = vst.msk [vmem:[#allocation3 + $0x38] sm:$0xff] %vm685, %v1061
      %v1066 = vld [vmem:[#allocation2] sm:$0xff]
      %v1067 = vld [vmem:[#allocation2 + $0x8] sm:$0xff]
      %v1068 = vld [vmem:[#allocation2 + $0x10] sm:$0xff]
      %v1069 = vld [vmem:[#allocation2 + $0x18] sm:$0xff]
      %v1070 = vld [vmem:[#allocation2 + $0x20] sm:$0xff]
      %v1071 = vld [vmem:[#allocation2 + $0x28] sm:$0xff]
      %v1072 = vld [vmem:[#allocation2 + $0x30] sm:$0xff]
      %v1073 = vld [vmem:[#allocation2 + $0x38] sm:$0xff]
      %v1074 = vld [vmem:[#allocation3] sm:$0xff]
      %v1075 = vld [vmem:[#allocation3 + $0x8] sm:$0xff]
      %v1076 = vld [vmem:[#allocation3 + $0x10] sm:$0xff]
      %v1077 = vld [vmem:[#allocation3 + $0x18] sm:$0xff]
      %v1078 = vld [vmem:[#allocation3 + $0x20] sm:$0xff]
      %v1079 = vld [vmem:[#allocation3 + $0x28] sm:$0xff]
      %v1080 = vld [vmem:[#allocation3 + $0x30] sm:$0xff]
      %v1081 = vld [vmem:[#allocation3 + $0x38] sm:$0xff]
      %v1082 = vld [vmem:[%s3] sm:$0xff]
      %v1083 = vld [vmem:[%s3 + $0x8] sm:$0xff]
      %v1084 = vld [vmem:[%s4] sm:$0xff]
      %v1085 = vld [vmem:[%s4 + $0x8] sm:$0xff]
      %v1087 = vsel %vm685, %v1066, 0
      %v1090 = vsel %vm685, %v1067, 0
      %v1093 = vsel %vm685, %v1068, 0
      %v1096 = vsel %vm685, %v1069, 0
      %v1099 = vsel %vm685, %v1070, 0
      %v1102 = vsel %vm685, %v1071, 0
      %v1105 = vsel %vm685, %v1072, 0
      %v1108 = vsel %vm685, %v1073, 0
      %1110 = vmatpush.msra.mxu0 0.0
      %1111 = vmatpush.msra.mxu0 0.0
      %1112 = vmatpush.msra.mxu0 0.0
      %1113 = vmatpush.msra.mxu0 0.0
      %1114 = vmatpush.msra.mxu0 0.0
      %1115 = vmatpush.msra.mxu0 0.0
      %1116 = vmatpush.msra.mxu0 0.0
      %1117 = vmatpush.msra.mxu0 0.0
      %1118 = vmatpush.msra.mxu0 0.0
      %1119 = vmatpush.msra.mxu0 0.0
      %1120 = vmatpush.msra.mxu0 0.0
      %1121 = vmatpush.msra.mxu0 0.0
      %1122 = vmatpush.msra.mxu0 0.0
      %1123 = vmatpush.msra.mxu0 0.0
      %1124 = vmatpush.msra.mxu0 %v1083
      %1125 = vmatpush.msra.mxu0 %v1082
      %1126 = vmatmul.f32.gmra.mxu0 %v1087
      %v1127 = vpop.f32.mrf.mxu0
      %v1128 = vadd.f32 0.0, %v1127
      %1129 = vmatmul.f32.gmra.mxu0 %v1090
      %v1130 = vpop.f32.mrf.mxu0
      %v1131 = vadd.f32 0.0, %v1130
      %1132 = vmatmul.f32.gmra.mxu0 %v1093
      %v1133 = vpop.f32.mrf.mxu0
      %v1134 = vadd.f32 0.0, %v1133
      %1135 = vmatmul.f32.gmra.mxu0 %v1096
      %v1136 = vpop.f32.mrf.mxu0
      %v1137 = vadd.f32 0.0, %v1136
      %1138 = vmatmul.f32.gmra.mxu0 %v1099
      %v1139 = vpop.f32.mrf.mxu0
      %v1140 = vadd.f32 0.0, %v1139
      %1141 = vmatmul.f32.gmra.mxu0 %v1102
      %v1142 = vpop.f32.mrf.mxu0
      %v1143 = vadd.f32 0.0, %v1142
      %1144 = vmatmul.f32.gmra.mxu0 %v1105
      %v1145 = vpop.f32.mrf.mxu0
      %v1146 = vadd.f32 0.0, %v1145
      %1147 = vmatmul.f32.gmra.mxu0 %v1108
      %v1148 = vpop.f32.mrf.mxu0
      %v1149 = vadd.f32 0.0, %v1148
      %1150 = vdwg.mxu0
      %v1152 = vsel %vm685, %v1074, 0
      %v1155 = vsel %vm685, %v1075, 0
      %v1158 = vsel %vm685, %v1076, 0
      %v1161 = vsel %vm685, %v1077, 0
      %v1164 = vsel %vm685, %v1078, 0
      %v1167 = vsel %vm685, %v1079, 0
      %v1170 = vsel %vm685, %v1080, 0
      %v1173 = vsel %vm685, %v1081, 0
      %1175 = vmatpush.msra.mxu0 0.0
      %1176 = vmatpush.msra.mxu0 0.0
      %1177 = vmatpush.msra.mxu0 0.0
      %1178 = vmatpush.msra.mxu0 0.0
      %1179 = vmatpush.msra.mxu0 0.0
      %1180 = vmatpush.msra.mxu0 0.0
      %1181 = vmatpush.msra.mxu0 0.0
      %1182 = vmatpush.msra.mxu0 0.0
      %1183 = vmatpush.msra.mxu0 0.0
      %1184 = vmatpush.msra.mxu0 0.0
      %1185 = vmatpush.msra.mxu0 0.0
      %1186 = vmatpush.msra.mxu0 0.0
      %1187 = vmatpush.msra.mxu0 0.0
      %1188 = vmatpush.msra.mxu0 0.0
      %1189 = vmatpush.msra.mxu0 %v1085
      %1190 = vmatpush.msra.mxu0 %v1084
      %1191 = vmatmul.f32.gmra.mxu0 %v1152
      %v1192 = vpop.f32.mrf.mxu0
      %v1193 = vadd.f32 0.0, %v1192
      %1194 = vmatmul.f32.gmra.mxu0 %v1155
      %v1195 = vpop.f32.mrf.mxu0
      %v1196 = vadd.f32 0.0, %v1195
      %1197 = vmatmul.f32.gmra.mxu0 %v1158
      %v1198 = vpop.f32.mrf.mxu0
      %v1199 = vadd.f32 0.0, %v1198
      %1200 = vmatmul.f32.gmra.mxu0 %v1161
      %v1201 = vpop.f32.mrf.mxu0
      %v1202 = vadd.f32 0.0, %v1201
      %1203 = vmatmul.f32.gmra.mxu0 %v1164
      %v1204 = vpop.f32.mrf.mxu0
      %v1205 = vadd.f32 0.0, %v1204
      %1206 = vmatmul.f32.gmra.mxu0 %v1167
      %v1207 = vpop.f32.mrf.mxu0
      %v1208 = vadd.f32 0.0, %v1207
      %1209 = vmatmul.f32.gmra.mxu0 %v1170
      %v1210 = vpop.f32.mrf.mxu0
      %v1211 = vadd.f32 0.0, %v1210
      %1212 = vmatmul.f32.gmra.mxu0 %v1173
      %v1213 = vpop.f32.mrf.mxu0
      %v1214 = vadd.f32 0.0, %v1213
      %1215 = vdwg.mxu0
      %v1216 = vadd.f32 %v1066, %v1074
      %v1217 = vadd.f32 %v1067, %v1075
      %v1218 = vadd.f32 %v1068, %v1076
      %v1219 = vadd.f32 %v1069, %v1077
      %v1220 = vadd.f32 %v1070, %v1078
      %v1221 = vadd.f32 %v1071, %v1079
      %v1222 = vadd.f32 %v1072, %v1080
      %v1223 = vadd.f32 %v1073, %v1081
      %v1224 = vadd.f32 %v1082, %v1084
      %v1225 = vadd.f32 %v1083, %v1085
      %v1227 = vsel %vm685, %v1216, 0
      %v1230 = vsel %vm685, %v1217, 0
      %v1233 = vsel %vm685, %v1218, 0
      %v1236 = vsel %vm685, %v1219, 0
      %v1239 = vsel %vm685, %v1220, 0
      %v1242 = vsel %vm685, %v1221, 0
      %v1245 = vsel %vm685, %v1222, 0
      %v1248 = vsel %vm685, %v1223, 0
      %1250 = vmatpush.msra.mxu0 0.0
      %1251 = vmatpush.msra.mxu0 0.0
      %1252 = vmatpush.msra.mxu0 0.0
      %1253 = vmatpush.msra.mxu0 0.0
      %1254 = vmatpush.msra.mxu0 0.0
      %1255 = vmatpush.msra.mxu0 0.0
      %1256 = vmatpush.msra.mxu0 0.0
      %1257 = vmatpush.msra.mxu0 0.0
      %1258 = vmatpush.msra.mxu0 0.0
      %1259 = vmatpush.msra.mxu0 0.0
      %1260 = vmatpush.msra.mxu0 0.0
      %1261 = vmatpush.msra.mxu0 0.0
      %1262 = vmatpush.msra.mxu0 0.0
      %1263 = vmatpush.msra.mxu0 0.0
      %1264 = vmatpush.msra.mxu0 %v1225
      %1265 = vmatpush.msra.mxu0 %v1224
      %1266 = vmatmul.f32.gmra.mxu0 %v1227
      %v1267 = vpop.f32.mrf.mxu0
      %v1268 = vadd.f32 0.0, %v1267
      %1269 = vmatmul.f32.gmra.mxu0 %v1230
      %v1270 = vpop.f32.mrf.mxu0
      %v1271 = vadd.f32 0.0, %v1270
      %1272 = vmatmul.f32.gmra.mxu0 %v1233
      %v1273 = vpop.f32.mrf.mxu0
      %v1274 = vadd.f32 0.0, %v1273
      %1275 = vmatmul.f32.gmra.mxu0 %v1236
      %v1276 = vpop.f32.mrf.mxu0
      %v1277 = vadd.f32 0.0, %v1276
      %1278 = vmatmul.f32.gmra.mxu0 %v1239
      %v1279 = vpop.f32.mrf.mxu0
      %v1280 = vadd.f32 0.0, %v1279
      %1281 = vmatmul.f32.gmra.mxu0 %v1242
      %v1282 = vpop.f32.mrf.mxu0
      %v1283 = vadd.f32 0.0, %v1282
      %1284 = vmatmul.f32.gmra.mxu0 %v1245
      %v1285 = vpop.f32.mrf.mxu0
      %v1286 = vadd.f32 0.0, %v1285
      %1287 = vmatmul.f32.gmra.mxu0 %v1248
      %v1288 = vpop.f32.mrf.mxu0
      %v1289 = vadd.f32 0.0, %v1288
      %1290 = vdwg.mxu0
      %v1291 = vsub.f32 %v1128, %v1193
      %v1292 = vsub.f32 %v1131, %v1196
      %v1293 = vsub.f32 %v1134, %v1199
      %v1294 = vsub.f32 %v1137, %v1202
      %v1295 = vsub.f32 %v1140, %v1205
      %v1296 = vsub.f32 %v1143, %v1208
      %v1297 = vsub.f32 %v1146, %v1211
      %v1298 = vsub.f32 %v1149, %v1214
      %v1299 = vsub.f32 %v1268, %v1128
      %v1300 = vsub.f32 %v1271, %v1131
      %v1301 = vsub.f32 %v1274, %v1134
      %v1302 = vsub.f32 %v1277, %v1137
      %v1303 = vsub.f32 %v1280, %v1140
      %v1304 = vsub.f32 %v1283, %v1143
      %v1305 = vsub.f32 %v1286, %v1146
      %v1306 = vsub.f32 %v1289, %v1149
      %v1307 = vsub.f32 %v1299, %v1193
      %v1308 = vsub.f32 %v1300, %v1196
      %v1309 = vsub.f32 %v1301, %v1199
      %v1310 = vsub.f32 %v1302, %v1202
      %v1311 = vsub.f32 %v1303, %v1205
      %v1312 = vsub.f32 %v1304, %v1208
      %v1313 = vsub.f32 %v1305, %v1211
      %v1314 = vsub.f32 %v1306, %v1214
      %s1315 = sld [smem:[#allocation4]]
      %v1316 = vld [vmem:[%s5] sm:$0x1]
      %vm1317 = vcmp.gt.f32.partialorder %v1316, 0.0
      %v1318 = vld [vmem:[%s623] sm:$0xff]
      %v1319 = vld [vmem:[%s623 + $0x8] sm:$0xff]
      %v1320 = vld [vmem:[%s623 + $0x10] sm:$0xff]
      %v1321 = vld [vmem:[%s623 + $0x18] sm:$0xff]
      %v1322 = vld [vmem:[%s623 + $0x20] sm:$0xff]
      %v1323 = vld [vmem:[%s623 + $0x28] sm:$0xff]
      %v1324 = vld [vmem:[%s623 + $0x30] sm:$0xff]
      %v1325 = vld [vmem:[%s623 + $0x38] sm:$0xff]
      %v1326 = vld [vmem:[%s628] sm:$0xff]
      %v1327 = vld [vmem:[%s628 + $0x8] sm:$0xff]
      %v1328 = vld [vmem:[%s628 + $0x10] sm:$0xff]
      %v1329 = vld [vmem:[%s628 + $0x18] sm:$0xff]
      %v1330 = vld [vmem:[%s628 + $0x20] sm:$0xff]
      %v1331 = vld [vmem:[%s628 + $0x28] sm:$0xff]
      %v1332 = vld [vmem:[%s628 + $0x30] sm:$0xff]
      %v1333 = vld [vmem:[%s628 + $0x38] sm:$0xff]
      %v1334 = vld [vmem:[%s633] sm:$0xff]
      %v1335 = vld [vmem:[%s633 + $0x8] sm:$0xff]
      %v1336 = vld [vmem:[%s633 + $0x10] sm:$0xff]
      %v1337 = vld [vmem:[%s633 + $0x18] sm:$0xff]
      %v1338 = vld [vmem:[%s633 + $0x20] sm:$0xff]
      %v1339 = vld [vmem:[%s633 + $0x28] sm:$0xff]
      %v1340 = vld [vmem:[%s633 + $0x30] sm:$0xff]
      %v1341 = vld [vmem:[%s633 + $0x38] sm:$0xff]
      %v1342 = vld [vmem:[%s638] sm:$0xff]
      %v1343 = vld [vmem:[%s638 + $0x8] sm:$0xff]
      %v1344 = vld [vmem:[%s638 + $0x10] sm:$0xff]
      %v1345 = vld [vmem:[%s638 + $0x18] sm:$0xff]
      %v1346 = vld [vmem:[%s638 + $0x20] sm:$0xff]
      %v1347 = vld [vmem:[%s638 + $0x28] sm:$0xff]
      %v1348 = vld [vmem:[%s638 + $0x30] sm:$0xff]
      %v1349 = vld [vmem:[%s638 + $0x38] sm:$0xff]
      %v1350 = vsub.f32 %v1318, %v1334
      %v1351 = vsub.f32 %v1319, %v1335
      %v1352 = vsub.f32 %v1320, %v1336
      %v1353 = vsub.f32 %v1321, %v1337
      %v1354 = vsub.f32 %v1322, %v1338
      %v1355 = vsub.f32 %v1323, %v1339
      %v1356 = vsub.f32 %v1324, %v1340
      %v1357 = vsub.f32 %v1325, %v1341
      %v1358 = vsel %vm1317, 1, 0
      %v1359 = vperm.slane %v1358, 0
      %vm1360 = vcmp.eq.s32.totalorder %v1359, 1
      %v1361 = vsel %vm1360, %v1350, 0.0
      %v1362 = vsel %vm1360, %v1351, 0.0
      %v1363 = vsel %vm1360, %v1352, 0.0
      %v1364 = vsel %vm1360, %v1353, 0.0
      %v1365 = vsel %vm1360, %v1354, 0.0
      %v1366 = vsel %vm1360, %v1355, 0.0
      %v1367 = vsel %vm1360, %v1356, 0.0
      %v1368 = vsel %vm1360, %v1357, 0.0
      %v1369 = vstv %s1315
      %v1370 = vmul.f32 %v1361, %v1369
      %v1371 = vmul.f32 %v1362, %v1369
      %v1372 = vmul.f32 %v1363, %v1369
      %v1373 = vmul.f32 %v1364, %v1369
      %v1374 = vmul.f32 %v1365, %v1369
      %v1375 = vmul.f32 %v1366, %v1369
      %v1376 = vmul.f32 %v1367, %v1369
      %v1377 = vmul.f32 %v1368, %v1369
      %v1378 = vsub.f32 %v1318, %v1370
      %v1379 = vsub.f32 %v1319, %v1371
      %v1380 = vsub.f32 %v1320, %v1372
      %v1381 = vsub.f32 %v1321, %v1373
      %v1382 = vsub.f32 %v1322, %v1374
      %v1383 = vsub.f32 %v1323, %v1375
      %v1384 = vsub.f32 %v1324, %v1376
      %v1385 = vsub.f32 %v1325, %v1377
      %v1386 = vsub.f32 %v1378, %v1291
      %v1387 = vsub.f32 %v1379, %v1292
      %v1388 = vsub.f32 %v1380, %v1293
      %v1389 = vsub.f32 %v1381, %v1294
      %v1390 = vsub.f32 %v1382, %v1295
      %v1391 = vsub.f32 %v1383, %v1296
      %v1392 = vsub.f32 %v1384, %v1297
      %v1393 = vsub.f32 %v1385, %v1298
      %1394 = vst.msk [vmem:[%s643] sm:$0xff] %vm685, %v1386
      %1395 = vst.msk [vmem:[%s643 + $0x8] sm:$0xff] %vm685, %v1387
      %1396 = vst.msk [vmem:[%s643 + $0x10] sm:$0xff] %vm685, %v1388
      %1397 = vst.msk [vmem:[%s643 + $0x18] sm:$0xff] %vm685, %v1389
      %1398 = vst.msk [vmem:[%s643 + $0x20] sm:$0xff] %vm685, %v1390
      %1399 = vst.msk [vmem:[%s643 + $0x28] sm:$0xff] %vm685, %v1391
      %1400 = vst.msk [vmem:[%s643 + $0x30] sm:$0xff] %vm685, %v1392
      %1401 = vst.msk [vmem:[%s643 + $0x38] sm:$0xff] %vm685, %v1393
      %v1402 = vsub.f32 %v1326, %v1342
      %v1403 = vsub.f32 %v1327, %v1343
      %v1404 = vsub.f32 %v1328, %v1344
      %v1405 = vsub.f32 %v1329, %v1345
      %v1406 = vsub.f32 %v1330, %v1346
      %v1407 = vsub.f32 %v1331, %v1347
      %v1408 = vsub.f32 %v1332, %v1348
      %v1409 = vsub.f32 %v1333, %v1349
      %v1410 = vsel %vm1360, %v1402, 0.0
      %v1411 = vsel %vm1360, %v1403, 0.0
      %v1412 = vsel %vm1360, %v1404, 0.0
      %v1413 = vsel %vm1360, %v1405, 0.0
      %v1414 = vsel %vm1360, %v1406, 0.0
      %v1415 = vsel %vm1360, %v1407, 0.0
      %v1416 = vsel %vm1360, %v1408, 0.0
      %v1417 = vsel %vm1360, %v1409, 0.0
      %v1418 = vmul.f32 %v1410, %v1369
      %v1419 = vmul.f32 %v1411, %v1369
      %v1420 = vmul.f32 %v1412, %v1369
      %v1421 = vmul.f32 %v1413, %v1369
      %v1422 = vmul.f32 %v1414, %v1369
      %v1423 = vmul.f32 %v1415, %v1369
      %v1424 = vmul.f32 %v1416, %v1369
      %v1425 = vmul.f32 %v1417, %v1369
      %v1426 = vsub.f32 %v1326, %v1418
      %v1427 = vsub.f32 %v1327, %v1419
      %v1428 = vsub.f32 %v1328, %v1420
      %v1429 = vsub.f32 %v1329, %v1421
      %v1430 = vsub.f32 %v1330, %v1422
      %v1431 = vsub.f32 %v1331, %v1423
      %v1432 = vsub.f32 %v1332, %v1424
      %v1433 = vsub.f32 %v1333, %v1425
      %v1434 = vsub.f32 %v1426, %v1307
      %v1435 = vsub.f32 %v1427, %v1308
      %v1436 = vsub.f32 %v1428, %v1309
      %v1437 = vsub.f32 %v1429, %v1310
      %v1438 = vsub.f32 %v1430, %v1311
      %v1439 = vsub.f32 %v1431, %v1312
      %v1440 = vsub.f32 %v1432, %v1313
      %v1441 = vsub.f32 %v1433, %v1314
      %1442 = vst.msk [vmem:[%s648] sm:$0xff] %vm685, %v1434
      %1443 = vst.msk [vmem:[%s648 + $0x8] sm:$0xff] %vm685, %v1435
      %1444 = vst.msk [vmem:[%s648 + $0x10] sm:$0xff] %vm685, %v1436
      %1445 = vst.msk [vmem:[%s648 + $0x18] sm:$0xff] %vm685, %v1437
      %1446 = vst.msk [vmem:[%s648 + $0x20] sm:$0xff] %vm685, %v1438
      %1447 = vst.msk [vmem:[%s648 + $0x28] sm:$0xff] %vm685, %v1439
      %1448 = vst.msk [vmem:[%s648 + $0x30] sm:$0xff] %vm685, %v1440
      %1449 = vst.msk [vmem:[%s648 + $0x38] sm:$0xff] %vm685, %v1441
      %p1450 = scmp.lt.s32.totalorder %s28, 1
      %s1451 = scalar_select %p1450, %s28, 1
      %s1452 = smul.addr %s1451, 8
      %s1453 = smul.addr %s1452, 8
      %s1454 = scalar_lea.vmem %s14, %s1453
      %p1455 = scmp.lt.s32.totalorder %s28, 1
      %s1456 = scalar_select %p1455, %s28, 1
      %s1457 = smul.addr %s1456, 8
      %s1458 = smul.addr %s1457, 8
      %s1459 = scalar_lea.vmem %s15, %s1458
      // Predicated region
      $region77: #{varnet_forward.20} parent=75 // pred_check
        %p1460 = pneg %p380
      $region78: #{varnet_forward.20} parent=75 // pred_check_branch
        %1462 = sbr.rel (%p1460) target = $region80
      $region79: #{varnet_forward.20} parent=75 // pred_region
        _
      $region80: #{varnet_forward.20} parent=75 // pred_fallthru
        _
      // Predicated region
      $region81: #{varnet_forward.20} parent=75 // pred_check
        %p1463 = pneg %p406
      $region82: #{varnet_forward.20} parent=75 // pred_check_branch
        %1465 = sbr.rel (%p1463) target = $region84
      $region83: #{varnet_forward.20} parent=75 // pred_region
        _
      $region84: #{varnet_forward.20} parent=75 // pred_fallthru
        _
    $region76: #{varnet_forward.20} parent=5 // pred_fallthru
      _
    %p1466 = scmp.le.s32.totalorder 2, %s23
    // Predicated region
    $region85: #{varnet_forward.20} parent=5 // pred_check
      %p1467 = pneg %p1466
    $region86: #{varnet_forward.20} parent=5 // pred_check_branch
      %1469 = sbr.rel (%p1467) target = $region88
    $region87: #{varnet_forward.20} parent=5 // pred_region
      %s1470 = ssub.s32 %s23, 2
      // Predicated region
      $region89: #{varnet_forward.20} parent=87 // pred_check
        %p1471 = pneg %p386
      $region90: #{varnet_forward.20} parent=87 // pred_check_branch
        %1473 = sbr.rel (%p1471) target = $region92
      $region91: #{varnet_forward.20} parent=87 // pred_region
        %p1474 = scmp.lt.s32.totalorder %s29, 1
        %s1475 = scalar_select %p1474, %s29, 1
        %s1476 = smul.addr %s1475, 8
        %s1477 = smul.addr %s1476, 8
        %s1478 = scalar_lea.vmem %s14, %s1477
      $region92: #{varnet_forward.20} parent=87 // pred_fallthru
        _
      // Predicated region
      $region93: #{varnet_forward.20} parent=87 // pred_check
        %p1479 = pneg %p412
      $region94: #{varnet_forward.20} parent=87 // pred_check_branch
        %1481 = sbr.rel (%p1479) target = $region96
      $region95: #{varnet_forward.20} parent=87 // pred_region
        %p1482 = scmp.lt.s32.totalorder %s29, 1
        %s1483 = scalar_select %p1482, %s29, 1
        %s1484 = smul.addr %s1483, 8
        %s1485 = smul.addr %s1484, 8
        %s1486 = scalar_lea.vmem %s15, %s1485
      $region96: #{varnet_forward.20} parent=87 // pred_fallthru
        _
    $region88: #{varnet_forward.20} parent=5 // pred_fallthru
      _
  $region6: #{varnet_forward.20} parent=0 // loop_footer
    %s27 = sadd.s32 1, %s23
  $region7: #{varnet_forward.20} parent=0 // loop_footer_branch
    %22 = sbr.rel target = $region3
  $region8: #{varnet_forward.20} parent=0 // loop_exit
    _

// kernel: varnet_forward.25
$region0: #{varnet_forward.25}
  #allocation0 [shape = 'u32[]', space=smem, size = 0x4, offset = 0x4, fixed_abs, tag = 'smem constant byte address 0x4 - core index']
  #allocation1 [shape = 'u32[72,128]{1,0:T(1,128)}', space=vmem, size = 0x9000, scoped, tag = 'internal scratch']
  %s0 = inlined_call_operand.vmem [shape: f32[16,16], index: 0, kind: input, shape index: {}]
  %s1 = inlined_call_operand.vmem [shape: f32[16,16], index: 1, kind: input, shape index: {}]
  %s2 = inlined_call_operand.vmem [shape: f32[16,16], index: 2, kind: input, shape index: {}]
  %s3 = inlined_call_operand.vmem [shape: f32[16,16], index: 3, kind: input, shape index: {}]
  %s4 = inlined_call_operand.vmem [shape: f32[2,64,16], index: 4, kind: input, shape index: {}]
  %s5 = inlined_call_operand.vmem [shape: f32[2,64,16], index: 5, kind: input, shape index: {}]
  %s6 = inlined_call_operand.hbm [shape: f32[2,16,16], index: 6, kind: output, shape index: {}]
  %s7 = sld [smem:[#allocation0]]
  $region57: #{varnet_forward.25} parent=0
    _
  %s9 = ssub.s32 1, %s7
  %s10 = scalar_select 0, %s9, %s7
  $region1: #{varnet_forward.25} parent=0
    #allocation2 [shape = 'u8[16384]{0}', space=vmem, size = 0x4000, scoped, tag = 'output window, operand 0']
    #allocation3 [shape = 's32[2]{0}', space=sflag, size = 0x8, scoped, tag = 'scoped memory for varnet_forward.25']
    %11 = vsyncpa [#allocation3], 0
    %s12 = scalar_lea.sflag [#allocation3], 1
    %13 = vsyncpa %s12, 0
    loop: start=0, step=1, limit=4
    $region2: #{varnet_forward.25} parent=1 // loop_pre_header
      _
    $region3: #{varnet_forward.25} parent=1 // loop_header
      %s15 = sphi 0, %s19
      %p16 = scmp.ge.s32.totalorder %s15, 4
      %s23 = sphi 0, %s23
      %s25 = sphi 0, %s23
      %s26 = sphi 0, %s25
      %s40 = sphi 0, %s26
      %s44 = sphi 0, %s44
      %s46 = sphi 0, %s44
      %s47 = sphi 0, %s46
      %s61 = sphi 0, %s47
      %s65 = sphi 0, %s65
      %s67 = sphi 0, %s65
      %s68 = sphi 0, %s67
      %s82 = sphi 0, %s68
      %s86 = sphi 0, %s86
      %s88 = sphi 0, %s86
      %s89 = sphi 0, %s88
      %s103 = sphi 0, %s89
      %s109 = sphi 0, %s111
      %s112 = sphi 0, %s109
      %s113 = sphi 0, %s112
      %s129 = sphi 0, %s113
      %s135 = sphi 0, %s137
      %s138 = sphi 0, %s135
      %s139 = sphi 0, %s138
      %s155 = sphi 0, %s139
      %s161 = sphi 0, %s163
      %s164 = sphi 0, %s161
      %s165 = sphi 0, %s164
      %s181 = sphi 0, %s165
    $region4: #{varnet_forward.25} parent=1 // loop_header_branch
      %18 = sbr.rel (%p16) target = $region8
    $region5: #{varnet_forward.25} parent=1 // loop_body
      %s20 = ssub.s32 %s15, 1
      %s21 = ssub.s32 %s15, 2
      %s22 = sadd.s32 %s15, 1
      %s24 = sadd.s32 %s23, 1
      %p27 = scmp.eq.s32.totalorder %s15, 1
      %p28 = scmp.ne.s32.totalorder %s23, %s25
      %p29 = scmp.eq.s32.totalorder %s15, 0
      %p30 = por %p28, %p29
      %p31 = scmp.ne.s32.totalorder %s23, %s25
      %p32 = scmp.eq.s32.totalorder %s20, 1
      %p33 = por %p31, %p32
      %p34 = scmp.ne.s32.totalorder %s25, %s26
      %p35 = scmp.eq.s32.totalorder %s20, 0
      %p36 = por %p34, %p35
      %p37 = scmp.ne.s32.totalorder %s25, %s26
      %p38 = scmp.eq.s32.totalorder %s21, 1
      %p39 = por %p37, %p38
      %p41 = scmp.ne.s32.totalorder %s26, %s40
      %p42 = scmp.eq.s32.totalorder %s21, 0
      %p43 = por %p41, %p42
      %s45 = sadd.s32 %s44, 1
      %p48 = scmp.eq.s32.totalorder %s15, 1
      %p49 = scmp.ne.s32.totalorder %s44, %s46
      %p50 = scmp.eq.s32.totalorder %s15, 0
      %p51 = por %p49, %p50
      %p52 = scmp.ne.s32.totalorder %s44, %s46
      %p53 = scmp.eq.s32.totalorder %s20, 1
      %p54 = por %p52, %p53
      %p55 = scmp.ne.s32.totalorder %s46, %s47
      %p56 = scmp.eq.s32.totalorder %s20, 0
      %p57 = por %p55, %p56
      %p58 = scmp.ne.s32.totalorder %s46, %s47
      %p59 = scmp.eq.s32.totalorder %s21, 1
      %p60 = por %p58, %p59
      %p62 = scmp.ne.s32.totalorder %s47, %s61
      %p63 = scmp.eq.s32.totalorder %s21, 0
      %p64 = por %p62, %p63
      %s66 = sadd.s32 %s65, 1
      %p69 = scmp.eq.s32.totalorder %s15, 1
      %p70 = scmp.ne.s32.totalorder %s65, %s67
      %p71 = scmp.eq.s32.totalorder %s15, 0
      %p72 = por %p70, %p71
      %p73 = scmp.ne.s32.totalorder %s65, %s67
      %p74 = scmp.eq.s32.totalorder %s20, 1
      %p75 = por %p73, %p74
      %p76 = scmp.ne.s32.totalorder %s67, %s68
      %p77 = scmp.eq.s32.totalorder %s20, 0
      %p78 = por %p76, %p77
      %p79 = scmp.ne.s32.totalorder %s67, %s68
      %p80 = scmp.eq.s32.totalorder %s21, 1
      %p81 = por %p79, %p80
      %p83 = scmp.ne.s32.totalorder %s68, %s82
      %p84 = scmp.eq.s32.totalorder %s21, 0
      %p85 = por %p83, %p84
      %s87 = sadd.s32 %s86, 1
      %p90 = scmp.eq.s32.totalorder %s15, 1
      %p91 = scmp.ne.s32.totalorder %s86, %s88
      %p92 = scmp.eq.s32.totalorder %s15, 0
      %p93 = por %p91, %p92
      %p94 = scmp.ne.s32.totalorder %s86, %s88
      %p95 = scmp.eq.s32.totalorder %s20, 1
      %p96 = por %p94, %p95
      %p97 = scmp.ne.s32.totalorder %s88, %s89
      %p98 = scmp.eq.s32.totalorder %s20, 0
      %p99 = por %p97, %p98
      %p100 = scmp.ne.s32.totalorder %s88, %s89
      %p101 = scmp.eq.s32.totalorder %s21, 1
      %p102 = por %p100, %p101
      %p104 = scmp.ne.s32.totalorder %s89, %s103
      %p105 = scmp.eq.s32.totalorder %s21, 0
      %p106 = por %p104, %p105
      %s107 = ssub.s32 %s15, %s22
      %p108 = scmp.eq.s32.totalorder %s107, 0
      %s110 = sadd.s32 %s109, 1
      %s111 = scalar_select %p108, %s109, %s110
      %p114 = pneg %p108
      %p115 = scmp.eq.s32.totalorder %s15, 1
      %p116 = por %p114, %p115
      %p117 = scmp.ne.s32.totalorder %s109, %s112
      %p118 = scmp.eq.s32.totalorder %s15, 0
      %p119 = por %p117, %p118
      %p120 = scmp.ne.s32.totalorder %s109, %s112
      %p121 = scmp.eq.s32.totalorder %s20, 1
      %p122 = por %p120, %p121
      %p123 = scmp.ne.s32.totalorder %s112, %s113
      %p124 = scmp.eq.s32.totalorder %s20, 0
      %p125 = por %p123, %p124
      %p126 = scmp.ne.s32.totalorder %s112, %s113
      %p127 = scmp.eq.s32.totalorder %s21, 1
      %p128 = por %p126, %p127
      %p130 = scmp.ne.s32.totalorder %s113, %s129
      %p131 = scmp.eq.s32.totalorder %s21, 0
      %p132 = por %p130, %p131
      %s133 = ssub.s32 %s15, %s22
      %p134 = scmp.eq.s32.totalorder %s133, 0
      %s136 = sadd.s32 %s135, 1
      %s137 = scalar_select %p134, %s135, %s136
      %p140 = pneg %p134
      %p141 = scmp.eq.s32.totalorder %s15, 1
      %p142 = por %p140, %p141
      %p143 = scmp.ne.s32.totalorder %s135, %s138
      %p144 = scmp.eq.s32.totalorder %s15, 0
      %p145 = por %p143, %p144
      %p146 = scmp.ne.s32.totalorder %s135, %s138
      %p147 = scmp.eq.s32.totalorder %s20, 1
      %p148 = por %p146, %p147
      %p149 = scmp.ne.s32.totalorder %s138, %s139
      %p150 = scmp.eq.s32.totalorder %s20, 0
      %p151 = por %p149, %p150
      %p152 = scmp.ne.s32.totalorder %s138, %s139
      %p153 = scmp.eq.s32.totalorder %s21, 1
      %p154 = por %p152, %p153
      %p156 = scmp.ne.s32.totalorder %s139, %s155
      %p157 = scmp.eq.s32.totalorder %s21, 0
      %p158 = por %p156, %p157
      %s159 = ssub.s32 %s15, %s22
      %p160 = scmp.eq.s32.totalorder %s159, 0
      %s162 = sadd.s32 %s161, 1
      %s163 = scalar_select %p160, %s161, %s162
      %p166 = pneg %p160
      %p167 = scmp.eq.s32.totalorder %s15, 1
      %p168 = por %p166, %p167
      %p169 = scmp.ne.s32.totalorder %s161, %s164
      %p170 = scmp.eq.s32.totalorder %s15, 0
      %p171 = por %p169, %p170
      %p172 = scmp.ne.s32.totalorder %s161, %s164
      %p173 = scmp.eq.s32.totalorder %s20, 1
      %p174 = por %p172, %p173
      %p175 = scmp.ne.s32.totalorder %s164, %s165
      %p176 = scmp.eq.s32.totalorder %s20, 0
      %p177 = por %p175, %p176
      %p178 = scmp.ne.s32.totalorder %s164, %s165
      %p179 = scmp.eq.s32.totalorder %s21, 1
      %p180 = por %p178, %p179
      %p182 = scmp.ne.s32.totalorder %s165, %s181
      %p183 = scmp.eq.s32.totalorder %s21, 0
      %p184 = por %p182, %p183
      %p185 = scmp.le.s32.totalorder 1, %s15
      %p186 = scmp.lt.s32.totalorder %s15, 3
      %p187 = pnand %p185, %p186
      %p188 = pneg %p187
      // Predicated region
      $region9: #{varnet_forward.25} parent=5 // pred_check
        _
      $region10: #{varnet_forward.25} parent=5 // pred_check_branch
        %190 = sbr.rel (%p187) target = $region12
      $region11: #{varnet_forward.25} parent=5 // pred_region
        %s191 = ssub.s32 %s15, 1
        // Predicated region
        $region13: #{varnet_forward.25} parent=11 // pred_check
          %p192 = pneg %p36
        $region14: #{varnet_forward.25} parent=11 // pred_check_branch
          %194 = sbr.rel (%p192) target = $region16
        $region15: #{varnet_forward.25} parent=11 // pred_region
          _
        $region16: #{varnet_forward.25} parent=11 // pred_fallthru
          _
        // Predicated region
        $region17: #{varnet_forward.25} parent=11 // pred_check
          %p195 = pneg %p57
        $region18: #{varnet_forward.25} parent=11 // pred_check_branch
          %197 = sbr.rel (%p195) target = $region20
        $region19: #{varnet_forward.25} parent=11 // pred_region
          _
        $region20: #{varnet_forward.25} parent=11 // pred_fallthru
          _
        // Predicated region
        $region21: #{varnet_forward.25} parent=11 // pred_check
          %p198 = pneg %p78
        $region22: #{varnet_forward.25} parent=11 // pred_check_branch
          %200 = sbr.rel (%p198) target = $region24
        $region23: #{varnet_forward.25} parent=11 // pred_region
          _
        $region24: #{varnet_forward.25} parent=11 // pred_fallthru
          _
        // Predicated region
        $region25: #{varnet_forward.25} parent=11 // pred_check
          %p201 = pneg %p99
        $region26: #{varnet_forward.25} parent=11 // pred_check_branch
          %203 = sbr.rel (%p201) target = $region28
        $region27: #{varnet_forward.25} parent=11 // pred_region
          _
        $region28: #{varnet_forward.25} parent=11 // pred_fallthru
          _
      $region12: #{varnet_forward.25} parent=5 // pred_fallthru
        _
      %p204 = scmp.lt.s32.totalorder %s15, 2
      // Predicated region
      $region29: #{varnet_forward.25} parent=5 // pred_check
        %p205 = pneg %p204
      $region30: #{varnet_forward.25} parent=5 // pred_check_branch
        %207 = sbr.rel (%p205) target = $region32
      $region31: #{varnet_forward.25} parent=5 // pred_region
        // Predicated region
        $region33: #{varnet_forward.25} parent=31 // pred_check
          %p208 = pneg %p119
        $region34: #{varnet_forward.25} parent=31 // pred_check_branch
          %210 = sbr.rel (%p208) target = $region36
        $region35: #{varnet_forward.25} parent=31 // pred_region
          %p211 = scmp.lt.s32.totalorder %s15, 1
          %s212 = scalar_select %p211, %s15, 1
          %s213 = smul.addr %s212, 8
          %s214 = smul.addr %s213, 8
          %s215 = scalar_lea.vmem %s4, %s214
        $region36: #{varnet_forward.25} parent=31 // pred_fallthru
          _
        // Predicated region
        $region37: #{varnet_forward.25} parent=31 // pred_check
          %p216 = pneg %p145
        $region38: #{varnet_forward.25} parent=31 // pred_check_branch
          %218 = sbr.rel (%p216) target = $region40
        $region39: #{varnet_forward.25} parent=31 // pred_region
          %p219 = scmp.lt.s32.totalorder %s15, 1
          %s220 = scalar_select %p219, %s15, 1
          %s221 = smul.addr %s220, 8
          %s222 = smul.addr %s221, 8
          %s223 = scalar_lea.vmem %s5, %s222
        $region40: #{varnet_forward.25} parent=31 // pred_fallthru
          _
      $region32: #{varnet_forward.25} parent=5 // pred_fallthru
        _
      %p224 = scmp.le.s32.totalorder 1, %s15
      %p225 = scmp.lt.s32.totalorder %s15, 3
      %p226 = pnand %p224, %p225
      %p227 = pneg %p226
      // Predicated region
      $region41: #{varnet_forward.25} parent=5 // pred_check
        _
      $region42: #{varnet_forward.25} parent=5 // pred_check_branch
        %229 = sbr.rel (%p226) target = $region44
      $region43: #{varnet_forward.25} parent=5 // pred_region
        %s230 = ssub.s32 %s15, 1
        %p231 = pneg %p36
        %p232 = pneg %p33
        %p233 = pneg %p57
        %p234 = pneg %p54
        %p235 = pneg %p78
        %p236 = pneg %p75
        %p237 = pneg %p99
        %p238 = pneg %p96
        %p239 = scmp.lt.s32.totalorder %s20, 1
        %s240 = scalar_select %p239, %s20, 1
        %s241 = smul.addr %s240, 8
        %s242 = smul.addr %s241, 8
        %s243 = scalar_lea.vmem %s4, %s242
        %p244 = pneg %p125
        %p245 = pneg %p122
        %p246 = scmp.lt.s32.totalorder %s20, 1
        %s247 = scalar_select %p246, %s20, 1
        %s248 = smul.addr %s247, 8
        %s249 = smul.addr %s248, 8
        %s250 = scalar_lea.vmem %s5, %s249
        %p251 = pneg %p151
        %p252 = pneg %p148
        %p253 = pneg %p177
        %p254 = pneg %p174
        %s255 = sand.u32 %s164, 1
        %s256 = scalar_lea.sflag [#allocation3], %s255
        %s257 = sand.u32 %s164, 1
        %s258 = smul.addr %s257, 16
        %s259 = scalar_lea.vmem [#allocation2], %s258
        %p260 = scmp.lt.s32.totalorder %s20, 1
        %s261 = scalar_select %p260, %s20, 1
        %s262 = smul.addr %s261, 8
        %s263 = smul.addr %s262, 8
        %s264 = scalar_lea.vmem %s4, %s263
        %p265 = scmp.lt.s32.totalorder %s20, 1
        %s266 = scalar_select %p265, %s20, 1
        %s267 = smul.addr %s266, 8
        %s268 = smul.addr %s267, 8
        %s269 = scalar_lea.vmem %s5, %s268
        %v270 = vld [vmem:[%s264] sm:$0xff]
        %v271 = vld [vmem:[%s264 + $0x8] sm:$0xff]
        %v272 = vld [vmem:[%s264 + $0x10] sm:$0xff]
        %v273 = vld [vmem:[%s264 + $0x18] sm:$0xff]
        %v274 = vld [vmem:[%s264 + $0x20] sm:$0xff]
        %v275 = vld [vmem:[%s264 + $0x28] sm:$0xff]
        %v276 = vld [vmem:[%s264 + $0x30] sm:$0xff]
        %v277 = vld [vmem:[%s264 + $0x38] sm:$0xff]
        %v278 = vld [vmem:[%s269] sm:$0xff]
        %v279 = vld [vmem:[%s269 + $0x8] sm:$0xff]
        %v280 = vld [vmem:[%s269 + $0x10] sm:$0xff]
        %v281 = vld [vmem:[%s269 + $0x18] sm:$0xff]
        %v282 = vld [vmem:[%s269 + $0x20] sm:$0xff]
        %v283 = vld [vmem:[%s269 + $0x28] sm:$0xff]
        %v284 = vld [vmem:[%s269 + $0x30] sm:$0xff]
        %v285 = vld [vmem:[%s269 + $0x38] sm:$0xff]
        %v286 = vld [vmem:[%s2] sm:$0xff]
        %v287 = vld [vmem:[%s2 + $0x8] sm:$0xff]
        %v288 = vld [vmem:[%s3] sm:$0xff]
        %v289 = vld [vmem:[%s3 + $0x8] sm:$0xff]
        %vm290 = vcmask 130048
        %v292 = vsel %vm290, %v270, 0
        %v295 = vsel %vm290, %v271, 0
        %v298 = vsel %vm290, %v272, 0
        %v301 = vsel %vm290, %v273, 0
        %v304 = vsel %vm290, %v274, 0
        %v307 = vsel %vm290, %v275, 0
        %v310 = vsel %vm290, %v276, 0
        %v313 = vsel %vm290, %v277, 0
        %315 = vmatpush.msra.mxu0 0.0
        %316 = vmatpush.msra.mxu0 0.0
        %317 = vmatpush.msra.mxu0 0.0
        %318 = vmatpush.msra.mxu0 0.0
        %319 = vmatpush.msra.mxu0 0.0
        %320 = vmatpush.msra.mxu0 0.0
        %321 = vmatpush.msra.mxu0 0.0
        %322 = vmatpush.msra.mxu0 0.0
        %323 = vmatpush.msra.mxu0 0.0
        %324 = vmatpush.msra.mxu0 0.0
        %325 = vmatpush.msra.mxu0 0.0
        %326 = vmatpush.msra.mxu0 0.0
        %327 = vmatpush.msra.mxu0 0.0
        %328 = vmatpush.msra.mxu0 0.0
        %329 = vmatpush.msra.mxu0 %v287
        %330 = vmatpush.msra.mxu0 %v286
        %331 = vmatmul.f32.gmra.mxu0 %v292
        %v332 = vpop.f32.mrf.mxu0
        %v333 = vadd.f32 0.0, %v332
        %334 = vmatmul.f32.gmra.mxu0 %v295
        %v335 = vpop.f32.mrf.mxu0
        %v336 = vadd.f32 0.0, %v335
        %337 = vmatmul.f32.gmra.mxu0 %v298
        %v338 = vpop.f32.mrf.mxu0
        %v339 = vadd.f32 0.0, %v338
        %340 = vmatmul.f32.gmra.mxu0 %v301
        %v341 = vpop.f32.mrf.mxu0
        %v342 = vadd.f32 0.0, %v341
        %343 = vmatmul.f32.gmra.mxu0 %v304
        %v344 = vpop.f32.mrf.mxu0
        %v345 = vadd.f32 0.0, %v344
        %346 = vmatmul.f32.gmra.mxu0 %v307
        %v347 = vpop.f32.mrf.mxu0
        %v348 = vadd.f32 0.0, %v347
        %349 = vmatmul.f32.gmra.mxu0 %v310
        %v350 = vpop.f32.mrf.mxu0
        %v351 = vadd.f32 0.0, %v350
        %352 = vmatmul.f32.gmra.mxu0 %v313
        %v353 = vpop.f32.mrf.mxu0
        %v354 = vadd.f32 0.0, %v353
        %355 = vdwg.mxu0
        %v357 = vsel %vm290, %v278, 0
        %v360 = vsel %vm290, %v279, 0
        %v363 = vsel %vm290, %v280, 0
        %v366 = vsel %vm290, %v281, 0
        %v369 = vsel %vm290, %v282, 0
        %v372 = vsel %vm290, %v283, 0
        %v375 = vsel %vm290, %v284, 0
        %v378 = vsel %vm290, %v285, 0
        %380 = vmatpush.msra.mxu0 0.0
        %381 = vmatpush.msra.mxu0 0.0
        %382 = vmatpush.msra.mxu0 0.0
        %383 = vmatpush.msra.mxu0 0.0
        %384 = vmatpush.msra.mxu0 0.0
        %385 = vmatpush.msra.mxu0 0.0
        %386 = vmatpush.msra.mxu0 0.0
        %387 = vmatpush.msra.mxu0 0.0
        %388 = vmatpush.msra.mxu0 0.0
        %389 = vmatpush.msra.mxu0 0.0
        %390 = vmatpush.msra.mxu0 0.0
        %391 = vmatpush.msra.mxu0 0.0
        %392 = vmatpush.msra.mxu0 0.0
        %393 = vmatpush.msra.mxu0 0.0
        %394 = vmatpush.msra.mxu0 %v289
        %395 = vmatpush.msra.mxu0 %v288
        %396 = vmatmul.f32.gmra.mxu0 %v357
        %v397 = vpop.f32.mrf.mxu0
        %v398 = vadd.f32 0.0, %v397
        %399 = vmatmul.f32.gmra.mxu0 %v360
        %v400 = vpop.f32.mrf.mxu0
        %v401 = vadd.f32 0.0, %v400
        %402 = vmatmul.f32.gmra.mxu0 %v363
        %v403 = vpop.f32.mrf.mxu0
        %v404 = vadd.f32 0.0, %v403
        %405 = vmatmul.f32.gmra.mxu0 %v366
        %v406 = vpop.f32.mrf.mxu0
        %v407 = vadd.f32 0.0, %v406
        %408 = vmatmul.f32.gmra.mxu0 %v369
        %v409 = vpop.f32.mrf.mxu0
        %v410 = vadd.f32 0.0, %v409
        %411 = vmatmul.f32.gmra.mxu0 %v372
        %v412 = vpop.f32.mrf.mxu0
        %v413 = vadd.f32 0.0, %v412
        %414 = vmatmul.f32.gmra.mxu0 %v375
        %v415 = vpop.f32.mrf.mxu0
        %v416 = vadd.f32 0.0, %v415
        %417 = vmatmul.f32.gmra.mxu0 %v378
        %v418 = vpop.f32.mrf.mxu0
        %v419 = vadd.f32 0.0, %v418
        %420 = vdwg.mxu0
        %v421 = vadd.f32 %v270, %v278
        %v422 = vadd.f32 %v271, %v279
        %v423 = vadd.f32 %v272, %v280
        %v424 = vadd.f32 %v273, %v281
        %v425 = vadd.f32 %v274, %v282
        %v426 = vadd.f32 %v275, %v283
        %v427 = vadd.f32 %v276, %v284
        %v428 = vadd.f32 %v277, %v285
        %v429 = vadd.f32 %v286, %v288
        %v430 = vadd.f32 %v287, %v289
        %v432 = vsel %vm290, %v421, 0
        %v435 = vsel %vm290, %v422, 0
        %v438 = vsel %vm290, %v423, 0
        %v441 = vsel %vm290, %v424, 0
        %v444 = vsel %vm290, %v425, 0
        %v447 = vsel %vm290, %v426, 0
        %v450 = vsel %vm290, %v427, 0
        %v453 = vsel %vm290, %v428, 0
        %455 = vmatpush.msra.mxu0 0.0
        %456 = vmatpush.msra.mxu0 0.0
        %457 = vmatpush.msra.mxu0 0.0
        %458 = vmatpush.msra.mxu0 0.0
        %459 = vmatpush.msra.mxu0 0.0
        %460 = vmatpush.msra.mxu0 0.0
        %461 = vmatpush.msra.mxu0 0.0
        %462 = vmatpush.msra.mxu0 0.0
        %463 = vmatpush.msra.mxu0 0.0
        %464 = vmatpush.msra.mxu0 0.0
        %465 = vmatpush.msra.mxu0 0.0
        %466 = vmatpush.msra.mxu0 0.0
        %467 = vmatpush.msra.mxu0 0.0
        %468 = vmatpush.msra.mxu0 0.0
        %469 = vmatpush.msra.mxu0 %v430
        %470 = vmatpush.msra.mxu0 %v429
        %471 = vmatmul.f32.gmra.mxu0 %v432
        %v472 = vpop.f32.mrf.mxu0
        %v473 = vadd.f32 0.0, %v472
        %474 = vmatmul.f32.gmra.mxu0 %v435
        %v475 = vpop.f32.mrf.mxu0
        %v476 = vadd.f32 0.0, %v475
        %477 = vmatmul.f32.gmra.mxu0 %v438
        %v478 = vpop.f32.mrf.mxu0
        %v479 = vadd.f32 0.0, %v478
        %480 = vmatmul.f32.gmra.mxu0 %v441
        %v481 = vpop.f32.mrf.mxu0
        %v482 = vadd.f32 0.0, %v481
        %483 = vmatmul.f32.gmra.mxu0 %v444
        %v484 = vpop.f32.mrf.mxu0
        %v485 = vadd.f32 0.0, %v484
        %486 = vmatmul.f32.gmra.mxu0 %v447
        %v487 = vpop.f32.mrf.mxu0
        %v488 = vadd.f32 0.0, %v487
        %489 = vmatmul.f32.gmra.mxu0 %v450
        %v490 = vpop.f32.mrf.mxu0
        %v491 = vadd.f32 0.0, %v490
        %492 = vmatmul.f32.gmra.mxu0 %v453
        %v493 = vpop.f32.mrf.mxu0
        %v494 = vadd.f32 0.0, %v493
        %495 = vdwg.mxu0
        %v496 = vsub.f32 %v333, %v398
        %v497 = vsub.f32 %v336, %v401
        %v498 = vsub.f32 %v339, %v404
        %v499 = vsub.f32 %v342, %v407
        %v500 = vsub.f32 %v345, %v410
        %v501 = vsub.f32 %v348, %v413
        %v502 = vsub.f32 %v351, %v416
        %v503 = vsub.f32 %v354, %v419
        %v504 = vsub.f32 %v473, %v333
        %v505 = vsub.f32 %v476, %v336
        %v506 = vsub.f32 %v479, %v339
        %v507 = vsub.f32 %v482, %v342
        %v508 = vsub.f32 %v485, %v345
        %v509 = vsub.f32 %v488, %v348
        %v510 = vsub.f32 %v491, %v351
        %v511 = vsub.f32 %v494, %v354
        %v512 = vsub.f32 %v504, %v398
        %v513 = vsub.f32 %v505, %v401
        %v514 = vsub.f32 %v506, %v404
        %v515 = vsub.f32 %v507, %v407
        %v516 = vsub.f32 %v508, %v410
        %v517 = vsub.f32 %v509, %v413
        %v518 = vsub.f32 %v510, %v416
        %v519 = vsub.f32 %v511, %v419
        %v520 = vld [vmem:[%s0] sm:$0xff]
        %v521 = vld [vmem:[%s0 + $0x8] sm:$0xff]
        %v522 = vld [vmem:[%s1] sm:$0xff]
        %v523 = vld [vmem:[%s1 + $0x8] sm:$0xff]
        %v525 = vsel %vm290, %v520, 0
        %v528 = vsel %vm290, %v521, 0
        %530 = vmatpush.msra.mxu0 0.0
        %531 = vmatpush.msra.mxu0 0.0
        %532 = vmatpush.msra.mxu0 0.0
        %533 = vmatpush.msra.mxu0 0.0
        %534 = vmatpush.msra.mxu0 0.0
        %535 = vmatpush.msra.mxu0 0.0
        %536 = vmatpush.msra.mxu0 0.0
        %537 = vmatpush.msra.mxu0 0.0
        %538 = vmatpush.msra.mxu0 0.0
        %539 = vmatpush.msra.mxu0 0.0
        %540 = vmatpush.msra.mxu0 0.0
        %541 = vmatpush.msra.mxu0 0.0
        %542 = vmatpush.msra.mxu0 0.0
        %543 = vmatpush.msra.mxu0 0.0
        %544 = vmatpush.msra.mxu0 %v497
        %545 = vmatpush.msra.mxu0 %v496
        %546 = vmatmul.f32.gmra.mxu0 %v525
        %v547 = vpop.f32.mrf.mxu0
        %v548 = vadd.f32 0.0, %v547
        %549 = vmatmul.f32.gmra.mxu0 %v528
        %v550 = vpop.f32.mrf.mxu0
        %v551 = vadd.f32 0.0, %v550
        %552 = vdwg.mxu0
        %v554 = vsel %vm290, %v522, 0
        %v557 = vsel %vm290, %v523, 0
        %559 = vmatpush.msra.mxu0 0.0
        %560 = vmatpush.msra.mxu0 0.0
        %561 = vmatpush.msra.mxu0 0.0
        %562 = vmatpush.msra.mxu0 0.0
        %563 = vmatpush.msra.mxu0 0.0
        %564 = vmatpush.msra.mxu0 0.0
        %565 = vmatpush.msra.mxu0 0.0
        %566 = vmatpush.msra.mxu0 0.0
        %567 = vmatpush.msra.mxu0 0.0
        %568 = vmatpush.msra.mxu0 0.0
        %569 = vmatpush.msra.mxu0 0.0
        %570 = vmatpush.msra.mxu0 0.0
        %571 = vmatpush.msra.mxu0 0.0
        %572 = vmatpush.msra.mxu0 0.0
        %573 = vmatpush.msra.mxu0 %v513
        %574 = vmatpush.msra.mxu0 %v512
        %575 = vmatmul.f32.gmra.mxu0 %v554
        %v576 = vpop.f32.mrf.mxu0
        %v577 = vadd.f32 0.0, %v576
        %578 = vmatmul.f32.gmra.mxu0 %v557
        %v579 = vpop.f32.mrf.mxu0
        %v580 = vadd.f32 0.0, %v579
        %581 = vdwg.mxu0
        %v582 = vadd.f32 %v520, %v522
        %v583 = vadd.f32 %v521, %v523
        %v584 = vadd.f32 %v496, %v512
        %v585 = vadd.f32 %v497, %v513
        %v587 = vsel %vm290, %v582, 0
        %v590 = vsel %vm290, %v583, 0
        %592 = vmatpush.msra.mxu0 0.0
        %593 = vmatpush.msra.mxu0 0.0
        %594 = vmatpush.msra.mxu0 0.0
        %595 = vmatpush.msra.mxu0 0.0
        %596 = vmatpush.msra.mxu0 0.0
        %597 = vmatpush.msra.mxu0 0.0
        %598 = vmatpush.msra.mxu0 0.0
        %599 = vmatpush.msra.mxu0 0.0
        %600 = vmatpush.msra.mxu0 0.0
        %601 = vmatpush.msra.mxu0 0.0
        %602 = vmatpush.msra.mxu0 0.0
        %603 = vmatpush.msra.mxu0 0.0
        %604 = vmatpush.msra.mxu0 0.0
        %605 = vmatpush.msra.mxu0 0.0
        %606 = vmatpush.msra.mxu0 %v585
        %607 = vmatpush.msra.mxu0 %v584
        %608 = vmatmul.f32.gmra.mxu0 %v587
        %v609 = vpop.f32.mrf.mxu0
        %v610 = vadd.f32 0.0, %v609
        %611 = vmatmul.f32.gmra.mxu0 %v590
        %v612 = vpop.f32.mrf.mxu0
        %v613 = vadd.f32 0.0, %v612
        %614 = vdwg.mxu0
        %v615 = vsub.f32 %v548, %v577
        %v616 = vsub.f32 %v551, %v580
        %v617 = vsub.f32 %v610, %v548
        %v618 = vsub.f32 %v613, %v551
        %v619 = vsub.f32 %v617, %v577
        %v620 = vsub.f32 %v618, %v580
        %v621 = vmul.f32 %v615, %v615
        %v622 = vmul.f32 %v616, %v616
        %v623 = vadd.f32 %v621, 0.0
        %v624 = vadd.f32 %v622, 0.0
        %v625 = vmul.f32 %v619, %v619
        %v626 = vmul.f32 %v620, %v620
        %v627 = vadd.f32 %v623, %v625
        %v628 = vadd.f32 %v624, %v626
        %629 = vmatpush.msra.mxu0 0.0
        %630 = vmatpush.msra.mxu0 0.0
        %631 = vmatpush.msra.mxu0 0.0
        %632 = vmatpush.msra.mxu0 0.0
        %633 = vmatpush.msra.mxu0 0.0
        %634 = vmatpush.msra.mxu0 0.0
        %635 = vmatpush.msra.mxu0 0.0
        %636 = vmatpush.msra.mxu0 0.0
        %637 = vmatpush.msra.mxu0 0.0
        %638 = vmatpush.msra.mxu0 0.0
        %639 = vmatpush.msra.mxu0 0.0
        %640 = vmatpush.msra.mxu0 0.0
        %641 = vmatpush.msra.mxu0 0.0
        %642 = vmatpush.msra.mxu0 0.0
        %643 = vmatpush.msra.mxu0 %v499
        %644 = vmatpush.msra.mxu0 %v498
        %645 = vmatmul.f32.gmra.mxu0 %v525
        %v646 = vpop.f32.mrf.mxu0
        %v647 = vadd.f32 0.0, %v646
        %648 = vmatmul.f32.gmra.mxu0 %v528
        %v649 = vpop.f32.mrf.mxu0
        %v650 = vadd.f32 0.0, %v649
        %651 = vdwg.mxu0
        %652 = vmatpush.msra.mxu0 0.0
        %653 = vmatpush.msra.mxu0 0.0
        %654 = vmatpush.msra.mxu0 0.0
        %655 = vmatpush.msra.mxu0 0.0
        %656 = vmatpush.msra.mxu0 0.0
        %657 = vmatpush.msra.mxu0 0.0
        %658 = vmatpush.msra.mxu0 0.0
        %659 = vmatpush.msra.mxu0 0.0
        %660 = vmatpush.msra.mxu0 0.0
        %661 = vmatpush.msra.mxu0 0.0
        %662 = vmatpush.msra.mxu0 0.0
        %663 = vmatpush.msra.mxu0 0.0
        %664 = vmatpush.msra.mxu0 0.0
        %665 = vmatpush.msra.mxu0 0.0
        %666 = vmatpush.msra.mxu0 %v515
        %667 = vmatpush.msra.mxu0 %v514
        %668 = vmatmul.f32.gmra.mxu0 %v554
        %v669 = vpop.f32.mrf.mxu0
        %v670 = vadd.f32 0.0, %v669
        %671 = vmatmul.f32.gmra.mxu0 %v557
        %v672 = vpop.f32.mrf.mxu0
        %v673 = vadd.f32 0.0, %v672
        %674 = vdwg.mxu0
        %v675 = vadd.f32 %v498, %v514
        %v676 = vadd.f32 %v499, %v515
        %677 = vmatpush.msra.mxu0 0.0
        %678 = vmatpush.msra.mxu0 0.0
        %679 = vmatpush.msra.mxu0 0.0
        %680 = vmatpush.msra.mxu0 0.0
        %681 = vmatpush.msra.mxu0 0.0
        %682 = vmatpush.msra.mxu0 0.0
        %683 = vmatpush.msra.mxu0 0.0
        %684 = vmatpush.msra.mxu0 0.0
        %685 = vmatpush.msra.mxu0 0.0
        %686 = vmatpush.msra.mxu0 0.0
        %687 = vmatpush.msra.mxu0 0.0
        %688 = vmatpush.msra.mxu0 0.0
        %689 = vmatpush.msra.mxu0 0.0
        %690 = vmatpush.msra.mxu0 0.0
        %691 = vmatpush.msra.mxu0 %v676
        %692 = vmatpush.msra.mxu0 %v675
        %693 = vmatmul.f32.gmra.mxu0 %v587
        %v694 = vpop.f32.mrf.mxu0
        %v695 = vadd.f32 0.0, %v694
        %696 = vmatmul.f32.gmra.mxu0 %v590
        %v697 = vpop.f32.mrf.mxu0
        %v698 = vadd.f32 0.0, %v697
        %699 = vdwg.mxu0
        %v700 = vsub.f32 %v647, %v670
        %v701 = vsub.f32 %v650, %v673
        %v702 = vsub.f32 %v695, %v647
        %v703 = vsub.f32 %v698, %v650
        %v704 = vsub.f32 %v702, %v670
        %v705 = vsub.f32 %v703, %v673
        %v706 = vmul.f32 %v700, %v700
        %v707 = vmul.f32 %v701, %v701
        %v708 = vadd.f32 %v627, %v706
        %v709 = vadd.f32 %v628, %v707
        %v710 = vmul.f32 %v704, %v704
        %v711 = vmul.f32 %v705, %v705
        %v712 = vadd.f32 %v708, %v710
        %v713 = vadd.f32 %v709, %v711
        %714 = vmatpush.msra.mxu0 0.0
        %715 = vmatpush.msra.mxu0 0.0
        %716 = vmatpush.msra.mxu0 0.0
        %717 = vmatpush.msra.mxu0 0.0
        %718 = vmatpush.msra.mxu0 0.0
        %719 = vmatpush.msra.mxu0 0.0
        %720 = vmatpush.msra.mxu0 0.0
        %721 = vmatpush.msra.mxu0 0.0
        %722 = vmatpush.msra.mxu0 0.0
        %723 = vmatpush.msra.mxu0 0.0
        %724 = vmatpush.msra.mxu0 0.0
        %725 = vmatpush.msra.mxu0 0.0
        %726 = vmatpush.msra.mxu0 0.0
        %727 = vmatpush.msra.mxu0 0.0
        %728 = vmatpush.msra.mxu0 %v501
        %729 = vmatpush.msra.mxu0 %v500
        %730 = vmatmul.f32.gmra.mxu0 %v525
        %v731 = vpop.f32.mrf.mxu0
        %v732 = vadd.f32 0.0, %v731
        %733 = vmatmul.f32.gmra.mxu0 %v528
        %v734 = vpop.f32.mrf.mxu0
        %v735 = vadd.f32 0.0, %v734
        %736 = vdwg.mxu0
        %737 = vmatpush.msra.mxu0 0.0
        %738 = vmatpush.msra.mxu0 0.0
        %739 = vmatpush.msra.mxu0 0.0
        %740 = vmatpush.msra.mxu0 0.0
        %741 = vmatpush.msra.mxu0 0.0
        %742 = vmatpush.msra.mxu0 0.0
        %743 = vmatpush.msra.mxu0 0.0
        %744 = vmatpush.msra.mxu0 0.0
        %745 = vmatpush.msra.mxu0 0.0
        %746 = vmatpush.msra.mxu0 0.0
        %747 = vmatpush.msra.mxu0 0.0
        %748 = vmatpush.msra.mxu0 0.0
        %749 = vmatpush.msra.mxu0 0.0
        %750 = vmatpush.msra.mxu0 0.0
        %751 = vmatpush.msra.mxu0 %v517
        %752 = vmatpush.msra.mxu0 %v516
        %753 = vmatmul.f32.gmra.mxu0 %v554
        %v754 = vpop.f32.mrf.mxu0
        %v755 = vadd.f32 0.0, %v754
        %756 = vmatmul.f32.gmra.mxu0 %v557
        %v757 = vpop.f32.mrf.mxu0
        %v758 = vadd.f32 0.0, %v757
        %759 = vdwg.mxu0
        %v760 = vadd.f32 %v500, %v516
        %v761 = vadd.f32 %v501, %v517
        %762 = vmatpush.msra.mxu0 0.0
        %763 = vmatpush.msra.mxu0 0.0
        %764 = vmatpush.msra.mxu0 0.0
        %765 = vmatpush.msra.mxu0 0.0
        %766 = vmatpush.msra.mxu0 0.0
        %767 = vmatpush.msra.mxu0 0.0
        %768 = vmatpush.msra.mxu0 0.0
        %769 = vmatpush.msra.mxu0 0.0
        %770 = vmatpush.msra.mxu0 0.0
        %771 = vmatpush.msra.mxu0 0.0
        %772 = vmatpush.msra.mxu0 0.0
        %773 = vmatpush.msra.mxu0 0.0
        %774 = vmatpush.msra.mxu0 0.0
        %775 = vmatpush.msra.mxu0 0.0
        %776 = vmatpush.msra.mxu0 %v761
        %777 = vmatpush.msra.mxu0 %v760
        %778 = vmatmul.f32.gmra.mxu0 %v587
        %v779 = vpop.f32.mrf.mxu0
        %v780 = vadd.f32 0.0, %v779
        %781 = vmatmul.f32.gmra.mxu0 %v590
        %v782 = vpop.f32.mrf.mxu0
        %v783 = vadd.f32 0.0, %v782
        %784 = vdwg.mxu0
        %v785 = vsub.f32 %v732, %v755
        %v786 = vsub.f32 %v735, %v758
        %v787 = vsub.f32 %v780, %v732
        %v788 = vsub.f32 %v783, %v735
        %v789 = vsub.f32 %v787, %v755
        %v790 = vsub.f32 %v788, %v758
        %v791 = vmul.f32 %v785, %v785
        %v792 = vmul.f32 %v786, %v786
        %v793 = vadd.f32 %v712, %v791
        %v794 = vadd.f32 %v713, %v792
        %v795 = vmul.f32 %v789, %v789
        %v796 = vmul.f32 %v790, %v790
        %v797 = vadd.f32 %v793, %v795
        %v798 = vadd.f32 %v794, %v796
        %799 = vmatpush.msra.mxu0 0.0
        %800 = vmatpush.msra.mxu0 0.0
        %801 = vmatpush.msra.mxu0 0.0
        %802 = vmatpush.msra.mxu0 0.0
        %803 = vmatpush.msra.mxu0 0.0
        %804 = vmatpush.msra.mxu0 0.0
        %805 = vmatpush.msra.mxu0 0.0
        %806 = vmatpush.msra.mxu0 0.0
        %807 = vmatpush.msra.mxu0 0.0
        %808 = vmatpush.msra.mxu0 0.0
        %809 = vmatpush.msra.mxu0 0.0
        %810 = vmatpush.msra.mxu0 0.0
        %811 = vmatpush.msra.mxu0 0.0
        %812 = vmatpush.msra.mxu0 0.0
        %813 = vmatpush.msra.mxu0 %v503
        %814 = vmatpush.msra.mxu0 %v502
        %815 = vmatmul.f32.gmra.mxu0 %v525
        %v816 = vpop.f32.mrf.mxu0
        %v817 = vadd.f32 0.0, %v816
        %818 = vmatmul.f32.gmra.mxu0 %v528
        %v819 = vpop.f32.mrf.mxu0
        %v820 = vadd.f32 0.0, %v819
        %821 = vdwg.mxu0
        %822 = vmatpush.msra.mxu0 0.0
        %823 = vmatpush.msra.mxu0 0.0
        %824 = vmatpush.msra.mxu0 0.0
        %825 = vmatpush.msra.mxu0 0.0
        %826 = vmatpush.msra.mxu0 0.0
        %827 = vmatpush.msra.mxu0 0.0
        %828 = vmatpush.msra.mxu0 0.0
        %829 = vmatpush.msra.mxu0 0.0
        %830 = vmatpush.msra.mxu0 0.0
        %831 = vmatpush.msra.mxu0 0.0
        %832 = vmatpush.msra.mxu0 0.0
        %833 = vmatpush.msra.mxu0 0.0
        %834 = vmatpush.msra.mxu0 0.0
        %835 = vmatpush.msra.mxu0 0.0
        %836 = vmatpush.msra.mxu0 %v519
        %837 = vmatpush.msra.mxu0 %v518
        %838 = vmatmul.f32.gmra.mxu0 %v554
        %v839 = vpop.f32.mrf.mxu0
        %v840 = vadd.f32 0.0, %v839
        %841 = vmatmul.f32.gmra.mxu0 %v557
        %v842 = vpop.f32.mrf.mxu0
        %v843 = vadd.f32 0.0, %v842
        %844 = vdwg.mxu0
        %v845 = vadd.f32 %v502, %v518
        %v846 = vadd.f32 %v503, %v519
        %847 = vmatpush.msra.mxu0 0.0
        %848 = vmatpush.msra.mxu0 0.0
        %849 = vmatpush.msra.mxu0 0.0
        %850 = vmatpush.msra.mxu0 0.0
        %851 = vmatpush.msra.mxu0 0.0
        %852 = vmatpush.msra.mxu0 0.0
        %853 = vmatpush.msra.mxu0 0.0
        %854 = vmatpush.msra.mxu0 0.0
        %855 = vmatpush.msra.mxu0 0.0
        %856 = vmatpush.msra.mxu0 0.0
        %857 = vmatpush.msra.mxu0 0.0
        %858 = vmatpush.msra.mxu0 0.0
        %859 = vmatpush.msra.mxu0 0.0
        %860 = vmatpush.msra.mxu0 0.0
        %861 = vmatpush.msra.mxu0 %v846
        %862 = vmatpush.msra.mxu0 %v845
        %863 = vmatmul.f32.gmra.mxu0 %v587
        %v864 = vpop.f32.mrf.mxu0
        %v865 = vadd.f32 0.0, %v864
        %866 = vmatmul.f32.gmra.mxu0 %v590
        %v867 = vpop.f32.mrf.mxu0
        %v868 = vadd.f32 0.0, %v867
        %869 = vdwg.mxu0
        %v870 = vsub.f32 %v817, %v840
        %v871 = vsub.f32 %v820, %v843
        %v872 = vsub.f32 %v865, %v817
        %v873 = vsub.f32 %v868, %v820
        %v874 = vsub.f32 %v872, %v840
        %v875 = vsub.f32 %v873, %v843
        %v876 = vmul.f32 %v870, %v870
        %v877 = vmul.f32 %v871, %v871
        %v878 = vadd.f32 %v797, %v876
        %v879 = vadd.f32 %v798, %v877
        %v880 = vmul.f32 %v874, %v874
        %v881 = vmul.f32 %v875, %v875
        %v882 = vadd.f32 %v878, %v880
        %v883 = vadd.f32 %v879, %v881
        %v884 = vrsqrt.pop %v882
        %v885 = vmul.f32 %v884, %v882
        %v886 = vmul.f32 %v885, %v884
        %v887 = vmul.f32 0.5, %v886
        %v888 = vsub.f32 1.5, %v887
        %v889 = vmul.f32 %v884, %v888
        %v890 = vmul.f32 %v882, %v889
        %vm891 = vcmp.eq.f32.partialorder %v882, inf
        %v892 = vsel %vm891, %v882, %v890
        %vm893 = vcmp.eq.f32.partialorder %v882, 0.0
        %v894 = vand.u32 %v882, 2147483648
        %v895 = vsel %vm893, %v894, %v892
        %v896 = vrsqrt.pop %v883
        %v897 = vmul.f32 %v896, %v883
        %v898 = vmul.f32 %v897, %v896
        %v899 = vmul.f32 0.5, %v898
        %v900 = vsub.f32 1.5, %v899
        %v901 = vmul.f32 %v896, %v900
        %v902 = vmul.f32 %v883, %v901
        %vm903 = vcmp.eq.f32.partialorder %v883, inf
        %v904 = vsel %vm903, %v883, %v902
        %vm905 = vcmp.eq.f32.partialorder %v883, 0.0
        %v906 = vand.u32 %v883, 2147483648
        %v907 = vsel %vm905, %v906, %v904
        %908 = vst.msk [vmem:[%s259] sm:$0xff] %vm290, %v895
        %909 = vst.msk [vmem:[%s259 + $0x8] sm:$0xff] %vm290, %v907
        %s910 = sand.u32 %s164, 1
        %s911 = scalar_lea.sflag [#allocation3], %s910
        %s912 = sand.u32 %s164, 1
        %s913 = smul.addr %s912, 16
        %s914 = scalar_lea.vmem [#allocation2], %s913
        // Predicated region
        $region45: #{varnet_forward.25} parent=43 // pred_check
          %p915 = pneg %p174
        $region46: #{varnet_forward.25} parent=43 // pred_check_branch
          %917 = sbr.rel (%p915) target = $region48
        $region47: #{varnet_forward.25} parent=43 // pred_region
          %919 = vsyncadd %s911, 0
          %s920 = smul.addr %s20, 2
          %s921 = smul.addr %s920, 8
          %s922 = scalar_lea.hbm %s6, %s921
          %s923 = sshll.u32 %s914, 4
          %s924 = int_to_ptr.vmem [resolvable:$true] %s923
          %s925 = sshll.u32 %s922, 4
          %s926 = int_to_ptr.hbm [resolvable:$true] %s925
          %931 = dma.vmem_to_hbm [thread:$0]  %s924, 256, %s926, %s911, 128, 128, 8
        $region48: #{varnet_forward.25} parent=43 // pred_fallthru
          _
      $region44: #{varnet_forward.25} parent=5 // pred_fallthru
        _
      %p932 = scmp.le.s32.totalorder 2, %s15
      // Predicated region
      $region49: #{varnet_forward.25} parent=5 // pred_check
        %p933 = pneg %p932
      $region50: #{varnet_forward.25} parent=5 // pred_check_branch
        %935 = sbr.rel (%p933) target = $region52
      $region51: #{varnet_forward.25} parent=5 // pred_region
        %s936 = ssub.s32 %s15, 2
        // Predicated region
        $region53: #{varnet_forward.25} parent=51 // pred_check
          %p937 = pneg %p180
        $region54: #{varnet_forward.25} parent=51 // pred_check_branch
          %939 = sbr.rel (%p937) target = $region56
        $region55: #{varnet_forward.25} parent=51 // pred_region
          %s940 = sand.u32 %s165, 1
          %s941 = scalar_lea.sflag [#allocation3], %s940
          %s942 = sand.u32 %s165, 1
          %s943 = smul.addr %s942, 16
          %s944 = scalar_lea.vmem [#allocation2], %s943
          %946 = dma.done %s941, 256
        $region56: #{varnet_forward.25} parent=51 // pred_fallthru
          _
      $region52: #{varnet_forward.25} parent=5 // pred_fallthru
        _
    $region6: #{varnet_forward.25} parent=1 // loop_footer
      %s19 = sadd.s32 1, %s15
    $region7: #{varnet_forward.25} parent=1 // loop_footer_branch
      %14 = sbr.rel target = $region3
    $region8: #{varnet_forward.25} parent=1 // loop_exit
      _
    %947 = vsyncpa [#allocation3], 1
    %s948 = scalar_lea.sflag [#allocation3], 1
    %949 = vsyncpa %s948, 1

</llo_original>
